<compile_context>
chip_gen: v6e
topology: v6e:2x2x1
jax: 0.10.0
libtpu: 0.0.40
codegen_flags: <defaults>
</compile_context>

<pallas_src>
import functools
import math

import jax
import jax.numpy as jnp
from jax.experimental import pallas as pl
from jax.experimental.pallas import tpu as pltpu

_BN_EPS = 1e-5
_ACT_DTYPE = jnp.bfloat16     # internal activation dtype
_MIN_PALLAS_M = 128           # below this, the XLA GEMM path is faster


def _round_up(x, m):
    return ((x + m - 1) // m) * m


# ----------------------------------------------------------------------------
# Fused matmul kernel: K-tiled reduction, f32 accumulator, bias + ReLU epilogue
# ----------------------------------------------------------------------------
def _mm_kernel(a_ref, b_ref, t_ref, o_ref, acc_ref, *, relu):
    @pl.when(pl.program_id(2) == 0)
    def _():
        acc_ref[...] = jnp.zeros_like(acc_ref)

    acc_ref[...] += jnp.dot(a_ref[...], b_ref[...],
                            preferred_element_type=jnp.float32)

    @pl.when(pl.program_id(2) == pl.num_programs(2) - 1)
    def _():
        out = acc_ref[...] + t_ref[...]
        if relu:
            out = jnp.maximum(out, 0.0)
        o_ref[...] = out.astype(o_ref.dtype)


def matmul_bias_act(a, wm_p, shift, relu=False, out_dtype=_ACT_DTYPE):
    """out[M, n_out] = act(a[M, K] @ W + shift).

    wm_p  : (Kp, Np) bf16, pre-packed (BN scale folded, zero padded).
    shift : (1, n_out) f32 (bias / folded BN shift), unpadded.
    """
    M, K = a.shape
    Kp, Np = wm_p.shape
    n_out = shift.shape[1]
    a = a.astype(jnp.bfloat16)

    if M < _MIN_PALLAS_M:
        # Tiny-M GEMV-ish case (SE FC, bottleneck layers at low resolution):
        # plain XLA avoids pallas launch overhead and <8-row MXU utilization.
        out = jnp.dot(a, wm_p[:K, :n_out],
                      preferred_element_type=jnp.float32) + shift
        if relu:
            out = jnp.maximum(out, 0.0)
        return out.astype(out_dtype)

    # ---- Pallas tiled path -------------------------------------------------
    TM = next((t for t in (256, 128, 64, 32, 16) if M % t == 0), 128)
    Mp = _round_up(M, TM)
    TN = 256 if (Np % 256 == 0) else 128
    TK = next(t for t in (512, 384, 256, 128) if Kp % t == 0)

    if Mp != M or Kp != K:
        a = jnp.pad(a, ((0, Mp - M), (0, Kp - K)))
    shift_p = shift if Np == n_out else jnp.pad(
        shift, ((0, 0), (0, Np - n_out)))

    grid = (Mp // TM, Np // TN, Kp // TK)
    out = pl.pallas_call(
        functools.partial(_mm_kernel, relu=relu),
        out_shape=jax.ShapeDtypeStruct((Mp, Np), out_dtype),
        grid_spec=pltpu.PrefetchScalarGridSpec(
            num_scalar_prefetch=0,
            grid=grid,
            in_specs=[
                pl.BlockSpec((TM, TK), lambda i, j, k: (i, k)),
                pl.BlockSpec((TK, TN), lambda i, j, k: (k, j)),
                pl.BlockSpec((1, TN), lambda i, j, k: (0, j)),
            ],
            out_specs=pl.BlockSpec((TM, TN), lambda i, j, k: (i, j)),
            scratch_shapes=[pltpu.VMEM((TM, TN), jnp.float32)],
        ),
        compiler_params=pltpu.CompilerParams(
            dimension_semantics=("parallel", "parallel", "arbitrary"),
            vmem_limit_bytes=48 * 1024 * 1024,
        ),
    )(a, wm_p, shift_p)
    return out[:M, :n_out]


# ----------------------------------------------------------------------------
# Layer apply functions (NHWC).
# ----------------------------------------------------------------------------
def conv3x3_apply(p, x, relu=True):
    """x: (B,H,W,Cin);  p: packed {wm:(Kp,Np) bf16, shift:(1,Cout) f32}."""
    B, H, W, Cin = x.shape
    cout = p["shift"].shape[1]
    xp = jnp.pad(x, ((0, 0), (1, 1), (1, 1), (0, 0)))
    # TODO(synk): the 9-tap im2col is still materialized by XLA glue; a fully
    # in-kernel tap gather (Element-offset index_maps over the padded NHWC
    # tensor) would remove this HBM traffic at large resolutions.
    taps = [xp[:, dy:dy + H, dx:dx + W, :] for dy in range(3) for dx in range(3)]
    A = jnp.concatenate(taps, axis=-1).reshape(B * H * W, 9 * Cin)
    y = matmul_bias_act(A, p["wm"], p["shift"], relu=relu)
    return y.reshape(B, H, W, cout)


def double_conv_apply(p, x):
    x = conv3x3_apply(p["c1"], x, relu=True)
    x = conv3x3_apply(p["c2"], x, relu=True)
    return x


def se_apply(p, x):
    """Squeeze-and-excitation gate; tiny FCs stay in XLA (M = batch)."""
    B, H, W, C = x.shape
    z = jnp.mean(x.astype(jnp.float32), axis=(1, 2))              # (B, C)
    h1 = jnp.dot(z.astype(jnp.bfloat16), p["w1"],
                 preferred_element_type=jnp.float32) + p["b1"]
    h1 = jnp.maximum(h1, 0.0)
    h2 = jnp.dot(h1.astype(jnp.bfloat16), p["w2"],
                 preferred_element_type=jnp.float32) + p["b2"]
    s = jax.nn.sigmoid(h2)
    return (x.astype(jnp.float32) * s[:, None, None, :]).astype(x.dtype)


# TODO(synk): source of Incpetion_SE_block / Incpetion_SE_block_decoder was not
# provided with the module; approximated as double_conv (Conv3x3-BN-ReLU x2)
# followed by a squeeze-and-excitation gate with reduction ratio `decay`.
# Channel arithmetic (encoder C->2C, decoder C->C/2) matches the forward graph.
def inception_se_apply(p, x):
    x = double_conv_apply(p["dc"], x)
    x = se_apply(p["se"], x)
    return x


def conv_transpose2x2_apply(p, x):
    """ConvTranspose2d(k=2, stride=2).  p packed: wm (Kp, 4*Cout) bf16."""
    B, H, W, Cin = x.shape
    n = p["shift"].shape[1]
    cout = n // 4
    A = x.reshape(B * H * W, Cin)
    y = matmul_bias_act(A, p["wm"], p["shift"], relu=False)
    y = y.reshape(B, H, W, 2, 2, cout)
    y = jnp.transpose(y, (0, 1, 3, 2, 4, 5)).reshape(B, 2 * H, 2 * W, cout)
    return y


def conv1x1_xla(p, x):
    """Tiny 1x1 heads (n_class / 1 output channels) -> plain XLA, f32 output."""
    B, H, W, Cin = x.shape
    y = jnp.dot(x.reshape(-1, Cin).astype(jnp.float32), p["wm"]) + p["b"]
    return y.reshape(B, H, W, -1)


def maxpool2x2(x):
    B, H, W, C = x.shape
    return x.reshape(B, H // 2, 2, W // 2, 2, C).max(axis=(2, 4))


# ----------------------------------------------------------------------------
# Deterministic raw parameter initialization (PyTorch-like layout).
# ----------------------------------------------------------------------------
def _conv_w(key, cout, cin, k):
    fan_in = cin * k * k
    return jax.random.normal(key, (cout, cin, k, k), jnp.float32) / math.sqrt(fan_in)


def _bias(key, cout):
    return 0.01 * jax.random.normal(key, (cout,), jnp.float32)


def _bn(c):
    return dict(gamma=jnp.ones((c,), jnp.float32),
                beta=jnp.zeros((c,), jnp.float32),
                mean=jnp.zeros((c,), jnp.float32),
                var=jnp.ones((c,), jnp.float32))


def make_double_conv(key, cin, cout):
    k = jax.random.split(key, 4)
    return dict(w1=_conv_w(k[0], cout, cin, 3), b1=_bias(k[1], cout), bn1=_bn(cout),
                w2=_conv_w(k[2], cout, cout, 3), b2=_bias(k[3], cout), bn2=_bn(cout))


def make_se(key, c, decay):
    k = jax.random.split(key, 2)
    cr = max(1, c // decay)
    return dict(w1=jax.random.normal(k[0], (c, cr), jnp.float32) / math.sqrt(c),
                b1=jnp.zeros((cr,), jnp.float32),
                w2=jax.random.normal(k[1], (cr, c), jnp.float32) / math.sqrt(cr),
                b2=jnp.zeros((c,), jnp.float32))


def make_inception_se(key, cin, cout, decay):
    k1, k2 = jax.random.split(key)
    return dict(dc=make_double_conv(k1, cin, cout), se=make_se(k2, cout, decay))


def make_conv_t(key, cin, cout):
    k1, k2 = jax.random.split(key)
    w = jax.random.normal(k1, (cin, cout, 2, 2), jnp.float32) / math.sqrt(cin * 4)
    return dict(w=w, b=_bias(k2, cout))


def make_conv1x1(key, cin, cout):
    k1, k2 = jax.random.split(key)
    return dict(w=_conv_w(k1, cout, cin, 1), b=_bias(k2, cout))


def init_params(key, n_class, decay=2):
    ks = jax.random.split(key, 18)
    return dict(
        down1=make_double_conv(ks[0], 3, 64),
        down2=make_inception_se(ks[1], 64, 128, decay),
        down3=make_inception_se(ks[2], 128, 256, decay),
        down4=make_inception_se(ks[3], 256, 512, decay),
        down5=make_inception_se(ks[4], 512, 1024, decay),
        up1=make_conv_t(ks[5], 1024, 512),
        cup1=make_inception_se(ks[6], 1024, 512, decay),
        up2=make_conv_t(ks[7], 512, 256),
        cup2=make_inception_se(ks[8], 512, 256, decay),
        up3=make_conv_t(ks[9], 256, 128),
        cup3=make_inception_se(ks[10], 256, 128, decay),
        up4=make_conv_t(ks[11], 128, 64),
        cup4=make_inception_se(ks[12], 128, 64, decay),
        conv_out=make_conv1x1(ks[13], 64, n_class),
        dp4=make_conv1x1(ks[14], 512, 1),
        dp3=make_conv1x1(ks[15], 256, 1),
        dp2=make_conv1x1(ks[16], 128, 1),
    )


# ----------------------------------------------------------------------------
# One-time parameter packing: fold BN, transpose to (K, N), pad, cast bf16.
# ----------------------------------------------------------------------------
def _pack_mm(wm, shift):
    K, N = wm.shape
    Kp = _round_up(K, 128)
    Np = _round_up(N, 128)
    wm_p = jnp.pad(wm, ((0, Kp - K), (0, Np - N))).astype(jnp.bfloat16)
    return dict(wm=wm_p, shift=shift.reshape(1, N).astype(jnp.float32))


def pack_conv3x3(w, b, bn):
    cout, cin = w.shape[0], w.shape[1]
    s = bn["gamma"] / jnp.sqrt(bn["var"] + _BN_EPS)
    shift = (b - bn["mean"]) * s + bn["beta"]
    wm = jnp.transpose(w, (2, 3, 1, 0)).reshape(9 * cin, cout) * s[None, :]
    return _pack_mm(wm, shift)


def pack_double_conv(p):
    return dict(c1=pack_conv3x3(p["w1"], p["b1"], p["bn1"]),
                c2=pack_conv3x3(p["w2"], p["b2"], p["bn2"]))


def pack_se(p):
    return dict(w1=p["w1"].astype(jnp.bfloat16), b1=p["b1"],
                w2=p["w2"].astype(jnp.bfloat16), b2=p["b2"])


def pack_inception_se(p):
    return dict(dc=pack_double_conv(p["dc"]), se=pack_se(p["se"]))


def pack_conv_t(p):
    cin, cout = p["w"].shape[0], p["w"].shape[1]
    # columns ordered ((dy*2 + dx) * Cout + o)
    wm = jnp.transpose(p["w"], (0, 2, 3, 1)).reshape(cin, 4 * cout)
    shift = jnp.tile(p["b"], 4)
    return _pack_mm(wm, shift)


def pack_conv1x1(p):
    cout, cin = p["w"].shape[0], p["w"].shape[1]
    return dict(wm=p["w"].reshape(cout, cin).T.astype(jnp.float32), b=p["b"])


def pack_params(raw):
    return dict(
        down1=pack_double_conv(raw["down1"]),
        down2=pack_inception_se(raw["down2"]),
        down3=pack_inception_se(raw["down3"]),
        down4=pack_inception_se(raw["down4"]),
        down5=pack_inception_se(raw["down5"]),
        up1=pack_conv_t(raw["up1"]), cup1=pack_inception_se(raw["cup1"]),
        up2=pack_conv_t(raw["up2"]), cup2=pack_inception_se(raw["cup2"]),
        up3=pack_conv_t(raw["up3"]), cup3=pack_inception_se(raw["cup3"]),
        up4=pack_conv_t(raw["up4"]), cup4=pack_inception_se(raw["cup4"]),
        conv_out=pack_conv1x1(raw["conv_out"]),
        dp4=pack_conv1x1(raw["dp4"]),
        dp3=pack_conv1x1(raw["dp3"]),
        dp2=pack_conv1x1(raw["dp2"]),
    )


# ----------------------------------------------------------------------------
# Full forward pass (matches the PyTorch module's forward graph).
# ----------------------------------------------------------------------------
def unet_forward(pp, x_nchw):
    B, C, H, W = x_nchw.shape
    x = jnp.transpose(x_nchw, (0, 2, 3, 1)).astype(_ACT_DTYPE)   # NCHW -> NHWC

    conv1 = double_conv_apply(pp["down1"], x)
    x = maxpool2x2(conv1)
    conv2 = inception_se_apply(pp["down2"], x)
    x = maxpool2x2(conv2)
    conv3 = inception_se_apply(pp["down3"], x)
    x = maxpool2x2(conv3)
    conv4 = inception_se_apply(pp["down4"], x)
    x = maxpool2x2(conv4)
    conv5 = inception_se_apply(pp["down5"], x)

    up1 = conv_transpose2x2_apply(pp["up1"], conv5)
    merge1 = jnp.concatenate([conv4, up1], axis=-1)
    cu1 = inception_se_apply(pp["cup1"], merge1)
    dp4 = conv1x1_xla(pp["dp4"], cu1)
    dp4 = jax.image.resize(dp4, (B, H, W, 1), method="bilinear")  # ~align_corners=False

    up2 = conv_transpose2x2_apply(pp["up2"], cu1)
    merge2 = jnp.concatenate([conv3, up2], axis=-1)
    cu2 = inception_se_apply(pp["cup2"], merge2)
    dp3 = conv1x1_xla(pp["dp3"], cu2)
    dp3 = jax.image.resize(dp3, (B, H, W, 1), method="bilinear")

    up3 = conv_transpose2x2_apply(pp["up3"], cu2)
    merge3 = jnp.concatenate([conv2, up3], axis=-1)
    cu3 = inception_se_apply(pp["cup3"], merge3)
    dp2 = conv1x1_xla(pp["dp2"], cu3)
    dp2 = jax.image.resize(dp2, (B, H, W, 1), method="bilinear")

    up4 = conv_transpose2x2_apply(pp["up4"], cu3)
    merge4 = jnp.concatenate([conv1, up4], axis=-1)
    cu4 = inception_se_apply(pp["cup4"], merge4)
    dp1 = conv1x1_xla(pp["conv_out"], cu4)

    to_nchw = lambda t: jnp.transpose(t, (0, 3, 1, 2))
    return to_nchw(dp4), to_nchw(dp3), to_nchw(dp2), to_nchw(dp1)


if __name__ == "__main__":
    n_class = 2
    key = jax.random.PRNGKey(0)
    pkey, xkey = jax.random.split(key)
    raw_params = init_params(pkey, n_class, decay=2)
    params = pack_params(raw_params)   # one-time weight packing (BN fold, bf16)

    # small deterministic example input: batch=2, channels=3, spatial=16
    x = jax.random.normal(xkey, (2, 3, 16, 16), jnp.float32)

    fwd = jax.jit(unet_forward)
    outs = jax.block_until_ready(fwd(params, x))
    dp4, dp3, dp2, dp1 = outs

    assert dp4.shape == (2, 1, 16, 16)
    assert dp3.shape == (2, 1, 16, 16)
    assert dp2.shape == (2, 1, 16, 16)
    assert dp1.shape == (2, n_class, 16, 16)
    assert all(bool(jnp.all(jnp.isfinite(o.astype(jnp.float32)))) for o in outs)
    print("KERNEL_OK")
</pallas_src>

<mosaic_0001>
module attributes {stable_mosaic.version = 11 : i64} {
  func.func @_mm_kernel(%arg0: i32, %arg1: i32, %arg2: i32, %arg3: memref<256x128xbf16, #tpu.memory_space<vmem>>, %arg4: memref<128x128xbf16, #tpu.memory_space<vmem>>, %arg5: memref<1x128xf32, #tpu.memory_space<vmem>>, %arg6: memref<256x128xbf16, #tpu.memory_space<vmem>>, %arg7: memref<256x128xf32, #tpu.memory_space<vmem>>) attributes {dimension_semantics = [#tpu.dimension_semantics<parallel>, #tpu.dimension_semantics<parallel>, #tpu.dimension_semantics<arbitrary>], iteration_bounds = array<i64: 2, 1, 1>, scalar_prefetch = 0 : i64, scratch_operands = 1 : i64, tpu.core_type = #tpu.core_type<tc>, window_params = [{transform_indices = @transform_0, window_bounds = array<i64: 256, 128>}, {transform_indices = @transform_1, window_bounds = array<i64: 128, 128>}, {transform_indices = @transform_2, window_bounds = array<i64: 1, 128>}, {transform_indices = @transform_3, window_bounds = array<i64: 256, 128>}]} {
    %c0_i32 = arith.constant 0 : i32
    %0 = arith.cmpi eq, %arg2, %c0_i32 : i32
    %1 = arith.extui %0 : i1 to i32
    %c0_i32_0 = arith.constant 0 : i32
    %2 = arith.cmpi ne, %1, %c0_i32_0 : i32
    scf.if %2 {
      %cst_10 = arith.constant 0.000000e+00 : f32
      %12 = vector.broadcast %cst_10 : f32 to vector<256x128xf32>
      %c0_11 = arith.constant 0 : index
      %c0_12 = arith.constant 0 : index
      %13 = vector.load %arg7[%c0_11, %c0_12] : memref<256x128xf32, #tpu.memory_space<vmem>>, vector<256x128xf32>
      tpu.vector_store %arg7[%c0_11, %c0_12], %12 {strides = array<i32>} : memref<256x128xf32, #tpu.memory_space<vmem>>, vector<256x128xf32>,
    } else {
    }
    %c0 = arith.constant 0 : index
    %c0_1 = arith.constant 0 : index
    %3 = vector.load %arg7[%c0, %c0_1] : memref<256x128xf32, #tpu.memory_space<vmem>>, vector<256x128xf32>
    %c0_2 = arith.constant 0 : index
    %c0_3 = arith.constant 0 : index
    %4 = vector.load %arg3[%c0_2, %c0_3] : memref<256x128xbf16, #tpu.memory_space<vmem>>, vector<256x128xbf16>
    %c0_4 = arith.constant 0 : index
    %c0_5 = arith.constant 0 : index
    %5 = vector.load %arg4[%c0_4, %c0_5] : memref<128x128xbf16, #tpu.memory_space<vmem>>, vector<128x128xbf16>
    %cst = arith.constant dense<0.000000e+00> : vector<256x128xf32>
    %6 = tpu.matmul %4, %5, %cst {dimension_numbers = #tpu.dot_dimension_numbers<[1], [0], [0], [1], [0, 0, 1, 1], [], []>} : vector<256x128xbf16>, vector<128x128xbf16>, vector<256x128xf32> -> vector<256x128xf32>
    %7 = arith.addf %3, %6 : vector<256x128xf32>
    %c0_6 = arith.constant 0 : index
    %c0_7 = arith.constant 0 : index
    %8 = vector.load %arg7[%c0_6, %c0_7] : memref<256x128xf32, #tpu.memory_space<vmem>>, vector<256x128xf32>
    tpu.vector_store %arg7[%c0_6, %c0_7], %7 {strides = array<i32>} : memref<256x128xf32, #tpu.memory_space<vmem>>, vector<256x128xf32>,
    %c0_i32_8 = arith.constant 0 : i32
    %9 = arith.cmpi eq, %arg2, %c0_i32_8 : i32
    %10 = arith.extui %9 : i1 to i32
    %c0_i32_9 = arith.constant 0 : i32
    %11 = arith.cmpi ne, %10, %c0_i32_9 : i32
    scf.if %11 {
      %c0_10 = arith.constant 0 : index
      %c0_11 = arith.constant 0 : index
      %12 = vector.load %arg7[%c0_10, %c0_11] : memref<256x128xf32, #tpu.memory_space<vmem>>, vector<256x128xf32>
      %c0_12 = arith.constant 0 : index
      %c0_13 = arith.constant 0 : index
      %13 = vector.load %arg5[%c0_12, %c0_13] : memref<1x128xf32, #tpu.memory_space<vmem>>, vector<1x128xf32>
      %14 = vector.broadcast %13 : vector<1x128xf32> to vector<256x128xf32>
      %15 = arith.addf %12, %14 : vector<256x128xf32>
      %cst_14 = arith.constant 0.000000e+00 : f32
      %16 = vector.broadcast %cst_14 : f32 to vector<256x128xf32>
      %17 = arith.maximumf %15, %16 : vector<256x128xf32>
      %18 = arith.truncf %17 : vector<256x128xf32> to vector<256x128xbf16>
      %c0_15 = arith.constant 0 : index
      %c0_16 = arith.constant 0 : index
      %19 = vector.load %arg6[%c0_15, %c0_16] : memref<256x128xbf16, #tpu.memory_space<vmem>>, vector<256x128xbf16>
      tpu.vector_store %arg6[%c0_15, %c0_16], %18 {strides = array<i32>} : memref<256x128xbf16, #tpu.memory_space<vmem>>, vector<256x128xbf16>,
    } else {
    }
    return
  }
  func.func @transform_0(%arg0: i32, %arg1: i32, %arg2: i32) -> (i32, i32) {
    %c0_i32 = arith.constant 0 : i32
    return %arg0, %arg2 : i32, i32
  }
  func.func @transform_1(%arg0: i32, %arg1: i32, %arg2: i32) -> (i32, i32) {
    %c0_i32 = arith.constant 0 : i32
    return %arg2, %arg1 : i32, i32
  }
  func.func @transform_2(%arg0: i32, %arg1: i32, %arg2: i32) -> (i32, i32) {
    %c0_i32 = arith.constant 0 : i32
    %c0_i32_0 = arith.constant 0 : i32
    return %c0_i32, %arg1 : i32, i32
  }
  func.func @transform_3(%arg0: i32, %arg1: i32, %arg2: i32) -> (i32, i32) {
    %c0_i32 = arith.constant 0 : i32
    return %arg0, %arg1 : i32, i32
  }
}

module attributes {stable_mosaic.version = 11 : i64} {
  func.func @_mm_kernel(%arg0: i32, %arg1: i32, %arg2: i32, %arg3: memref<256x128xbf16, #tpu.memory_space<vmem>>, %arg4: memref<128x128xbf16, #tpu.memory_space<vmem>>, %arg5: memref<1x128xf32, #tpu.memory_space<vmem>>, %arg6: memref<256x128xbf16, #tpu.memory_space<vmem>>, %arg7: memref<256x128xf32, #tpu.memory_space<vmem>>) attributes {dimension_semantics = [#tpu.dimension_semantics<parallel>, #tpu.dimension_semantics<parallel>, #tpu.dimension_semantics<arbitrary>], iteration_bounds = array<i64: 2, 1, 5>, scalar_prefetch = 0 : i64, scratch_operands = 1 : i64, tpu.core_type = #tpu.core_type<tc>, window_params = [{transform_indices = @transform_0, window_bounds = array<i64: 256, 128>}, {transform_indices = @transform_1, window_bounds = array<i64: 128, 128>}, {transform_indices = @transform_2, window_bounds = array<i64: 1, 128>}, {transform_indices = @transform_3, window_bounds = array<i64: 256, 128>}]} {
    %c0_i32 = arith.constant 0 : i32
    %0 = arith.cmpi eq, %arg2, %c0_i32 : i32
    %1 = arith.extui %0 : i1 to i32
    %c0_i32_0 = arith.constant 0 : i32
    %2 = arith.cmpi ne, %1, %c0_i32_0 : i32
    scf.if %2 {
      %cst_9 = arith.constant 0.000000e+00 : f32
      %12 = vector.broadcast %cst_9 : f32 to vector<256x128xf32>
      %c0_10 = arith.constant 0 : index
      %c0_11 = arith.constant 0 : index
      %13 = vector.load %arg7[%c0_10, %c0_11] : memref<256x128xf32, #tpu.memory_space<vmem>>, vector<256x128xf32>
      tpu.vector_store %arg7[%c0_10, %c0_11], %12 {strides = array<i32>} : memref<256x128xf32, #tpu.memory_space<vmem>>, vector<256x128xf32>,
    } else {
    }
    %c0 = arith.constant 0 : index
    %c0_1 = arith.constant 0 : index
    %3 = vector.load %arg7[%c0, %c0_1] : memref<256x128xf32, #tpu.memory_space<vmem>>, vector<256x128xf32>
    %c0_2 = arith.constant 0 : index
    %c0_3 = arith.constant 0 : index
    %4 = vector.load %arg3[%c0_2, %c0_3] : memref<256x128xbf16, #tpu.memory_space<vmem>>, vector<256x128xbf16>
    %c0_4 = arith.constant 0 : index
    %c0_5 = arith.constant 0 : index
    %5 = vector.load %arg4[%c0_4, %c0_5] : memref<128x128xbf16, #tpu.memory_space<vmem>>, vector<128x128xbf16>
    %cst = arith.constant dense<0.000000e+00> : vector<256x128xf32>
    %6 = tpu.matmul %4, %5, %cst {dimension_numbers = #tpu.dot_dimension_numbers<[1], [0], [0], [1], [0, 0, 1, 1], [], []>} : vector<256x128xbf16>, vector<128x128xbf16>, vector<256x128xf32> -> vector<256x128xf32>
    %7 = arith.addf %3, %6 : vector<256x128xf32>
    %c0_6 = arith.constant 0 : index
    %c0_7 = arith.constant 0 : index
    %8 = vector.load %arg7[%c0_6, %c0_7] : memref<256x128xf32, #tpu.memory_space<vmem>>, vector<256x128xf32>
    tpu.vector_store %arg7[%c0_6, %c0_7], %7 {strides = array<i32>} : memref<256x128xf32, #tpu.memory_space<vmem>>, vector<256x128xf32>,
    %c4_i32 = arith.constant 4 : i32
    %9 = arith.cmpi eq, %arg2, %c4_i32 : i32
    %10 = arith.extui %9 : i1 to i32
    %c0_i32_8 = arith.constant 0 : i32
    %11 = arith.cmpi ne, %10, %c0_i32_8 : i32
    scf.if %11 {
      %c0_9 = arith.constant 0 : index
      %c0_10 = arith.constant 0 : index
      %12 = vector.load %arg7[%c0_9, %c0_10] : memref<256x128xf32, #tpu.memory_space<vmem>>, vector<256x128xf32>
      %c0_11 = arith.constant 0 : index
      %c0_12 = arith.constant 0 : index
      %13 = vector.load %arg5[%c0_11, %c0_12] : memref<1x128xf32, #tpu.memory_space<vmem>>, vector<1x128xf32>
      %14 = vector.broadcast %13 : vector<1x128xf32> to vector<256x128xf32>
      %15 = arith.addf %12, %14 : vector<256x128xf32>
      %cst_13 = arith.constant 0.000000e+00 : f32
      %16 = vector.broadcast %cst_13 : f32 to vector<256x128xf32>
      %17 = arith.maximumf %15, %16 : vector<256x128xf32>
      %18 = arith.truncf %17 : vector<256x128xf32> to vector<256x128xbf16>
      %c0_14 = arith.constant 0 : index
      %c0_15 = arith.constant 0 : index
      %19 = vector.load %arg6[%c0_14, %c0_15] : memref<256x128xbf16, #tpu.memory_space<vmem>>, vector<256x128xbf16>
      tpu.vector_store %arg6[%c0_14, %c0_15], %18 {strides = array<i32>} : memref<256x128xbf16, #tpu.memory_space<vmem>>, vector<256x128xbf16>,
    } else {
    }
    return
  }
  func.func @transform_0(%arg0: i32, %arg1: i32, %arg2: i32) -> (i32, i32) {
    %c0_i32 = arith.constant 0 : i32
    return %arg0, %arg2 : i32, i32
  }
  func.func @transform_1(%arg0: i32, %arg1: i32, %arg2: i32) -> (i32, i32) {
    %c0_i32 = arith.constant 0 : i32
    return %arg2, %arg1 : i32, i32
  }
  func.func @transform_2(%arg0: i32, %arg1: i32, %arg2: i32) -> (i32, i32) {
    %c0_i32 = arith.constant 0 : i32
    %c0_i32_0 = arith.constant 0 : i32
    return %c0_i32, %arg1 : i32, i32
  }
  func.func @transform_3(%arg0: i32, %arg1: i32, %arg2: i32) -> (i32, i32) {
    %c0_i32 = arith.constant 0 : i32
    return %arg0, %arg1 : i32, i32
  }
}

module attributes {stable_mosaic.version = 11 : i64} {
  func.func @_mm_kernel(%arg0: i32, %arg1: i32, %arg2: i32, %arg3: memref<128x128xbf16, #tpu.memory_space<vmem>>, %arg4: memref<128x128xbf16, #tpu.memory_space<vmem>>, %arg5: memref<1x128xf32, #tpu.memory_space<vmem>>, %arg6: memref<128x128xbf16, #tpu.memory_space<vmem>>, %arg7: memref<128x128xf32, #tpu.memory_space<vmem>>) attributes {dimension_semantics = [#tpu.dimension_semantics<parallel>, #tpu.dimension_semantics<parallel>, #tpu.dimension_semantics<arbitrary>], iteration_bounds = array<i64: 1, 1, 5>, scalar_prefetch = 0 : i64, scratch_operands = 1 : i64, tpu.core_type = #tpu.core_type<tc>, window_params = [{transform_indices = @transform_0, window_bounds = array<i64: 128, 128>}, {transform_indices = @transform_1, window_bounds = array<i64: 128, 128>}, {transform_indices = @transform_2, window_bounds = array<i64: 1, 128>}, {transform_indices = @transform_3, window_bounds = array<i64: 128, 128>}]} {
    %c0_i32 = arith.constant 0 : i32
    %0 = arith.cmpi eq, %arg2, %c0_i32 : i32
    %1 = arith.extui %0 : i1 to i32
    %c0_i32_0 = arith.constant 0 : i32
    %2 = arith.cmpi ne, %1, %c0_i32_0 : i32
    scf.if %2 {
      %cst_9 = arith.constant 0.000000e+00 : f32
      %12 = vector.broadcast %cst_9 : f32 to vector<128x128xf32>
      %c0_10 = arith.constant 0 : index
      %c0_11 = arith.constant 0 : index
      %13 = vector.load %arg7[%c0_10, %c0_11] : memref<128x128xf32, #tpu.memory_space<vmem>>, vector<128x128xf32>
      tpu.vector_store %arg7[%c0_10, %c0_11], %12 {strides = array<i32>} : memref<128x128xf32, #tpu.memory_space<vmem>>, vector<128x128xf32>,
    } else {
    }
    %c0 = arith.constant 0 : index
    %c0_1 = arith.constant 0 : index
    %3 = vector.load %arg7[%c0, %c0_1] : memref<128x128xf32, #tpu.memory_space<vmem>>, vector<128x128xf32>
    %c0_2 = arith.constant 0 : index
    %c0_3 = arith.constant 0 : index
    %4 = vector.load %arg3[%c0_2, %c0_3] : memref<128x128xbf16, #tpu.memory_space<vmem>>, vector<128x128xbf16>
    %c0_4 = arith.constant 0 : index
    %c0_5 = arith.constant 0 : index
    %5 = vector.load %arg4[%c0_4, %c0_5] : memref<128x128xbf16, #tpu.memory_space<vmem>>, vector<128x128xbf16>
    %cst = arith.constant dense<0.000000e+00> : vector<128x128xf32>
    %6 = tpu.matmul %4, %5, %cst {dimension_numbers = #tpu.dot_dimension_numbers<[1], [0], [0], [1], [0, 0, 1, 1], [], []>} : vector<128x128xbf16>, vector<128x128xbf16>, vector<128x128xf32> -> vector<128x128xf32>
    %7 = arith.addf %3, %6 : vector<128x128xf32>
    %c0_6 = arith.constant 0 : index
    %c0_7 = arith.constant 0 : index
    %8 = vector.load %arg7[%c0_6, %c0_7] : memref<128x128xf32, #tpu.memory_space<vmem>>, vector<128x128xf32>
    tpu.vector_store %arg7[%c0_6, %c0_7], %7 {strides = array<i32>} : memref<128x128xf32, #tpu.memory_space<vmem>>, vector<128x128xf32>,
    %c4_i32 = arith.constant 4 : i32
    %9 = arith.cmpi eq, %arg2, %c4_i32 : i32
    %10 = arith.extui %9 : i1 to i32
    %c0_i32_8 = arith.constant 0 : i32
    %11 = arith.cmpi ne, %10, %c0_i32_8 : i32
    scf.if %11 {
      %c0_9 = arith.constant 0 : index
      %c0_10 = arith.constant 0 : index
      %12 = vector.load %arg7[%c0_9, %c0_10] : memref<128x128xf32, #tpu.memory_space<vmem>>, vector<128x128xf32>
      %c0_11 = arith.constant 0 : index
      %c0_12 = arith.constant 0 : index
      %13 = vector.load %arg5[%c0_11, %c0_12] : memref<1x128xf32, #tpu.memory_space<vmem>>, vector<1x128xf32>
      %14 = vector.broadcast %13 : vector<1x128xf32> to vector<128x128xf32>
      %15 = arith.addf %12, %14 : vector<128x128xf32>
      %cst_13 = arith.constant 0.000000e+00 : f32
      %16 = vector.broadcast %cst_13 : f32 to vector<128x128xf32>
      %17 = arith.maximumf %15, %16 : vector<128x128xf32>
      %18 = arith.truncf %17 : vector<128x128xf32> to vector<128x128xbf16>
      %c0_14 = arith.constant 0 : index
      %c0_15 = arith.constant 0 : index
      %19 = vector.load %arg6[%c0_14, %c0_15] : memref<128x128xbf16, #tpu.memory_space<vmem>>, vector<128x128xbf16>
      tpu.vector_store %arg6[%c0_14, %c0_15], %18 {strides = array<i32>} : memref<128x128xbf16, #tpu.memory_space<vmem>>, vector<128x128xbf16>,
    } else {
    }
    return
  }
  func.func @transform_0(%arg0: i32, %arg1: i32, %arg2: i32) -> (i32, i32) {
    %c0_i32 = arith.constant 0 : i32
    return %arg0, %arg2 : i32, i32
  }
  func.func @transform_1(%arg0: i32, %arg1: i32, %arg2: i32) -> (i32, i32) {
    %c0_i32 = arith.constant 0 : i32
    return %arg2, %arg1 : i32, i32
  }
  func.func @transform_2(%arg0: i32, %arg1: i32, %arg2: i32) -> (i32, i32) {
    %c0_i32 = arith.constant 0 : i32
    %c0_i32_0 = arith.constant 0 : i32
    return %c0_i32, %arg1 : i32, i32
  }
  func.func @transform_3(%arg0: i32, %arg1: i32, %arg2: i32) -> (i32, i32) {
    %c0_i32 = arith.constant 0 : i32
    return %arg0, %arg1 : i32, i32
  }
}

module attributes {stable_mosaic.version = 11 : i64} {
  func.func @_mm_kernel(%arg0: i32, %arg1: i32, %arg2: i32, %arg3: memref<128x384xbf16, #tpu.memory_space<vmem>>, %arg4: memref<384x128xbf16, #tpu.memory_space<vmem>>, %arg5: memref<1x128xf32, #tpu.memory_space<vmem>>, %arg6: memref<128x128xbf16, #tpu.memory_space<vmem>>, %arg7: memref<128x128xf32, #tpu.memory_space<vmem>>) attributes {dimension_semantics = [#tpu.dimension_semantics<parallel>, #tpu.dimension_semantics<parallel>, #tpu.dimension_semantics<arbitrary>], iteration_bounds = array<i64: 1, 1, 3>, scalar_prefetch = 0 : i64, scratch_operands = 1 : i64, tpu.core_type = #tpu.core_type<tc>, window_params = [{transform_indices = @transform_0, window_bounds = array<i64: 128, 384>}, {transform_indices = @transform_1, window_bounds = array<i64: 384, 128>}, {transform_indices = @transform_2, window_bounds = array<i64: 1, 128>}, {transform_indices = @transform_3, window_bounds = array<i64: 128, 128>}]} {
    %c0_i32 = arith.constant 0 : i32
    %0 = arith.cmpi eq, %arg2, %c0_i32 : i32
    %1 = arith.extui %0 : i1 to i32
    %c0_i32_0 = arith.constant 0 : i32
    %2 = arith.cmpi ne, %1, %c0_i32_0 : i32
    scf.if %2 {
      %cst_9 = arith.constant 0.000000e+00 : f32
      %12 = vector.broadcast %cst_9 : f32 to vector<128x128xf32>
      %c0_10 = arith.constant 0 : index
      %c0_11 = arith.constant 0 : index
      %13 = vector.load %arg7[%c0_10, %c0_11] : memref<128x128xf32, #tpu.memory_space<vmem>>, vector<128x128xf32>
      tpu.vector_store %arg7[%c0_10, %c0_11], %12 {strides = array<i32>} : memref<128x128xf32, #tpu.memory_space<vmem>>, vector<128x128xf32>,
    } else {
    }
    %c0 = arith.constant 0 : index
    %c0_1 = arith.constant 0 : index
    %3 = vector.load %arg7[%c0, %c0_1] : memref<128x128xf32, #tpu.memory_space<vmem>>, vector<128x128xf32>
    %c0_2 = arith.constant 0 : index
    %c0_3 = arith.constant 0 : index
    %4 = vector.load %arg3[%c0_2, %c0_3] : memref<128x384xbf16, #tpu.memory_space<vmem>>, vector<128x384xbf16>
    %c0_4 = arith.constant 0 : index
    %c0_5 = arith.constant 0 : index
    %5 = vector.load %arg4[%c0_4, %c0_5] : memref<384x128xbf16, #tpu.memory_space<vmem>>, vector<384x128xbf16>
    %cst = arith.constant dense<0.000000e+00> : vector<128x128xf32>
    %6 = tpu.matmul %4, %5, %cst {dimension_numbers = #tpu.dot_dimension_numbers<[1], [0], [0], [1], [0, 0, 1, 1], [], []>} : vector<128x384xbf16>, vector<384x128xbf16>, vector<128x128xf32> -> vector<128x128xf32>
    %7 = arith.addf %3, %6 : vector<128x128xf32>
    %c0_6 = arith.constant 0 : index
    %c0_7 = arith.constant 0 : index
    %8 = vector.load %arg7[%c0_6, %c0_7] : memref<128x128xf32, #tpu.memory_space<vmem>>, vector<128x128xf32>
    tpu.vector_store %arg7[%c0_6, %c0_7], %7 {strides = array<i32>} : memref<128x128xf32, #tpu.memory_space<vmem>>, vector<128x128xf32>,
    %c2_i32 = arith.constant 2 : i32
    %9 = arith.cmpi eq, %arg2, %c2_i32 : i32
    %10 = arith.extui %9 : i1 to i32
    %c0_i32_8 = arith.constant 0 : i32
    %11 = arith.cmpi ne, %10, %c0_i32_8 : i32
    scf.if %11 {
      %c0_9 = arith.constant 0 : index
      %c0_10 = arith.constant 0 : index
      %12 = vector.load %arg7[%c0_9, %c0_10] : memref<128x128xf32, #tpu.memory_space<vmem>>, vector<128x128xf32>
      %c0_11 = arith.constant 0 : index
      %c0_12 = arith.constant 0 : index
      %13 = vector.load %arg5[%c0_11, %c0_12] : memref<1x128xf32, #tpu.memory_space<vmem>>, vector<1x128xf32>
      %14 = vector.broadcast %13 : vector<1x128xf32> to vector<128x128xf32>
      %15 = arith.addf %12, %14 : vector<128x128xf32>
      %cst_13 = arith.constant 0.000000e+00 : f32
      %16 = vector.broadcast %cst_13 : f32 to vector<128x128xf32>
      %17 = arith.maximumf %15, %16 : vector<128x128xf32>
      %18 = arith.truncf %17 : vector<128x128xf32> to vector<128x128xbf16>
      %c0_14 = arith.constant 0 : index
      %c0_15 = arith.constant 0 : index
      %19 = vector.load %arg6[%c0_14, %c0_15] : memref<128x128xbf16, #tpu.memory_space<vmem>>, vector<128x128xbf16>
      tpu.vector_store %arg6[%c0_14, %c0_15], %18 {strides = array<i32>} : memref<128x128xbf16, #tpu.memory_space<vmem>>, vector<128x128xbf16>,
    } else {
    }
    return
  }
  func.func @transform_0(%arg0: i32, %arg1: i32, %arg2: i32) -> (i32, i32) {
    %c0_i32 = arith.constant 0 : i32
    return %arg0, %arg2 : i32, i32
  }
  func.func @transform_1(%arg0: i32, %arg1: i32, %arg2: i32) -> (i32, i32) {
    %c0_i32 = arith.constant 0 : i32
    return %arg2, %arg1 : i32, i32
  }
  func.func @transform_2(%arg0: i32, %arg1: i32, %arg2: i32) -> (i32, i32) {
    %c0_i32 = arith.constant 0 : i32
    %c0_i32_0 = arith.constant 0 : i32
    return %c0_i32, %arg1 : i32, i32
  }
  func.func @transform_3(%arg0: i32, %arg1: i32, %arg2: i32) -> (i32, i32) {
    %c0_i32 = arith.constant 0 : i32
    return %arg0, %arg1 : i32, i32
  }
}

module attributes {stable_mosaic.version = 11 : i64} {
  func.func @_mm_kernel(%arg0: i32, %arg1: i32, %arg2: i32, %arg3: memref<128x384xbf16, #tpu.memory_space<vmem>>, %arg4: memref<384x128xbf16, #tpu.memory_space<vmem>>, %arg5: memref<1x128xf32, #tpu.memory_space<vmem>>, %arg6: memref<128x128xbf16, #tpu.memory_space<vmem>>, %arg7: memref<128x128xf32, #tpu.memory_space<vmem>>) attributes {dimension_semantics = [#tpu.dimension_semantics<parallel>, #tpu.dimension_semantics<parallel>, #tpu.dimension_semantics<arbitrary>], iteration_bounds = array<i64: 1, 1, 6>, scalar_prefetch = 0 : i64, scratch_operands = 1 : i64, tpu.core_type = #tpu.core_type<tc>, window_params = [{transform_indices = @transform_0, window_bounds = array<i64: 128, 384>}, {transform_indices = @transform_1, window_bounds = array<i64: 384, 128>}, {transform_indices = @transform_2, window_bounds = array<i64: 1, 128>}, {transform_indices = @transform_3, window_bounds = array<i64: 128, 128>}]} {
    %c0_i32 = arith.constant 0 : i32
    %0 = arith.cmpi eq, %arg2, %c0_i32 : i32
    %1 = arith.extui %0 : i1 to i32
    %c0_i32_0 = arith.constant 0 : i32
    %2 = arith.cmpi ne, %1, %c0_i32_0 : i32
    scf.if %2 {
      %cst_9 = arith.constant 0.000000e+00 : f32
      %12 = vector.broadcast %cst_9 : f32 to vector<128x128xf32>
      %c0_10 = arith.constant 0 : index
      %c0_11 = arith.constant 0 : index
      %13 = vector.load %arg7[%c0_10, %c0_11] : memref<128x128xf32, #tpu.memory_space<vmem>>, vector<128x128xf32>
      tpu.vector_store %arg7[%c0_10, %c0_11], %12 {strides = array<i32>} : memref<128x128xf32, #tpu.memory_space<vmem>>, vector<128x128xf32>,
    } else {
    }
    %c0 = arith.constant 0 : index
    %c0_1 = arith.constant 0 : index
    %3 = vector.load %arg7[%c0, %c0_1] : memref<128x128xf32, #tpu.memory_space<vmem>>, vector<128x128xf32>
    %c0_2 = arith.constant 0 : index
    %c0_3 = arith.constant 0 : index
    %4 = vector.load %arg3[%c0_2, %c0_3] : memref<128x384xbf16, #tpu.memory_space<vmem>>, vector<128x384xbf16>
    %c0_4 = arith.constant 0 : index
    %c0_5 = arith.constant 0 : index
    %5 = vector.load %arg4[%c0_4, %c0_5] : memref<384x128xbf16, #tpu.memory_space<vmem>>, vector<384x128xbf16>
    %cst = arith.constant dense<0.000000e+00> : vector<128x128xf32>
    %6 = tpu.matmul %4, %5, %cst {dimension_numbers = #tpu.dot_dimension_numbers<[1], [0], [0], [1], [0, 0, 1, 1], [], []>} : vector<128x384xbf16>, vector<384x128xbf16>, vector<128x128xf32> -> vector<128x128xf32>
    %7 = arith.addf %3, %6 : vector<128x128xf32>
    %c0_6 = arith.constant 0 : index
    %c0_7 = arith.constant 0 : index
    %8 = vector.load %arg7[%c0_6, %c0_7] : memref<128x128xf32, #tpu.memory_space<vmem>>, vector<128x128xf32>
    tpu.vector_store %arg7[%c0_6, %c0_7], %7 {strides = array<i32>} : memref<128x128xf32, #tpu.memory_space<vmem>>, vector<128x128xf32>,
    %c5_i32 = arith.constant 5 : i32
    %9 = arith.cmpi eq, %arg2, %c5_i32 : i32
    %10 = arith.extui %9 : i1 to i32
    %c0_i32_8 = arith.constant 0 : i32
    %11 = arith.cmpi ne, %10, %c0_i32_8 : i32
    scf.if %11 {
      %c0_9 = arith.constant 0 : index
      %c0_10 = arith.constant 0 : index
      %12 = vector.load %arg7[%c0_9, %c0_10] : memref<128x128xf32, #tpu.memory_space<vmem>>, vector<128x128xf32>
      %c0_11 = arith.constant 0 : index
      %c0_12 = arith.constant 0 : index
      %13 = vector.load %arg5[%c0_11, %c0_12] : memref<1x128xf32, #tpu.memory_space<vmem>>, vector<1x128xf32>
      %14 = vector.broadcast %13 : vector<1x128xf32> to vector<128x128xf32>
      %15 = arith.addf %12, %14 : vector<128x128xf32>
      %cst_13 = arith.constant 0.000000e+00 : f32
      %16 = vector.broadcast %cst_13 : f32 to vector<128x128xf32>
      %17 = arith.maximumf %15, %16 : vector<128x128xf32>
      %18 = arith.truncf %17 : vector<128x128xf32> to vector<128x128xbf16>
      %c0_14 = arith.constant 0 : index
      %c0_15 = arith.constant 0 : index
      %19 = vector.load %arg6[%c0_14, %c0_15] : memref<128x128xbf16, #tpu.memory_space<vmem>>, vector<128x128xbf16>
      tpu.vector_store %arg6[%c0_14, %c0_15], %18 {strides = array<i32>} : memref<128x128xbf16, #tpu.memory_space<vmem>>, vector<128x128xbf16>,
    } else {
    }
    return
  }
  func.func @transform_0(%arg0: i32, %arg1: i32, %arg2: i32) -> (i32, i32) {
    %c0_i32 = arith.constant 0 : i32
    return %arg0, %arg2 : i32, i32
  }
  func.func @transform_1(%arg0: i32, %arg1: i32, %arg2: i32) -> (i32, i32) {
    %c0_i32 = arith.constant 0 : i32
    return %arg2, %arg1 : i32, i32
  }
  func.func @transform_2(%arg0: i32, %arg1: i32, %arg2: i32) -> (i32, i32) {
    %c0_i32 = arith.constant 0 : i32
    %c0_i32_0 = arith.constant 0 : i32
    return %c0_i32, %arg1 : i32, i32
  }
  func.func @transform_3(%arg0: i32, %arg1: i32, %arg2: i32) -> (i32, i32) {
    %c0_i32 = arith.constant 0 : i32
    return %arg0, %arg1 : i32, i32
  }
}

module attributes {stable_mosaic.version = 11 : i64} {
  func.func @_mm_kernel(%arg0: i32, %arg1: i32, %arg2: i32, %arg3: memref<128x128xbf16, #tpu.memory_space<vmem>>, %arg4: memref<128x256xbf16, #tpu.memory_space<vmem>>, %arg5: memref<1x256xf32, #tpu.memory_space<vmem>>, %arg6: memref<128x256xbf16, #tpu.memory_space<vmem>>, %arg7: memref<128x256xf32, #tpu.memory_space<vmem>>) attributes {dimension_semantics = [#tpu.dimension_semantics<parallel>, #tpu.dimension_semantics<parallel>, #tpu.dimension_semantics<arbitrary>], iteration_bounds = array<i64: 1, 1, 1>, scalar_prefetch = 0 : i64, scratch_operands = 1 : i64, tpu.core_type = #tpu.core_type<tc>, window_params = [{transform_indices = @transform_0, window_bounds = array<i64: 128, 128>}, {transform_indices = @transform_1, window_bounds = array<i64: 128, 256>}, {transform_indices = @transform_2, window_bounds = array<i64: 1, 256>}, {transform_indices = @transform_3, window_bounds = array<i64: 128, 256>}]} {
    %c0_i32 = arith.constant 0 : i32
    %0 = arith.cmpi eq, %arg2, %c0_i32 : i32
    %1 = arith.extui %0 : i1 to i32
    %c0_i32_0 = arith.constant 0 : i32
    %2 = arith.cmpi ne, %1, %c0_i32_0 : i32
    scf.if %2 {
      %cst_10 = arith.constant 0.000000e+00 : f32
      %12 = vector.broadcast %cst_10 : f32 to vector<128x256xf32>
      %c0_11 = arith.constant 0 : index
      %c0_12 = arith.constant 0 : index
      %13 = vector.load %arg7[%c0_11, %c0_12] : memref<128x256xf32, #tpu.memory_space<vmem>>, vector<128x256xf32>
      tpu.vector_store %arg7[%c0_11, %c0_12], %12 {strides = array<i32>} : memref<128x256xf32, #tpu.memory_space<vmem>>, vector<128x256xf32>,
    } else {
    }
    %c0 = arith.constant 0 : index
    %c0_1 = arith.constant 0 : index
    %3 = vector.load %arg7[%c0, %c0_1] : memref<128x256xf32, #tpu.memory_space<vmem>>, vector<128x256xf32>
    %c0_2 = arith.constant 0 : index
    %c0_3 = arith.constant 0 : index
    %4 = vector.load %arg3[%c0_2, %c0_3] : memref<128x128xbf16, #tpu.memory_space<vmem>>, vector<128x128xbf16>
    %c0_4 = arith.constant 0 : index
    %c0_5 = arith.constant 0 : index
    %5 = vector.load %arg4[%c0_4, %c0_5] : memref<128x256xbf16, #tpu.memory_space<vmem>>, vector<128x256xbf16>
    %cst = arith.constant dense<0.000000e+00> : vector<128x256xf32>
    %6 = tpu.matmul %4, %5, %cst {dimension_numbers = #tpu.dot_dimension_numbers<[1], [0], [0], [1], [0, 0, 1, 1], [], []>} : vector<128x128xbf16>, vector<128x256xbf16>, vector<128x256xf32> -> vector<128x256xf32>
    %7 = arith.addf %3, %6 : vector<128x256xf32>
    %c0_6 = arith.constant 0 : index
    %c0_7 = arith.constant 0 : index
    %8 = vector.load %arg7[%c0_6, %c0_7] : memref<128x256xf32, #tpu.memory_space<vmem>>, vector<128x256xf32>
    tpu.vector_store %arg7[%c0_6, %c0_7], %7 {strides = array<i32>} : memref<128x256xf32, #tpu.memory_space<vmem>>, vector<128x256xf32>,
    %c0_i32_8 = arith.constant 0 : i32
    %9 = arith.cmpi eq, %arg2, %c0_i32_8 : i32
    %10 = arith.extui %9 : i1 to i32
    %c0_i32_9 = arith.constant 0 : i32
    %11 = arith.cmpi ne, %10, %c0_i32_9 : i32
    scf.if %11 {
      %c0_10 = arith.constant 0 : index
      %c0_11 = arith.constant 0 : index
      %12 = vector.load %arg7[%c0_10, %c0_11] : memref<128x256xf32, #tpu.memory_space<vmem>>, vector<128x256xf32>
      %c0_12 = arith.constant 0 : index
      %c0_13 = arith.constant 0 : index
      %13 = vector.load %arg5[%c0_12, %c0_13] : memref<1x256xf32, #tpu.memory_space<vmem>>, vector<1x256xf32>
      %14 = vector.broadcast %13 : vector<1x256xf32> to vector<128x256xf32>
      %15 = arith.addf %12, %14 : vector<128x256xf32>
      %16 = arith.truncf %15 : vector<128x256xf32> to vector<128x256xbf16>
      %c0_14 = arith.constant 0 : index
      %c0_15 = arith.constant 0 : index
      %17 = vector.load %arg6[%c0_14, %c0_15] : memref<128x256xbf16, #tpu.memory_space<vmem>>, vector<128x256xbf16>
      tpu.vector_store %arg6[%c0_14, %c0_15], %16 {strides = array<i32>} : memref<128x256xbf16, #tpu.memory_space<vmem>>, vector<128x256xbf16>,
    } else {
    }
    return
  }
  func.func @transform_0(%arg0: i32, %arg1: i32, %arg2: i32) -> (i32, i32) {
    %c0_i32 = arith.constant 0 : i32
    return %arg0, %arg2 : i32, i32
  }
  func.func @transform_1(%arg0: i32, %arg1: i32, %arg2: i32) -> (i32, i32) {
    %c0_i32 = arith.constant 0 : i32
    return %arg2, %arg1 : i32, i32
  }
  func.func @transform_2(%arg0: i32, %arg1: i32, %arg2: i32) -> (i32, i32) {
    %c0_i32 = arith.constant 0 : i32
    %c0_i32_0 = arith.constant 0 : i32
    return %c0_i32, %arg1 : i32, i32
  }
  func.func @transform_3(%arg0: i32, %arg1: i32, %arg2: i32) -> (i32, i32) {
    %c0_i32 = arith.constant 0 : i32
    return %arg0, %arg1 : i32, i32
  }
}

module attributes {stable_mosaic.version = 11 : i64} {
  func.func @_mm_kernel(%arg0: i32, %arg1: i32, %arg2: i32, %arg3: memref<256x384xbf16, #tpu.memory_space<vmem>>, %arg4: memref<384x128xbf16, #tpu.memory_space<vmem>>, %arg5: memref<1x128xf32, #tpu.memory_space<vmem>>, %arg6: memref<256x128xbf16, #tpu.memory_space<vmem>>, %arg7: memref<256x128xf32, #tpu.memory_space<vmem>>) attributes {dimension_semantics = [#tpu.dimension_semantics<parallel>, #tpu.dimension_semantics<parallel>, #tpu.dimension_semantics<arbitrary>], iteration_bounds = array<i64: 2, 1, 3>, scalar_prefetch = 0 : i64, scratch_operands = 1 : i64, tpu.core_type = #tpu.core_type<tc>, window_params = [{transform_indices = @transform_0, window_bounds = array<i64: 256, 384>}, {transform_indices = @transform_1, window_bounds = array<i64: 384, 128>}, {transform_indices = @transform_2, window_bounds = array<i64: 1, 128>}, {transform_indices = @transform_3, window_bounds = array<i64: 256, 128>}]} {
    %c0_i32 = arith.constant 0 : i32
    %0 = arith.cmpi eq, %arg2, %c0_i32 : i32
    %1 = arith.extui %0 : i1 to i32
    %c0_i32_0 = arith.constant 0 : i32
    %2 = arith.cmpi ne, %1, %c0_i32_0 : i32
    scf.if %2 {
      %cst_9 = arith.constant 0.000000e+00 : f32
      %12 = vector.broadcast %cst_9 : f32 to vector<256x128xf32>
      %c0_10 = arith.constant 0 : index
      %c0_11 = arith.constant 0 : index
      %13 = vector.load %arg7[%c0_10, %c0_11] : memref<256x128xf32, #tpu.memory_space<vmem>>, vector<256x128xf32>
      tpu.vector_store %arg7[%c0_10, %c0_11], %12 {strides = array<i32>} : memref<256x128xf32, #tpu.memory_space<vmem>>, vector<256x128xf32>,
    } else {
    }
    %c0 = arith.constant 0 : index
    %c0_1 = arith.constant 0 : index
    %3 = vector.load %arg7[%c0, %c0_1] : memref<256x128xf32, #tpu.memory_space<vmem>>, vector<256x128xf32>
    %c0_2 = arith.constant 0 : index
    %c0_3 = arith.constant 0 : index
    %4 = vector.load %arg3[%c0_2, %c0_3] : memref<256x384xbf16, #tpu.memory_space<vmem>>, vector<256x384xbf16>
    %c0_4 = arith.constant 0 : index
    %c0_5 = arith.constant 0 : index
    %5 = vector.load %arg4[%c0_4, %c0_5] : memref<384x128xbf16, #tpu.memory_space<vmem>>, vector<384x128xbf16>
    %cst = arith.constant dense<0.000000e+00> : vector<256x128xf32>
    %6 = tpu.matmul %4, %5, %cst {dimension_numbers = #tpu.dot_dimension_numbers<[1], [0], [0], [1], [0, 0, 1, 1], [], []>} : vector<256x384xbf16>, vector<384x128xbf16>, vector<256x128xf32> -> vector<256x128xf32>
    %7 = arith.addf %3, %6 : vector<256x128xf32>
    %c0_6 = arith.constant 0 : index
    %c0_7 = arith.constant 0 : index
    %8 = vector.load %arg7[%c0_6, %c0_7] : memref<256x128xf32, #tpu.memory_space<vmem>>, vector<256x128xf32>
    tpu.vector_store %arg7[%c0_6, %c0_7], %7 {strides = array<i32>} : memref<256x128xf32, #tpu.memory_space<vmem>>, vector<256x128xf32>,
    %c2_i32 = arith.constant 2 : i32
    %9 = arith.cmpi eq, %arg2, %c2_i32 : i32
    %10 = arith.extui %9 : i1 to i32
    %c0_i32_8 = arith.constant 0 : i32
    %11 = arith.cmpi ne, %10, %c0_i32_8 : i32
    scf.if %11 {
      %c0_9 = arith.constant 0 : index
      %c0_10 = arith.constant 0 : index
      %12 = vector.load %arg7[%c0_9, %c0_10] : memref<256x128xf32, #tpu.memory_space<vmem>>, vector<256x128xf32>
      %c0_11 = arith.constant 0 : index
      %c0_12 = arith.constant 0 : index
      %13 = vector.load %arg5[%c0_11, %c0_12] : memref<1x128xf32, #tpu.memory_space<vmem>>, vector<1x128xf32>
      %14 = vector.broadcast %13 : vector<1x128xf32> to vector<256x128xf32>
      %15 = arith.addf %12, %14 : vector<256x128xf32>
      %cst_13 = arith.constant 0.000000e+00 : f32
      %16 = vector.broadcast %cst_13 : f32 to vector<256x128xf32>
      %17 = arith.maximumf %15, %16 : vector<256x128xf32>
      %18 = arith.truncf %17 : vector<256x128xf32> to vector<256x128xbf16>
      %c0_14 = arith.constant 0 : index
      %c0_15 = arith.constant 0 : index
      %19 = vector.load %arg6[%c0_14, %c0_15] : memref<256x128xbf16, #tpu.memory_space<vmem>>, vector<256x128xbf16>
      tpu.vector_store %arg6[%c0_14, %c0_15], %18 {strides = array<i32>} : memref<256x128xbf16, #tpu.memory_space<vmem>>, vector<256x128xbf16>,
    } else {
    }
    return
  }
  func.func @transform_0(%arg0: i32, %arg1: i32, %arg2: i32) -> (i32, i32) {
    %c0_i32 = arith.constant 0 : i32
    return %arg0, %arg2 : i32, i32
  }
  func.func @transform_1(%arg0: i32, %arg1: i32, %arg2: i32) -> (i32, i32) {
    %c0_i32 = arith.constant 0 : i32
    return %arg2, %arg1 : i32, i32
  }
  func.func @transform_2(%arg0: i32, %arg1: i32, %arg2: i32) -> (i32, i32) {
    %c0_i32 = arith.constant 0 : i32
    %c0_i32_0 = arith.constant 0 : i32
    return %c0_i32, %arg1 : i32, i32
  }
  func.func @transform_3(%arg0: i32, %arg1: i32, %arg2: i32) -> (i32, i32) {
    %c0_i32 = arith.constant 0 : i32
    return %arg0, %arg1 : i32, i32
  }
}

</mosaic_0001>

<llo_original>
// kernel: unet_forward.9
$region0: #{unet_forward.9}
  #allocation0 [shape = 'u32[]', space=smem, size = 0x4, offset = 0x4, fixed_abs, tag = 'smem constant byte address 0x4 - core index']
  #allocation1 [shape = 'u32[144,128]{1,0:T(1,128)}', space=vmem, size = 0x12000, scoped, tag = 'internal scratch']
  #allocation2 [shape = 'f32[256,128]{1,0:T(8,128)}', space=vmem, size = 0x20000, scoped, tag = 'scratch operand']
  %s0 = inlined_call_operand.vmem [shape: bf16[512,128], index: 0, kind: input, shape index: {}]
  %s1 = inlined_call_operand.hbm [shape: bf16[128,128], index: 1, kind: input, shape index: {}]
  %s2 = inlined_call_operand.vmem [shape: f32[1,128], index: 2, kind: input, shape index: {}]
  %s3 = inlined_call_operand.vmem [shape: bf16[512,128], index: 3, kind: output, shape index: {}]
  %s4 = sld [smem:[#allocation0]]
  $region57: #{unet_forward.9} parent=0
    _
  %s6 = ssub.s32 1, %s4
  %s7 = scalar_select 0, %s6, %s4
  $region1: #{unet_forward.9} parent=0
    #allocation3 [shape = 'u8[32768]{0}', space=vmem, size = 0x8000, scoped, tag = 'input window, operand 1, single buffered']
    #allocation4 [shape = 's32[2]{0}', space=sflag, size = 0x8, scoped, tag = 'scoped memory for unet_forward.9']
    %8 = vsyncpa [#allocation4], 0
    loop: start=0, step=1, limit=4
    $region2: #{unet_forward.9} parent=1 // loop_pre_header
      _
    $region3: #{unet_forward.9} parent=1 // loop_header
      %s10 = sphi 0, %s14
      %p11 = scmp.ge.s32.totalorder %s10, 4
      %s17 = sphi 0, %s36
      %s18 = sphi 0, %s32
      %s19 = sphi 0, %s28
      %s20 = sphi 0, %s17
      %s21 = sphi 0, %s18
      %s22 = sphi 0, %s19
      %s23 = sphi 0, %s20
      %s24 = sphi 0, %s21
      %s25 = sphi 0, %s22
      %s41 = sphi 0, %s43
      %s44 = sphi 0, %s41
      %s45 = sphi 0, %s44
      %s61 = sphi 0, %s45
      %s69 = sphi 0, %s71
      %s72 = sphi 0, %s69
      %s73 = sphi 0, %s72
      %s89 = sphi 0, %s73
      %s95 = sphi 0, %s97
      %s98 = sphi 0, %s95
      %s99 = sphi 0, %s98
      %s115 = sphi 0, %s99
      %s123 = sphi 0, %s125
      %s126 = sphi 0, %s123
      %s127 = sphi 0, %s126
      %s143 = sphi 0, %s127
    $region4: #{unet_forward.9} parent=1 // loop_header_branch
      %13 = sbr.rel (%p11) target = $region8
    $region5: #{unet_forward.9} parent=1 // loop_body
      %s15 = ssub.s32 %s10, 1
      %s16 = ssub.s32 %s10, 2
      %s26 = sadd.s32 1, %s19
      %p27 = scmp.ge.s32.totalorder %s26, 1
      %s28 = scalar_select %p27, 0, %s26
      %s29 = sadd.s32 1, %s18
      %s30 = scalar_select %p27, %s29, %s18
      %p31 = scmp.ge.s32.totalorder %s30, 1
      %s32 = scalar_select %p31, 0, %s30
      %s33 = sadd.s32 1, %s17
      %s34 = scalar_select %p31, %s33, %s17
      %p35 = scmp.ge.s32.totalorder %s34, 2
      %s36 = scalar_select %p35, 0, %s34
      %s37 = ssub.s32 %s17, %s36
      %s38 = ssub.s32 %s19, %s28
      %s39 = sor.u32 %s37, %s38
      %p40 = scmp.eq.s32.totalorder %s39, 0
      %s42 = sadd.s32 %s41, 1
      %s43 = scalar_select %p40, %s41, %s42
      %p46 = pneg %p40
      %p47 = scmp.eq.s32.totalorder %s10, 1
      %p48 = por %p46, %p47
      %p49 = scmp.ne.s32.totalorder %s41, %s44
      %p50 = scmp.eq.s32.totalorder %s10, 0
      %p51 = por %p49, %p50
      %p52 = scmp.ne.s32.totalorder %s41, %s44
      %p53 = scmp.eq.s32.totalorder %s15, 1
      %p54 = por %p52, %p53
      %p55 = scmp.ne.s32.totalorder %s44, %s45
      %p56 = scmp.eq.s32.totalorder %s15, 0
      %p57 = por %p55, %p56
      %p58 = scmp.ne.s32.totalorder %s44, %s45
      %p59 = scmp.eq.s32.totalorder %s16, 1
      %p60 = por %p58, %p59
      %p62 = scmp.ne.s32.totalorder %s45, %s61
      %p63 = scmp.eq.s32.totalorder %s16, 0
      %p64 = por %p62, %p63
      %s65 = ssub.s32 %s19, %s28
      %s66 = ssub.s32 %s18, %s32
      %s67 = sor.u32 %s65, %s66
      %p68 = scmp.eq.s32.totalorder %s67, 0
      %s70 = sadd.s32 %s69, 1
      %s71 = scalar_select %p68, %s69, %s70
      %p74 = pneg %p68
      %p75 = scmp.eq.s32.totalorder %s10, 1
      %p76 = por %p74, %p75
      %p77 = scmp.ne.s32.totalorder %s69, %s72
      %p78 = scmp.eq.s32.totalorder %s10, 0
      %p79 = por %p77, %p78
      %p80 = scmp.ne.s32.totalorder %s69, %s72
      %p81 = scmp.eq.s32.totalorder %s15, 1
      %p82 = por %p80, %p81
      %p83 = scmp.ne.s32.totalorder %s72, %s73
      %p84 = scmp.eq.s32.totalorder %s15, 0
      %p85 = por %p83, %p84
      %p86 = scmp.ne.s32.totalorder %s72, %s73
      %p87 = scmp.eq.s32.totalorder %s16, 1
      %p88 = por %p86, %p87
      %p90 = scmp.ne.s32.totalorder %s73, %s89
      %p91 = scmp.eq.s32.totalorder %s16, 0
      %p92 = por %p90, %p91
      %s93 = ssub.s32 %s18, %s32
      %p94 = scmp.eq.s32.totalorder %s93, 0
      %s96 = sadd.s32 %s95, 1
      %s97 = scalar_select %p94, %s95, %s96
      %p100 = pneg %p94
      %p101 = scmp.eq.s32.totalorder %s10, 1
      %p102 = por %p100, %p101
      %p103 = scmp.ne.s32.totalorder %s95, %s98
      %p104 = scmp.eq.s32.totalorder %s10, 0
      %p105 = por %p103, %p104
      %p106 = scmp.ne.s32.totalorder %s95, %s98
      %p107 = scmp.eq.s32.totalorder %s15, 1
      %p108 = por %p106, %p107
      %p109 = scmp.ne.s32.totalorder %s98, %s99
      %p110 = scmp.eq.s32.totalorder %s15, 0
      %p111 = por %p109, %p110
      %p112 = scmp.ne.s32.totalorder %s98, %s99
      %p113 = scmp.eq.s32.totalorder %s16, 1
      %p114 = por %p112, %p113
      %p116 = scmp.ne.s32.totalorder %s99, %s115
      %p117 = scmp.eq.s32.totalorder %s16, 0
      %p118 = por %p116, %p117
      %s119 = ssub.s32 %s17, %s36
      %s120 = ssub.s32 %s18, %s32
      %s121 = sor.u32 %s119, %s120
      %p122 = scmp.eq.s32.totalorder %s121, 0
      %s124 = sadd.s32 %s123, 1
      %s125 = scalar_select %p122, %s123, %s124
      %p128 = pneg %p122
      %p129 = scmp.eq.s32.totalorder %s10, 1
      %p130 = por %p128, %p129
      %p131 = scmp.ne.s32.totalorder %s123, %s126
      %p132 = scmp.eq.s32.totalorder %s10, 0
      %p133 = por %p131, %p132
      %p134 = scmp.ne.s32.totalorder %s123, %s126
      %p135 = scmp.eq.s32.totalorder %s15, 1
      %p136 = por %p134, %p135
      %p137 = scmp.ne.s32.totalorder %s126, %s127
      %p138 = scmp.eq.s32.totalorder %s15, 0
      %p139 = por %p137, %p138
      %p140 = scmp.ne.s32.totalorder %s126, %s127
      %p141 = scmp.eq.s32.totalorder %s16, 1
      %p142 = por %p140, %p141
      %p144 = scmp.ne.s32.totalorder %s127, %s143
      %p145 = scmp.eq.s32.totalorder %s16, 0
      %p146 = por %p144, %p145
      %p147 = scmp.le.s32.totalorder 1, %s10
      %p148 = scmp.lt.s32.totalorder %s10, 3
      %p149 = pnand %p147, %p148
      %p150 = pneg %p149
      // Predicated region
      $region9: #{unet_forward.9} parent=5 // pred_check
        _
      $region10: #{unet_forward.9} parent=5 // pred_check_branch
        %152 = sbr.rel (%p149) target = $region12
      $region11: #{unet_forward.9} parent=5 // pred_region
        %s153 = ssub.s32 %s10, 1
        // Predicated region
        $region13: #{unet_forward.9} parent=11 // pred_check
          %p154 = pneg %p85
        $region14: #{unet_forward.9} parent=11 // pred_check_branch
          %156 = sbr.rel (%p154) target = $region16
        $region15: #{unet_forward.9} parent=11 // pred_region
          %s157 = smul.u32 16, %s22
          %s159 = ssub.s32 1024, 1024
          %160 = vsyncadd [#allocation4], %s159
          %s161 = sadd.s32 %s21, %s157
          %s162 = smul.addr %s161, 64
          %s163 = scalar_lea.hbm %s1, %s162
          %s164 = sshll.u32 [#allocation3], 4
          %s165 = int_to_ptr.vmem [resolvable:$true] %s164
          %170 = dma.hbm_to_vmem [thread:$0]  %s163, 1024, %s165, [#allocation4], 64, 64, 4
        $region16: #{unet_forward.9} parent=11 // pred_fallthru
          _
        // Predicated region
        $region17: #{unet_forward.9} parent=11 // pred_check
          %p171 = pneg %p111
        $region18: #{unet_forward.9} parent=11 // pred_check_branch
          %173 = sbr.rel (%p171) target = $region20
        $region19: #{unet_forward.9} parent=11 // pred_region
          %p174 = scmp.lt.s32.totalorder %s21, 0
          %s175 = scalar_select %p174, %s21, 0
          %s176 = scalar_lea.vmem %s2, %s175
        $region20: #{unet_forward.9} parent=11 // pred_fallthru
          _
      $region12: #{unet_forward.9} parent=5 // pred_fallthru
        _
      %p177 = scmp.lt.s32.totalorder %s10, 2
      // Predicated region
      $region21: #{unet_forward.9} parent=5 // pred_check
        %p178 = pneg %p177
      $region22: #{unet_forward.9} parent=5 // pred_check_branch
        %180 = sbr.rel (%p178) target = $region24
      $region23: #{unet_forward.9} parent=5 // pred_region
        // Predicated region
        $region25: #{unet_forward.9} parent=23 // pred_check
          %p181 = pneg %p51
        $region26: #{unet_forward.9} parent=23 // pred_check_branch
          %183 = sbr.rel (%p181) target = $region28
        $region27: #{unet_forward.9} parent=23 // pred_region
          %s184 = smul.u32 32, %s17
          %p185 = scmp.lt.s32.totalorder %s184, 63
          %s186 = scalar_select %p185, %s184, 63
          %p187 = scmp.lt.s32.totalorder %s19, 0
          %s188 = scalar_select %p187, %s19, 0
          %s189 = sadd.s32 %s188, %s186
          %s190 = smul.addr %s189, 4
          %s191 = scalar_lea.vmem %s0, %s190
          %s192 = smul.u32 32, %s17
        $region28: #{unet_forward.9} parent=23 // pred_fallthru
          _
      $region24: #{unet_forward.9} parent=5 // pred_fallthru
        _
      %p193 = scmp.le.s32.totalorder 1, %s10
      %p194 = scmp.lt.s32.totalorder %s10, 3
      %p195 = pnand %p193, %p194
      %p196 = pneg %p195
      // Predicated region
      $region29: #{unet_forward.9} parent=5 // pred_check
        _
      $region30: #{unet_forward.9} parent=5 // pred_check_branch
        %198 = sbr.rel (%p195) target = $region32
      $region31: #{unet_forward.9} parent=5 // pred_region
        %s199 = ssub.s32 %s10, 1
        // Predicated region
        $region33: #{unet_forward.9} parent=31 // pred_check
          %p200 = pneg %p85
        $region34: #{unet_forward.9} parent=31 // pred_check_branch
          %202 = sbr.rel (%p200) target = $region36
        $region35: #{unet_forward.9} parent=31 // pred_region
          %203 = dma.done [#allocation4], 1024
        $region36: #{unet_forward.9} parent=31 // pred_fallthru
          _
        %s204 = smul.u32 32, %s20
        %p205 = scmp.lt.s32.totalorder %s204, 63
        %s206 = scalar_select %p205, %s204, 63
        %p207 = scmp.lt.s32.totalorder %s22, 0
        %s208 = scalar_select %p207, %s22, 0
        %s209 = sadd.s32 %s208, %s206
        %s210 = smul.addr %s209, 4
        %s211 = scalar_lea.vmem %s0, %s210
        %p212 = pneg %p57
        %p213 = pneg %p54
        %p214 = pneg %p85
        %p215 = pneg %p82
        %p216 = scmp.lt.s32.totalorder %s21, 0
        %s217 = scalar_select %p216, %s21, 0
        %s218 = scalar_lea.vmem %s2, %s217
        %p219 = pneg %p111
        %p220 = pneg %p108
        %p221 = pneg %p139
        %p222 = pneg %p136
        %s223 = smul.u32 32, %s20
        %p224 = scmp.lt.s32.totalorder %s223, 63
        %s225 = scalar_select %p224, %s223, 63
        %p226 = scmp.lt.s32.totalorder %s21, 0
        %s227 = scalar_select %p226, %s21, 0
        %s228 = sadd.s32 %s227, %s225
        %s229 = smul.addr %s228, 4
        %s230 = scalar_lea.vmem %s3, %s229
        %s231 = smul.u32 32, %s20
        %p232 = scmp.lt.s32.totalorder %s231, 63
        %s233 = scalar_select %p232, %s231, 63
        %p234 = scmp.lt.s32.totalorder %s22, 0
        %s235 = scalar_select %p234, %s22, 0
        %s236 = sadd.s32 %s235, %s233
        %s237 = smul.addr %s236, 4
        %s238 = scalar_lea.vmem %s0, %s237
        %s239 = smul.u32 32, %s20
        %s240 = smul.u32 16, %s22
        %p241 = scmp.lt.s32.totalorder %s21, 0
        %s242 = scalar_select %p241, %s21, 0
        %s243 = scalar_lea.vmem %s2, %s242
        %s244 = smul.u32 32, %s20
        %p245 = scmp.lt.s32.totalorder %s244, 63
        %s246 = scalar_select %p245, %s244, 63
        %p247 = scmp.lt.s32.totalorder %s21, 0
        %s248 = scalar_select %p247, %s21, 0
        %s249 = sadd.s32 %s248, %s246
        %s250 = smul.addr %s249, 4
        %s251 = scalar_lea.vmem %s3, %s250
        %s252 = smul.u32 32, %s20
        %p254 = scmp.eq.s32.totalorder %s22, 0
        // Predicated region
        $region37: #{unet_forward.9} parent=31 // pred_check
          %p255 = pneg %p254
        $region38: #{unet_forward.9} parent=31 // pred_check_branch
          %257 = sbr.rel (%p255) target = $region40
        $region39: #{unet_forward.9} parent=31 // pred_region
          %258 = vst [vmem:[#allocation2] sm:$0xff] 0.0
          %259 = vst [vmem:[#allocation2 + $0x8] sm:$0xff] 0.0
          %260 = vst [vmem:[#allocation2 + $0x10] sm:$0xff] 0.0
          %261 = vst [vmem:[#allocation2 + $0x18] sm:$0xff] 0.0
          %262 = vst [vmem:[#allocation2 + $0x20] sm:$0xff] 0.0
          %263 = vst [vmem:[#allocation2 + $0x28] sm:$0xff] 0.0
          %264 = vst [vmem:[#allocation2 + $0x30] sm:$0xff] 0.0
          %265 = vst [vmem:[#allocation2 + $0x38] sm:$0xff] 0.0
          %266 = vst [vmem:[#allocation2 + $0x40] sm:$0xff] 0.0
          %267 = vst [vmem:[#allocation2 + $0x48] sm:$0xff] 0.0
          %268 = vst [vmem:[#allocation2 + $0x50] sm:$0xff] 0.0
          %269 = vst [vmem:[#allocation2 + $0x58] sm:$0xff] 0.0
          %270 = vst [vmem:[#allocation2 + $0x60] sm:$0xff] 0.0
          %271 = vst [vmem:[#allocation2 + $0x68] sm:$0xff] 0.0
          %272 = vst [vmem:[#allocation2 + $0x70] sm:$0xff] 0.0
          %273 = vst [vmem:[#allocation2 + $0x78] sm:$0xff] 0.0
          %274 = vst [vmem:[#allocation2 + $0x80] sm:$0xff] 0.0
          %275 = vst [vmem:[#allocation2 + $0x88] sm:$0xff] 0.0
          %276 = vst [vmem:[#allocation2 + $0x90] sm:$0xff] 0.0
          %277 = vst [vmem:[#allocation2 + $0x98] sm:$0xff] 0.0
          %278 = vst [vmem:[#allocation2 + $0xa0] sm:$0xff] 0.0
          %279 = vst [vmem:[#allocation2 + $0xa8] sm:$0xff] 0.0
          %280 = vst [vmem:[#allocation2 + $0xb0] sm:$0xff] 0.0
          %281 = vst [vmem:[#allocation2 + $0xb8] sm:$0xff] 0.0
          %282 = vst [vmem:[#allocation2 + $0xc0] sm:$0xff] 0.0
          %283 = vst [vmem:[#allocation2 + $0xc8] sm:$0xff] 0.0
          %284 = vst [vmem:[#allocation2 + $0xd0] sm:$0xff] 0.0
          %285 = vst [vmem:[#allocation2 + $0xd8] sm:$0xff] 0.0
          %286 = vst [vmem:[#allocation2 + $0xe0] sm:$0xff] 0.0
          %287 = vst [vmem:[#allocation2 + $0xe8] sm:$0xff] 0.0
          %288 = vst [vmem:[#allocation2 + $0xf0] sm:$0xff] 0.0
          %289 = vst [vmem:[#allocation2 + $0xf8] sm:$0xff] 0.0
        $region40: #{unet_forward.9} parent=31 // pred_fallthru
          _
        %v290 = vld [vmem:[#allocation2] sm:$0xff]
        %v291 = vld [vmem:[#allocation2 + $0x8] sm:$0xff]
        %v292 = vld [vmem:[#allocation2 + $0x10] sm:$0xff]
        %v293 = vld [vmem:[#allocation2 + $0x18] sm:$0xff]
        %v294 = vld [vmem:[#allocation2 + $0x20] sm:$0xff]
        %v295 = vld [vmem:[#allocation2 + $0x28] sm:$0xff]
        %v296 = vld [vmem:[#allocation2 + $0x30] sm:$0xff]
        %v297 = vld [vmem:[#allocation2 + $0x38] sm:$0xff]
        %v298 = vld [vmem:[#allocation2 + $0x40] sm:$0xff]
        %v299 = vld [vmem:[#allocation2 + $0x48] sm:$0xff]
        %v300 = vld [vmem:[#allocation2 + $0x50] sm:$0xff]
        %v301 = vld [vmem:[#allocation2 + $0x58] sm:$0xff]
        %v302 = vld [vmem:[#allocation2 + $0x60] sm:$0xff]
        %v303 = vld [vmem:[#allocation2 + $0x68] sm:$0xff]
        %v304 = vld [vmem:[#allocation2 + $0x70] sm:$0xff]
        %v305 = vld [vmem:[#allocation2 + $0x78] sm:$0xff]
        %v306 = vld [vmem:[#allocation2 + $0x80] sm:$0xff]
        %v307 = vld [vmem:[#allocation2 + $0x88] sm:$0xff]
        %v308 = vld [vmem:[#allocation2 + $0x90] sm:$0xff]
        %v309 = vld [vmem:[#allocation2 + $0x98] sm:$0xff]
        %v310 = vld [vmem:[#allocation2 + $0xa0] sm:$0xff]
        %v311 = vld [vmem:[#allocation2 + $0xa8] sm:$0xff]
        %v312 = vld [vmem:[#allocation2 + $0xb0] sm:$0xff]
        %v313 = vld [vmem:[#allocation2 + $0xb8] sm:$0xff]
        %v314 = vld [vmem:[#allocation2 + $0xc0] sm:$0xff]
        %v315 = vld [vmem:[#allocation2 + $0xc8] sm:$0xff]
        %v316 = vld [vmem:[#allocation2 + $0xd0] sm:$0xff]
        %v317 = vld [vmem:[#allocation2 + $0xd8] sm:$0xff]
        %v318 = vld [vmem:[#allocation2 + $0xe0] sm:$0xff]
        %v319 = vld [vmem:[#allocation2 + $0xe8] sm:$0xff]
        %v320 = vld [vmem:[#allocation2 + $0xf0] sm:$0xff]
        %v321 = vld [vmem:[#allocation2 + $0xf8] sm:$0xff]
        %v322 = vld [vmem:[%s238] sm:$0xf]
        %v323 = vld [vmem:[%s238 + $0x4] sm:$0xf]
        %v324 = vld [vmem:[%s238 + $0x8] sm:$0xf]
        %v325 = vld [vmem:[%s238 + $0xc] sm:$0xf]
        %v326 = vld [vmem:[%s238 + $0x10] sm:$0xf]
        %v327 = vld [vmem:[%s238 + $0x14] sm:$0xf]
        %v328 = vld [vmem:[%s238 + $0x18] sm:$0xf]
        %v329 = vld [vmem:[%s238 + $0x1c] sm:$0xf]
        %v330 = vld [vmem:[%s238 + $0x20] sm:$0xf]
        %v331 = vld [vmem:[%s238 + $0x24] sm:$0xf]
        %v332 = vld [vmem:[%s238 + $0x28] sm:$0xf]
        %v333 = vld [vmem:[%s238 + $0x2c] sm:$0xf]
        %v334 = vld [vmem:[%s238 + $0x30] sm:$0xf]
        %v335 = vld [vmem:[%s238 + $0x34] sm:$0xf]
        %v336 = vld [vmem:[%s238 + $0x38] sm:$0xf]
        %v337 = vld [vmem:[%s238 + $0x3c] sm:$0xf]
        %v338 = vld [vmem:[%s238 + $0x40] sm:$0xf]
        %v339 = vld [vmem:[%s238 + $0x44] sm:$0xf]
        %v340 = vld [vmem:[%s238 + $0x48] sm:$0xf]
        %v341 = vld [vmem:[%s238 + $0x4c] sm:$0xf]
        %v342 = vld [vmem:[%s238 + $0x50] sm:$0xf]
        %v343 = vld [vmem:[%s238 + $0x54] sm:$0xf]
        %v344 = vld [vmem:[%s238 + $0x58] sm:$0xf]
        %v345 = vld [vmem:[%s238 + $0x5c] sm:$0xf]
        %v346 = vld [vmem:[%s238 + $0x60] sm:$0xf]
        %v347 = vld [vmem:[%s238 + $0x64] sm:$0xf]
        %v348 = vld [vmem:[%s238 + $0x68] sm:$0xf]
        %v349 = vld [vmem:[%s238 + $0x6c] sm:$0xf]
        %v350 = vld [vmem:[%s238 + $0x70] sm:$0xf]
        %v351 = vld [vmem:[%s238 + $0x74] sm:$0xf]
        %v352 = vld [vmem:[%s238 + $0x78] sm:$0xf]
        %v353 = vld [vmem:[%s238 + $0x7c] sm:$0xf]
        %v354 = vld [vmem:[#allocation3] sm:$0xf]
        %v355 = vld [vmem:[#allocation3 + $0x4] sm:$0xf]
        %v356 = vld [vmem:[#allocation3 + $0x8] sm:$0xf]
        %v357 = vld [vmem:[#allocation3 + $0xc] sm:$0xf]
        %v358 = vld [vmem:[#allocation3 + $0x10] sm:$0xf]
        %v359 = vld [vmem:[#allocation3 + $0x14] sm:$0xf]
        %v360 = vld [vmem:[#allocation3 + $0x18] sm:$0xf]
        %v361 = vld [vmem:[#allocation3 + $0x1c] sm:$0xf]
        %v362 = vld [vmem:[#allocation3 + $0x20] sm:$0xf]
        %v363 = vld [vmem:[#allocation3 + $0x24] sm:$0xf]
        %v364 = vld [vmem:[#allocation3 + $0x28] sm:$0xf]
        %v365 = vld [vmem:[#allocation3 + $0x2c] sm:$0xf]
        %v366 = vld [vmem:[#allocation3 + $0x30] sm:$0xf]
        %v367 = vld [vmem:[#allocation3 + $0x34] sm:$0xf]
        %v368 = vld [vmem:[#allocation3 + $0x38] sm:$0xf]
        %v369 = vld [vmem:[#allocation3 + $0x3c] sm:$0xf]
        %v402 = vunpack.c.l.b16 %v322
        %v403 = vunpack.c.l.b16 %v323
        %v404 = vunpack.c.l.b16 %v324
        %v405 = vunpack.c.l.b16 %v325
        %v406 = vunpack.c.l.b16 %v326
        %v407 = vunpack.c.l.b16 %v327
        %v408 = vunpack.c.l.b16 %v328
        %v409 = vunpack.c.l.b16 %v329
        %v410 = vunpack.c.l.b16 %v330
        %v411 = vunpack.c.l.b16 %v331
        %v412 = vunpack.c.l.b16 %v332
        %v413 = vunpack.c.l.b16 %v333
        %v414 = vunpack.c.l.b16 %v334
        %v415 = vunpack.c.l.b16 %v335
        %v416 = vunpack.c.l.b16 %v336
        %v417 = vunpack.c.l.b16 %v337
        %v418 = vunpack.c.l.b16 %v338
        %v419 = vunpack.c.l.b16 %v339
        %v420 = vunpack.c.l.b16 %v340
        %v421 = vunpack.c.l.b16 %v341
        %v422 = vunpack.c.l.b16 %v342
        %v423 = vunpack.c.l.b16 %v343
        %v424 = vunpack.c.l.b16 %v344
        %v425 = vunpack.c.l.b16 %v345
        %v426 = vunpack.c.l.b16 %v346
        %v427 = vunpack.c.l.b16 %v347
        %v428 = vunpack.c.l.b16 %v348
        %v429 = vunpack.c.l.b16 %v349
        %v430 = vunpack.c.l.b16 %v350
        %v431 = vunpack.c.l.b16 %v351
        %v432 = vunpack.c.l.b16 %v352
        %v433 = vunpack.c.l.b16 %v353
        %v434 = vpack.c.b16 %v403, %v402
        %v435 = vpack.c.b16 %v405, %v404
        %v436 = vpack.c.b16 %v407, %v406
        %v437 = vpack.c.b16 %v409, %v408
        %v438 = vpack.c.b16 %v411, %v410
        %v439 = vpack.c.b16 %v413, %v412
        %v440 = vpack.c.b16 %v415, %v414
        %v441 = vpack.c.b16 %v417, %v416
        %v442 = vpack.c.b16 %v419, %v418
        %v443 = vpack.c.b16 %v421, %v420
        %v444 = vpack.c.b16 %v423, %v422
        %v445 = vpack.c.b16 %v425, %v424
        %v446 = vpack.c.b16 %v427, %v426
        %v447 = vpack.c.b16 %v429, %v428
        %v448 = vpack.c.b16 %v431, %v430
        %v449 = vpack.c.b16 %v433, %v432
        %v482 = vunpack.c.l.b16 %v354
        %v483 = vunpack.c.l.b16 %v355
        %v484 = vunpack.c.l.b16 %v356
        %v485 = vunpack.c.l.b16 %v357
        %v486 = vunpack.c.l.b16 %v358
        %v487 = vunpack.c.l.b16 %v359
        %v488 = vunpack.c.l.b16 %v360
        %v489 = vunpack.c.l.b16 %v361
        %v490 = vunpack.c.l.b16 %v362
        %v491 = vunpack.c.l.b16 %v363
        %v492 = vunpack.c.l.b16 %v364
        %v493 = vunpack.c.l.b16 %v365
        %v494 = vunpack.c.l.b16 %v366
        %v495 = vunpack.c.l.b16 %v367
        %v496 = vunpack.c.l.b16 %v368
        %v497 = vunpack.c.l.b16 %v369
        %v498 = vpack.c.b16 %v483, %v482
        %v499 = vpack.c.b16 %v485, %v484
        %v500 = vpack.c.b16 %v487, %v486
        %v501 = vpack.c.b16 %v489, %v488
        %v502 = vpack.c.b16 %v491, %v490
        %v503 = vpack.c.b16 %v493, %v492
        %v504 = vpack.c.b16 %v495, %v494
        %v505 = vpack.c.b16 %v497, %v496
        %514 = vmatprep.subr.bf16.mxu0 0
        %515 = vmatpush1.bf16.msra.mxu0 %v505
        %516 = vmatprep.subr.bf16.mxu0 0
        %517 = vmatpush1.bf16.msra.mxu0 %v504
        %518 = vmatprep.subr.bf16.mxu0 0
        %519 = vmatpush1.bf16.msra.mxu0 %v503
        %520 = vmatprep.subr.bf16.mxu0 0
        %521 = vmatpush1.bf16.msra.mxu0 %v502
        %522 = vmatprep.subr.bf16.mxu0 0
        %523 = vmatpush1.bf16.msra.mxu0 %v501
        %524 = vmatprep.subr.bf16.mxu0 0
        %525 = vmatpush1.bf16.msra.mxu0 %v500
        %526 = vmatprep.subr.bf16.mxu0 0
        %527 = vmatpush1.bf16.msra.mxu0 %v499
        %528 = vmatprep.subr.bf16.mxu0 0
        %529 = vmatpush1.bf16.msra.mxu0 %v498
        %530 = vmatprep.subr.bf16.mxu0 0
        %531 = vmatpush2.bf16.msra.mxu0 0
        %532 = vmatprep.subr.bf16.mxu0 0
        %533 = vmatpush2.bf16.msra.mxu0 0
        %534 = vmatprep.subr.bf16.mxu0 0
        %535 = vmatpush2.bf16.msra.mxu0 0
        %536 = vmatprep.subr.bf16.mxu0 0
        %537 = vmatpush2.bf16.msra.mxu0 0
        %538 = vmatprep.subr.bf16.mxu0 0
        %539 = vmatpush2.bf16.msra.mxu0 0
        %540 = vmatprep.subr.bf16.mxu0 0
        %541 = vmatpush2.bf16.msra.mxu0 0
        %542 = vmatprep.subr.bf16.mxu0 0
        %543 = vmatpush2.bf16.msra.mxu0 0
        %544 = vmatprep.subr.bf16.mxu0 0
        %545 = vmatpush2.bf16.msra.mxu0 0
        %546 = vmatprep.mubr.bf16.mxu0 0
        %547 = vmatmul.mubr.bf16.gmra.mxu0 %v434
        %v548 = vpop.f32.mrf.mxu0
        %v549 = vadd.f32 0.0, %v548
        %v550 = vpop.f32.mrf.mxu0
        %v551 = vpop.f32.mrf.mxu0
        %v552 = vadd.f32 0.0, %v551
        %v553 = vpop.f32.mrf.mxu0
        %554 = vmatprep.mubr.bf16.mxu0 0
        %555 = vmatmul.mubr.bf16.gmra.mxu0 %v435
        %v556 = vpop.f32.mrf.mxu0
        %v557 = vadd.f32 0.0, %v556
        %v558 = vpop.f32.mrf.mxu0
        %v559 = vpop.f32.mrf.mxu0
        %v560 = vadd.f32 0.0, %v559
        %v561 = vpop.f32.mrf.mxu0
        %562 = vmatprep.mubr.bf16.mxu0 0
        %563 = vmatmul.mubr.bf16.gmra.mxu0 %v436
        %v564 = vpop.f32.mrf.mxu0
        %v565 = vadd.f32 0.0, %v564
        %v566 = vpop.f32.mrf.mxu0
        %v567 = vpop.f32.mrf.mxu0
        %v568 = vadd.f32 0.0, %v567
        %v569 = vpop.f32.mrf.mxu0
        %570 = vmatprep.mubr.bf16.mxu0 0
        %571 = vmatmul.mubr.bf16.gmra.mxu0 %v437
        %v572 = vpop.f32.mrf.mxu0
        %v573 = vadd.f32 0.0, %v572
        %v574 = vpop.f32.mrf.mxu0
        %v575 = vpop.f32.mrf.mxu0
        %v576 = vadd.f32 0.0, %v575
        %v577 = vpop.f32.mrf.mxu0
        %578 = vmatprep.mubr.bf16.mxu0 0
        %579 = vmatmul.mubr.bf16.gmra.mxu0 %v438
        %v580 = vpop.f32.mrf.mxu0
        %v581 = vadd.f32 0.0, %v580
        %v582 = vpop.f32.mrf.mxu0
        %v583 = vpop.f32.mrf.mxu0
        %v584 = vadd.f32 0.0, %v583
        %v585 = vpop.f32.mrf.mxu0
        %586 = vmatprep.mubr.bf16.mxu0 0
        %587 = vmatmul.mubr.bf16.gmra.mxu0 %v439
        %v588 = vpop.f32.mrf.mxu0
        %v589 = vadd.f32 0.0, %v588
        %v590 = vpop.f32.mrf.mxu0
        %v591 = vpop.f32.mrf.mxu0
        %v592 = vadd.f32 0.0, %v591
        %v593 = vpop.f32.mrf.mxu0
        %594 = vmatprep.mubr.bf16.mxu0 0
        %595 = vmatmul.mubr.bf16.gmra.mxu0 %v440
        %v596 = vpop.f32.mrf.mxu0
        %v597 = vadd.f32 0.0, %v596
        %v598 = vpop.f32.mrf.mxu0
        %v599 = vpop.f32.mrf.mxu0
        %v600 = vadd.f32 0.0, %v599
        %v601 = vpop.f32.mrf.mxu0
        %602 = vmatprep.mubr.bf16.mxu0 0
        %603 = vmatmul.mubr.bf16.gmra.mxu0 %v441
        %v604 = vpop.f32.mrf.mxu0
        %v605 = vadd.f32 0.0, %v604
        %v606 = vpop.f32.mrf.mxu0
        %v607 = vpop.f32.mrf.mxu0
        %v608 = vadd.f32 0.0, %v607
        %v609 = vpop.f32.mrf.mxu0
        %610 = vmatprep.mubr.bf16.mxu0 0
        %611 = vmatmul.mubr.bf16.gmra.mxu0 %v442
        %v612 = vpop.f32.mrf.mxu0
        %v613 = vadd.f32 0.0, %v612
        %v614 = vpop.f32.mrf.mxu0
        %v615 = vpop.f32.mrf.mxu0
        %v616 = vadd.f32 0.0, %v615
        %v617 = vpop.f32.mrf.mxu0
        %618 = vmatprep.mubr.bf16.mxu0 0
        %619 = vmatmul.mubr.bf16.gmra.mxu0 %v443
        %v620 = vpop.f32.mrf.mxu0
        %v621 = vadd.f32 0.0, %v620
        %v622 = vpop.f32.mrf.mxu0
        %v623 = vpop.f32.mrf.mxu0
        %v624 = vadd.f32 0.0, %v623
        %v625 = vpop.f32.mrf.mxu0
        %626 = vmatprep.mubr.bf16.mxu0 0
        %627 = vmatmul.mubr.bf16.gmra.mxu0 %v444
        %v628 = vpop.f32.mrf.mxu0
        %v629 = vadd.f32 0.0, %v628
        %v630 = vpop.f32.mrf.mxu0
        %v631 = vpop.f32.mrf.mxu0
        %v632 = vadd.f32 0.0, %v631
        %v633 = vpop.f32.mrf.mxu0
        %634 = vmatprep.mubr.bf16.mxu0 0
        %635 = vmatmul.mubr.bf16.gmra.mxu0 %v445
        %v636 = vpop.f32.mrf.mxu0
        %v637 = vadd.f32 0.0, %v636
        %v638 = vpop.f32.mrf.mxu0
        %v639 = vpop.f32.mrf.mxu0
        %v640 = vadd.f32 0.0, %v639
        %v641 = vpop.f32.mrf.mxu0
        %642 = vmatprep.mubr.bf16.mxu0 0
        %643 = vmatmul.mubr.bf16.gmra.mxu0 %v446
        %v644 = vpop.f32.mrf.mxu0
        %v645 = vadd.f32 0.0, %v644
        %v646 = vpop.f32.mrf.mxu0
        %v647 = vpop.f32.mrf.mxu0
        %v648 = vadd.f32 0.0, %v647
        %v649 = vpop.f32.mrf.mxu0
        %650 = vmatprep.mubr.bf16.mxu0 0
        %651 = vmatmul.mubr.bf16.gmra.mxu0 %v447
        %v652 = vpop.f32.mrf.mxu0
        %v653 = vadd.f32 0.0, %v652
        %v654 = vpop.f32.mrf.mxu0
        %v655 = vpop.f32.mrf.mxu0
        %v656 = vadd.f32 0.0, %v655
        %v657 = vpop.f32.mrf.mxu0
        %658 = vmatprep.mubr.bf16.mxu0 0
        %659 = vmatmul.mubr.bf16.gmra.mxu0 %v448
        %v660 = vpop.f32.mrf.mxu0
        %v661 = vadd.f32 0.0, %v660
        %v662 = vpop.f32.mrf.mxu0
        %v663 = vpop.f32.mrf.mxu0
        %v664 = vadd.f32 0.0, %v663
        %v665 = vpop.f32.mrf.mxu0
        %666 = vmatprep.mubr.bf16.mxu0 0
        %667 = vmatmul.mubr.bf16.gmra.mxu0 %v449
        %v668 = vpop.f32.mrf.mxu0
        %v669 = vadd.f32 0.0, %v668
        %v670 = vpop.f32.mrf.mxu0
        %v671 = vpop.f32.mrf.mxu0
        %v672 = vadd.f32 0.0, %v671
        %v673 = vpop.f32.mrf.mxu0
        %674 = vdwg.mxu0
        %v675 = vadd.f32 %v290, %v549
        %v676 = vadd.f32 %v291, %v552
        %v677 = vadd.f32 %v292, %v557
        %v678 = vadd.f32 %v293, %v560
        %v679 = vadd.f32 %v294, %v565
        %v680 = vadd.f32 %v295, %v568
        %v681 = vadd.f32 %v296, %v573
        %v682 = vadd.f32 %v297, %v576
        %v683 = vadd.f32 %v298, %v581
        %v684 = vadd.f32 %v299, %v584
        %v685 = vadd.f32 %v300, %v589
        %v686 = vadd.f32 %v301, %v592
        %v687 = vadd.f32 %v302, %v597
        %v688 = vadd.f32 %v303, %v600
        %v689 = vadd.f32 %v304, %v605
        %v690 = vadd.f32 %v305, %v608
        %v691 = vadd.f32 %v306, %v613
        %v692 = vadd.f32 %v307, %v616
        %v693 = vadd.f32 %v308, %v621
        %v694 = vadd.f32 %v309, %v624
        %v695 = vadd.f32 %v310, %v629
        %v696 = vadd.f32 %v311, %v632
        %v697 = vadd.f32 %v312, %v637
        %v698 = vadd.f32 %v313, %v640
        %v699 = vadd.f32 %v314, %v645
        %v700 = vadd.f32 %v315, %v648
        %v701 = vadd.f32 %v316, %v653
        %v702 = vadd.f32 %v317, %v656
        %v703 = vadd.f32 %v318, %v661
        %v704 = vadd.f32 %v319, %v664
        %v705 = vadd.f32 %v320, %v669
        %v706 = vadd.f32 %v321, %v672
        %707 = vst [vmem:[#allocation2] sm:$0xff] %v675
        %708 = vst [vmem:[#allocation2 + $0x8] sm:$0xff] %v676
        %709 = vst [vmem:[#allocation2 + $0x10] sm:$0xff] %v677
        %710 = vst [vmem:[#allocation2 + $0x18] sm:$0xff] %v678
        %711 = vst [vmem:[#allocation2 + $0x20] sm:$0xff] %v679
        %712 = vst [vmem:[#allocation2 + $0x28] sm:$0xff] %v680
        %713 = vst [vmem:[#allocation2 + $0x30] sm:$0xff] %v681
        %714 = vst [vmem:[#allocation2 + $0x38] sm:$0xff] %v682
        %715 = vst [vmem:[#allocation2 + $0x40] sm:$0xff] %v683
        %716 = vst [vmem:[#allocation2 + $0x48] sm:$0xff] %v684
        %717 = vst [vmem:[#allocation2 + $0x50] sm:$0xff] %v685
        %718 = vst [vmem:[#allocation2 + $0x58] sm:$0xff] %v686
        %719 = vst [vmem:[#allocation2 + $0x60] sm:$0xff] %v687
        %720 = vst [vmem:[#allocation2 + $0x68] sm:$0xff] %v688
        %721 = vst [vmem:[#allocation2 + $0x70] sm:$0xff] %v689
        %722 = vst [vmem:[#allocation2 + $0x78] sm:$0xff] %v690
        %723 = vst [vmem:[#allocation2 + $0x80] sm:$0xff] %v691
        %724 = vst [vmem:[#allocation2 + $0x88] sm:$0xff] %v692
        %725 = vst [vmem:[#allocation2 + $0x90] sm:$0xff] %v693
        %726 = vst [vmem:[#allocation2 + $0x98] sm:$0xff] %v694
        %727 = vst [vmem:[#allocation2 + $0xa0] sm:$0xff] %v695
        %728 = vst [vmem:[#allocation2 + $0xa8] sm:$0xff] %v696
        %729 = vst [vmem:[#allocation2 + $0xb0] sm:$0xff] %v697
        %730 = vst [vmem:[#allocation2 + $0xb8] sm:$0xff] %v698
        %731 = vst [vmem:[#allocation2 + $0xc0] sm:$0xff] %v699
        %732 = vst [vmem:[#allocation2 + $0xc8] sm:$0xff] %v700
        %733 = vst [vmem:[#allocation2 + $0xd0] sm:$0xff] %v701
        %734 = vst [vmem:[#allocation2 + $0xd8] sm:$0xff] %v702
        %735 = vst [vmem:[#allocation2 + $0xe0] sm:$0xff] %v703
        %736 = vst [vmem:[#allocation2 + $0xe8] sm:$0xff] %v704
        %737 = vst [vmem:[#allocation2 + $0xf0] sm:$0xff] %v705
        %738 = vst [vmem:[#allocation2 + $0xf8] sm:$0xff] %v706
        // Predicated region
        $region41: #{unet_forward.9} parent=31 // pred_check
          %p739 = pneg %p254
        $region42: #{unet_forward.9} parent=31 // pred_check_branch
          %741 = sbr.rel (%p739) target = $region44
        $region43: #{unet_forward.9} parent=31 // pred_region
          %v742 = vld [vmem:[#allocation2] sm:$0xff]
          %v743 = vld [vmem:[#allocation2 + $0x8] sm:$0xff]
          %v744 = vld [vmem:[#allocation2 + $0x10] sm:$0xff]
          %v745 = vld [vmem:[#allocation2 + $0x18] sm:$0xff]
          %v746 = vld [vmem:[#allocation2 + $0x20] sm:$0xff]
          %v747 = vld [vmem:[#allocation2 + $0x28] sm:$0xff]
          %v748 = vld [vmem:[#allocation2 + $0x30] sm:$0xff]
          %v749 = vld [vmem:[#allocation2 + $0x38] sm:$0xff]
          %v750 = vld [vmem:[#allocation2 + $0x40] sm:$0xff]
          %v751 = vld [vmem:[#allocation2 + $0x48] sm:$0xff]
          %v752 = vld [vmem:[#allocation2 + $0x50] sm:$0xff]
          %v753 = vld [vmem:[#allocation2 + $0x58] sm:$0xff]
          %v754 = vld [vmem:[#allocation2 + $0x60] sm:$0xff]
          %v755 = vld [vmem:[#allocation2 + $0x68] sm:$0xff]
          %v756 = vld [vmem:[#allocation2 + $0x70] sm:$0xff]
          %v757 = vld [vmem:[#allocation2 + $0x78] sm:$0xff]
          %v758 = vld [vmem:[#allocation2 + $0x80] sm:$0xff]
          %v759 = vld [vmem:[#allocation2 + $0x88] sm:$0xff]
          %v760 = vld [vmem:[#allocation2 + $0x90] sm:$0xff]
          %v761 = vld [vmem:[#allocation2 + $0x98] sm:$0xff]
          %v762 = vld [vmem:[#allocation2 + $0xa0] sm:$0xff]
          %v763 = vld [vmem:[#allocation2 + $0xa8] sm:$0xff]
          %v764 = vld [vmem:[#allocation2 + $0xb0] sm:$0xff]
          %v765 = vld [vmem:[#allocation2 + $0xb8] sm:$0xff]
          %v766 = vld [vmem:[#allocation2 + $0xc0] sm:$0xff]
          %v767 = vld [vmem:[#allocation2 + $0xc8] sm:$0xff]
          %v768 = vld [vmem:[#allocation2 + $0xd0] sm:$0xff]
          %v769 = vld [vmem:[#allocation2 + $0xd8] sm:$0xff]
          %v770 = vld [vmem:[#allocation2 + $0xe0] sm:$0xff]
          %v771 = vld [vmem:[#allocation2 + $0xe8] sm:$0xff]
          %v772 = vld [vmem:[#allocation2 + $0xf0] sm:$0xff]
          %v773 = vld [vmem:[#allocation2 + $0xf8] sm:$0xff]
          %v774 = vld [vmem:[%s243] sm:$0x1]
          %v776 = vlaneseq
          %v777 = vshrl.u32 %v776, 7
          %v778 = vsub.s32 0, %v777
          %v779 = vrot.slane %v774, %v778
          %v781 = vadd.f32 %v742, %v779
          %v782 = vadd.f32 %v743, %v779
          %v783 = vadd.f32 %v744, %v779
          %v784 = vadd.f32 %v745, %v779
          %v785 = vadd.f32 %v746, %v779
          %v786 = vadd.f32 %v747, %v779
          %v787 = vadd.f32 %v748, %v779
          %v788 = vadd.f32 %v749, %v779
          %v789 = vadd.f32 %v750, %v779
          %v790 = vadd.f32 %v751, %v779
          %v791 = vadd.f32 %v752, %v779
          %v792 = vadd.f32 %v753, %v779
          %v793 = vadd.f32 %v754, %v779
          %v794 = vadd.f32 %v755, %v779
          %v795 = vadd.f32 %v756, %v779
          %v796 = vadd.f32 %v757, %v779
          %v797 = vadd.f32 %v758, %v779
          %v798 = vadd.f32 %v759, %v779
          %v799 = vadd.f32 %v760, %v779
          %v800 = vadd.f32 %v761, %v779
          %v801 = vadd.f32 %v762, %v779
          %v802 = vadd.f32 %v763, %v779
          %v803 = vadd.f32 %v764, %v779
          %v804 = vadd.f32 %v765, %v779
          %v805 = vadd.f32 %v766, %v779
          %v806 = vadd.f32 %v767, %v779
          %v807 = vadd.f32 %v768, %v779
          %v808 = vadd.f32 %v769, %v779
          %v809 = vadd.f32 %v770, %v779
          %v810 = vadd.f32 %v771, %v779
          %v811 = vadd.f32 %v772, %v779
          %v812 = vadd.f32 %v773, %v779
          %v813 = vmax.f32 %v781, 0.0
          %v814 = vmax.f32 %v782, 0.0
          %v815 = vmax.f32 %v783, 0.0
          %v816 = vmax.f32 %v784, 0.0
          %v817 = vmax.f32 %v785, 0.0
          %v818 = vmax.f32 %v786, 0.0
          %v819 = vmax.f32 %v787, 0.0
          %v820 = vmax.f32 %v788, 0.0
          %v821 = vmax.f32 %v789, 0.0
          %v822 = vmax.f32 %v790, 0.0
          %v823 = vmax.f32 %v791, 0.0
          %v824 = vmax.f32 %v792, 0.0
          %v825 = vmax.f32 %v793, 0.0
          %v826 = vmax.f32 %v794, 0.0
          %v827 = vmax.f32 %v795, 0.0
          %v828 = vmax.f32 %v796, 0.0
          %v829 = vmax.f32 %v797, 0.0
          %v830 = vmax.f32 %v798, 0.0
          %v831 = vmax.f32 %v799, 0.0
          %v832 = vmax.f32 %v800, 0.0
          %v833 = vmax.f32 %v801, 0.0
          %v834 = vmax.f32 %v802, 0.0
          %v835 = vmax.f32 %v803, 0.0
          %v836 = vmax.f32 %v804, 0.0
          %v837 = vmax.f32 %v805, 0.0
          %v838 = vmax.f32 %v806, 0.0
          %v839 = vmax.f32 %v807, 0.0
          %v840 = vmax.f32 %v808, 0.0
          %v841 = vmax.f32 %v809, 0.0
          %v842 = vmax.f32 %v810, 0.0
          %v843 = vmax.f32 %v811, 0.0
          %v844 = vmax.f32 %v812, 0.0
          %v845 = vpack.c.bf16 %v814, %v813
          %v846 = vpack.c.bf16 %v816, %v815
          %v847 = vpack.c.bf16 %v818, %v817
          %v848 = vpack.c.bf16 %v820, %v819
          %v849 = vpack.c.bf16 %v822, %v821
          %v850 = vpack.c.bf16 %v824, %v823
          %v851 = vpack.c.bf16 %v826, %v825
          %v852 = vpack.c.bf16 %v828, %v827
          %v853 = vpack.c.bf16 %v830, %v829
          %v854 = vpack.c.bf16 %v832, %v831
          %v855 = vpack.c.bf16 %v834, %v833
          %v856 = vpack.c.bf16 %v836, %v835
          %v857 = vpack.c.bf16 %v838, %v837
          %v858 = vpack.c.bf16 %v840, %v839
          %v859 = vpack.c.bf16 %v842, %v841
          %v860 = vpack.c.bf16 %v844, %v843
          %v877 = vunpack.c.l.b16 %v845
          %v878 = vunpack.c.h.b16 %v845
          %v879 = vunpack.c.l.b16 %v846
          %v880 = vunpack.c.h.b16 %v846
          %v881 = vunpack.c.l.b16 %v847
          %v882 = vunpack.c.h.b16 %v847
          %v883 = vunpack.c.l.b16 %v848
          %v884 = vunpack.c.h.b16 %v848
          %v885 = vunpack.c.l.b16 %v849
          %v886 = vunpack.c.h.b16 %v849
          %v887 = vunpack.c.l.b16 %v850
          %v888 = vunpack.c.h.b16 %v850
          %v889 = vunpack.c.l.b16 %v851
          %v890 = vunpack.c.h.b16 %v851
          %v891 = vunpack.c.l.b16 %v852
          %v892 = vunpack.c.h.b16 %v852
          %v893 = vunpack.c.l.b16 %v853
          %v894 = vunpack.c.h.b16 %v853
          %v895 = vunpack.c.l.b16 %v854
          %v896 = vunpack.c.h.b16 %v854
          %v897 = vunpack.c.l.b16 %v855
          %v898 = vunpack.c.h.b16 %v855
          %v899 = vunpack.c.l.b16 %v856
          %v900 = vunpack.c.h.b16 %v856
          %v901 = vunpack.c.l.b16 %v857
          %v902 = vunpack.c.h.b16 %v857
          %v903 = vunpack.c.l.b16 %v858
          %v904 = vunpack.c.h.b16 %v858
          %v905 = vunpack.c.l.b16 %v859
          %v906 = vunpack.c.h.b16 %v859
          %v907 = vunpack.c.l.b16 %v860
          %v908 = vunpack.c.h.b16 %v860
          %v909 = vpack.c.b16 %v877, %v877
          %v910 = vpack.c.b16 %v878, %v878
          %v911 = vpack.c.b16 %v879, %v879
          %v912 = vpack.c.b16 %v880, %v880
          %v913 = vpack.c.b16 %v881, %v881
          %v914 = vpack.c.b16 %v882, %v882
          %v915 = vpack.c.b16 %v883, %v883
          %v916 = vpack.c.b16 %v884, %v884
          %v917 = vpack.c.b16 %v885, %v885
          %v918 = vpack.c.b16 %v886, %v886
          %v919 = vpack.c.b16 %v887, %v887
          %v920 = vpack.c.b16 %v888, %v888
          %v921 = vpack.c.b16 %v889, %v889
          %v922 = vpack.c.b16 %v890, %v890
          %v923 = vpack.c.b16 %v891, %v891
          %v924 = vpack.c.b16 %v892, %v892
          %v925 = vpack.c.b16 %v893, %v893
          %v926 = vpack.c.b16 %v894, %v894
          %v927 = vpack.c.b16 %v895, %v895
          %v928 = vpack.c.b16 %v896, %v896
          %v929 = vpack.c.b16 %v897, %v897
          %v930 = vpack.c.b16 %v898, %v898
          %v931 = vpack.c.b16 %v899, %v899
          %v932 = vpack.c.b16 %v900, %v900
          %v933 = vpack.c.b16 %v901, %v901
          %v934 = vpack.c.b16 %v902, %v902
          %v935 = vpack.c.b16 %v903, %v903
          %v936 = vpack.c.b16 %v904, %v904
          %v937 = vpack.c.b16 %v905, %v905
          %v938 = vpack.c.b16 %v906, %v906
          %v939 = vpack.c.b16 %v907, %v907
          %v940 = vpack.c.b16 %v908, %v908
          %973 = vst [vmem:[%s251] sm:$0xf] %v909
          %974 = vst [vmem:[%s251 + $0x4] sm:$0xf] %v910
          %975 = vst [vmem:[%s251 + $0x8] sm:$0xf] %v911
          %976 = vst [vmem:[%s251 + $0xc] sm:$0xf] %v912
          %977 = vst [vmem:[%s251 + $0x10] sm:$0xf] %v913
          %978 = vst [vmem:[%s251 + $0x14] sm:$0xf] %v914
          %979 = vst [vmem:[%s251 + $0x18] sm:$0xf] %v915
          %980 = vst [vmem:[%s251 + $0x1c] sm:$0xf] %v916
          %981 = vst [vmem:[%s251 + $0x20] sm:$0xf] %v917
          %982 = vst [vmem:[%s251 + $0x24] sm:$0xf] %v918
          %983 = vst [vmem:[%s251 + $0x28] sm:$0xf] %v919
          %984 = vst [vmem:[%s251 + $0x2c] sm:$0xf] %v920
          %985 = vst [vmem:[%s251 + $0x30] sm:$0xf] %v921
          %986 = vst [vmem:[%s251 + $0x34] sm:$0xf] %v922
          %987 = vst [vmem:[%s251 + $0x38] sm:$0xf] %v923
          %988 = vst [vmem:[%s251 + $0x3c] sm:$0xf] %v924
          %989 = vst [vmem:[%s251 + $0x40] sm:$0xf] %v925
          %990 = vst [vmem:[%s251 + $0x44] sm:$0xf] %v926
          %991 = vst [vmem:[%s251 + $0x48] sm:$0xf] %v927
          %992 = vst [vmem:[%s251 + $0x4c] sm:$0xf] %v928
          %993 = vst [vmem:[%s251 + $0x50] sm:$0xf] %v929
          %994 = vst [vmem:[%s251 + $0x54] sm:$0xf] %v930
          %995 = vst [vmem:[%s251 + $0x58] sm:$0xf] %v931
          %996 = vst [vmem:[%s251 + $0x5c] sm:$0xf] %v932
          %997 = vst [vmem:[%s251 + $0x60] sm:$0xf] %v933
          %998 = vst [vmem:[%s251 + $0x64] sm:$0xf] %v934
          %999 = vst [vmem:[%s251 + $0x68] sm:$0xf] %v935
          %1000 = vst [vmem:[%s251 + $0x6c] sm:$0xf] %v936
          %1001 = vst [vmem:[%s251 + $0x70] sm:$0xf] %v937
          %1002 = vst [vmem:[%s251 + $0x74] sm:$0xf] %v938
          %1003 = vst [vmem:[%s251 + $0x78] sm:$0xf] %v939
          %1004 = vst [vmem:[%s251 + $0x7c] sm:$0xf] %v940
        $region44: #{unet_forward.9} parent=31 // pred_fallthru
          _
        %s1005 = smul.u32 32, %s20
        %p1006 = scmp.lt.s32.totalorder %s1005, 63
        %s1007 = scalar_select %p1006, %s1005, 63
        %p1008 = scmp.lt.s32.totalorder %s21, 0
        %s1009 = scalar_select %p1008, %s21, 0
        %s1010 = sadd.s32 %s1009, %s1007
        %s1011 = smul.addr %s1010, 4
        %s1012 = scalar_lea.vmem %s3, %s1011
        // Predicated region
        $region45: #{unet_forward.9} parent=31 // pred_check
          %p1013 = pneg %p136
        $region46: #{unet_forward.9} parent=31 // pred_check_branch
          %1015 = sbr.rel (%p1013) target = $region48
        $region47: #{unet_forward.9} parent=31 // pred_region
          %s1016 = smul.u32 32, %s20
        $region48: #{unet_forward.9} parent=31 // pred_fallthru
          _
      $region32: #{unet_forward.9} parent=5 // pred_fallthru
        _
      %p1017 = scmp.le.s32.totalorder 2, %s10
      // Predicated region
      $region49: #{unet_forward.9} parent=5 // pred_check
        %p1018 = pneg %p1017
      $region50: #{unet_forward.9} parent=5 // pred_check_branch
        %1020 = sbr.rel (%p1018) target = $region52
      $region51: #{unet_forward.9} parent=5 // pred_region
        %s1021 = ssub.s32 %s10, 2
        // Predicated region
        $region53: #{unet_forward.9} parent=51 // pred_check
          %p1022 = pneg %p142
        $region54: #{unet_forward.9} parent=51 // pred_check_branch
          %1024 = sbr.rel (%p1022) target = $region56
        $region55: #{unet_forward.9} parent=51 // pred_region
          %s1025 = smul.u32 32, %s23
          %p1026 = scmp.lt.s32.totalorder %s1025, 63
          %s1027 = scalar_select %p1026, %s1025, 63
          %p1028 = scmp.lt.s32.totalorder %s24, 0
          %s1029 = scalar_select %p1028, %s24, 0
          %s1030 = sadd.s32 %s1029, %s1027
          %s1031 = smul.addr %s1030, 4
          %s1032 = scalar_lea.vmem %s3, %s1031
        $region56: #{unet_forward.9} parent=51 // pred_fallthru
          _
      $region52: #{unet_forward.9} parent=5 // pred_fallthru
        _
    $region6: #{unet_forward.9} parent=1 // loop_footer
      %s14 = sadd.s32 1, %s10
    $region7: #{unet_forward.9} parent=1 // loop_footer_branch
      %9 = sbr.rel target = $region3
    $region8: #{unet_forward.9} parent=1 // loop_exit
      _
    %1033 = vsyncpa [#allocation4], 1
    %s1034 = scalar_lea.sflag [#allocation4], 1
    %1035 = vsyncpa %s1034, 1

// kernel: unet_forward.10
$region0: #{unet_forward.10}
  #allocation0 [shape = 'u32[]', space=smem, size = 0x4, offset = 0x4, fixed_abs, tag = 'smem constant byte address 0x4 - core index']
  #allocation1 [shape = 'u32[144,128]{1,0:T(1,128)}', space=vmem, size = 0x12000, scoped, tag = 'internal scratch']
  #allocation2 [shape = 'f32[256,128]{1,0:T(8,128)}', space=vmem, size = 0x20000, scoped, tag = 'scratch operand']
  %s0 = inlined_call_operand.vmem [shape: bf16[512,640], index: 0, kind: input, shape index: {}]
  %s1 = inlined_call_operand.vmem [shape: bf16[640,128], index: 1, kind: input, shape index: {}]
  %s2 = inlined_call_operand.vmem [shape: f32[1,128], index: 2, kind: input, shape index: {}]
  %s3 = inlined_call_operand.vmem [shape: bf16[512,128], index: 3, kind: output, shape index: {}]
  %s4 = sld [smem:[#allocation0]]
  $region94: #{unet_forward.10} parent=0
    _
  %s6 = ssub.s32 1, %s4
  %s7 = scalar_select 0, %s6, %s4
  $region1: #{unet_forward.10} parent=0
    #allocation3 [shape = 'u8[131072]{0}', space=vmem, size = 0x20000, scoped, tag = 'input window, operand 0']
    loop: start=0, step=1, limit=12
    $region2: #{unet_forward.10} parent=1 // loop_pre_header
      _
    $region3: #{unet_forward.10} parent=1 // loop_header
      %s9 = sphi 0, %s13
      %p10 = scmp.ge.s32.totalorder %s9, 12
      %s16 = sphi 0, %s35
      %s17 = sphi 0, %s31
      %s18 = sphi 0, %s27
      %s19 = sphi 0, %s16
      %s20 = sphi 0, %s17
      %s21 = sphi 0, %s18
      %s22 = sphi 0, %s19
      %s23 = sphi 0, %s20
      %s24 = sphi 0, %s21
      %s40 = sphi 0, %s42
      %s43 = sphi 0, %s40
      %s44 = sphi 0, %s43
      %s60 = sphi 0, %s44
      %s68 = sphi 0, %s70
      %s71 = sphi 0, %s68
      %s72 = sphi 0, %s71
      %s88 = sphi 0, %s72
      %s94 = sphi 0, %s96
      %s97 = sphi 0, %s94
      %s98 = sphi 0, %s97
      %s114 = sphi 0, %s98
      %s122 = sphi 0, %s124
      %s125 = sphi 0, %s122
      %s126 = sphi 0, %s125
      %s142 = sphi 0, %s126
    $region4: #{unet_forward.10} parent=1 // loop_header_branch
      %12 = sbr.rel (%p10) target = $region8
    $region5: #{unet_forward.10} parent=1 // loop_body
      %s14 = ssub.s32 %s9, 1
      %s15 = ssub.s32 %s9, 2
      %s25 = sadd.s32 1, %s18
      %p26 = scmp.ge.s32.totalorder %s25, 5
      %s27 = scalar_select %p26, 0, %s25
      %s28 = sadd.s32 1, %s17
      %s29 = scalar_select %p26, %s28, %s17
      %p30 = scmp.ge.s32.totalorder %s29, 1
      %s31 = scalar_select %p30, 0, %s29
      %s32 = sadd.s32 1, %s16
      %s33 = scalar_select %p30, %s32, %s16
      %p34 = scmp.ge.s32.totalorder %s33, 2
      %s35 = scalar_select %p34, 0, %s33
      %s36 = ssub.s32 %s16, %s35
      %s37 = ssub.s32 %s18, %s27
      %s38 = sor.u32 %s36, %s37
      %p39 = scmp.eq.s32.totalorder %s38, 0
      %s41 = sadd.s32 %s40, 1
      %s42 = scalar_select %p39, %s40, %s41
      %p45 = pneg %p39
      %p46 = scmp.eq.s32.totalorder %s9, 9
      %p47 = por %p45, %p46
      %p48 = scmp.ne.s32.totalorder %s40, %s43
      %p49 = scmp.eq.s32.totalorder %s9, 0
      %p50 = por %p48, %p49
      %p51 = scmp.ne.s32.totalorder %s40, %s43
      %p52 = scmp.eq.s32.totalorder %s14, 9
      %p53 = por %p51, %p52
      %p54 = scmp.ne.s32.totalorder %s43, %s44
      %p55 = scmp.eq.s32.totalorder %s14, 0
      %p56 = por %p54, %p55
      %p57 = scmp.ne.s32.totalorder %s43, %s44
      %p58 = scmp.eq.s32.totalorder %s15, 9
      %p59 = por %p57, %p58
      %p61 = scmp.ne.s32.totalorder %s44, %s60
      %p62 = scmp.eq.s32.totalorder %s15, 0
      %p63 = por %p61, %p62
      %s64 = ssub.s32 %s18, %s27
      %s65 = ssub.s32 %s17, %s31
      %s66 = sor.u32 %s64, %s65
      %p67 = scmp.eq.s32.totalorder %s66, 0
      %s69 = sadd.s32 %s68, 1
      %s70 = scalar_select %p67, %s68, %s69
      %p73 = pneg %p67
      %p74 = scmp.eq.s32.totalorder %s9, 9
      %p75 = por %p73, %p74
      %p76 = scmp.ne.s32.totalorder %s68, %s71
      %p77 = scmp.eq.s32.totalorder %s9, 0
      %p78 = por %p76, %p77
      %p79 = scmp.ne.s32.totalorder %s68, %s71
      %p80 = scmp.eq.s32.totalorder %s14, 9
      %p81 = por %p79, %p80
      %p82 = scmp.ne.s32.totalorder %s71, %s72
      %p83 = scmp.eq.s32.totalorder %s14, 0
      %p84 = por %p82, %p83
      %p85 = scmp.ne.s32.totalorder %s71, %s72
      %p86 = scmp.eq.s32.totalorder %s15, 9
      %p87 = por %p85, %p86
      %p89 = scmp.ne.s32.totalorder %s72, %s88
      %p90 = scmp.eq.s32.totalorder %s15, 0
      %p91 = por %p89, %p90
      %s92 = ssub.s32 %s17, %s31
      %p93 = scmp.eq.s32.totalorder %s92, 0
      %s95 = sadd.s32 %s94, 1
      %s96 = scalar_select %p93, %s94, %s95
      %p99 = pneg %p93
      %p100 = scmp.eq.s32.totalorder %s9, 9
      %p101 = por %p99, %p100
      %p102 = scmp.ne.s32.totalorder %s94, %s97
      %p103 = scmp.eq.s32.totalorder %s9, 0
      %p104 = por %p102, %p103
      %p105 = scmp.ne.s32.totalorder %s94, %s97
      %p106 = scmp.eq.s32.totalorder %s14, 9
      %p107 = por %p105, %p106
      %p108 = scmp.ne.s32.totalorder %s97, %s98
      %p109 = scmp.eq.s32.totalorder %s14, 0
      %p110 = por %p108, %p109
      %p111 = scmp.ne.s32.totalorder %s97, %s98
      %p112 = scmp.eq.s32.totalorder %s15, 9
      %p113 = por %p111, %p112
      %p115 = scmp.ne.s32.totalorder %s98, %s114
      %p116 = scmp.eq.s32.totalorder %s15, 0
      %p117 = por %p115, %p116
      %s118 = ssub.s32 %s16, %s35
      %s119 = ssub.s32 %s17, %s31
      %s120 = sor.u32 %s118, %s119
      %p121 = scmp.eq.s32.totalorder %s120, 0
      %s123 = sadd.s32 %s122, 1
      %s124 = scalar_select %p121, %s122, %s123
      %p127 = pneg %p121
      %p128 = scmp.eq.s32.totalorder %s9, 9
      %p129 = por %p127, %p128
      %p130 = scmp.ne.s32.totalorder %s122, %s125
      %p131 = scmp.eq.s32.totalorder %s9, 0
      %p132 = por %p130, %p131
      %p133 = scmp.ne.s32.totalorder %s122, %s125
      %p134 = scmp.eq.s32.totalorder %s14, 9
      %p135 = por %p133, %p134
      %p136 = scmp.ne.s32.totalorder %s125, %s126
      %p137 = scmp.eq.s32.totalorder %s14, 0
      %p138 = por %p136, %p137
      %p139 = scmp.ne.s32.totalorder %s125, %s126
      %p140 = scmp.eq.s32.totalorder %s15, 9
      %p141 = por %p139, %p140
      %p143 = scmp.ne.s32.totalorder %s126, %s142
      %p144 = scmp.eq.s32.totalorder %s15, 0
      %p145 = por %p143, %p144
      %p146 = scmp.le.s32.totalorder 1, %s9
      %p147 = scmp.lt.s32.totalorder %s9, 11
      %p148 = pnand %p146, %p147
      %p149 = pneg %p148
      // Predicated region
      $region9: #{unet_forward.10} parent=5 // pred_check
        _
      $region10: #{unet_forward.10} parent=5 // pred_check_branch
        %151 = sbr.rel (%p148) target = $region12
      $region11: #{unet_forward.10} parent=5 // pred_region
        %s152 = ssub.s32 %s9, 1
        // Predicated region
        $region13: #{unet_forward.10} parent=11 // pred_check
          %p153 = pneg %p110
        $region14: #{unet_forward.10} parent=11 // pred_check_branch
          %155 = sbr.rel (%p153) target = $region16
        $region15: #{unet_forward.10} parent=11 // pred_region
          %p156 = scmp.lt.s32.totalorder %s20, 0
          %s157 = scalar_select %p156, %s20, 0
          %s158 = scalar_lea.vmem %s2, %s157
        $region16: #{unet_forward.10} parent=11 // pred_fallthru
          _
      $region12: #{unet_forward.10} parent=5 // pred_fallthru
        _
      %p159 = scmp.lt.s32.totalorder %s9, 10
      // Predicated region
      $region17: #{unet_forward.10} parent=5 // pred_check
        %p160 = pneg %p159
      $region18: #{unet_forward.10} parent=5 // pred_check_branch
        %162 = sbr.rel (%p160) target = $region20
      $region19: #{unet_forward.10} parent=5 // pred_region
        // Predicated region
        $region21: #{unet_forward.10} parent=19 // pred_check
          %p163 = pneg %p50
        $region22: #{unet_forward.10} parent=19 // pred_check_branch
          %165 = sbr.rel (%p163) target = $region24
        $region23: #{unet_forward.10} parent=19 // pred_region
          %s166 = sand.u32 %s40, 1
          %s167 = sand.u32 %s40, 1
          %s168 = smul.addr %s167, 128
          %s169 = scalar_lea.vmem [#allocation3], %s168
          %s170 = smul.u32 32, %s16
          %s171 = smul.addr %s170, 5
          %s172 = sadd.s32 %s18, %s171
          %s173 = smul.addr %s172, 4
          %s174 = scalar_lea.vmem %s0, %s173
          // Predicated region
          $region25: #{unet_forward.10} parent=23 // pred_check
            _
          $region26: #{unet_forward.10} parent=23 // pred_check_branch
            %176 = sbr.rel (0) target = $region28
          $region27: #{unet_forward.10} parent=23 // pred_region
            // Predicated region
            $region29: #{unet_forward.10} parent=27 // pred_check
              _
            $region30: #{unet_forward.10} parent=27 // pred_check_branch
              %178 = sbr.rel target = $region32
            $region31: #{unet_forward.10} parent=27 // pred_region
              // Predicated region
              $region44: #{unet_forward.10} parent=31 // pred_check
                _
              $region45: #{unet_forward.10} parent=31 // pred_check_branch
                %256 = sbr.rel (0) target = $region47
              $region46: #{unet_forward.10} parent=31 // pred_region
                loop: start=0, step=1, limit=1
                $region48: #{unet_forward.10} parent=46 // loop_pre_header
                  _
                $region49: #{unet_forward.10} parent=46 // loop_header
                  %s258 = sphi 0, %s262
                  %p259 = scmp.ge.s32.totalorder %s258, 1
                  %s263 = sphi %s174, %s174
                  %s264 = sphi %s169, %s169
                $region50: #{unet_forward.10} parent=46 // loop_header_branch
                  %261 = sbr.rel (%p259) target = $region54
                $region51: #{unet_forward.10} parent=46 // loop_body
                  _
                $region52: #{unet_forward.10} parent=46 // loop_footer
                  %s262 = sadd.s32 1, %s258
                $region53: #{unet_forward.10} parent=46 // loop_footer_branch
                  %257 = sbr.rel target = $region49
                $region54: #{unet_forward.10} parent=46 // loop_exit
                  _
                %s266 = ssub.s32 16, 1
                loop: start=0, step=1, limit=1
                $region55: #{unet_forward.10} parent=46 // loop_pre_header
                  _
                $region56: #{unet_forward.10} parent=46 // loop_header
                  %s268 = sphi 0, %s272
                  %p269 = scmp.ge.s32.totalorder %s268, 1
                  %s273 = sphi %s174, %s174
                  %s274 = sphi %s169, %s169
                $region57: #{unet_forward.10} parent=46 // loop_header_branch
                  %271 = sbr.rel (%p269) target = $region61
                $region58: #{unet_forward.10} parent=46 // loop_body
                  %v275 = vld [vmem:[%s273] sm:%s266]
                  %276 = vst [vmem:[%s274] sm:%s266] %v275
                  %v277 = vld [vmem:[%s273 + $0x14] sm:%s266]
                  %278 = vst [vmem:[%s274 + $0x4] sm:%s266] %v277
                  %v279 = vld [vmem:[%s273 + $0x28] sm:%s266]
                  %280 = vst [vmem:[%s274 + $0x8] sm:%s266] %v279
                  %v281 = vld [vmem:[%s273 + $0x3c] sm:%s266]
                  %282 = vst [vmem:[%s274 + $0xc] sm:%s266] %v281
                  %v283 = vld [vmem:[%s273 + $0x50] sm:%s266]
                  %284 = vst [vmem:[%s274 + $0x10] sm:%s266] %v283
                  %v285 = vld [vmem:[%s273 + $0x64] sm:%s266]
                  %286 = vst [vmem:[%s274 + $0x14] sm:%s266] %v285
                  %v287 = vld [vmem:[%s273 + $0x78] sm:%s266]
                  %288 = vst [vmem:[%s274 + $0x18] sm:%s266] %v287
                  %v289 = vld [vmem:[%s273 + $0x8c] sm:%s266]
                  %290 = vst [vmem:[%s274 + $0x1c] sm:%s266] %v289
                  %v291 = vld [vmem:[%s273 + $0xa0] sm:%s266]
                  %292 = vst [vmem:[%s274 + $0x20] sm:%s266] %v291
                  %v293 = vld [vmem:[%s273 + $0xb4] sm:%s266]
                  %294 = vst [vmem:[%s274 + $0x24] sm:%s266] %v293
                  %v295 = vld [vmem:[%s273 + $0xc8] sm:%s266]
                  %296 = vst [vmem:[%s274 + $0x28] sm:%s266] %v295
                  %v297 = vld [vmem:[%s273 + $0xdc] sm:%s266]
                  %298 = vst [vmem:[%s274 + $0x2c] sm:%s266] %v297
                  %v299 = vld [vmem:[%s273 + $0xf0] sm:%s266]
                  %300 = vst [vmem:[%s274 + $0x30] sm:%s266] %v299
                  %v301 = vld [vmem:[%s273 + $0x104] sm:%s266]
                  %302 = vst [vmem:[%s274 + $0x34] sm:%s266] %v301
                  %v303 = vld [vmem:[%s273 + $0x118] sm:%s266]
                  %304 = vst [vmem:[%s274 + $0x38] sm:%s266] %v303
                  %v305 = vld [vmem:[%s273 + $0x12c] sm:%s266]
                  %306 = vst [vmem:[%s274 + $0x3c] sm:%s266] %v305
                  %v307 = vld [vmem:[%s273 + $0x140] sm:%s266]
                  %308 = vst [vmem:[%s274 + $0x40] sm:%s266] %v307
                  %v309 = vld [vmem:[%s273 + $0x154] sm:%s266]
                  %310 = vst [vmem:[%s274 + $0x44] sm:%s266] %v309
                  %v311 = vld [vmem:[%s273 + $0x168] sm:%s266]
                  %312 = vst [vmem:[%s274 + $0x48] sm:%s266] %v311
                  %v313 = vld [vmem:[%s273 + $0x17c] sm:%s266]
                  %314 = vst [vmem:[%s274 + $0x4c] sm:%s266] %v313
                  %v315 = vld [vmem:[%s273 + $0x190] sm:%s266]
                  %316 = vst [vmem:[%s274 + $0x50] sm:%s266] %v315
                  %v317 = vld [vmem:[%s273 + $0x1a4] sm:%s266]
                  %318 = vst [vmem:[%s274 + $0x54] sm:%s266] %v317
                  %v319 = vld [vmem:[%s273 + $0x1b8] sm:%s266]
                  %320 = vst [vmem:[%s274 + $0x58] sm:%s266] %v319
                  %v321 = vld [vmem:[%s273 + $0x1cc] sm:%s266]
                  %322 = vst [vmem:[%s274 + $0x5c] sm:%s266] %v321
                  %v323 = vld [vmem:[%s273 + $0x1e0] sm:%s266]
                  %324 = vst [vmem:[%s274 + $0x60] sm:%s266] %v323
                  %v325 = vld [vmem:[%s273 + $0x1f4] sm:%s266]
                  %326 = vst [vmem:[%s274 + $0x64] sm:%s266] %v325
                  %v327 = vld [vmem:[%s273 + $0x208] sm:%s266]
                  %328 = vst [vmem:[%s274 + $0x68] sm:%s266] %v327
                  %v329 = vld [vmem:[%s273 + $0x21c] sm:%s266]
                  %330 = vst [vmem:[%s274 + $0x6c] sm:%s266] %v329
                  %v331 = vld [vmem:[%s273 + $0x230] sm:%s266]
                  %332 = vst [vmem:[%s274 + $0x70] sm:%s266] %v331
                  %v333 = vld [vmem:[%s273 + $0x244] sm:%s266]
                  %334 = vst [vmem:[%s274 + $0x74] sm:%s266] %v333
                  %v335 = vld [vmem:[%s273 + $0x258] sm:%s266]
                  %336 = vst [vmem:[%s274 + $0x78] sm:%s266] %v335
                  %v337 = vld [vmem:[%s273 + $0x26c] sm:%s266]
                  %338 = vst [vmem:[%s274 + $0x7c] sm:%s266] %v337
                $region59: #{unet_forward.10} parent=46 // loop_footer
                  %s272 = sadd.s32 1, %s268
                $region60: #{unet_forward.10} parent=46 // loop_footer_branch
                  %267 = sbr.rel target = $region56
                $region61: #{unet_forward.10} parent=46 // loop_exit
                  _
              $region47: #{unet_forward.10} parent=31 // pred_fallthru
                _
            $region32: #{unet_forward.10} parent=27 // pred_fallthru
              _
            // Predicated region
            $region33: #{unet_forward.10} parent=27 // pred_check
              _
            $region34: #{unet_forward.10} parent=27 // pred_check_branch
              %180 = sbr.rel (0) target = $region36
            $region35: #{unet_forward.10} parent=27 // pred_region
              %s182 = ssub.s32 16, 1
              loop: start=0, step=1, limit=1
              $region37: #{unet_forward.10} parent=35 // loop_pre_header
                _
              $region38: #{unet_forward.10} parent=35 // loop_header
                %s184 = sphi 0, %s188
                %p185 = scmp.ge.s32.totalorder %s184, 1
                %s189 = sphi %s174, %s174
                %s190 = sphi %s169, %s169
              $region39: #{unet_forward.10} parent=35 // loop_header_branch
                %187 = sbr.rel (%p185) target = $region43
              $region40: #{unet_forward.10} parent=35 // loop_body
                %v191 = vld [vmem:[%s189] sm:%s182]
                %192 = vst [vmem:[%s190] sm:%s182] %v191
                %v193 = vld [vmem:[%s189 + $0x14] sm:%s182]
                %194 = vst [vmem:[%s190 + $0x4] sm:%s182] %v193
                %v195 = vld [vmem:[%s189 + $0x28] sm:%s182]
                %196 = vst [vmem:[%s190 + $0x8] sm:%s182] %v195
                %v197 = vld [vmem:[%s189 + $0x3c] sm:%s182]
                %198 = vst [vmem:[%s190 + $0xc] sm:%s182] %v197
                %v199 = vld [vmem:[%s189 + $0x50] sm:%s182]
                %200 = vst [vmem:[%s190 + $0x10] sm:%s182] %v199
                %v201 = vld [vmem:[%s189 + $0x64] sm:%s182]
                %202 = vst [vmem:[%s190 + $0x14] sm:%s182] %v201
                %v203 = vld [vmem:[%s189 + $0x78] sm:%s182]
                %204 = vst [vmem:[%s190 + $0x18] sm:%s182] %v203
                %v205 = vld [vmem:[%s189 + $0x8c] sm:%s182]
                %206 = vst [vmem:[%s190 + $0x1c] sm:%s182] %v205
                %v207 = vld [vmem:[%s189 + $0xa0] sm:%s182]
                %208 = vst [vmem:[%s190 + $0x20] sm:%s182] %v207
                %v209 = vld [vmem:[%s189 + $0xb4] sm:%s182]
                %210 = vst [vmem:[%s190 + $0x24] sm:%s182] %v209
                %v211 = vld [vmem:[%s189 + $0xc8] sm:%s182]
                %212 = vst [vmem:[%s190 + $0x28] sm:%s182] %v211
                %v213 = vld [vmem:[%s189 + $0xdc] sm:%s182]
                %214 = vst [vmem:[%s190 + $0x2c] sm:%s182] %v213
                %v215 = vld [vmem:[%s189 + $0xf0] sm:%s182]
                %216 = vst [vmem:[%s190 + $0x30] sm:%s182] %v215
                %v217 = vld [vmem:[%s189 + $0x104] sm:%s182]
                %218 = vst [vmem:[%s190 + $0x34] sm:%s182] %v217
                %v219 = vld [vmem:[%s189 + $0x118] sm:%s182]
                %220 = vst [vmem:[%s190 + $0x38] sm:%s182] %v219
                %v221 = vld [vmem:[%s189 + $0x12c] sm:%s182]
                %222 = vst [vmem:[%s190 + $0x3c] sm:%s182] %v221
                %v223 = vld [vmem:[%s189 + $0x140] sm:%s182]
                %224 = vst [vmem:[%s190 + $0x40] sm:%s182] %v223
                %v225 = vld [vmem:[%s189 + $0x154] sm:%s182]
                %226 = vst [vmem:[%s190 + $0x44] sm:%s182] %v225
                %v227 = vld [vmem:[%s189 + $0x168] sm:%s182]
                %228 = vst [vmem:[%s190 + $0x48] sm:%s182] %v227
                %v229 = vld [vmem:[%s189 + $0x17c] sm:%s182]
                %230 = vst [vmem:[%s190 + $0x4c] sm:%s182] %v229
                %v231 = vld [vmem:[%s189 + $0x190] sm:%s182]
                %232 = vst [vmem:[%s190 + $0x50] sm:%s182] %v231
                %v233 = vld [vmem:[%s189 + $0x1a4] sm:%s182]
                %234 = vst [vmem:[%s190 + $0x54] sm:%s182] %v233
                %v235 = vld [vmem:[%s189 + $0x1b8] sm:%s182]
                %236 = vst [vmem:[%s190 + $0x58] sm:%s182] %v235
                %v237 = vld [vmem:[%s189 + $0x1cc] sm:%s182]
                %238 = vst [vmem:[%s190 + $0x5c] sm:%s182] %v237
                %v239 = vld [vmem:[%s189 + $0x1e0] sm:%s182]
                %240 = vst [vmem:[%s190 + $0x60] sm:%s182] %v239
                %v241 = vld [vmem:[%s189 + $0x1f4] sm:%s182]
                %242 = vst [vmem:[%s190 + $0x64] sm:%s182] %v241
                %v243 = vld [vmem:[%s189 + $0x208] sm:%s182]
                %244 = vst [vmem:[%s190 + $0x68] sm:%s182] %v243
                %v245 = vld [vmem:[%s189 + $0x21c] sm:%s182]
                %246 = vst [vmem:[%s190 + $0x6c] sm:%s182] %v245
                %v247 = vld [vmem:[%s189 + $0x230] sm:%s182]
                %248 = vst [vmem:[%s190 + $0x70] sm:%s182] %v247
                %v249 = vld [vmem:[%s189 + $0x244] sm:%s182]
                %250 = vst [vmem:[%s190 + $0x74] sm:%s182] %v249
                %v251 = vld [vmem:[%s189 + $0x258] sm:%s182]
                %252 = vst [vmem:[%s190 + $0x78] sm:%s182] %v251
                %v253 = vld [vmem:[%s189 + $0x26c] sm:%s182]
                %254 = vst [vmem:[%s190 + $0x7c] sm:%s182] %v253
              $region41: #{unet_forward.10} parent=35 // loop_footer
                %s188 = sadd.s32 1, %s184
              $region42: #{unet_forward.10} parent=35 // loop_footer_branch
                %183 = sbr.rel target = $region38
              $region43: #{unet_forward.10} parent=35 // loop_exit
                _
            $region36: #{unet_forward.10} parent=27 // pred_fallthru
              _
          $region28: #{unet_forward.10} parent=23 // pred_fallthru
            _
          %339 = vnop
        $region24: #{unet_forward.10} parent=19 // pred_fallthru
          _
        // Predicated region
        $region62: #{unet_forward.10} parent=19 // pred_check
          %p340 = pneg %p78
        $region63: #{unet_forward.10} parent=19 // pred_check_branch
          %342 = sbr.rel (%p340) target = $region65
        $region64: #{unet_forward.10} parent=19 // pred_region
          %s343 = smul.u32 16, %s18
          %p344 = scmp.lt.s32.totalorder %s343, 79
          %s345 = scalar_select %p344, %s343, 79
          %p346 = scmp.lt.s32.totalorder %s17, 0
          %s347 = scalar_select %p346, %s17, 0
          %s348 = sadd.s32 %s347, %s345
          %s349 = smul.addr %s348, 4
          %s350 = scalar_lea.vmem %s1, %s349
          %s351 = smul.u32 16, %s18
        $region65: #{unet_forward.10} parent=19 // pred_fallthru
          _
      $region20: #{unet_forward.10} parent=5 // pred_fallthru
        _
      %p352 = scmp.le.s32.totalorder 1, %s9
      %p353 = scmp.lt.s32.totalorder %s9, 11
      %p354 = pnand %p352, %p353
      %p355 = pneg %p354
      // Predicated region
      $region66: #{unet_forward.10} parent=5 // pred_check
        _
      $region67: #{unet_forward.10} parent=5 // pred_check_branch
        %357 = sbr.rel (%p354) target = $region69
      $region68: #{unet_forward.10} parent=5 // pred_region
        %s358 = ssub.s32 %s9, 1
        %s359 = sand.u32 %s43, 1
        %s360 = sand.u32 %s43, 1
        %s361 = smul.addr %s360, 128
        %s362 = scalar_lea.vmem [#allocation3], %s361
        // Predicated region
        $region70: #{unet_forward.10} parent=68 // pred_check
          %p363 = pneg %p56
        $region71: #{unet_forward.10} parent=68 // pred_check_branch
          %365 = sbr.rel (%p363) target = $region73
        $region72: #{unet_forward.10} parent=68 // pred_region
          _
        $region73: #{unet_forward.10} parent=68 // pred_fallthru
          _
        %s366 = sand.u32 %s43, 1
        %s367 = sand.u32 %s43, 1
        %s368 = smul.addr %s367, 128
        %s369 = scalar_lea.vmem [#allocation3], %s368
        %p370 = pneg %p56
        %p371 = pneg %p53
        %s372 = smul.u32 16, %s21
        %p373 = scmp.lt.s32.totalorder %s372, 79
        %s374 = scalar_select %p373, %s372, 79
        %p375 = scmp.lt.s32.totalorder %s20, 0
        %s376 = scalar_select %p375, %s20, 0
        %s377 = sadd.s32 %s376, %s374
        %s378 = smul.addr %s377, 4
        %s379 = scalar_lea.vmem %s1, %s378
        %p380 = pneg %p84
        %p381 = pneg %p81
        %p382 = scmp.lt.s32.totalorder %s20, 0
        %s383 = scalar_select %p382, %s20, 0
        %s384 = scalar_lea.vmem %s2, %s383
        %p385 = pneg %p110
        %p386 = pneg %p107
        %p387 = pneg %p138
        %p388 = pneg %p135
        %s389 = smul.u32 32, %s19
        %p390 = scmp.lt.s32.totalorder %s389, 63
        %s391 = scalar_select %p390, %s389, 63
        %p392 = scmp.lt.s32.totalorder %s20, 0
        %s393 = scalar_select %p392, %s20, 0
        %s394 = sadd.s32 %s393, %s391
        %s395 = smul.addr %s394, 4
        %s396 = scalar_lea.vmem %s3, %s395
        %s397 = smul.u32 32, %s19
        %s398 = smul.u32 16, %s21
        %p399 = scmp.lt.s32.totalorder %s398, 79
        %s400 = scalar_select %p399, %s398, 79
        %p401 = scmp.lt.s32.totalorder %s20, 0
        %s402 = scalar_select %p401, %s20, 0
        %s403 = sadd.s32 %s402, %s400
        %s404 = smul.addr %s403, 4
        %s405 = scalar_lea.vmem %s1, %s404
        %s406 = smul.u32 16, %s21
        %p407 = scmp.lt.s32.totalorder %s20, 0
        %s408 = scalar_select %p407, %s20, 0
        %s409 = scalar_lea.vmem %s2, %s408
        %s410 = smul.u32 32, %s19
        %p411 = scmp.lt.s32.totalorder %s410, 63
        %s412 = scalar_select %p411, %s410, 63
        %p413 = scmp.lt.s32.totalorder %s20, 0
        %s414 = scalar_select %p413, %s20, 0
        %s415 = sadd.s32 %s414, %s412
        %s416 = smul.addr %s415, 4
        %s417 = scalar_lea.vmem %s3, %s416
        %s418 = smul.u32 32, %s19
        %p420 = scmp.eq.s32.totalorder %s21, 0
        // Predicated region
        $region74: #{unet_forward.10} parent=68 // pred_check
          %p421 = pneg %p420
        $region75: #{unet_forward.10} parent=68 // pred_check_branch
          %423 = sbr.rel (%p421) target = $region77
        $region76: #{unet_forward.10} parent=68 // pred_region
          %424 = vst [vmem:[#allocation2] sm:$0xff] 0.0
          %425 = vst [vmem:[#allocation2 + $0x8] sm:$0xff] 0.0
          %426 = vst [vmem:[#allocation2 + $0x10] sm:$0xff] 0.0
          %427 = vst [vmem:[#allocation2 + $0x18] sm:$0xff] 0.0
          %428 = vst [vmem:[#allocation2 + $0x20] sm:$0xff] 0.0
          %429 = vst [vmem:[#allocation2 + $0x28] sm:$0xff] 0.0
          %430 = vst [vmem:[#allocation2 + $0x30] sm:$0xff] 0.0
          %431 = vst [vmem:[#allocation2 + $0x38] sm:$0xff] 0.0
          %432 = vst [vmem:[#allocation2 + $0x40] sm:$0xff] 0.0
          %433 = vst [vmem:[#allocation2 + $0x48] sm:$0xff] 0.0
          %434 = vst [vmem:[#allocation2 + $0x50] sm:$0xff] 0.0
          %435 = vst [vmem:[#allocation2 + $0x58] sm:$0xff] 0.0
          %436 = vst [vmem:[#allocation2 + $0x60] sm:$0xff] 0.0
          %437 = vst [vmem:[#allocation2 + $0x68] sm:$0xff] 0.0
          %438 = vst [vmem:[#allocation2 + $0x70] sm:$0xff] 0.0
          %439 = vst [vmem:[#allocation2 + $0x78] sm:$0xff] 0.0
          %440 = vst [vmem:[#allocation2 + $0x80] sm:$0xff] 0.0
          %441 = vst [vmem:[#allocation2 + $0x88] sm:$0xff] 0.0
          %442 = vst [vmem:[#allocation2 + $0x90] sm:$0xff] 0.0
          %443 = vst [vmem:[#allocation2 + $0x98] sm:$0xff] 0.0
          %444 = vst [vmem:[#allocation2 + $0xa0] sm:$0xff] 0.0
          %445 = vst [vmem:[#allocation2 + $0xa8] sm:$0xff] 0.0
          %446 = vst [vmem:[#allocation2 + $0xb0] sm:$0xff] 0.0
          %447 = vst [vmem:[#allocation2 + $0xb8] sm:$0xff] 0.0
          %448 = vst [vmem:[#allocation2 + $0xc0] sm:$0xff] 0.0
          %449 = vst [vmem:[#allocation2 + $0xc8] sm:$0xff] 0.0
          %450 = vst [vmem:[#allocation2 + $0xd0] sm:$0xff] 0.0
          %451 = vst [vmem:[#allocation2 + $0xd8] sm:$0xff] 0.0
          %452 = vst [vmem:[#allocation2 + $0xe0] sm:$0xff] 0.0
          %453 = vst [vmem:[#allocation2 + $0xe8] sm:$0xff] 0.0
          %454 = vst [vmem:[#allocation2 + $0xf0] sm:$0xff] 0.0
          %455 = vst [vmem:[#allocation2 + $0xf8] sm:$0xff] 0.0
        $region77: #{unet_forward.10} parent=68 // pred_fallthru
          _
        %v456 = vld [vmem:[#allocation2] sm:$0xff]
        %v457 = vld [vmem:[#allocation2 + $0x8] sm:$0xff]
        %v458 = vld [vmem:[#allocation2 + $0x10] sm:$0xff]
        %v459 = vld [vmem:[#allocation2 + $0x18] sm:$0xff]
        %v460 = vld [vmem:[#allocation2 + $0x20] sm:$0xff]
        %v461 = vld [vmem:[#allocation2 + $0x28] sm:$0xff]
        %v462 = vld [vmem:[#allocation2 + $0x30] sm:$0xff]
        %v463 = vld [vmem:[#allocation2 + $0x38] sm:$0xff]
        %v464 = vld [vmem:[#allocation2 + $0x40] sm:$0xff]
        %v465 = vld [vmem:[#allocation2 + $0x48] sm:$0xff]
        %v466 = vld [vmem:[#allocation2 + $0x50] sm:$0xff]
        %v467 = vld [vmem:[#allocation2 + $0x58] sm:$0xff]
        %v468 = vld [vmem:[#allocation2 + $0x60] sm:$0xff]
        %v469 = vld [vmem:[#allocation2 + $0x68] sm:$0xff]
        %v470 = vld [vmem:[#allocation2 + $0x70] sm:$0xff]
        %v471 = vld [vmem:[#allocation2 + $0x78] sm:$0xff]
        %v472 = vld [vmem:[#allocation2 + $0x80] sm:$0xff]
        %v473 = vld [vmem:[#allocation2 + $0x88] sm:$0xff]
        %v474 = vld [vmem:[#allocation2 + $0x90] sm:$0xff]
        %v475 = vld [vmem:[#allocation2 + $0x98] sm:$0xff]
        %v476 = vld [vmem:[#allocation2 + $0xa0] sm:$0xff]
        %v477 = vld [vmem:[#allocation2 + $0xa8] sm:$0xff]
        %v478 = vld [vmem:[#allocation2 + $0xb0] sm:$0xff]
        %v479 = vld [vmem:[#allocation2 + $0xb8] sm:$0xff]
        %v480 = vld [vmem:[#allocation2 + $0xc0] sm:$0xff]
        %v481 = vld [vmem:[#allocation2 + $0xc8] sm:$0xff]
        %v482 = vld [vmem:[#allocation2 + $0xd0] sm:$0xff]
        %v483 = vld [vmem:[#allocation2 + $0xd8] sm:$0xff]
        %v484 = vld [vmem:[#allocation2 + $0xe0] sm:$0xff]
        %v485 = vld [vmem:[#allocation2 + $0xe8] sm:$0xff]
        %v486 = vld [vmem:[#allocation2 + $0xf0] sm:$0xff]
        %v487 = vld [vmem:[#allocation2 + $0xf8] sm:$0xff]
        %v488 = vld [vmem:[%s362] sm:$0xf]
        %v489 = vld [vmem:[%s362 + $0x4] sm:$0xf]
        %v490 = vld [vmem:[%s362 + $0x8] sm:$0xf]
        %v491 = vld [vmem:[%s362 + $0xc] sm:$0xf]
        %v492 = vld [vmem:[%s362 + $0x10] sm:$0xf]
        %v493 = vld [vmem:[%s362 + $0x14] sm:$0xf]
        %v494 = vld [vmem:[%s362 + $0x18] sm:$0xf]
        %v495 = vld [vmem:[%s362 + $0x1c] sm:$0xf]
        %v496 = vld [vmem:[%s362 + $0x20] sm:$0xf]
        %v497 = vld [vmem:[%s362 + $0x24] sm:$0xf]
        %v498 = vld [vmem:[%s362 + $0x28] sm:$0xf]
        %v499 = vld [vmem:[%s362 + $0x2c] sm:$0xf]
        %v500 = vld [vmem:[%s362 + $0x30] sm:$0xf]
        %v501 = vld [vmem:[%s362 + $0x34] sm:$0xf]
        %v502 = vld [vmem:[%s362 + $0x38] sm:$0xf]
        %v503 = vld [vmem:[%s362 + $0x3c] sm:$0xf]
        %v504 = vld [vmem:[%s362 + $0x40] sm:$0xf]
        %v505 = vld [vmem:[%s362 + $0x44] sm:$0xf]
        %v506 = vld [vmem:[%s362 + $0x48] sm:$0xf]
        %v507 = vld [vmem:[%s362 + $0x4c] sm:$0xf]
        %v508 = vld [vmem:[%s362 + $0x50] sm:$0xf]
        %v509 = vld [vmem:[%s362 + $0x54] sm:$0xf]
        %v510 = vld [vmem:[%s362 + $0x58] sm:$0xf]
        %v511 = vld [vmem:[%s362 + $0x5c] sm:$0xf]
        %v512 = vld [vmem:[%s362 + $0x60] sm:$0xf]
        %v513 = vld [vmem:[%s362 + $0x64] sm:$0xf]
        %v514 = vld [vmem:[%s362 + $0x68] sm:$0xf]
        %v515 = vld [vmem:[%s362 + $0x6c] sm:$0xf]
        %v516 = vld [vmem:[%s362 + $0x70] sm:$0xf]
        %v517 = vld [vmem:[%s362 + $0x74] sm:$0xf]
        %v518 = vld [vmem:[%s362 + $0x78] sm:$0xf]
        %v519 = vld [vmem:[%s362 + $0x7c] sm:$0xf]
        %v520 = vld [vmem:[%s405] sm:$0xf]
        %v521 = vld [vmem:[%s405 + $0x4] sm:$0xf]
        %v522 = vld [vmem:[%s405 + $0x8] sm:$0xf]
        %v523 = vld [vmem:[%s405 + $0xc] sm:$0xf]
        %v524 = vld [vmem:[%s405 + $0x10] sm:$0xf]
        %v525 = vld [vmem:[%s405 + $0x14] sm:$0xf]
        %v526 = vld [vmem:[%s405 + $0x18] sm:$0xf]
        %v527 = vld [vmem:[%s405 + $0x1c] sm:$0xf]
        %v528 = vld [vmem:[%s405 + $0x20] sm:$0xf]
        %v529 = vld [vmem:[%s405 + $0x24] sm:$0xf]
        %v530 = vld [vmem:[%s405 + $0x28] sm:$0xf]
        %v531 = vld [vmem:[%s405 + $0x2c] sm:$0xf]
        %v532 = vld [vmem:[%s405 + $0x30] sm:$0xf]
        %v533 = vld [vmem:[%s405 + $0x34] sm:$0xf]
        %v534 = vld [vmem:[%s405 + $0x38] sm:$0xf]
        %v535 = vld [vmem:[%s405 + $0x3c] sm:$0xf]
        %v568 = vunpack.c.l.b16 %v488
        %v569 = vunpack.c.l.b16 %v489
        %v570 = vunpack.c.l.b16 %v490
        %v571 = vunpack.c.l.b16 %v491
        %v572 = vunpack.c.l.b16 %v492
        %v573 = vunpack.c.l.b16 %v493
        %v574 = vunpack.c.l.b16 %v494
        %v575 = vunpack.c.l.b16 %v495
        %v576 = vunpack.c.l.b16 %v496
        %v577 = vunpack.c.l.b16 %v497
        %v578 = vunpack.c.l.b16 %v498
        %v579 = vunpack.c.l.b16 %v499
        %v580 = vunpack.c.l.b16 %v500
        %v581 = vunpack.c.l.b16 %v501
        %v582 = vunpack.c.l.b16 %v502
        %v583 = vunpack.c.l.b16 %v503
        %v584 = vunpack.c.l.b16 %v504
        %v585 = vunpack.c.l.b16 %v505
        %v586 = vunpack.c.l.b16 %v506
        %v587 = vunpack.c.l.b16 %v507
        %v588 = vunpack.c.l.b16 %v508
        %v589 = vunpack.c.l.b16 %v509
        %v590 = vunpack.c.l.b16 %v510
        %v591 = vunpack.c.l.b16 %v511
        %v592 = vunpack.c.l.b16 %v512
        %v593 = vunpack.c.l.b16 %v513
        %v594 = vunpack.c.l.b16 %v514
        %v595 = vunpack.c.l.b16 %v515
        %v596 = vunpack.c.l.b16 %v516
        %v597 = vunpack.c.l.b16 %v517
        %v598 = vunpack.c.l.b16 %v518
        %v599 = vunpack.c.l.b16 %v519
        %v600 = vpack.c.b16 %v569, %v568
        %v601 = vpack.c.b16 %v571, %v570
        %v602 = vpack.c.b16 %v573, %v572
        %v603 = vpack.c.b16 %v575, %v574
        %v604 = vpack.c.b16 %v577, %v576
        %v605 = vpack.c.b16 %v579, %v578
        %v606 = vpack.c.b16 %v581, %v580
        %v607 = vpack.c.b16 %v583, %v582
        %v608 = vpack.c.b16 %v585, %v584
        %v609 = vpack.c.b16 %v587, %v586
        %v610 = vpack.c.b16 %v589, %v588
        %v611 = vpack.c.b16 %v591, %v590
        %v612 = vpack.c.b16 %v593, %v592
        %v613 = vpack.c.b16 %v595, %v594
        %v614 = vpack.c.b16 %v597, %v596
        %v615 = vpack.c.b16 %v599, %v598
        %v648 = vunpack.c.l.b16 %v520
        %v649 = vunpack.c.l.b16 %v521
        %v650 = vunpack.c.l.b16 %v522
        %v651 = vunpack.c.l.b16 %v523
        %v652 = vunpack.c.l.b16 %v524
        %v653 = vunpack.c.l.b16 %v525
        %v654 = vunpack.c.l.b16 %v526
        %v655 = vunpack.c.l.b16 %v527
        %v656 = vunpack.c.l.b16 %v528
        %v657 = vunpack.c.l.b16 %v529
        %v658 = vunpack.c.l.b16 %v530
        %v659 = vunpack.c.l.b16 %v531
        %v660 = vunpack.c.l.b16 %v532
        %v661 = vunpack.c.l.b16 %v533
        %v662 = vunpack.c.l.b16 %v534
        %v663 = vunpack.c.l.b16 %v535
        %v664 = vpack.c.b16 %v649, %v648
        %v665 = vpack.c.b16 %v651, %v650
        %v666 = vpack.c.b16 %v653, %v652
        %v667 = vpack.c.b16 %v655, %v654
        %v668 = vpack.c.b16 %v657, %v656
        %v669 = vpack.c.b16 %v659, %v658
        %v670 = vpack.c.b16 %v661, %v660
        %v671 = vpack.c.b16 %v663, %v662
        %680 = vmatprep.subr.bf16.mxu0 0
        %681 = vmatpush1.bf16.msra.mxu0 %v671
        %682 = vmatprep.subr.bf16.mxu0 0
        %683 = vmatpush1.bf16.msra.mxu0 %v670
        %684 = vmatprep.subr.bf16.mxu0 0
        %685 = vmatpush1.bf16.msra.mxu0 %v669
        %686 = vmatprep.subr.bf16.mxu0 0
        %687 = vmatpush1.bf16.msra.mxu0 %v668
        %688 = vmatprep.subr.bf16.mxu0 0
        %689 = vmatpush1.bf16.msra.mxu0 %v667
        %690 = vmatprep.subr.bf16.mxu0 0
        %691 = vmatpush1.bf16.msra.mxu0 %v666
        %692 = vmatprep.subr.bf16.mxu0 0
        %693 = vmatpush1.bf16.msra.mxu0 %v665
        %694 = vmatprep.subr.bf16.mxu0 0
        %695 = vmatpush1.bf16.msra.mxu0 %v664
        %696 = vmatprep.subr.bf16.mxu0 0
        %697 = vmatpush2.bf16.msra.mxu0 0
        %698 = vmatprep.subr.bf16.mxu0 0
        %699 = vmatpush2.bf16.msra.mxu0 0
        %700 = vmatprep.subr.bf16.mxu0 0
        %701 = vmatpush2.bf16.msra.mxu0 0
        %702 = vmatprep.subr.bf16.mxu0 0
        %703 = vmatpush2.bf16.msra.mxu0 0
        %704 = vmatprep.subr.bf16.mxu0 0
        %705 = vmatpush2.bf16.msra.mxu0 0
        %706 = vmatprep.subr.bf16.mxu0 0
        %707 = vmatpush2.bf16.msra.mxu0 0
        %708 = vmatprep.subr.bf16.mxu0 0
        %709 = vmatpush2.bf16.msra.mxu0 0
        %710 = vmatprep.subr.bf16.mxu0 0
        %711 = vmatpush2.bf16.msra.mxu0 0
        %712 = vmatprep.mubr.bf16.mxu0 0
        %713 = vmatmul.mubr.bf16.gmra.mxu0 %v600
        %v714 = vpop.f32.mrf.mxu0
        %v715 = vadd.f32 0.0, %v714
        %v716 = vpop.f32.mrf.mxu0
        %v717 = vpop.f32.mrf.mxu0
        %v718 = vadd.f32 0.0, %v717
        %v719 = vpop.f32.mrf.mxu0
        %720 = vmatprep.mubr.bf16.mxu0 0
        %721 = vmatmul.mubr.bf16.gmra.mxu0 %v601
        %v722 = vpop.f32.mrf.mxu0
        %v723 = vadd.f32 0.0, %v722
        %v724 = vpop.f32.mrf.mxu0
        %v725 = vpop.f32.mrf.mxu0
        %v726 = vadd.f32 0.0, %v725
        %v727 = vpop.f32.mrf.mxu0
        %728 = vmatprep.mubr.bf16.mxu0 0
        %729 = vmatmul.mubr.bf16.gmra.mxu0 %v602
        %v730 = vpop.f32.mrf.mxu0
        %v731 = vadd.f32 0.0, %v730
        %v732 = vpop.f32.mrf.mxu0
        %v733 = vpop.f32.mrf.mxu0
        %v734 = vadd.f32 0.0, %v733
        %v735 = vpop.f32.mrf.mxu0
        %736 = vmatprep.mubr.bf16.mxu0 0
        %737 = vmatmul.mubr.bf16.gmra.mxu0 %v603
        %v738 = vpop.f32.mrf.mxu0
        %v739 = vadd.f32 0.0, %v738
        %v740 = vpop.f32.mrf.mxu0
        %v741 = vpop.f32.mrf.mxu0
        %v742 = vadd.f32 0.0, %v741
        %v743 = vpop.f32.mrf.mxu0
        %744 = vmatprep.mubr.bf16.mxu0 0
        %745 = vmatmul.mubr.bf16.gmra.mxu0 %v604
        %v746 = vpop.f32.mrf.mxu0
        %v747 = vadd.f32 0.0, %v746
        %v748 = vpop.f32.mrf.mxu0
        %v749 = vpop.f32.mrf.mxu0
        %v750 = vadd.f32 0.0, %v749
        %v751 = vpop.f32.mrf.mxu0
        %752 = vmatprep.mubr.bf16.mxu0 0
        %753 = vmatmul.mubr.bf16.gmra.mxu0 %v605
        %v754 = vpop.f32.mrf.mxu0
        %v755 = vadd.f32 0.0, %v754
        %v756 = vpop.f32.mrf.mxu0
        %v757 = vpop.f32.mrf.mxu0
        %v758 = vadd.f32 0.0, %v757
        %v759 = vpop.f32.mrf.mxu0
        %760 = vmatprep.mubr.bf16.mxu0 0
        %761 = vmatmul.mubr.bf16.gmra.mxu0 %v606
        %v762 = vpop.f32.mrf.mxu0
        %v763 = vadd.f32 0.0, %v762
        %v764 = vpop.f32.mrf.mxu0
        %v765 = vpop.f32.mrf.mxu0
        %v766 = vadd.f32 0.0, %v765
        %v767 = vpop.f32.mrf.mxu0
        %768 = vmatprep.mubr.bf16.mxu0 0
        %769 = vmatmul.mubr.bf16.gmra.mxu0 %v607
        %v770 = vpop.f32.mrf.mxu0
        %v771 = vadd.f32 0.0, %v770
        %v772 = vpop.f32.mrf.mxu0
        %v773 = vpop.f32.mrf.mxu0
        %v774 = vadd.f32 0.0, %v773
        %v775 = vpop.f32.mrf.mxu0
        %776 = vmatprep.mubr.bf16.mxu0 0
        %777 = vmatmul.mubr.bf16.gmra.mxu0 %v608
        %v778 = vpop.f32.mrf.mxu0
        %v779 = vadd.f32 0.0, %v778
        %v780 = vpop.f32.mrf.mxu0
        %v781 = vpop.f32.mrf.mxu0
        %v782 = vadd.f32 0.0, %v781
        %v783 = vpop.f32.mrf.mxu0
        %784 = vmatprep.mubr.bf16.mxu0 0
        %785 = vmatmul.mubr.bf16.gmra.mxu0 %v609
        %v786 = vpop.f32.mrf.mxu0
        %v787 = vadd.f32 0.0, %v786
        %v788 = vpop.f32.mrf.mxu0
        %v789 = vpop.f32.mrf.mxu0
        %v790 = vadd.f32 0.0, %v789
        %v791 = vpop.f32.mrf.mxu0
        %792 = vmatprep.mubr.bf16.mxu0 0
        %793 = vmatmul.mubr.bf16.gmra.mxu0 %v610
        %v794 = vpop.f32.mrf.mxu0
        %v795 = vadd.f32 0.0, %v794
        %v796 = vpop.f32.mrf.mxu0
        %v797 = vpop.f32.mrf.mxu0
        %v798 = vadd.f32 0.0, %v797
        %v799 = vpop.f32.mrf.mxu0
        %800 = vmatprep.mubr.bf16.mxu0 0
        %801 = vmatmul.mubr.bf16.gmra.mxu0 %v611
        %v802 = vpop.f32.mrf.mxu0
        %v803 = vadd.f32 0.0, %v802
        %v804 = vpop.f32.mrf.mxu0
        %v805 = vpop.f32.mrf.mxu0
        %v806 = vadd.f32 0.0, %v805
        %v807 = vpop.f32.mrf.mxu0
        %808 = vmatprep.mubr.bf16.mxu0 0
        %809 = vmatmul.mubr.bf16.gmra.mxu0 %v612
        %v810 = vpop.f32.mrf.mxu0
        %v811 = vadd.f32 0.0, %v810
        %v812 = vpop.f32.mrf.mxu0
        %v813 = vpop.f32.mrf.mxu0
        %v814 = vadd.f32 0.0, %v813
        %v815 = vpop.f32.mrf.mxu0
        %816 = vmatprep.mubr.bf16.mxu0 0
        %817 = vmatmul.mubr.bf16.gmra.mxu0 %v613
        %v818 = vpop.f32.mrf.mxu0
        %v819 = vadd.f32 0.0, %v818
        %v820 = vpop.f32.mrf.mxu0
        %v821 = vpop.f32.mrf.mxu0
        %v822 = vadd.f32 0.0, %v821
        %v823 = vpop.f32.mrf.mxu0
        %824 = vmatprep.mubr.bf16.mxu0 0
        %825 = vmatmul.mubr.bf16.gmra.mxu0 %v614
        %v826 = vpop.f32.mrf.mxu0
        %v827 = vadd.f32 0.0, %v826
        %v828 = vpop.f32.mrf.mxu0
        %v829 = vpop.f32.mrf.mxu0
        %v830 = vadd.f32 0.0, %v829
        %v831 = vpop.f32.mrf.mxu0
        %832 = vmatprep.mubr.bf16.mxu0 0
        %833 = vmatmul.mubr.bf16.gmra.mxu0 %v615
        %v834 = vpop.f32.mrf.mxu0
        %v835 = vadd.f32 0.0, %v834
        %v836 = vpop.f32.mrf.mxu0
        %v837 = vpop.f32.mrf.mxu0
        %v838 = vadd.f32 0.0, %v837
        %v839 = vpop.f32.mrf.mxu0
        %840 = vdwg.mxu0
        %v841 = vadd.f32 %v456, %v715
        %v842 = vadd.f32 %v457, %v718
        %v843 = vadd.f32 %v458, %v723
        %v844 = vadd.f32 %v459, %v726
        %v845 = vadd.f32 %v460, %v731
        %v846 = vadd.f32 %v461, %v734
        %v847 = vadd.f32 %v462, %v739
        %v848 = vadd.f32 %v463, %v742
        %v849 = vadd.f32 %v464, %v747
        %v850 = vadd.f32 %v465, %v750
        %v851 = vadd.f32 %v466, %v755
        %v852 = vadd.f32 %v467, %v758
        %v853 = vadd.f32 %v468, %v763
        %v854 = vadd.f32 %v469, %v766
        %v855 = vadd.f32 %v470, %v771
        %v856 = vadd.f32 %v471, %v774
        %v857 = vadd.f32 %v472, %v779
        %v858 = vadd.f32 %v473, %v782
        %v859 = vadd.f32 %v474, %v787
        %v860 = vadd.f32 %v475, %v790
        %v861 = vadd.f32 %v476, %v795
        %v862 = vadd.f32 %v477, %v798
        %v863 = vadd.f32 %v478, %v803
        %v864 = vadd.f32 %v479, %v806
        %v865 = vadd.f32 %v480, %v811
        %v866 = vadd.f32 %v481, %v814
        %v867 = vadd.f32 %v482, %v819
        %v868 = vadd.f32 %v483, %v822
        %v869 = vadd.f32 %v484, %v827
        %v870 = vadd.f32 %v485, %v830
        %v871 = vadd.f32 %v486, %v835
        %v872 = vadd.f32 %v487, %v838
        %873 = vst [vmem:[#allocation2] sm:$0xff] %v841
        %874 = vst [vmem:[#allocation2 + $0x8] sm:$0xff] %v842
        %875 = vst [vmem:[#allocation2 + $0x10] sm:$0xff] %v843
        %876 = vst [vmem:[#allocation2 + $0x18] sm:$0xff] %v844
        %877 = vst [vmem:[#allocation2 + $0x20] sm:$0xff] %v845
        %878 = vst [vmem:[#allocation2 + $0x28] sm:$0xff] %v846
        %879 = vst [vmem:[#allocation2 + $0x30] sm:$0xff] %v847
        %880 = vst [vmem:[#allocation2 + $0x38] sm:$0xff] %v848
        %881 = vst [vmem:[#allocation2 + $0x40] sm:$0xff] %v849
        %882 = vst [vmem:[#allocation2 + $0x48] sm:$0xff] %v850
        %883 = vst [vmem:[#allocation2 + $0x50] sm:$0xff] %v851
        %884 = vst [vmem:[#allocation2 + $0x58] sm:$0xff] %v852
        %885 = vst [vmem:[#allocation2 + $0x60] sm:$0xff] %v853
        %886 = vst [vmem:[#allocation2 + $0x68] sm:$0xff] %v854
        %887 = vst [vmem:[#allocation2 + $0x70] sm:$0xff] %v855
        %888 = vst [vmem:[#allocation2 + $0x78] sm:$0xff] %v856
        %889 = vst [vmem:[#allocation2 + $0x80] sm:$0xff] %v857
        %890 = vst [vmem:[#allocation2 + $0x88] sm:$0xff] %v858
        %891 = vst [vmem:[#allocation2 + $0x90] sm:$0xff] %v859
        %892 = vst [vmem:[#allocation2 + $0x98] sm:$0xff] %v860
        %893 = vst [vmem:[#allocation2 + $0xa0] sm:$0xff] %v861
        %894 = vst [vmem:[#allocation2 + $0xa8] sm:$0xff] %v862
        %895 = vst [vmem:[#allocation2 + $0xb0] sm:$0xff] %v863
        %896 = vst [vmem:[#allocation2 + $0xb8] sm:$0xff] %v864
        %897 = vst [vmem:[#allocation2 + $0xc0] sm:$0xff] %v865
        %898 = vst [vmem:[#allocation2 + $0xc8] sm:$0xff] %v866
        %899 = vst [vmem:[#allocation2 + $0xd0] sm:$0xff] %v867
        %900 = vst [vmem:[#allocation2 + $0xd8] sm:$0xff] %v868
        %901 = vst [vmem:[#allocation2 + $0xe0] sm:$0xff] %v869
        %902 = vst [vmem:[#allocation2 + $0xe8] sm:$0xff] %v870
        %903 = vst [vmem:[#allocation2 + $0xf0] sm:$0xff] %v871
        %904 = vst [vmem:[#allocation2 + $0xf8] sm:$0xff] %v872
        %p905 = scmp.eq.s32.totalorder %s21, 4
        // Predicated region
        $region78: #{unet_forward.10} parent=68 // pred_check
          %p906 = pneg %p905
        $region79: #{unet_forward.10} parent=68 // pred_check_branch
          %908 = sbr.rel (%p906) target = $region81
        $region80: #{unet_forward.10} parent=68 // pred_region
          %v909 = vld [vmem:[#allocation2] sm:$0xff]
          %v910 = vld [vmem:[#allocation2 + $0x8] sm:$0xff]
          %v911 = vld [vmem:[#allocation2 + $0x10] sm:$0xff]
          %v912 = vld [vmem:[#allocation2 + $0x18] sm:$0xff]
          %v913 = vld [vmem:[#allocation2 + $0x20] sm:$0xff]
          %v914 = vld [vmem:[#allocation2 + $0x28] sm:$0xff]
          %v915 = vld [vmem:[#allocation2 + $0x30] sm:$0xff]
          %v916 = vld [vmem:[#allocation2 + $0x38] sm:$0xff]
          %v917 = vld [vmem:[#allocation2 + $0x40] sm:$0xff]
          %v918 = vld [vmem:[#allocation2 + $0x48] sm:$0xff]
          %v919 = vld [vmem:[#allocation2 + $0x50] sm:$0xff]
          %v920 = vld [vmem:[#allocation2 + $0x58] sm:$0xff]
          %v921 = vld [vmem:[#allocation2 + $0x60] sm:$0xff]
          %v922 = vld [vmem:[#allocation2 + $0x68] sm:$0xff]
          %v923 = vld [vmem:[#allocation2 + $0x70] sm:$0xff]
          %v924 = vld [vmem:[#allocation2 + $0x78] sm:$0xff]
          %v925 = vld [vmem:[#allocation2 + $0x80] sm:$0xff]
          %v926 = vld [vmem:[#allocation2 + $0x88] sm:$0xff]
          %v927 = vld [vmem:[#allocation2 + $0x90] sm:$0xff]
          %v928 = vld [vmem:[#allocation2 + $0x98] sm:$0xff]
          %v929 = vld [vmem:[#allocation2 + $0xa0] sm:$0xff]
          %v930 = vld [vmem:[#allocation2 + $0xa8] sm:$0xff]
          %v931 = vld [vmem:[#allocation2 + $0xb0] sm:$0xff]
          %v932 = vld [vmem:[#allocation2 + $0xb8] sm:$0xff]
          %v933 = vld [vmem:[#allocation2 + $0xc0] sm:$0xff]
          %v934 = vld [vmem:[#allocation2 + $0xc8] sm:$0xff]
          %v935 = vld [vmem:[#allocation2 + $0xd0] sm:$0xff]
          %v936 = vld [vmem:[#allocation2 + $0xd8] sm:$0xff]
          %v937 = vld [vmem:[#allocation2 + $0xe0] sm:$0xff]
          %v938 = vld [vmem:[#allocation2 + $0xe8] sm:$0xff]
          %v939 = vld [vmem:[#allocation2 + $0xf0] sm:$0xff]
          %v940 = vld [vmem:[#allocation2 + $0xf8] sm:$0xff]
          %v941 = vld [vmem:[%s409] sm:$0x1]
          %v943 = vlaneseq
          %v944 = vshrl.u32 %v943, 7
          %v945 = vsub.s32 0, %v944
          %v946 = vrot.slane %v941, %v945
          %v948 = vadd.f32 %v909, %v946
          %v949 = vadd.f32 %v910, %v946
          %v950 = vadd.f32 %v911, %v946
          %v951 = vadd.f32 %v912, %v946
          %v952 = vadd.f32 %v913, %v946
          %v953 = vadd.f32 %v914, %v946
          %v954 = vadd.f32 %v915, %v946
          %v955 = vadd.f32 %v916, %v946
          %v956 = vadd.f32 %v917, %v946
          %v957 = vadd.f32 %v918, %v946
          %v958 = vadd.f32 %v919, %v946
          %v959 = vadd.f32 %v920, %v946
          %v960 = vadd.f32 %v921, %v946
          %v961 = vadd.f32 %v922, %v946
          %v962 = vadd.f32 %v923, %v946
          %v963 = vadd.f32 %v924, %v946
          %v964 = vadd.f32 %v925, %v946
          %v965 = vadd.f32 %v926, %v946
          %v966 = vadd.f32 %v927, %v946
          %v967 = vadd.f32 %v928, %v946
          %v968 = vadd.f32 %v929, %v946
          %v969 = vadd.f32 %v930, %v946
          %v970 = vadd.f32 %v931, %v946
          %v971 = vadd.f32 %v932, %v946
          %v972 = vadd.f32 %v933, %v946
          %v973 = vadd.f32 %v934, %v946
          %v974 = vadd.f32 %v935, %v946
          %v975 = vadd.f32 %v936, %v946
          %v976 = vadd.f32 %v937, %v946
          %v977 = vadd.f32 %v938, %v946
          %v978 = vadd.f32 %v939, %v946
          %v979 = vadd.f32 %v940, %v946
          %v980 = vmax.f32 %v948, 0.0
          %v981 = vmax.f32 %v949, 0.0
          %v982 = vmax.f32 %v950, 0.0
          %v983 = vmax.f32 %v951, 0.0
          %v984 = vmax.f32 %v952, 0.0
          %v985 = vmax.f32 %v953, 0.0
          %v986 = vmax.f32 %v954, 0.0
          %v987 = vmax.f32 %v955, 0.0
          %v988 = vmax.f32 %v956, 0.0
          %v989 = vmax.f32 %v957, 0.0
          %v990 = vmax.f32 %v958, 0.0
          %v991 = vmax.f32 %v959, 0.0
          %v992 = vmax.f32 %v960, 0.0
          %v993 = vmax.f32 %v961, 0.0
          %v994 = vmax.f32 %v962, 0.0
          %v995 = vmax.f32 %v963, 0.0
          %v996 = vmax.f32 %v964, 0.0
          %v997 = vmax.f32 %v965, 0.0
          %v998 = vmax.f32 %v966, 0.0
          %v999 = vmax.f32 %v967, 0.0
          %v1000 = vmax.f32 %v968, 0.0
          %v1001 = vmax.f32 %v969, 0.0
          %v1002 = vmax.f32 %v970, 0.0
          %v1003 = vmax.f32 %v971, 0.0
          %v1004 = vmax.f32 %v972, 0.0
          %v1005 = vmax.f32 %v973, 0.0
          %v1006 = vmax.f32 %v974, 0.0
          %v1007 = vmax.f32 %v975, 0.0
          %v1008 = vmax.f32 %v976, 0.0
          %v1009 = vmax.f32 %v977, 0.0
          %v1010 = vmax.f32 %v978, 0.0
          %v1011 = vmax.f32 %v979, 0.0
          %v1012 = vpack.c.bf16 %v981, %v980
          %v1013 = vpack.c.bf16 %v983, %v982
          %v1014 = vpack.c.bf16 %v985, %v984
          %v1015 = vpack.c.bf16 %v987, %v986
          %v1016 = vpack.c.bf16 %v989, %v988
          %v1017 = vpack.c.bf16 %v991, %v990
          %v1018 = vpack.c.bf16 %v993, %v992
          %v1019 = vpack.c.bf16 %v995, %v994
          %v1020 = vpack.c.bf16 %v997, %v996
          %v1021 = vpack.c.bf16 %v999, %v998
          %v1022 = vpack.c.bf16 %v1001, %v1000
          %v1023 = vpack.c.bf16 %v1003, %v1002
          %v1024 = vpack.c.bf16 %v1005, %v1004
          %v1025 = vpack.c.bf16 %v1007, %v1006
          %v1026 = vpack.c.bf16 %v1009, %v1008
          %v1027 = vpack.c.bf16 %v1011, %v1010
          %v1044 = vunpack.c.l.b16 %v1012
          %v1045 = vunpack.c.h.b16 %v1012
          %v1046 = vunpack.c.l.b16 %v1013
          %v1047 = vunpack.c.h.b16 %v1013
          %v1048 = vunpack.c.l.b16 %v1014
          %v1049 = vunpack.c.h.b16 %v1014
          %v1050 = vunpack.c.l.b16 %v1015
          %v1051 = vunpack.c.h.b16 %v1015
          %v1052 = vunpack.c.l.b16 %v1016
          %v1053 = vunpack.c.h.b16 %v1016
          %v1054 = vunpack.c.l.b16 %v1017
          %v1055 = vunpack.c.h.b16 %v1017
          %v1056 = vunpack.c.l.b16 %v1018
          %v1057 = vunpack.c.h.b16 %v1018
          %v1058 = vunpack.c.l.b16 %v1019
          %v1059 = vunpack.c.h.b16 %v1019
          %v1060 = vunpack.c.l.b16 %v1020
          %v1061 = vunpack.c.h.b16 %v1020
          %v1062 = vunpack.c.l.b16 %v1021
          %v1063 = vunpack.c.h.b16 %v1021
          %v1064 = vunpack.c.l.b16 %v1022
          %v1065 = vunpack.c.h.b16 %v1022
          %v1066 = vunpack.c.l.b16 %v1023
          %v1067 = vunpack.c.h.b16 %v1023
          %v1068 = vunpack.c.l.b16 %v1024
          %v1069 = vunpack.c.h.b16 %v1024
          %v1070 = vunpack.c.l.b16 %v1025
          %v1071 = vunpack.c.h.b16 %v1025
          %v1072 = vunpack.c.l.b16 %v1026
          %v1073 = vunpack.c.h.b16 %v1026
          %v1074 = vunpack.c.l.b16 %v1027
          %v1075 = vunpack.c.h.b16 %v1027
          %v1076 = vpack.c.b16 %v1044, %v1044
          %v1077 = vpack.c.b16 %v1045, %v1045
          %v1078 = vpack.c.b16 %v1046, %v1046
          %v1079 = vpack.c.b16 %v1047, %v1047
          %v1080 = vpack.c.b16 %v1048, %v1048
          %v1081 = vpack.c.b16 %v1049, %v1049
          %v1082 = vpack.c.b16 %v1050, %v1050
          %v1083 = vpack.c.b16 %v1051, %v1051
          %v1084 = vpack.c.b16 %v1052, %v1052
          %v1085 = vpack.c.b16 %v1053, %v1053
          %v1086 = vpack.c.b16 %v1054, %v1054
          %v1087 = vpack.c.b16 %v1055, %v1055
          %v1088 = vpack.c.b16 %v1056, %v1056
          %v1089 = vpack.c.b16 %v1057, %v1057
          %v1090 = vpack.c.b16 %v1058, %v1058
          %v1091 = vpack.c.b16 %v1059, %v1059
          %v1092 = vpack.c.b16 %v1060, %v1060
          %v1093 = vpack.c.b16 %v1061, %v1061
          %v1094 = vpack.c.b16 %v1062, %v1062
          %v1095 = vpack.c.b16 %v1063, %v1063
          %v1096 = vpack.c.b16 %v1064, %v1064
          %v1097 = vpack.c.b16 %v1065, %v1065
          %v1098 = vpack.c.b16 %v1066, %v1066
          %v1099 = vpack.c.b16 %v1067, %v1067
          %v1100 = vpack.c.b16 %v1068, %v1068
          %v1101 = vpack.c.b16 %v1069, %v1069
          %v1102 = vpack.c.b16 %v1070, %v1070
          %v1103 = vpack.c.b16 %v1071, %v1071
          %v1104 = vpack.c.b16 %v1072, %v1072
          %v1105 = vpack.c.b16 %v1073, %v1073
          %v1106 = vpack.c.b16 %v1074, %v1074
          %v1107 = vpack.c.b16 %v1075, %v1075
          %1140 = vst [vmem:[%s417] sm:$0xf] %v1076
          %1141 = vst [vmem:[%s417 + $0x4] sm:$0xf] %v1077
          %1142 = vst [vmem:[%s417 + $0x8] sm:$0xf] %v1078
          %1143 = vst [vmem:[%s417 + $0xc] sm:$0xf] %v1079
          %1144 = vst [vmem:[%s417 + $0x10] sm:$0xf] %v1080
          %1145 = vst [vmem:[%s417 + $0x14] sm:$0xf] %v1081
          %1146 = vst [vmem:[%s417 + $0x18] sm:$0xf] %v1082
          %1147 = vst [vmem:[%s417 + $0x1c] sm:$0xf] %v1083
          %1148 = vst [vmem:[%s417 + $0x20] sm:$0xf] %v1084
          %1149 = vst [vmem:[%s417 + $0x24] sm:$0xf] %v1085
          %1150 = vst [vmem:[%s417 + $0x28] sm:$0xf] %v1086
          %1151 = vst [vmem:[%s417 + $0x2c] sm:$0xf] %v1087
          %1152 = vst [vmem:[%s417 + $0x30] sm:$0xf] %v1088
          %1153 = vst [vmem:[%s417 + $0x34] sm:$0xf] %v1089
          %1154 = vst [vmem:[%s417 + $0x38] sm:$0xf] %v1090
          %1155 = vst [vmem:[%s417 + $0x3c] sm:$0xf] %v1091
          %1156 = vst [vmem:[%s417 + $0x40] sm:$0xf] %v1092
          %1157 = vst [vmem:[%s417 + $0x44] sm:$0xf] %v1093
          %1158 = vst [vmem:[%s417 + $0x48] sm:$0xf] %v1094
          %1159 = vst [vmem:[%s417 + $0x4c] sm:$0xf] %v1095
          %1160 = vst [vmem:[%s417 + $0x50] sm:$0xf] %v1096
          %1161 = vst [vmem:[%s417 + $0x54] sm:$0xf] %v1097
          %1162 = vst [vmem:[%s417 + $0x58] sm:$0xf] %v1098
          %1163 = vst [vmem:[%s417 + $0x5c] sm:$0xf] %v1099
          %1164 = vst [vmem:[%s417 + $0x60] sm:$0xf] %v1100
          %1165 = vst [vmem:[%s417 + $0x64] sm:$0xf] %v1101
          %1166 = vst [vmem:[%s417 + $0x68] sm:$0xf] %v1102
          %1167 = vst [vmem:[%s417 + $0x6c] sm:$0xf] %v1103
          %1168 = vst [vmem:[%s417 + $0x70] sm:$0xf] %v1104
          %1169 = vst [vmem:[%s417 + $0x74] sm:$0xf] %v1105
          %1170 = vst [vmem:[%s417 + $0x78] sm:$0xf] %v1106
          %1171 = vst [vmem:[%s417 + $0x7c] sm:$0xf] %v1107
        $region81: #{unet_forward.10} parent=68 // pred_fallthru
          _
        %s1172 = smul.u32 32, %s19
        %p1173 = scmp.lt.s32.totalorder %s1172, 63
        %s1174 = scalar_select %p1173, %s1172, 63
        %p1175 = scmp.lt.s32.totalorder %s20, 0
        %s1176 = scalar_select %p1175, %s20, 0
        %s1177 = sadd.s32 %s1176, %s1174
        %s1178 = smul.addr %s1177, 4
        %s1179 = scalar_lea.vmem %s3, %s1178
        // Predicated region
        $region82: #{unet_forward.10} parent=68 // pred_check
          %p1180 = pneg %p135
        $region83: #{unet_forward.10} parent=68 // pred_check_branch
          %1182 = sbr.rel (%p1180) target = $region85
        $region84: #{unet_forward.10} parent=68 // pred_region
          %s1183 = smul.u32 32, %s19
        $region85: #{unet_forward.10} parent=68 // pred_fallthru
          _
      $region69: #{unet_forward.10} parent=5 // pred_fallthru
        _
      %p1184 = scmp.le.s32.totalorder 2, %s9
      // Predicated region
      $region86: #{unet_forward.10} parent=5 // pred_check
        %p1185 = pneg %p1184
      $region87: #{unet_forward.10} parent=5 // pred_check_branch
        %1187 = sbr.rel (%p1185) target = $region89
      $region88: #{unet_forward.10} parent=5 // pred_region
        %s1188 = ssub.s32 %s9, 2
        // Predicated region
        $region90: #{unet_forward.10} parent=88 // pred_check
          %p1189 = pneg %p141
        $region91: #{unet_forward.10} parent=88 // pred_check_branch
          %1191 = sbr.rel (%p1189) target = $region93
        $region92: #{unet_forward.10} parent=88 // pred_region
          %s1192 = smul.u32 32, %s22
          %p1193 = scmp.lt.s32.totalorder %s1192, 63
          %s1194 = scalar_select %p1193, %s1192, 63
          %p1195 = scmp.lt.s32.totalorder %s23, 0
          %s1196 = scalar_select %p1195, %s23, 0
          %s1197 = sadd.s32 %s1196, %s1194
          %s1198 = smul.addr %s1197, 4
          %s1199 = scalar_lea.vmem %s3, %s1198
        $region93: #{unet_forward.10} parent=88 // pred_fallthru
          _
      $region89: #{unet_forward.10} parent=5 // pred_fallthru
        _
    $region6: #{unet_forward.10} parent=1 // loop_footer
      %s13 = sadd.s32 1, %s9
    $region7: #{unet_forward.10} parent=1 // loop_footer_branch
      %8 = sbr.rel target = $region3
    $region8: #{unet_forward.10} parent=1 // loop_exit
      _

// kernel: unet_forward.11
$region0: #{unet_forward.11}
  #allocation0 [shape = 'u32[]', space=smem, size = 0x4, offset = 0x4, fixed_abs, tag = 'smem constant byte address 0x4 - core index']
  #allocation1 [shape = 'u32[144,128]{1,0:T(1,128)}', space=vmem, size = 0x12000, scoped, tag = 'internal scratch']
  #allocation2 [shape = 'f32[128,128]{1,0:T(8,128)}', space=vmem, size = 0x10000, scoped, tag = 'scratch operand']
  %s0 = inlined_call_operand.vmem [shape: bf16[128,640], index: 0, kind: input, shape index: {}]
  %s1 = inlined_call_operand.vmem [shape: bf16[640,128], index: 1, kind: input, shape index: {}]
  %s2 = inlined_call_operand.vmem [shape: f32[1,128], index: 2, kind: input, shape index: {}]
  %s3 = inlined_call_operand.vmem [shape: bf16[128,128], index: 3, kind: output, shape index: {}]
  %s4 = sld [smem:[#allocation0]]
  $region94: #{unet_forward.11} parent=0
    _
  %s6 = ssub.s32 1, %s4
  %s7 = scalar_select 0, %s6, %s4
  $region1: #{unet_forward.11} parent=0
    #allocation3 [shape = 'u8[65536]{0}', space=vmem, size = 0x10000, scoped, tag = 'input window, operand 0']
    loop: start=0, step=1, limit=7
    $region2: #{unet_forward.11} parent=1 // loop_pre_header
      _
    $region3: #{unet_forward.11} parent=1 // loop_header
      %s9 = sphi 0, %s13
      %p10 = scmp.ge.s32.totalorder %s9, 7
      %s16 = sphi 0, %s35
      %s17 = sphi 0, %s31
      %s18 = sphi 0, %s27
      %s19 = sphi 0, %s16
      %s20 = sphi 0, %s17
      %s21 = sphi 0, %s18
      %s22 = sphi 0, %s19
      %s23 = sphi 0, %s20
      %s24 = sphi 0, %s21
      %s40 = sphi 0, %s42
      %s43 = sphi 0, %s40
      %s44 = sphi 0, %s43
      %s60 = sphi 0, %s44
      %s68 = sphi 0, %s70
      %s71 = sphi 0, %s68
      %s72 = sphi 0, %s71
      %s88 = sphi 0, %s72
      %s94 = sphi 0, %s96
      %s97 = sphi 0, %s94
      %s98 = sphi 0, %s97
      %s114 = sphi 0, %s98
      %s122 = sphi 0, %s124
      %s125 = sphi 0, %s122
      %s126 = sphi 0, %s125
      %s142 = sphi 0, %s126
    $region4: #{unet_forward.11} parent=1 // loop_header_branch
      %12 = sbr.rel (%p10) target = $region8
    $region5: #{unet_forward.11} parent=1 // loop_body
      %s14 = ssub.s32 %s9, 1
      %s15 = ssub.s32 %s9, 2
      %s25 = sadd.s32 1, %s18
      %p26 = scmp.ge.s32.totalorder %s25, 5
      %s27 = scalar_select %p26, 0, %s25
      %s28 = sadd.s32 1, %s17
      %s29 = scalar_select %p26, %s28, %s17
      %p30 = scmp.ge.s32.totalorder %s29, 1
      %s31 = scalar_select %p30, 0, %s29
      %s32 = sadd.s32 1, %s16
      %s33 = scalar_select %p30, %s32, %s16
      %p34 = scmp.ge.s32.totalorder %s33, 1
      %s35 = scalar_select %p34, 0, %s33
      %s36 = ssub.s32 %s16, %s35
      %s37 = ssub.s32 %s18, %s27
      %s38 = sor.u32 %s36, %s37
      %p39 = scmp.eq.s32.totalorder %s38, 0
      %s41 = sadd.s32 %s40, 1
      %s42 = scalar_select %p39, %s40, %s41
      %p45 = pneg %p39
      %p46 = scmp.eq.s32.totalorder %s9, 4
      %p47 = por %p45, %p46
      %p48 = scmp.ne.s32.totalorder %s40, %s43
      %p49 = scmp.eq.s32.totalorder %s9, 0
      %p50 = por %p48, %p49
      %p51 = scmp.ne.s32.totalorder %s40, %s43
      %p52 = scmp.eq.s32.totalorder %s14, 4
      %p53 = por %p51, %p52
      %p54 = scmp.ne.s32.totalorder %s43, %s44
      %p55 = scmp.eq.s32.totalorder %s14, 0
      %p56 = por %p54, %p55
      %p57 = scmp.ne.s32.totalorder %s43, %s44
      %p58 = scmp.eq.s32.totalorder %s15, 4
      %p59 = por %p57, %p58
      %p61 = scmp.ne.s32.totalorder %s44, %s60
      %p62 = scmp.eq.s32.totalorder %s15, 0
      %p63 = por %p61, %p62
      %s64 = ssub.s32 %s18, %s27
      %s65 = ssub.s32 %s17, %s31
      %s66 = sor.u32 %s64, %s65
      %p67 = scmp.eq.s32.totalorder %s66, 0
      %s69 = sadd.s32 %s68, 1
      %s70 = scalar_select %p67, %s68, %s69
      %p73 = pneg %p67
      %p74 = scmp.eq.s32.totalorder %s9, 4
      %p75 = por %p73, %p74
      %p76 = scmp.ne.s32.totalorder %s68, %s71
      %p77 = scmp.eq.s32.totalorder %s9, 0
      %p78 = por %p76, %p77
      %p79 = scmp.ne.s32.totalorder %s68, %s71
      %p80 = scmp.eq.s32.totalorder %s14, 4
      %p81 = por %p79, %p80
      %p82 = scmp.ne.s32.totalorder %s71, %s72
      %p83 = scmp.eq.s32.totalorder %s14, 0
      %p84 = por %p82, %p83
      %p85 = scmp.ne.s32.totalorder %s71, %s72
      %p86 = scmp.eq.s32.totalorder %s15, 4
      %p87 = por %p85, %p86
      %p89 = scmp.ne.s32.totalorder %s72, %s88
      %p90 = scmp.eq.s32.totalorder %s15, 0
      %p91 = por %p89, %p90
      %s92 = ssub.s32 %s17, %s31
      %p93 = scmp.eq.s32.totalorder %s92, 0
      %s95 = sadd.s32 %s94, 1
      %s96 = scalar_select %p93, %s94, %s95
      %p99 = pneg %p93
      %p100 = scmp.eq.s32.totalorder %s9, 4
      %p101 = por %p99, %p100
      %p102 = scmp.ne.s32.totalorder %s94, %s97
      %p103 = scmp.eq.s32.totalorder %s9, 0
      %p104 = por %p102, %p103
      %p105 = scmp.ne.s32.totalorder %s94, %s97
      %p106 = scmp.eq.s32.totalorder %s14, 4
      %p107 = por %p105, %p106
      %p108 = scmp.ne.s32.totalorder %s97, %s98
      %p109 = scmp.eq.s32.totalorder %s14, 0
      %p110 = por %p108, %p109
      %p111 = scmp.ne.s32.totalorder %s97, %s98
      %p112 = scmp.eq.s32.totalorder %s15, 4
      %p113 = por %p111, %p112
      %p115 = scmp.ne.s32.totalorder %s98, %s114
      %p116 = scmp.eq.s32.totalorder %s15, 0
      %p117 = por %p115, %p116
      %s118 = ssub.s32 %s16, %s35
      %s119 = ssub.s32 %s17, %s31
      %s120 = sor.u32 %s118, %s119
      %p121 = scmp.eq.s32.totalorder %s120, 0
      %s123 = sadd.s32 %s122, 1
      %s124 = scalar_select %p121, %s122, %s123
      %p127 = pneg %p121
      %p128 = scmp.eq.s32.totalorder %s9, 4
      %p129 = por %p127, %p128
      %p130 = scmp.ne.s32.totalorder %s122, %s125
      %p131 = scmp.eq.s32.totalorder %s9, 0
      %p132 = por %p130, %p131
      %p133 = scmp.ne.s32.totalorder %s122, %s125
      %p134 = scmp.eq.s32.totalorder %s14, 4
      %p135 = por %p133, %p134
      %p136 = scmp.ne.s32.totalorder %s125, %s126
      %p137 = scmp.eq.s32.totalorder %s14, 0
      %p138 = por %p136, %p137
      %p139 = scmp.ne.s32.totalorder %s125, %s126
      %p140 = scmp.eq.s32.totalorder %s15, 4
      %p141 = por %p139, %p140
      %p143 = scmp.ne.s32.totalorder %s126, %s142
      %p144 = scmp.eq.s32.totalorder %s15, 0
      %p145 = por %p143, %p144
      %p146 = scmp.le.s32.totalorder 1, %s9
      %p147 = scmp.lt.s32.totalorder %s9, 6
      %p148 = pnand %p146, %p147
      %p149 = pneg %p148
      // Predicated region
      $region9: #{unet_forward.11} parent=5 // pred_check
        _
      $region10: #{unet_forward.11} parent=5 // pred_check_branch
        %151 = sbr.rel (%p148) target = $region12
      $region11: #{unet_forward.11} parent=5 // pred_region
        %s152 = ssub.s32 %s9, 1
        // Predicated region
        $region13: #{unet_forward.11} parent=11 // pred_check
          %p153 = pneg %p110
        $region14: #{unet_forward.11} parent=11 // pred_check_branch
          %155 = sbr.rel (%p153) target = $region16
        $region15: #{unet_forward.11} parent=11 // pred_region
          %p156 = scmp.lt.s32.totalorder %s20, 0
          %s157 = scalar_select %p156, %s20, 0
          %s158 = scalar_lea.vmem %s2, %s157
        $region16: #{unet_forward.11} parent=11 // pred_fallthru
          _
      $region12: #{unet_forward.11} parent=5 // pred_fallthru
        _
      %p159 = scmp.lt.s32.totalorder %s9, 5
      // Predicated region
      $region17: #{unet_forward.11} parent=5 // pred_check
        %p160 = pneg %p159
      $region18: #{unet_forward.11} parent=5 // pred_check_branch
        %162 = sbr.rel (%p160) target = $region20
      $region19: #{unet_forward.11} parent=5 // pred_region
        // Predicated region
        $region21: #{unet_forward.11} parent=19 // pred_check
          %p163 = pneg %p50
        $region22: #{unet_forward.11} parent=19 // pred_check_branch
          %165 = sbr.rel (%p163) target = $region24
        $region23: #{unet_forward.11} parent=19 // pred_region
          %s166 = sand.u32 %s40, 1
          %s167 = sand.u32 %s40, 1
          %s168 = smul.addr %s167, 64
          %s169 = scalar_lea.vmem [#allocation3], %s168
          %s170 = smul.u32 16, %s16
          %s171 = smul.addr %s170, 5
          %s172 = sadd.s32 %s18, %s171
          %s173 = smul.addr %s172, 4
          %s174 = scalar_lea.vmem %s0, %s173
          // Predicated region
          $region25: #{unet_forward.11} parent=23 // pred_check
            _
          $region26: #{unet_forward.11} parent=23 // pred_check_branch
            %176 = sbr.rel (0) target = $region28
          $region27: #{unet_forward.11} parent=23 // pred_region
            // Predicated region
            $region29: #{unet_forward.11} parent=27 // pred_check
              _
            $region30: #{unet_forward.11} parent=27 // pred_check_branch
              %178 = sbr.rel target = $region32
            $region31: #{unet_forward.11} parent=27 // pred_region
              // Predicated region
              $region44: #{unet_forward.11} parent=31 // pred_check
                _
              $region45: #{unet_forward.11} parent=31 // pred_check_branch
                %224 = sbr.rel (0) target = $region47
              $region46: #{unet_forward.11} parent=31 // pred_region
                loop: start=0, step=1, limit=1
                $region48: #{unet_forward.11} parent=46 // loop_pre_header
                  _
                $region49: #{unet_forward.11} parent=46 // loop_header
                  %s226 = sphi 0, %s230
                  %p227 = scmp.ge.s32.totalorder %s226, 1
                  %s231 = sphi %s174, %s174
                  %s232 = sphi %s169, %s169
                $region50: #{unet_forward.11} parent=46 // loop_header_branch
                  %229 = sbr.rel (%p227) target = $region54
                $region51: #{unet_forward.11} parent=46 // loop_body
                  _
                $region52: #{unet_forward.11} parent=46 // loop_footer
                  %s230 = sadd.s32 1, %s226
                $region53: #{unet_forward.11} parent=46 // loop_footer_branch
                  %225 = sbr.rel target = $region49
                $region54: #{unet_forward.11} parent=46 // loop_exit
                  _
                %s234 = ssub.s32 16, 1
                loop: start=0, step=1, limit=1
                $region55: #{unet_forward.11} parent=46 // loop_pre_header
                  _
                $region56: #{unet_forward.11} parent=46 // loop_header
                  %s236 = sphi 0, %s240
                  %p237 = scmp.ge.s32.totalorder %s236, 1
                  %s241 = sphi %s174, %s174
                  %s242 = sphi %s169, %s169
                $region57: #{unet_forward.11} parent=46 // loop_header_branch
                  %239 = sbr.rel (%p237) target = $region61
                $region58: #{unet_forward.11} parent=46 // loop_body
                  %v243 = vld [vmem:[%s241] sm:%s234]
                  %244 = vst [vmem:[%s242] sm:%s234] %v243
                  %v245 = vld [vmem:[%s241 + $0x14] sm:%s234]
                  %246 = vst [vmem:[%s242 + $0x4] sm:%s234] %v245
                  %v247 = vld [vmem:[%s241 + $0x28] sm:%s234]
                  %248 = vst [vmem:[%s242 + $0x8] sm:%s234] %v247
                  %v249 = vld [vmem:[%s241 + $0x3c] sm:%s234]
                  %250 = vst [vmem:[%s242 + $0xc] sm:%s234] %v249
                  %v251 = vld [vmem:[%s241 + $0x50] sm:%s234]
                  %252 = vst [vmem:[%s242 + $0x10] sm:%s234] %v251
                  %v253 = vld [vmem:[%s241 + $0x64] sm:%s234]
                  %254 = vst [vmem:[%s242 + $0x14] sm:%s234] %v253
                  %v255 = vld [vmem:[%s241 + $0x78] sm:%s234]
                  %256 = vst [vmem:[%s242 + $0x18] sm:%s234] %v255
                  %v257 = vld [vmem:[%s241 + $0x8c] sm:%s234]
                  %258 = vst [vmem:[%s242 + $0x1c] sm:%s234] %v257
                  %v259 = vld [vmem:[%s241 + $0xa0] sm:%s234]
                  %260 = vst [vmem:[%s242 + $0x20] sm:%s234] %v259
                  %v261 = vld [vmem:[%s241 + $0xb4] sm:%s234]
                  %262 = vst [vmem:[%s242 + $0x24] sm:%s234] %v261
                  %v263 = vld [vmem:[%s241 + $0xc8] sm:%s234]
                  %264 = vst [vmem:[%s242 + $0x28] sm:%s234] %v263
                  %v265 = vld [vmem:[%s241 + $0xdc] sm:%s234]
                  %266 = vst [vmem:[%s242 + $0x2c] sm:%s234] %v265
                  %v267 = vld [vmem:[%s241 + $0xf0] sm:%s234]
                  %268 = vst [vmem:[%s242 + $0x30] sm:%s234] %v267
                  %v269 = vld [vmem:[%s241 + $0x104] sm:%s234]
                  %270 = vst [vmem:[%s242 + $0x34] sm:%s234] %v269
                  %v271 = vld [vmem:[%s241 + $0x118] sm:%s234]
                  %272 = vst [vmem:[%s242 + $0x38] sm:%s234] %v271
                  %v273 = vld [vmem:[%s241 + $0x12c] sm:%s234]
                  %274 = vst [vmem:[%s242 + $0x3c] sm:%s234] %v273
                $region59: #{unet_forward.11} parent=46 // loop_footer
                  %s240 = sadd.s32 1, %s236
                $region60: #{unet_forward.11} parent=46 // loop_footer_branch
                  %235 = sbr.rel target = $region56
                $region61: #{unet_forward.11} parent=46 // loop_exit
                  _
              $region47: #{unet_forward.11} parent=31 // pred_fallthru
                _
            $region32: #{unet_forward.11} parent=27 // pred_fallthru
              _
            // Predicated region
            $region33: #{unet_forward.11} parent=27 // pred_check
              _
            $region34: #{unet_forward.11} parent=27 // pred_check_branch
              %180 = sbr.rel (0) target = $region36
            $region35: #{unet_forward.11} parent=27 // pred_region
              %s182 = ssub.s32 16, 1
              loop: start=0, step=1, limit=1
              $region37: #{unet_forward.11} parent=35 // loop_pre_header
                _
              $region38: #{unet_forward.11} parent=35 // loop_header
                %s184 = sphi 0, %s188
                %p185 = scmp.ge.s32.totalorder %s184, 1
                %s189 = sphi %s174, %s174
                %s190 = sphi %s169, %s169
              $region39: #{unet_forward.11} parent=35 // loop_header_branch
                %187 = sbr.rel (%p185) target = $region43
              $region40: #{unet_forward.11} parent=35 // loop_body
                %v191 = vld [vmem:[%s189] sm:%s182]
                %192 = vst [vmem:[%s190] sm:%s182] %v191
                %v193 = vld [vmem:[%s189 + $0x14] sm:%s182]
                %194 = vst [vmem:[%s190 + $0x4] sm:%s182] %v193
                %v195 = vld [vmem:[%s189 + $0x28] sm:%s182]
                %196 = vst [vmem:[%s190 + $0x8] sm:%s182] %v195
                %v197 = vld [vmem:[%s189 + $0x3c] sm:%s182]
                %198 = vst [vmem:[%s190 + $0xc] sm:%s182] %v197
                %v199 = vld [vmem:[%s189 + $0x50] sm:%s182]
                %200 = vst [vmem:[%s190 + $0x10] sm:%s182] %v199
                %v201 = vld [vmem:[%s189 + $0x64] sm:%s182]
                %202 = vst [vmem:[%s190 + $0x14] sm:%s182] %v201
                %v203 = vld [vmem:[%s189 + $0x78] sm:%s182]
                %204 = vst [vmem:[%s190 + $0x18] sm:%s182] %v203
                %v205 = vld [vmem:[%s189 + $0x8c] sm:%s182]
                %206 = vst [vmem:[%s190 + $0x1c] sm:%s182] %v205
                %v207 = vld [vmem:[%s189 + $0xa0] sm:%s182]
                %208 = vst [vmem:[%s190 + $0x20] sm:%s182] %v207
                %v209 = vld [vmem:[%s189 + $0xb4] sm:%s182]
                %210 = vst [vmem:[%s190 + $0x24] sm:%s182] %v209
                %v211 = vld [vmem:[%s189 + $0xc8] sm:%s182]
                %212 = vst [vmem:[%s190 + $0x28] sm:%s182] %v211
                %v213 = vld [vmem:[%s189 + $0xdc] sm:%s182]
                %214 = vst [vmem:[%s190 + $0x2c] sm:%s182] %v213
                %v215 = vld [vmem:[%s189 + $0xf0] sm:%s182]
                %216 = vst [vmem:[%s190 + $0x30] sm:%s182] %v215
                %v217 = vld [vmem:[%s189 + $0x104] sm:%s182]
                %218 = vst [vmem:[%s190 + $0x34] sm:%s182] %v217
                %v219 = vld [vmem:[%s189 + $0x118] sm:%s182]
                %220 = vst [vmem:[%s190 + $0x38] sm:%s182] %v219
                %v221 = vld [vmem:[%s189 + $0x12c] sm:%s182]
                %222 = vst [vmem:[%s190 + $0x3c] sm:%s182] %v221
              $region41: #{unet_forward.11} parent=35 // loop_footer
                %s188 = sadd.s32 1, %s184
              $region42: #{unet_forward.11} parent=35 // loop_footer_branch
                %183 = sbr.rel target = $region38
              $region43: #{unet_forward.11} parent=35 // loop_exit
                _
            $region36: #{unet_forward.11} parent=27 // pred_fallthru
              _
          $region28: #{unet_forward.11} parent=23 // pred_fallthru
            _
          %275 = vnop
        $region24: #{unet_forward.11} parent=19 // pred_fallthru
          _
        // Predicated region
        $region62: #{unet_forward.11} parent=19 // pred_check
          %p276 = pneg %p78
        $region63: #{unet_forward.11} parent=19 // pred_check_branch
          %278 = sbr.rel (%p276) target = $region65
        $region64: #{unet_forward.11} parent=19 // pred_region
          %s279 = smul.u32 16, %s18
          %p280 = scmp.lt.s32.totalorder %s279, 79
          %s281 = scalar_select %p280, %s279, 79
          %p282 = scmp.lt.s32.totalorder %s17, 0
          %s283 = scalar_select %p282, %s17, 0
          %s284 = sadd.s32 %s283, %s281
          %s285 = smul.addr %s284, 4
          %s286 = scalar_lea.vmem %s1, %s285
          %s287 = smul.u32 16, %s18
        $region65: #{unet_forward.11} parent=19 // pred_fallthru
          _
      $region20: #{unet_forward.11} parent=5 // pred_fallthru
        _
      %p288 = scmp.le.s32.totalorder 1, %s9
      %p289 = scmp.lt.s32.totalorder %s9, 6
      %p290 = pnand %p288, %p289
      %p291 = pneg %p290
      // Predicated region
      $region66: #{unet_forward.11} parent=5 // pred_check
        _
      $region67: #{unet_forward.11} parent=5 // pred_check_branch
        %293 = sbr.rel (%p290) target = $region69
      $region68: #{unet_forward.11} parent=5 // pred_region
        %s294 = ssub.s32 %s9, 1
        %s295 = sand.u32 %s43, 1
        %s296 = sand.u32 %s43, 1
        %s297 = smul.addr %s296, 64
        %s298 = scalar_lea.vmem [#allocation3], %s297
        // Predicated region
        $region70: #{unet_forward.11} parent=68 // pred_check
          %p299 = pneg %p56
        $region71: #{unet_forward.11} parent=68 // pred_check_branch
          %301 = sbr.rel (%p299) target = $region73
        $region72: #{unet_forward.11} parent=68 // pred_region
          _
        $region73: #{unet_forward.11} parent=68 // pred_fallthru
          _
        %s302 = sand.u32 %s43, 1
        %s303 = sand.u32 %s43, 1
        %s304 = smul.addr %s303, 64
        %s305 = scalar_lea.vmem [#allocation3], %s304
        %p306 = pneg %p56
        %p307 = pneg %p53
        %s308 = smul.u32 16, %s21
        %p309 = scmp.lt.s32.totalorder %s308, 79
        %s310 = scalar_select %p309, %s308, 79
        %p311 = scmp.lt.s32.totalorder %s20, 0
        %s312 = scalar_select %p311, %s20, 0
        %s313 = sadd.s32 %s312, %s310
        %s314 = smul.addr %s313, 4
        %s315 = scalar_lea.vmem %s1, %s314
        %p316 = pneg %p84
        %p317 = pneg %p81
        %p318 = scmp.lt.s32.totalorder %s20, 0
        %s319 = scalar_select %p318, %s20, 0
        %s320 = scalar_lea.vmem %s2, %s319
        %p321 = pneg %p110
        %p322 = pneg %p107
        %p323 = pneg %p138
        %p324 = pneg %p135
        %s325 = smul.u32 16, %s19
        %p326 = scmp.lt.s32.totalorder %s325, 15
        %s327 = scalar_select %p326, %s325, 15
        %p328 = scmp.lt.s32.totalorder %s20, 0
        %s329 = scalar_select %p328, %s20, 0
        %s330 = sadd.s32 %s329, %s327
        %s331 = smul.addr %s330, 4
        %s332 = scalar_lea.vmem %s3, %s331
        %s333 = smul.u32 16, %s19
        %s334 = smul.u32 16, %s21
        %p335 = scmp.lt.s32.totalorder %s334, 79
        %s336 = scalar_select %p335, %s334, 79
        %p337 = scmp.lt.s32.totalorder %s20, 0
        %s338 = scalar_select %p337, %s20, 0
        %s339 = sadd.s32 %s338, %s336
        %s340 = smul.addr %s339, 4
        %s341 = scalar_lea.vmem %s1, %s340
        %s342 = smul.u32 16, %s21
        %p343 = scmp.lt.s32.totalorder %s20, 0
        %s344 = scalar_select %p343, %s20, 0
        %s345 = scalar_lea.vmem %s2, %s344
        %s346 = smul.u32 16, %s19
        %p347 = scmp.lt.s32.totalorder %s346, 15
        %s348 = scalar_select %p347, %s346, 15
        %p349 = scmp.lt.s32.totalorder %s20, 0
        %s350 = scalar_select %p349, %s20, 0
        %s351 = sadd.s32 %s350, %s348
        %s352 = smul.addr %s351, 4
        %s353 = scalar_lea.vmem %s3, %s352
        %s354 = smul.u32 16, %s19
        %p356 = scmp.eq.s32.totalorder %s21, 0
        // Predicated region
        $region74: #{unet_forward.11} parent=68 // pred_check
          %p357 = pneg %p356
        $region75: #{unet_forward.11} parent=68 // pred_check_branch
          %359 = sbr.rel (%p357) target = $region77
        $region76: #{unet_forward.11} parent=68 // pred_region
          %360 = vst [vmem:[#allocation2] sm:$0xff] 0.0
          %361 = vst [vmem:[#allocation2 + $0x8] sm:$0xff] 0.0
          %362 = vst [vmem:[#allocation2 + $0x10] sm:$0xff] 0.0
          %363 = vst [vmem:[#allocation2 + $0x18] sm:$0xff] 0.0
          %364 = vst [vmem:[#allocation2 + $0x20] sm:$0xff] 0.0
          %365 = vst [vmem:[#allocation2 + $0x28] sm:$0xff] 0.0
          %366 = vst [vmem:[#allocation2 + $0x30] sm:$0xff] 0.0
          %367 = vst [vmem:[#allocation2 + $0x38] sm:$0xff] 0.0
          %368 = vst [vmem:[#allocation2 + $0x40] sm:$0xff] 0.0
          %369 = vst [vmem:[#allocation2 + $0x48] sm:$0xff] 0.0
          %370 = vst [vmem:[#allocation2 + $0x50] sm:$0xff] 0.0
          %371 = vst [vmem:[#allocation2 + $0x58] sm:$0xff] 0.0
          %372 = vst [vmem:[#allocation2 + $0x60] sm:$0xff] 0.0
          %373 = vst [vmem:[#allocation2 + $0x68] sm:$0xff] 0.0
          %374 = vst [vmem:[#allocation2 + $0x70] sm:$0xff] 0.0
          %375 = vst [vmem:[#allocation2 + $0x78] sm:$0xff] 0.0
        $region77: #{unet_forward.11} parent=68 // pred_fallthru
          _
        %v376 = vld [vmem:[#allocation2] sm:$0xff]
        %v377 = vld [vmem:[#allocation2 + $0x8] sm:$0xff]
        %v378 = vld [vmem:[#allocation2 + $0x10] sm:$0xff]
        %v379 = vld [vmem:[#allocation2 + $0x18] sm:$0xff]
        %v380 = vld [vmem:[#allocation2 + $0x20] sm:$0xff]
        %v381 = vld [vmem:[#allocation2 + $0x28] sm:$0xff]
        %v382 = vld [vmem:[#allocation2 + $0x30] sm:$0xff]
        %v383 = vld [vmem:[#allocation2 + $0x38] sm:$0xff]
        %v384 = vld [vmem:[#allocation2 + $0x40] sm:$0xff]
        %v385 = vld [vmem:[#allocation2 + $0x48] sm:$0xff]
        %v386 = vld [vmem:[#allocation2 + $0x50] sm:$0xff]
        %v387 = vld [vmem:[#allocation2 + $0x58] sm:$0xff]
        %v388 = vld [vmem:[#allocation2 + $0x60] sm:$0xff]
        %v389 = vld [vmem:[#allocation2 + $0x68] sm:$0xff]
        %v390 = vld [vmem:[#allocation2 + $0x70] sm:$0xff]
        %v391 = vld [vmem:[#allocation2 + $0x78] sm:$0xff]
        %v392 = vld [vmem:[%s298] sm:$0xf]
        %v393 = vld [vmem:[%s298 + $0x4] sm:$0xf]
        %v394 = vld [vmem:[%s298 + $0x8] sm:$0xf]
        %v395 = vld [vmem:[%s298 + $0xc] sm:$0xf]
        %v396 = vld [vmem:[%s298 + $0x10] sm:$0xf]
        %v397 = vld [vmem:[%s298 + $0x14] sm:$0xf]
        %v398 = vld [vmem:[%s298 + $0x18] sm:$0xf]
        %v399 = vld [vmem:[%s298 + $0x1c] sm:$0xf]
        %v400 = vld [vmem:[%s298 + $0x20] sm:$0xf]
        %v401 = vld [vmem:[%s298 + $0x24] sm:$0xf]
        %v402 = vld [vmem:[%s298 + $0x28] sm:$0xf]
        %v403 = vld [vmem:[%s298 + $0x2c] sm:$0xf]
        %v404 = vld [vmem:[%s298 + $0x30] sm:$0xf]
        %v405 = vld [vmem:[%s298 + $0x34] sm:$0xf]
        %v406 = vld [vmem:[%s298 + $0x38] sm:$0xf]
        %v407 = vld [vmem:[%s298 + $0x3c] sm:$0xf]
        %v408 = vld [vmem:[%s341] sm:$0xf]
        %v409 = vld [vmem:[%s341 + $0x4] sm:$0xf]
        %v410 = vld [vmem:[%s341 + $0x8] sm:$0xf]
        %v411 = vld [vmem:[%s341 + $0xc] sm:$0xf]
        %v412 = vld [vmem:[%s341 + $0x10] sm:$0xf]
        %v413 = vld [vmem:[%s341 + $0x14] sm:$0xf]
        %v414 = vld [vmem:[%s341 + $0x18] sm:$0xf]
        %v415 = vld [vmem:[%s341 + $0x1c] sm:$0xf]
        %v416 = vld [vmem:[%s341 + $0x20] sm:$0xf]
        %v417 = vld [vmem:[%s341 + $0x24] sm:$0xf]
        %v418 = vld [vmem:[%s341 + $0x28] sm:$0xf]
        %v419 = vld [vmem:[%s341 + $0x2c] sm:$0xf]
        %v420 = vld [vmem:[%s341 + $0x30] sm:$0xf]
        %v421 = vld [vmem:[%s341 + $0x34] sm:$0xf]
        %v422 = vld [vmem:[%s341 + $0x38] sm:$0xf]
        %v423 = vld [vmem:[%s341 + $0x3c] sm:$0xf]
        %v440 = vunpack.c.l.b16 %v392
        %v441 = vunpack.c.l.b16 %v393
        %v442 = vunpack.c.l.b16 %v394
        %v443 = vunpack.c.l.b16 %v395
        %v444 = vunpack.c.l.b16 %v396
        %v445 = vunpack.c.l.b16 %v397
        %v446 = vunpack.c.l.b16 %v398
        %v447 = vunpack.c.l.b16 %v399
        %v448 = vunpack.c.l.b16 %v400
        %v449 = vunpack.c.l.b16 %v401
        %v450 = vunpack.c.l.b16 %v402
        %v451 = vunpack.c.l.b16 %v403
        %v452 = vunpack.c.l.b16 %v404
        %v453 = vunpack.c.l.b16 %v405
        %v454 = vunpack.c.l.b16 %v406
        %v455 = vunpack.c.l.b16 %v407
        %v456 = vpack.c.b16 %v441, %v440
        %v457 = vpack.c.b16 %v443, %v442
        %v458 = vpack.c.b16 %v445, %v444
        %v459 = vpack.c.b16 %v447, %v446
        %v460 = vpack.c.b16 %v449, %v448
        %v461 = vpack.c.b16 %v451, %v450
        %v462 = vpack.c.b16 %v453, %v452
        %v463 = vpack.c.b16 %v455, %v454
        %v488 = vunpack.c.l.b16 %v408
        %v489 = vunpack.c.l.b16 %v409
        %v490 = vunpack.c.l.b16 %v410
        %v491 = vunpack.c.l.b16 %v411
        %v492 = vunpack.c.l.b16 %v412
        %v493 = vunpack.c.l.b16 %v413
        %v494 = vunpack.c.l.b16 %v414
        %v495 = vunpack.c.l.b16 %v415
        %v496 = vunpack.c.l.b16 %v416
        %v497 = vunpack.c.l.b16 %v417
        %v498 = vunpack.c.l.b16 %v418
        %v499 = vunpack.c.l.b16 %v419
        %v500 = vunpack.c.l.b16 %v420
        %v501 = vunpack.c.l.b16 %v421
        %v502 = vunpack.c.l.b16 %v422
        %v503 = vunpack.c.l.b16 %v423
        %v504 = vpack.c.b16 %v489, %v488
        %v505 = vpack.c.b16 %v491, %v490
        %v506 = vpack.c.b16 %v493, %v492
        %v507 = vpack.c.b16 %v495, %v494
        %v508 = vpack.c.b16 %v497, %v496
        %v509 = vpack.c.b16 %v499, %v498
        %v510 = vpack.c.b16 %v501, %v500
        %v511 = vpack.c.b16 %v503, %v502
        %520 = vmatprep.subr.bf16.mxu0 0
        %521 = vmatpush1.bf16.msra.mxu0 %v511
        %522 = vmatprep.subr.bf16.mxu0 0
        %523 = vmatpush1.bf16.msra.mxu0 %v510
        %524 = vmatprep.subr.bf16.mxu0 0
        %525 = vmatpush1.bf16.msra.mxu0 %v509
        %526 = vmatprep.subr.bf16.mxu0 0
        %527 = vmatpush1.bf16.msra.mxu0 %v508
        %528 = vmatprep.subr.bf16.mxu0 0
        %529 = vmatpush1.bf16.msra.mxu0 %v507
        %530 = vmatprep.subr.bf16.mxu0 0
        %531 = vmatpush1.bf16.msra.mxu0 %v506
        %532 = vmatprep.subr.bf16.mxu0 0
        %533 = vmatpush1.bf16.msra.mxu0 %v505
        %534 = vmatprep.subr.bf16.mxu0 0
        %535 = vmatpush1.bf16.msra.mxu0 %v504
        %536 = vmatprep.subr.bf16.mxu0 0
        %537 = vmatpush2.bf16.msra.mxu0 0
        %538 = vmatprep.subr.bf16.mxu0 0
        %539 = vmatpush2.bf16.msra.mxu0 0
        %540 = vmatprep.subr.bf16.mxu0 0
        %541 = vmatpush2.bf16.msra.mxu0 0
        %542 = vmatprep.subr.bf16.mxu0 0
        %543 = vmatpush2.bf16.msra.mxu0 0
        %544 = vmatprep.subr.bf16.mxu0 0
        %545 = vmatpush2.bf16.msra.mxu0 0
        %546 = vmatprep.subr.bf16.mxu0 0
        %547 = vmatpush2.bf16.msra.mxu0 0
        %548 = vmatprep.subr.bf16.mxu0 0
        %549 = vmatpush2.bf16.msra.mxu0 0
        %550 = vmatprep.subr.bf16.mxu0 0
        %551 = vmatpush2.bf16.msra.mxu0 0
        %552 = vmatprep.mubr.bf16.mxu0 0
        %553 = vmatmul.mubr.bf16.gmra.mxu0 %v456
        %v554 = vpop.f32.mrf.mxu0
        %v555 = vadd.f32 0.0, %v554
        %v556 = vpop.f32.mrf.mxu0
        %v557 = vpop.f32.mrf.mxu0
        %v558 = vadd.f32 0.0, %v557
        %v559 = vpop.f32.mrf.mxu0
        %560 = vmatprep.mubr.bf16.mxu0 0
        %561 = vmatmul.mubr.bf16.gmra.mxu0 %v457
        %v562 = vpop.f32.mrf.mxu0
        %v563 = vadd.f32 0.0, %v562
        %v564 = vpop.f32.mrf.mxu0
        %v565 = vpop.f32.mrf.mxu0
        %v566 = vadd.f32 0.0, %v565
        %v567 = vpop.f32.mrf.mxu0
        %568 = vmatprep.mubr.bf16.mxu0 0
        %569 = vmatmul.mubr.bf16.gmra.mxu0 %v458
        %v570 = vpop.f32.mrf.mxu0
        %v571 = vadd.f32 0.0, %v570
        %v572 = vpop.f32.mrf.mxu0
        %v573 = vpop.f32.mrf.mxu0
        %v574 = vadd.f32 0.0, %v573
        %v575 = vpop.f32.mrf.mxu0
        %576 = vmatprep.mubr.bf16.mxu0 0
        %577 = vmatmul.mubr.bf16.gmra.mxu0 %v459
        %v578 = vpop.f32.mrf.mxu0
        %v579 = vadd.f32 0.0, %v578
        %v580 = vpop.f32.mrf.mxu0
        %v581 = vpop.f32.mrf.mxu0
        %v582 = vadd.f32 0.0, %v581
        %v583 = vpop.f32.mrf.mxu0
        %584 = vmatprep.mubr.bf16.mxu0 0
        %585 = vmatmul.mubr.bf16.gmra.mxu0 %v460
        %v586 = vpop.f32.mrf.mxu0
        %v587 = vadd.f32 0.0, %v586
        %v588 = vpop.f32.mrf.mxu0
        %v589 = vpop.f32.mrf.mxu0
        %v590 = vadd.f32 0.0, %v589
        %v591 = vpop.f32.mrf.mxu0
        %592 = vmatprep.mubr.bf16.mxu0 0
        %593 = vmatmul.mubr.bf16.gmra.mxu0 %v461
        %v594 = vpop.f32.mrf.mxu0
        %v595 = vadd.f32 0.0, %v594
        %v596 = vpop.f32.mrf.mxu0
        %v597 = vpop.f32.mrf.mxu0
        %v598 = vadd.f32 0.0, %v597
        %v599 = vpop.f32.mrf.mxu0
        %600 = vmatprep.mubr.bf16.mxu0 0
        %601 = vmatmul.mubr.bf16.gmra.mxu0 %v462
        %v602 = vpop.f32.mrf.mxu0
        %v603 = vadd.f32 0.0, %v602
        %v604 = vpop.f32.mrf.mxu0
        %v605 = vpop.f32.mrf.mxu0
        %v606 = vadd.f32 0.0, %v605
        %v607 = vpop.f32.mrf.mxu0
        %608 = vmatprep.mubr.bf16.mxu0 0
        %609 = vmatmul.mubr.bf16.gmra.mxu0 %v463
        %v610 = vpop.f32.mrf.mxu0
        %v611 = vadd.f32 0.0, %v610
        %v612 = vpop.f32.mrf.mxu0
        %v613 = vpop.f32.mrf.mxu0
        %v614 = vadd.f32 0.0, %v613
        %v615 = vpop.f32.mrf.mxu0
        %616 = vdwg.mxu0
        %v617 = vadd.f32 %v376, %v555
        %v618 = vadd.f32 %v377, %v558
        %v619 = vadd.f32 %v378, %v563
        %v620 = vadd.f32 %v379, %v566
        %v621 = vadd.f32 %v380, %v571
        %v622 = vadd.f32 %v381, %v574
        %v623 = vadd.f32 %v382, %v579
        %v624 = vadd.f32 %v383, %v582
        %v625 = vadd.f32 %v384, %v587
        %v626 = vadd.f32 %v385, %v590
        %v627 = vadd.f32 %v386, %v595
        %v628 = vadd.f32 %v387, %v598
        %v629 = vadd.f32 %v388, %v603
        %v630 = vadd.f32 %v389, %v606
        %v631 = vadd.f32 %v390, %v611
        %v632 = vadd.f32 %v391, %v614
        %633 = vst [vmem:[#allocation2] sm:$0xff] %v617
        %634 = vst [vmem:[#allocation2 + $0x8] sm:$0xff] %v618
        %635 = vst [vmem:[#allocation2 + $0x10] sm:$0xff] %v619
        %636 = vst [vmem:[#allocation2 + $0x18] sm:$0xff] %v620
        %637 = vst [vmem:[#allocation2 + $0x20] sm:$0xff] %v621
        %638 = vst [vmem:[#allocation2 + $0x28] sm:$0xff] %v622
        %639 = vst [vmem:[#allocation2 + $0x30] sm:$0xff] %v623
        %640 = vst [vmem:[#allocation2 + $0x38] sm:$0xff] %v624
        %641 = vst [vmem:[#allocation2 + $0x40] sm:$0xff] %v625
        %642 = vst [vmem:[#allocation2 + $0x48] sm:$0xff] %v626
        %643 = vst [vmem:[#allocation2 + $0x50] sm:$0xff] %v627
        %644 = vst [vmem:[#allocation2 + $0x58] sm:$0xff] %v628
        %645 = vst [vmem:[#allocation2 + $0x60] sm:$0xff] %v629
        %646 = vst [vmem:[#allocation2 + $0x68] sm:$0xff] %v630
        %647 = vst [vmem:[#allocation2 + $0x70] sm:$0xff] %v631
        %648 = vst [vmem:[#allocation2 + $0x78] sm:$0xff] %v632
        %p649 = scmp.eq.s32.totalorder %s21, 4
        // Predicated region
        $region78: #{unet_forward.11} parent=68 // pred_check
          %p650 = pneg %p649
        $region79: #{unet_forward.11} parent=68 // pred_check_branch
          %652 = sbr.rel (%p650) target = $region81
        $region80: #{unet_forward.11} parent=68 // pred_region
          %v653 = vld [vmem:[#allocation2] sm:$0xff]
          %v654 = vld [vmem:[#allocation2 + $0x8] sm:$0xff]
          %v655 = vld [vmem:[#allocation2 + $0x10] sm:$0xff]
          %v656 = vld [vmem:[#allocation2 + $0x18] sm:$0xff]
          %v657 = vld [vmem:[#allocation2 + $0x20] sm:$0xff]
          %v658 = vld [vmem:[#allocation2 + $0x28] sm:$0xff]
          %v659 = vld [vmem:[#allocation2 + $0x30] sm:$0xff]
          %v660 = vld [vmem:[#allocation2 + $0x38] sm:$0xff]
          %v661 = vld [vmem:[#allocation2 + $0x40] sm:$0xff]
          %v662 = vld [vmem:[#allocation2 + $0x48] sm:$0xff]
          %v663 = vld [vmem:[#allocation2 + $0x50] sm:$0xff]
          %v664 = vld [vmem:[#allocation2 + $0x58] sm:$0xff]
          %v665 = vld [vmem:[#allocation2 + $0x60] sm:$0xff]
          %v666 = vld [vmem:[#allocation2 + $0x68] sm:$0xff]
          %v667 = vld [vmem:[#allocation2 + $0x70] sm:$0xff]
          %v668 = vld [vmem:[#allocation2 + $0x78] sm:$0xff]
          %v669 = vld [vmem:[%s345] sm:$0x1]
          %v671 = vlaneseq
          %v672 = vshrl.u32 %v671, 7
          %v673 = vsub.s32 0, %v672
          %v674 = vrot.slane %v669, %v673
          %v676 = vadd.f32 %v653, %v674
          %v677 = vadd.f32 %v654, %v674
          %v678 = vadd.f32 %v655, %v674
          %v679 = vadd.f32 %v656, %v674
          %v680 = vadd.f32 %v657, %v674
          %v681 = vadd.f32 %v658, %v674
          %v682 = vadd.f32 %v659, %v674
          %v683 = vadd.f32 %v660, %v674
          %v684 = vadd.f32 %v661, %v674
          %v685 = vadd.f32 %v662, %v674
          %v686 = vadd.f32 %v663, %v674
          %v687 = vadd.f32 %v664, %v674
          %v688 = vadd.f32 %v665, %v674
          %v689 = vadd.f32 %v666, %v674
          %v690 = vadd.f32 %v667, %v674
          %v691 = vadd.f32 %v668, %v674
          %v692 = vmax.f32 %v676, 0.0
          %v693 = vmax.f32 %v677, 0.0
          %v694 = vmax.f32 %v678, 0.0
          %v695 = vmax.f32 %v679, 0.0
          %v696 = vmax.f32 %v680, 0.0
          %v697 = vmax.f32 %v681, 0.0
          %v698 = vmax.f32 %v682, 0.0
          %v699 = vmax.f32 %v683, 0.0
          %v700 = vmax.f32 %v684, 0.0
          %v701 = vmax.f32 %v685, 0.0
          %v702 = vmax.f32 %v686, 0.0
          %v703 = vmax.f32 %v687, 0.0
          %v704 = vmax.f32 %v688, 0.0
          %v705 = vmax.f32 %v689, 0.0
          %v706 = vmax.f32 %v690, 0.0
          %v707 = vmax.f32 %v691, 0.0
          %v708 = vpack.c.bf16 %v693, %v692
          %v709 = vpack.c.bf16 %v695, %v694
          %v710 = vpack.c.bf16 %v697, %v696
          %v711 = vpack.c.bf16 %v699, %v698
          %v712 = vpack.c.bf16 %v701, %v700
          %v713 = vpack.c.bf16 %v703, %v702
          %v714 = vpack.c.bf16 %v705, %v704
          %v715 = vpack.c.bf16 %v707, %v706
          %v724 = vunpack.c.l.b16 %v708
          %v725 = vunpack.c.h.b16 %v708
          %v726 = vunpack.c.l.b16 %v709
          %v727 = vunpack.c.h.b16 %v709
          %v728 = vunpack.c.l.b16 %v710
          %v729 = vunpack.c.h.b16 %v710
          %v730 = vunpack.c.l.b16 %v711
          %v731 = vunpack.c.h.b16 %v711
          %v732 = vunpack.c.l.b16 %v712
          %v733 = vunpack.c.h.b16 %v712
          %v734 = vunpack.c.l.b16 %v713
          %v735 = vunpack.c.h.b16 %v713
          %v736 = vunpack.c.l.b16 %v714
          %v737 = vunpack.c.h.b16 %v714
          %v738 = vunpack.c.l.b16 %v715
          %v739 = vunpack.c.h.b16 %v715
          %v740 = vpack.c.b16 %v724, %v724
          %v741 = vpack.c.b16 %v725, %v725
          %v742 = vpack.c.b16 %v726, %v726
          %v743 = vpack.c.b16 %v727, %v727
          %v744 = vpack.c.b16 %v728, %v728
          %v745 = vpack.c.b16 %v729, %v729
          %v746 = vpack.c.b16 %v730, %v730
          %v747 = vpack.c.b16 %v731, %v731
          %v748 = vpack.c.b16 %v732, %v732
          %v749 = vpack.c.b16 %v733, %v733
          %v750 = vpack.c.b16 %v734, %v734
          %v751 = vpack.c.b16 %v735, %v735
          %v752 = vpack.c.b16 %v736, %v736
          %v753 = vpack.c.b16 %v737, %v737
          %v754 = vpack.c.b16 %v738, %v738
          %v755 = vpack.c.b16 %v739, %v739
          %772 = vst [vmem:[%s353] sm:$0xf] %v740
          %773 = vst [vmem:[%s353 + $0x4] sm:$0xf] %v741
          %774 = vst [vmem:[%s353 + $0x8] sm:$0xf] %v742
          %775 = vst [vmem:[%s353 + $0xc] sm:$0xf] %v743
          %776 = vst [vmem:[%s353 + $0x10] sm:$0xf] %v744
          %777 = vst [vmem:[%s353 + $0x14] sm:$0xf] %v745
          %778 = vst [vmem:[%s353 + $0x18] sm:$0xf] %v746
          %779 = vst [vmem:[%s353 + $0x1c] sm:$0xf] %v747
          %780 = vst [vmem:[%s353 + $0x20] sm:$0xf] %v748
          %781 = vst [vmem:[%s353 + $0x24] sm:$0xf] %v749
          %782 = vst [vmem:[%s353 + $0x28] sm:$0xf] %v750
          %783 = vst [vmem:[%s353 + $0x2c] sm:$0xf] %v751
          %784 = vst [vmem:[%s353 + $0x30] sm:$0xf] %v752
          %785 = vst [vmem:[%s353 + $0x34] sm:$0xf] %v753
          %786 = vst [vmem:[%s353 + $0x38] sm:$0xf] %v754
          %787 = vst [vmem:[%s353 + $0x3c] sm:$0xf] %v755
        $region81: #{unet_forward.11} parent=68 // pred_fallthru
          _
        %s788 = smul.u32 16, %s19
        %p789 = scmp.lt.s32.totalorder %s788, 15
        %s790 = scalar_select %p789, %s788, 15
        %p791 = scmp.lt.s32.totalorder %s20, 0
        %s792 = scalar_select %p791, %s20, 0
        %s793 = sadd.s32 %s792, %s790
        %s794 = smul.addr %s793, 4
        %s795 = scalar_lea.vmem %s3, %s794
        // Predicated region
        $region82: #{unet_forward.11} parent=68 // pred_check
          %p796 = pneg %p135
        $region83: #{unet_forward.11} parent=68 // pred_check_branch
          %798 = sbr.rel (%p796) target = $region85
        $region84: #{unet_forward.11} parent=68 // pred_region
          %s799 = smul.u32 16, %s19
        $region85: #{unet_forward.11} parent=68 // pred_fallthru
          _
        // Predicated region
        $region86: #{unet_forward.11} parent=68 // pred_check
          %p800 = pneg %p135
        $region87: #{unet_forward.11} parent=68 // pred_check_branch
          %802 = sbr.rel (%p800) target = $region89
        $region88: #{unet_forward.11} parent=68 // pred_region
          %s803 = smul.u32 16, %s19
          %p804 = scmp.lt.s32.totalorder %s803, 15
          %s805 = scalar_select %p804, %s803, 15
          %p806 = scmp.lt.s32.totalorder %s20, 0
          %s807 = scalar_select %p806, %s20, 0
          %s808 = sadd.s32 %s807, %s805
          %s809 = smul.addr %s808, 4
          %s810 = scalar_lea.vmem %s3, %s809
        $region89: #{unet_forward.11} parent=68 // pred_fallthru
          _
      $region69: #{unet_forward.11} parent=5 // pred_fallthru
        _
      %p811 = scmp.le.s32.totalorder 2, %s9
      // Predicated region
      $region90: #{unet_forward.11} parent=5 // pred_check
        %p812 = pneg %p811
      $region91: #{unet_forward.11} parent=5 // pred_check_branch
        %814 = sbr.rel (%p812) target = $region93
      $region92: #{unet_forward.11} parent=5 // pred_region
        %s815 = ssub.s32 %s9, 2
      $region93: #{unet_forward.11} parent=5 // pred_fallthru
        _
    $region6: #{unet_forward.11} parent=1 // loop_footer
      %s13 = sadd.s32 1, %s9
    $region7: #{unet_forward.11} parent=1 // loop_footer_branch
      %8 = sbr.rel target = $region3
    $region8: #{unet_forward.11} parent=1 // loop_exit
      _

// kernel: unet_forward.12
$region0: #{unet_forward.12}
  #allocation0 [shape = 'u32[]', space=smem, size = 0x4, offset = 0x4, fixed_abs, tag = 'smem constant byte address 0x4 - core index']
  #allocation1 [shape = 'u32[144,128]{1,0:T(1,128)}', space=vmem, size = 0x12000, scoped, tag = 'internal scratch']
  #allocation2 [shape = 'f32[128,128]{1,0:T(8,128)}', space=vmem, size = 0x10000, scoped, tag = 'scratch operand']
  %s0 = inlined_call_operand.vmem [shape: bf16[128,1152], index: 0, kind: input, shape index: {}]
  %s1 = inlined_call_operand.vmem [shape: bf16[1152,128], index: 1, kind: input, shape index: {}]
  %s2 = inlined_call_operand.vmem [shape: f32[1,128], index: 2, kind: input, shape index: {}]
  %s3 = inlined_call_operand.vmem [shape: bf16[128,128], index: 3, kind: output, shape index: {}]
  %s4 = sld [smem:[#allocation0]]
  $region79: #{unet_forward.12} parent=0
    _
  %s6 = ssub.s32 1, %s4
  %s7 = scalar_select 0, %s6, %s4
  $region1: #{unet_forward.12} parent=0
    #allocation3 [shape = 'u8[196608]{0}', space=vmem, size = 0x30000, scoped, tag = 'input window, operand 0']
    loop: start=0, step=1, limit=5
    $region2: #{unet_forward.12} parent=1 // loop_pre_header
      _
    $region3: #{unet_forward.12} parent=1 // loop_header
      %s9 = sphi 0, %s13
      %p10 = scmp.ge.s32.totalorder %s9, 5
      %s16 = sphi 0, %s35
      %s17 = sphi 0, %s31
      %s18 = sphi 0, %s27
      %s19 = sphi 0, %s16
      %s20 = sphi 0, %s17
      %s21 = sphi 0, %s18
      %s22 = sphi 0, %s19
      %s23 = sphi 0, %s20
      %s24 = sphi 0, %s21
      %s40 = sphi 0, %s42
      %s43 = sphi 0, %s40
      %s44 = sphi 0, %s43
      %s60 = sphi 0, %s44
      %s68 = sphi 0, %s70
      %s71 = sphi 0, %s68
      %s72 = sphi 0, %s71
      %s88 = sphi 0, %s72
      %s94 = sphi 0, %s96
      %s97 = sphi 0, %s94
      %s98 = sphi 0, %s97
      %s114 = sphi 0, %s98
      %s122 = sphi 0, %s124
      %s125 = sphi 0, %s122
      %s126 = sphi 0, %s125
      %s142 = sphi 0, %s126
    $region4: #{unet_forward.12} parent=1 // loop_header_branch
      %12 = sbr.rel (%p10) target = $region8
    $region5: #{unet_forward.12} parent=1 // loop_body
      %s14 = ssub.s32 %s9, 1
      %s15 = ssub.s32 %s9, 2
      %s25 = sadd.s32 1, %s18
      %p26 = scmp.ge.s32.totalorder %s25, 3
      %s27 = scalar_select %p26, 0, %s25
      %s28 = sadd.s32 1, %s17
      %s29 = scalar_select %p26, %s28, %s17
      %p30 = scmp.ge.s32.totalorder %s29, 1
      %s31 = scalar_select %p30, 0, %s29
      %s32 = sadd.s32 1, %s16
      %s33 = scalar_select %p30, %s32, %s16
      %p34 = scmp.ge.s32.totalorder %s33, 1
      %s35 = scalar_select %p34, 0, %s33
      %s36 = ssub.s32 %s16, %s35
      %s37 = ssub.s32 %s18, %s27
      %s38 = sor.u32 %s36, %s37
      %p39 = scmp.eq.s32.totalorder %s38, 0
      %s41 = sadd.s32 %s40, 1
      %s42 = scalar_select %p39, %s40, %s41
      %p45 = pneg %p39
      %p46 = scmp.eq.s32.totalorder %s9, 2
      %p47 = por %p45, %p46
      %p48 = scmp.ne.s32.totalorder %s40, %s43
      %p49 = scmp.eq.s32.totalorder %s9, 0
      %p50 = por %p48, %p49
      %p51 = scmp.ne.s32.totalorder %s40, %s43
      %p52 = scmp.eq.s32.totalorder %s14, 2
      %p53 = por %p51, %p52
      %p54 = scmp.ne.s32.totalorder %s43, %s44
      %p55 = scmp.eq.s32.totalorder %s14, 0
      %p56 = por %p54, %p55
      %p57 = scmp.ne.s32.totalorder %s43, %s44
      %p58 = scmp.eq.s32.totalorder %s15, 2
      %p59 = por %p57, %p58
      %p61 = scmp.ne.s32.totalorder %s44, %s60
      %p62 = scmp.eq.s32.totalorder %s15, 0
      %p63 = por %p61, %p62
      %s64 = ssub.s32 %s18, %s27
      %s65 = ssub.s32 %s17, %s31
      %s66 = sor.u32 %s64, %s65
      %p67 = scmp.eq.s32.totalorder %s66, 0
      %s69 = sadd.s32 %s68, 1
      %s70 = scalar_select %p67, %s68, %s69
      %p73 = pneg %p67
      %p74 = scmp.eq.s32.totalorder %s9, 2
      %p75 = por %p73, %p74
      %p76 = scmp.ne.s32.totalorder %s68, %s71
      %p77 = scmp.eq.s32.totalorder %s9, 0
      %p78 = por %p76, %p77
      %p79 = scmp.ne.s32.totalorder %s68, %s71
      %p80 = scmp.eq.s32.totalorder %s14, 2
      %p81 = por %p79, %p80
      %p82 = scmp.ne.s32.totalorder %s71, %s72
      %p83 = scmp.eq.s32.totalorder %s14, 0
      %p84 = por %p82, %p83
      %p85 = scmp.ne.s32.totalorder %s71, %s72
      %p86 = scmp.eq.s32.totalorder %s15, 2
      %p87 = por %p85, %p86
      %p89 = scmp.ne.s32.totalorder %s72, %s88
      %p90 = scmp.eq.s32.totalorder %s15, 0
      %p91 = por %p89, %p90
      %s92 = ssub.s32 %s17, %s31
      %p93 = scmp.eq.s32.totalorder %s92, 0
      %s95 = sadd.s32 %s94, 1
      %s96 = scalar_select %p93, %s94, %s95
      %p99 = pneg %p93
      %p100 = scmp.eq.s32.totalorder %s9, 2
      %p101 = por %p99, %p100
      %p102 = scmp.ne.s32.totalorder %s94, %s97
      %p103 = scmp.eq.s32.totalorder %s9, 0
      %p104 = por %p102, %p103
      %p105 = scmp.ne.s32.totalorder %s94, %s97
      %p106 = scmp.eq.s32.totalorder %s14, 2
      %p107 = por %p105, %p106
      %p108 = scmp.ne.s32.totalorder %s97, %s98
      %p109 = scmp.eq.s32.totalorder %s14, 0
      %p110 = por %p108, %p109
      %p111 = scmp.ne.s32.totalorder %s97, %s98
      %p112 = scmp.eq.s32.totalorder %s15, 2
      %p113 = por %p111, %p112
      %p115 = scmp.ne.s32.totalorder %s98, %s114
      %p116 = scmp.eq.s32.totalorder %s15, 0
      %p117 = por %p115, %p116
      %s118 = ssub.s32 %s16, %s35
      %s119 = ssub.s32 %s17, %s31
      %s120 = sor.u32 %s118, %s119
      %p121 = scmp.eq.s32.totalorder %s120, 0
      %s123 = sadd.s32 %s122, 1
      %s124 = scalar_select %p121, %s122, %s123
      %p127 = pneg %p121
      %p128 = scmp.eq.s32.totalorder %s9, 2
      %p129 = por %p127, %p128
      %p130 = scmp.ne.s32.totalorder %s122, %s125
      %p131 = scmp.eq.s32.totalorder %s9, 0
      %p132 = por %p130, %p131
      %p133 = scmp.ne.s32.totalorder %s122, %s125
      %p134 = scmp.eq.s32.totalorder %s14, 2
      %p135 = por %p133, %p134
      %p136 = scmp.ne.s32.totalorder %s125, %s126
      %p137 = scmp.eq.s32.totalorder %s14, 0
      %p138 = por %p136, %p137
      %p139 = scmp.ne.s32.totalorder %s125, %s126
      %p140 = scmp.eq.s32.totalorder %s15, 2
      %p141 = por %p139, %p140
      %p143 = scmp.ne.s32.totalorder %s126, %s142
      %p144 = scmp.eq.s32.totalorder %s15, 0
      %p145 = por %p143, %p144
      %p146 = scmp.le.s32.totalorder 1, %s9
      %p147 = scmp.lt.s32.totalorder %s9, 4
      %p148 = pnand %p146, %p147
      %p149 = pneg %p148
      // Predicated region
      $region9: #{unet_forward.12} parent=5 // pred_check
        _
      $region10: #{unet_forward.12} parent=5 // pred_check_branch
        %151 = sbr.rel (%p148) target = $region12
      $region11: #{unet_forward.12} parent=5 // pred_region
        %s152 = ssub.s32 %s9, 1
        // Predicated region
        $region13: #{unet_forward.12} parent=11 // pred_check
          %p153 = pneg %p110
        $region14: #{unet_forward.12} parent=11 // pred_check_branch
          %155 = sbr.rel (%p153) target = $region16
        $region15: #{unet_forward.12} parent=11 // pred_region
          %p156 = scmp.lt.s32.totalorder %s20, 0
          %s157 = scalar_select %p156, %s20, 0
          %s158 = scalar_lea.vmem %s2, %s157
        $region16: #{unet_forward.12} parent=11 // pred_fallthru
          _
      $region12: #{unet_forward.12} parent=5 // pred_fallthru
        _
      %p159 = scmp.lt.s32.totalorder %s9, 3
      // Predicated region
      $region17: #{unet_forward.12} parent=5 // pred_check
        %p160 = pneg %p159
      $region18: #{unet_forward.12} parent=5 // pred_check_branch
        %162 = sbr.rel (%p160) target = $region20
      $region19: #{unet_forward.12} parent=5 // pred_region
        // Predicated region
        $region21: #{unet_forward.12} parent=19 // pred_check
          %p163 = pneg %p50
        $region22: #{unet_forward.12} parent=19 // pred_check_branch
          %165 = sbr.rel (%p163) target = $region24
        $region23: #{unet_forward.12} parent=19 // pred_region
          %s166 = sand.u32 %s40, 1
          %s167 = sand.u32 %s40, 1
          %s168 = smul.addr %s167, 192
          %s169 = scalar_lea.vmem [#allocation3], %s168
          %s170 = smul.u32 16, %s16
          %s171 = smul.u32 3, %s18
          %s172 = smul.addr %s170, 9
          %s173 = sadd.s32 %s171, %s172
          %s174 = smul.addr %s173, 4
          %s175 = scalar_lea.vmem %s0, %s174
          // Predicated region
          $region25: #{unet_forward.12} parent=23 // pred_check
            _
          $region26: #{unet_forward.12} parent=23 // pred_check_branch
            %177 = sbr.rel (0) target = $region28
          $region27: #{unet_forward.12} parent=23 // pred_region
            // Predicated region
            $region29: #{unet_forward.12} parent=27 // pred_check
              _
            $region30: #{unet_forward.12} parent=27 // pred_check_branch
              %179 = sbr.rel (0) target = $region32
            $region31: #{unet_forward.12} parent=27 // pred_region
              %s180 = scalar_lea.vmem %s175, 8
              %s181 = scalar_lea.vmem %s169, 8 [#allocation3]
              loop: start=0, step=1, limit=1
              $region33: #{unet_forward.12} parent=31 // loop_pre_header
                _
              $region34: #{unet_forward.12} parent=31 // loop_header
                %s183 = sphi 0, %s187
                %p184 = scmp.ge.s32.totalorder %s183, 1
                %s188 = sphi %s175, %s175
                %s189 = sphi %s169, %s169
              $region35: #{unet_forward.12} parent=31 // loop_header_branch
                %186 = sbr.rel (%p184) target = $region39
              $region36: #{unet_forward.12} parent=31 // loop_body
                %v190 = vld [vmem:[%s188] sm:$0xff]
                %191 = vst [vmem:[%s189] sm:$0xff] %v190
                %v192 = vld [vmem:[%s188 + $0x24] sm:$0xff]
                %193 = vst [vmem:[%s189 + $0xc] sm:$0xff] %v192
                %v194 = vld [vmem:[%s188 + $0x48] sm:$0xff]
                %195 = vst [vmem:[%s189 + $0x18] sm:$0xff] %v194
                %v196 = vld [vmem:[%s188 + $0x6c] sm:$0xff]
                %197 = vst [vmem:[%s189 + $0x24] sm:$0xff] %v196
                %v198 = vld [vmem:[%s188 + $0x90] sm:$0xff]
                %199 = vst [vmem:[%s189 + $0x30] sm:$0xff] %v198
                %v200 = vld [vmem:[%s188 + $0xb4] sm:$0xff]
                %201 = vst [vmem:[%s189 + $0x3c] sm:$0xff] %v200
                %v202 = vld [vmem:[%s188 + $0xd8] sm:$0xff]
                %203 = vst [vmem:[%s189 + $0x48] sm:$0xff] %v202
                %v204 = vld [vmem:[%s188 + $0xfc] sm:$0xff]
                %205 = vst [vmem:[%s189 + $0x54] sm:$0xff] %v204
                %v206 = vld [vmem:[%s188 + $0x120] sm:$0xff]
                %207 = vst [vmem:[%s189 + $0x60] sm:$0xff] %v206
                %v208 = vld [vmem:[%s188 + $0x144] sm:$0xff]
                %209 = vst [vmem:[%s189 + $0x6c] sm:$0xff] %v208
                %v210 = vld [vmem:[%s188 + $0x168] sm:$0xff]
                %211 = vst [vmem:[%s189 + $0x78] sm:$0xff] %v210
                %v212 = vld [vmem:[%s188 + $0x18c] sm:$0xff]
                %213 = vst [vmem:[%s189 + $0x84] sm:$0xff] %v212
                %v214 = vld [vmem:[%s188 + $0x1b0] sm:$0xff]
                %215 = vst [vmem:[%s189 + $0x90] sm:$0xff] %v214
                %v216 = vld [vmem:[%s188 + $0x1d4] sm:$0xff]
                %217 = vst [vmem:[%s189 + $0x9c] sm:$0xff] %v216
                %v218 = vld [vmem:[%s188 + $0x1f8] sm:$0xff]
                %219 = vst [vmem:[%s189 + $0xa8] sm:$0xff] %v218
                %v220 = vld [vmem:[%s188 + $0x21c] sm:$0xff]
                %221 = vst [vmem:[%s189 + $0xb4] sm:$0xff] %v220
              $region37: #{unet_forward.12} parent=31 // loop_footer
                %s187 = sadd.s32 1, %s183
              $region38: #{unet_forward.12} parent=31 // loop_footer_branch
                %182 = sbr.rel target = $region34
              $region39: #{unet_forward.12} parent=31 // loop_exit
                _
              %s223 = ssub.s32 16, 1
              loop: start=0, step=1, limit=1
              $region40: #{unet_forward.12} parent=31 // loop_pre_header
                _
              $region41: #{unet_forward.12} parent=31 // loop_header
                %s225 = sphi 0, %s229
                %p226 = scmp.ge.s32.totalorder %s225, 1
                %s230 = sphi %s180, %s180
                %s231 = sphi %s181, %s181
              $region42: #{unet_forward.12} parent=31 // loop_header_branch
                %228 = sbr.rel (%p226) target = $region46
              $region43: #{unet_forward.12} parent=31 // loop_body
                %v232 = vld [vmem:[%s230] sm:%s223]
                %233 = vst [vmem:[%s231] sm:%s223] %v232
                %v234 = vld [vmem:[%s230 + $0x24] sm:%s223]
                %235 = vst [vmem:[%s231 + $0xc] sm:%s223] %v234
                %v236 = vld [vmem:[%s230 + $0x48] sm:%s223]
                %237 = vst [vmem:[%s231 + $0x18] sm:%s223] %v236
                %v238 = vld [vmem:[%s230 + $0x6c] sm:%s223]
                %239 = vst [vmem:[%s231 + $0x24] sm:%s223] %v238
                %v240 = vld [vmem:[%s230 + $0x90] sm:%s223]
                %241 = vst [vmem:[%s231 + $0x30] sm:%s223] %v240
                %v242 = vld [vmem:[%s230 + $0xb4] sm:%s223]
                %243 = vst [vmem:[%s231 + $0x3c] sm:%s223] %v242
                %v244 = vld [vmem:[%s230 + $0xd8] sm:%s223]
                %245 = vst [vmem:[%s231 + $0x48] sm:%s223] %v244
                %v246 = vld [vmem:[%s230 + $0xfc] sm:%s223]
                %247 = vst [vmem:[%s231 + $0x54] sm:%s223] %v246
                %v248 = vld [vmem:[%s230 + $0x120] sm:%s223]
                %249 = vst [vmem:[%s231 + $0x60] sm:%s223] %v248
                %v250 = vld [vmem:[%s230 + $0x144] sm:%s223]
                %251 = vst [vmem:[%s231 + $0x6c] sm:%s223] %v250
                %v252 = vld [vmem:[%s230 + $0x168] sm:%s223]
                %253 = vst [vmem:[%s231 + $0x78] sm:%s223] %v252
                %v254 = vld [vmem:[%s230 + $0x18c] sm:%s223]
                %255 = vst [vmem:[%s231 + $0x84] sm:%s223] %v254
                %v256 = vld [vmem:[%s230 + $0x1b0] sm:%s223]
                %257 = vst [vmem:[%s231 + $0x90] sm:%s223] %v256
                %v258 = vld [vmem:[%s230 + $0x1d4] sm:%s223]
                %259 = vst [vmem:[%s231 + $0x9c] sm:%s223] %v258
                %v260 = vld [vmem:[%s230 + $0x1f8] sm:%s223]
                %261 = vst [vmem:[%s231 + $0xa8] sm:%s223] %v260
                %v262 = vld [vmem:[%s230 + $0x21c] sm:%s223]
                %263 = vst [vmem:[%s231 + $0xb4] sm:%s223] %v262
              $region44: #{unet_forward.12} parent=31 // loop_footer
                %s229 = sadd.s32 1, %s225
              $region45: #{unet_forward.12} parent=31 // loop_footer_branch
                %224 = sbr.rel target = $region41
              $region46: #{unet_forward.12} parent=31 // loop_exit
                _
            $region32: #{unet_forward.12} parent=27 // pred_fallthru
              _
          $region28: #{unet_forward.12} parent=23 // pred_fallthru
            _
          %264 = vnop
        $region24: #{unet_forward.12} parent=19 // pred_fallthru
          _
        // Predicated region
        $region47: #{unet_forward.12} parent=19 // pred_check
          %p265 = pneg %p78
        $region48: #{unet_forward.12} parent=19 // pred_check_branch
          %267 = sbr.rel (%p265) target = $region50
        $region49: #{unet_forward.12} parent=19 // pred_region
          %s268 = smul.u32 48, %s18
          %p269 = scmp.lt.s32.totalorder %s268, 143
          %s270 = scalar_select %p269, %s268, 143
          %p271 = scmp.lt.s32.totalorder %s17, 0
          %s272 = scalar_select %p271, %s17, 0
          %s273 = sadd.s32 %s272, %s270
          %s274 = smul.addr %s273, 4
          %s275 = scalar_lea.vmem %s1, %s274
          %s276 = smul.u32 48, %s18
        $region50: #{unet_forward.12} parent=19 // pred_fallthru
          _
      $region20: #{unet_forward.12} parent=5 // pred_fallthru
        _
      %p277 = scmp.le.s32.totalorder 1, %s9
      %p278 = scmp.lt.s32.totalorder %s9, 4
      %p279 = pnand %p277, %p278
      %p280 = pneg %p279
      // Predicated region
      $region51: #{unet_forward.12} parent=5 // pred_check
        _
      $region52: #{unet_forward.12} parent=5 // pred_check_branch
        %282 = sbr.rel (%p279) target = $region54
      $region53: #{unet_forward.12} parent=5 // pred_region
        %s283 = ssub.s32 %s9, 1
        %s284 = sand.u32 %s43, 1
        %s285 = sand.u32 %s43, 1
        %s286 = smul.addr %s285, 192
        %s287 = scalar_lea.vmem [#allocation3], %s286
        // Predicated region
        $region55: #{unet_forward.12} parent=53 // pred_check
          %p288 = pneg %p56
        $region56: #{unet_forward.12} parent=53 // pred_check_branch
          %290 = sbr.rel (%p288) target = $region58
        $region57: #{unet_forward.12} parent=53 // pred_region
          _
        $region58: #{unet_forward.12} parent=53 // pred_fallthru
          _
        %s291 = sand.u32 %s43, 1
        %s292 = sand.u32 %s43, 1
        %s293 = smul.addr %s292, 192
        %s294 = scalar_lea.vmem [#allocation3], %s293
        %p295 = pneg %p56
        %p296 = pneg %p53
        %s297 = smul.u32 48, %s21
        %p298 = scmp.lt.s32.totalorder %s297, 143
        %s299 = scalar_select %p298, %s297, 143
        %p300 = scmp.lt.s32.totalorder %s20, 0
        %s301 = scalar_select %p300, %s20, 0
        %s302 = sadd.s32 %s301, %s299
        %s303 = smul.addr %s302, 4
        %s304 = scalar_lea.vmem %s1, %s303
        %p305 = pneg %p84
        %p306 = pneg %p81
        %p307 = scmp.lt.s32.totalorder %s20, 0
        %s308 = scalar_select %p307, %s20, 0
        %s309 = scalar_lea.vmem %s2, %s308
        %p310 = pneg %p110
        %p311 = pneg %p107
        %p312 = pneg %p138
        %p313 = pneg %p135
        %s314 = smul.u32 16, %s19
        %p315 = scmp.lt.s32.totalorder %s314, 15
        %s316 = scalar_select %p315, %s314, 15
        %p317 = scmp.lt.s32.totalorder %s20, 0
        %s318 = scalar_select %p317, %s20, 0
        %s319 = sadd.s32 %s318, %s316
        %s320 = smul.addr %s319, 4
        %s321 = scalar_lea.vmem %s3, %s320
        %s322 = smul.u32 16, %s19
        %s323 = smul.u32 3, %s21
        %s324 = smul.u32 48, %s21
        %p325 = scmp.lt.s32.totalorder %s324, 143
        %s326 = scalar_select %p325, %s324, 143
        %p327 = scmp.lt.s32.totalorder %s20, 0
        %s328 = scalar_select %p327, %s20, 0
        %s329 = sadd.s32 %s328, %s326
        %s330 = smul.addr %s329, 4
        %s331 = scalar_lea.vmem %s1, %s330
        %s332 = smul.u32 48, %s21
        %p333 = scmp.lt.s32.totalorder %s20, 0
        %s334 = scalar_select %p333, %s20, 0
        %s335 = scalar_lea.vmem %s2, %s334
        %s336 = smul.u32 16, %s19
        %p337 = scmp.lt.s32.totalorder %s336, 15
        %s338 = scalar_select %p337, %s336, 15
        %p339 = scmp.lt.s32.totalorder %s20, 0
        %s340 = scalar_select %p339, %s20, 0
        %s341 = sadd.s32 %s340, %s338
        %s342 = smul.addr %s341, 4
        %s343 = scalar_lea.vmem %s3, %s342
        %s344 = smul.u32 16, %s19
        %p346 = scmp.eq.s32.totalorder %s21, 0
        // Predicated region
        $region59: #{unet_forward.12} parent=53 // pred_check
          %p347 = pneg %p346
        $region60: #{unet_forward.12} parent=53 // pred_check_branch
          %349 = sbr.rel (%p347) target = $region62
        $region61: #{unet_forward.12} parent=53 // pred_region
          %350 = vst [vmem:[#allocation2] sm:$0xff] 0.0
          %351 = vst [vmem:[#allocation2 + $0x8] sm:$0xff] 0.0
          %352 = vst [vmem:[#allocation2 + $0x10] sm:$0xff] 0.0
          %353 = vst [vmem:[#allocation2 + $0x18] sm:$0xff] 0.0
          %354 = vst [vmem:[#allocation2 + $0x20] sm:$0xff] 0.0
          %355 = vst [vmem:[#allocation2 + $0x28] sm:$0xff] 0.0
          %356 = vst [vmem:[#allocation2 + $0x30] sm:$0xff] 0.0
          %357 = vst [vmem:[#allocation2 + $0x38] sm:$0xff] 0.0
          %358 = vst [vmem:[#allocation2 + $0x40] sm:$0xff] 0.0
          %359 = vst [vmem:[#allocation2 + $0x48] sm:$0xff] 0.0
          %360 = vst [vmem:[#allocation2 + $0x50] sm:$0xff] 0.0
          %361 = vst [vmem:[#allocation2 + $0x58] sm:$0xff] 0.0
          %362 = vst [vmem:[#allocation2 + $0x60] sm:$0xff] 0.0
          %363 = vst [vmem:[#allocation2 + $0x68] sm:$0xff] 0.0
          %364 = vst [vmem:[#allocation2 + $0x70] sm:$0xff] 0.0
          %365 = vst [vmem:[#allocation2 + $0x78] sm:$0xff] 0.0
        $region62: #{unet_forward.12} parent=53 // pred_fallthru
          _
        %v366 = vld [vmem:[#allocation2] sm:$0xff]
        %v367 = vld [vmem:[#allocation2 + $0x8] sm:$0xff]
        %v368 = vld [vmem:[#allocation2 + $0x10] sm:$0xff]
        %v369 = vld [vmem:[#allocation2 + $0x18] sm:$0xff]
        %v370 = vld [vmem:[#allocation2 + $0x20] sm:$0xff]
        %v371 = vld [vmem:[#allocation2 + $0x28] sm:$0xff]
        %v372 = vld [vmem:[#allocation2 + $0x30] sm:$0xff]
        %v373 = vld [vmem:[#allocation2 + $0x38] sm:$0xff]
        %v374 = vld [vmem:[#allocation2 + $0x40] sm:$0xff]
        %v375 = vld [vmem:[#allocation2 + $0x48] sm:$0xff]
        %v376 = vld [vmem:[#allocation2 + $0x50] sm:$0xff]
        %v377 = vld [vmem:[#allocation2 + $0x58] sm:$0xff]
        %v378 = vld [vmem:[#allocation2 + $0x60] sm:$0xff]
        %v379 = vld [vmem:[#allocation2 + $0x68] sm:$0xff]
        %v380 = vld [vmem:[#allocation2 + $0x70] sm:$0xff]
        %v381 = vld [vmem:[#allocation2 + $0x78] sm:$0xff]
        %v382 = vld [vmem:[%s287] sm:$0xff]
        %v383 = vld [vmem:[%s287 + $0x8] sm:$0xf]
        %v384 = vld [vmem:[%s287 + $0xc] sm:$0xff]
        %v385 = vld [vmem:[%s287 + $0x14] sm:$0xf]
        %v386 = vld [vmem:[%s287 + $0x18] sm:$0xff]
        %v387 = vld [vmem:[%s287 + $0x20] sm:$0xf]
        %v388 = vld [vmem:[%s287 + $0x24] sm:$0xff]
        %v389 = vld [vmem:[%s287 + $0x2c] sm:$0xf]
        %v390 = vld [vmem:[%s287 + $0x30] sm:$0xff]
        %v391 = vld [vmem:[%s287 + $0x38] sm:$0xf]
        %v392 = vld [vmem:[%s287 + $0x3c] sm:$0xff]
        %v393 = vld [vmem:[%s287 + $0x44] sm:$0xf]
        %v394 = vld [vmem:[%s287 + $0x48] sm:$0xff]
        %v395 = vld [vmem:[%s287 + $0x50] sm:$0xf]
        %v396 = vld [vmem:[%s287 + $0x54] sm:$0xff]
        %v397 = vld [vmem:[%s287 + $0x5c] sm:$0xf]
        %v398 = vld [vmem:[%s287 + $0x60] sm:$0xff]
        %v399 = vld [vmem:[%s287 + $0x68] sm:$0xf]
        %v400 = vld [vmem:[%s287 + $0x6c] sm:$0xff]
        %v401 = vld [vmem:[%s287 + $0x74] sm:$0xf]
        %v402 = vld [vmem:[%s287 + $0x78] sm:$0xff]
        %v403 = vld [vmem:[%s287 + $0x80] sm:$0xf]
        %v404 = vld [vmem:[%s287 + $0x84] sm:$0xff]
        %v405 = vld [vmem:[%s287 + $0x8c] sm:$0xf]
        %v406 = vld [vmem:[%s287 + $0x90] sm:$0xff]
        %v407 = vld [vmem:[%s287 + $0x98] sm:$0xf]
        %v408 = vld [vmem:[%s287 + $0x9c] sm:$0xff]
        %v409 = vld [vmem:[%s287 + $0xa4] sm:$0xf]
        %v410 = vld [vmem:[%s287 + $0xa8] sm:$0xff]
        %v411 = vld [vmem:[%s287 + $0xb0] sm:$0xf]
        %v412 = vld [vmem:[%s287 + $0xb4] sm:$0xff]
        %v413 = vld [vmem:[%s287 + $0xbc] sm:$0xf]
        %v414 = vld [vmem:[%s331] sm:$0xf]
        %v415 = vld [vmem:[%s331 + $0x4] sm:$0xf]
        %v416 = vld [vmem:[%s331 + $0x8] sm:$0xf]
        %v417 = vld [vmem:[%s331 + $0xc] sm:$0xf]
        %v418 = vld [vmem:[%s331 + $0x10] sm:$0xf]
        %v419 = vld [vmem:[%s331 + $0x14] sm:$0xf]
        %v420 = vld [vmem:[%s331 + $0x18] sm:$0xf]
        %v421 = vld [vmem:[%s331 + $0x1c] sm:$0xf]
        %v422 = vld [vmem:[%s331 + $0x20] sm:$0xf]
        %v423 = vld [vmem:[%s331 + $0x24] sm:$0xf]
        %v424 = vld [vmem:[%s331 + $0x28] sm:$0xf]
        %v425 = vld [vmem:[%s331 + $0x2c] sm:$0xf]
        %v426 = vld [vmem:[%s331 + $0x30] sm:$0xf]
        %v427 = vld [vmem:[%s331 + $0x34] sm:$0xf]
        %v428 = vld [vmem:[%s331 + $0x38] sm:$0xf]
        %v429 = vld [vmem:[%s331 + $0x3c] sm:$0xf]
        %v430 = vld [vmem:[%s331 + $0x40] sm:$0xf]
        %v431 = vld [vmem:[%s331 + $0x44] sm:$0xf]
        %v432 = vld [vmem:[%s331 + $0x48] sm:$0xf]
        %v433 = vld [vmem:[%s331 + $0x4c] sm:$0xf]
        %v434 = vld [vmem:[%s331 + $0x50] sm:$0xf]
        %v435 = vld [vmem:[%s331 + $0x54] sm:$0xf]
        %v436 = vld [vmem:[%s331 + $0x58] sm:$0xf]
        %v437 = vld [vmem:[%s331 + $0x5c] sm:$0xf]
        %v438 = vld [vmem:[%s331 + $0x60] sm:$0xf]
        %v439 = vld [vmem:[%s331 + $0x64] sm:$0xf]
        %v440 = vld [vmem:[%s331 + $0x68] sm:$0xf]
        %v441 = vld [vmem:[%s331 + $0x6c] sm:$0xf]
        %v442 = vld [vmem:[%s331 + $0x70] sm:$0xf]
        %v443 = vld [vmem:[%s331 + $0x74] sm:$0xf]
        %v444 = vld [vmem:[%s331 + $0x78] sm:$0xf]
        %v445 = vld [vmem:[%s331 + $0x7c] sm:$0xf]
        %v446 = vld [vmem:[%s331 + $0x80] sm:$0xf]
        %v447 = vld [vmem:[%s331 + $0x84] sm:$0xf]
        %v448 = vld [vmem:[%s331 + $0x88] sm:$0xf]
        %v449 = vld [vmem:[%s331 + $0x8c] sm:$0xf]
        %v450 = vld [vmem:[%s331 + $0x90] sm:$0xf]
        %v451 = vld [vmem:[%s331 + $0x94] sm:$0xf]
        %v452 = vld [vmem:[%s331 + $0x98] sm:$0xf]
        %v453 = vld [vmem:[%s331 + $0x9c] sm:$0xf]
        %v454 = vld [vmem:[%s331 + $0xa0] sm:$0xf]
        %v455 = vld [vmem:[%s331 + $0xa4] sm:$0xf]
        %v456 = vld [vmem:[%s331 + $0xa8] sm:$0xf]
        %v457 = vld [vmem:[%s331 + $0xac] sm:$0xf]
        %v458 = vld [vmem:[%s331 + $0xb0] sm:$0xf]
        %v459 = vld [vmem:[%s331 + $0xb4] sm:$0xf]
        %v460 = vld [vmem:[%s331 + $0xb8] sm:$0xf]
        %v461 = vld [vmem:[%s331 + $0xbc] sm:$0xf]
        %v494 = vunpack.c.l.b16 %v382
        %v495 = vunpack.c.h.b16 %v382
        %v496 = vunpack.c.l.b16 %v383
        %v497 = vunpack.c.l.b16 %v384
        %v498 = vunpack.c.h.b16 %v384
        %v499 = vunpack.c.l.b16 %v385
        %v500 = vunpack.c.l.b16 %v386
        %v501 = vunpack.c.h.b16 %v386
        %v502 = vunpack.c.l.b16 %v387
        %v503 = vunpack.c.l.b16 %v388
        %v504 = vunpack.c.h.b16 %v388
        %v505 = vunpack.c.l.b16 %v389
        %v506 = vunpack.c.l.b16 %v390
        %v507 = vunpack.c.h.b16 %v390
        %v508 = vunpack.c.l.b16 %v391
        %v509 = vunpack.c.l.b16 %v392
        %v510 = vunpack.c.h.b16 %v392
        %v511 = vunpack.c.l.b16 %v393
        %v512 = vunpack.c.l.b16 %v394
        %v513 = vunpack.c.h.b16 %v394
        %v514 = vunpack.c.l.b16 %v395
        %v515 = vunpack.c.l.b16 %v396
        %v516 = vunpack.c.h.b16 %v396
        %v517 = vunpack.c.l.b16 %v397
        %v518 = vunpack.c.l.b16 %v398
        %v519 = vunpack.c.h.b16 %v398
        %v520 = vunpack.c.l.b16 %v399
        %v521 = vunpack.c.l.b16 %v400
        %v522 = vunpack.c.h.b16 %v400
        %v523 = vunpack.c.l.b16 %v401
        %v524 = vunpack.c.l.b16 %v402
        %v525 = vunpack.c.h.b16 %v402
        %v526 = vunpack.c.l.b16 %v403
        %v527 = vunpack.c.l.b16 %v404
        %v528 = vunpack.c.h.b16 %v404
        %v529 = vunpack.c.l.b16 %v405
        %v530 = vunpack.c.l.b16 %v406
        %v531 = vunpack.c.h.b16 %v406
        %v532 = vunpack.c.l.b16 %v407
        %v533 = vunpack.c.l.b16 %v408
        %v534 = vunpack.c.h.b16 %v408
        %v535 = vunpack.c.l.b16 %v409
        %v536 = vunpack.c.l.b16 %v410
        %v537 = vunpack.c.h.b16 %v410
        %v538 = vunpack.c.l.b16 %v411
        %v539 = vunpack.c.l.b16 %v412
        %v540 = vunpack.c.h.b16 %v412
        %v541 = vunpack.c.l.b16 %v413
        %v542 = vpack.c.b16 %v497, %v494
        %v543 = vpack.c.b16 %v498, %v495
        %v544 = vpack.c.b16 %v499, %v496
        %v545 = vpack.c.b16 %v503, %v500
        %v546 = vpack.c.b16 %v504, %v501
        %v547 = vpack.c.b16 %v505, %v502
        %v548 = vpack.c.b16 %v509, %v506
        %v549 = vpack.c.b16 %v510, %v507
        %v550 = vpack.c.b16 %v511, %v508
        %v551 = vpack.c.b16 %v515, %v512
        %v552 = vpack.c.b16 %v516, %v513
        %v553 = vpack.c.b16 %v517, %v514
        %v554 = vpack.c.b16 %v521, %v518
        %v555 = vpack.c.b16 %v522, %v519
        %v556 = vpack.c.b16 %v523, %v520
        %v557 = vpack.c.b16 %v527, %v524
        %v558 = vpack.c.b16 %v528, %v525
        %v559 = vpack.c.b16 %v529, %v526
        %v560 = vpack.c.b16 %v533, %v530
        %v561 = vpack.c.b16 %v534, %v531
        %v562 = vpack.c.b16 %v535, %v532
        %v563 = vpack.c.b16 %v539, %v536
        %v564 = vpack.c.b16 %v540, %v537
        %v565 = vpack.c.b16 %v541, %v538
        %v638 = vunpack.c.l.b16 %v414
        %v639 = vunpack.c.l.b16 %v415
        %v640 = vunpack.c.l.b16 %v416
        %v641 = vunpack.c.l.b16 %v417
        %v642 = vunpack.c.l.b16 %v418
        %v643 = vunpack.c.l.b16 %v419
        %v644 = vunpack.c.l.b16 %v420
        %v645 = vunpack.c.l.b16 %v421
        %v646 = vunpack.c.l.b16 %v422
        %v647 = vunpack.c.l.b16 %v423
        %v648 = vunpack.c.l.b16 %v424
        %v649 = vunpack.c.l.b16 %v425
        %v650 = vunpack.c.l.b16 %v426
        %v651 = vunpack.c.l.b16 %v427
        %v652 = vunpack.c.l.b16 %v428
        %v653 = vunpack.c.l.b16 %v429
        %v654 = vunpack.c.l.b16 %v430
        %v655 = vunpack.c.l.b16 %v431
        %v656 = vunpack.c.l.b16 %v432
        %v657 = vunpack.c.l.b16 %v433
        %v658 = vunpack.c.l.b16 %v434
        %v659 = vunpack.c.l.b16 %v435
        %v660 = vunpack.c.l.b16 %v436
        %v661 = vunpack.c.l.b16 %v437
        %v662 = vunpack.c.l.b16 %v438
        %v663 = vunpack.c.l.b16 %v439
        %v664 = vunpack.c.l.b16 %v440
        %v665 = vunpack.c.l.b16 %v441
        %v666 = vunpack.c.l.b16 %v442
        %v667 = vunpack.c.l.b16 %v443
        %v668 = vunpack.c.l.b16 %v444
        %v669 = vunpack.c.l.b16 %v445
        %v670 = vunpack.c.l.b16 %v446
        %v671 = vunpack.c.l.b16 %v447
        %v672 = vunpack.c.l.b16 %v448
        %v673 = vunpack.c.l.b16 %v449
        %v674 = vunpack.c.l.b16 %v450
        %v675 = vunpack.c.l.b16 %v451
        %v676 = vunpack.c.l.b16 %v452
        %v677 = vunpack.c.l.b16 %v453
        %v678 = vunpack.c.l.b16 %v454
        %v679 = vunpack.c.l.b16 %v455
        %v680 = vunpack.c.l.b16 %v456
        %v681 = vunpack.c.l.b16 %v457
        %v682 = vunpack.c.l.b16 %v458
        %v683 = vunpack.c.l.b16 %v459
        %v684 = vunpack.c.l.b16 %v460
        %v685 = vunpack.c.l.b16 %v461
        %v686 = vpack.c.b16 %v639, %v638
        %v687 = vpack.c.b16 %v641, %v640
        %v688 = vpack.c.b16 %v643, %v642
        %v689 = vpack.c.b16 %v645, %v644
        %v690 = vpack.c.b16 %v647, %v646
        %v691 = vpack.c.b16 %v649, %v648
        %v692 = vpack.c.b16 %v651, %v650
        %v693 = vpack.c.b16 %v653, %v652
        %v694 = vpack.c.b16 %v655, %v654
        %v695 = vpack.c.b16 %v657, %v656
        %v696 = vpack.c.b16 %v659, %v658
        %v697 = vpack.c.b16 %v661, %v660
        %v698 = vpack.c.b16 %v663, %v662
        %v699 = vpack.c.b16 %v665, %v664
        %v700 = vpack.c.b16 %v667, %v666
        %v701 = vpack.c.b16 %v669, %v668
        %v702 = vpack.c.b16 %v671, %v670
        %v703 = vpack.c.b16 %v673, %v672
        %v704 = vpack.c.b16 %v675, %v674
        %v705 = vpack.c.b16 %v677, %v676
        %v706 = vpack.c.b16 %v679, %v678
        %v707 = vpack.c.b16 %v681, %v680
        %v708 = vpack.c.b16 %v683, %v682
        %v709 = vpack.c.b16 %v685, %v684
        %734 = vmatprep.subr.bf16.mxu0 0
        %735 = vmatpush1.bf16.msra.mxu0 %v693
        %736 = vmatprep.subr.bf16.mxu0 0
        %737 = vmatpush1.bf16.msra.mxu0 %v692
        %738 = vmatprep.subr.bf16.mxu0 0
        %739 = vmatpush1.bf16.msra.mxu0 %v691
        %740 = vmatprep.subr.bf16.mxu0 0
        %741 = vmatpush1.bf16.msra.mxu0 %v690
        %742 = vmatprep.subr.bf16.mxu0 0
        %743 = vmatpush1.bf16.msra.mxu0 %v689
        %744 = vmatprep.subr.bf16.mxu0 0
        %745 = vmatpush1.bf16.msra.mxu0 %v688
        %746 = vmatprep.subr.bf16.mxu0 0
        %747 = vmatpush1.bf16.msra.mxu0 %v687
        %748 = vmatprep.subr.bf16.mxu0 0
        %749 = vmatpush1.bf16.msra.mxu0 %v686
        %750 = vmatprep.subr.bf16.mxu0 0
        %751 = vmatpush2.bf16.msra.mxu0 %v701
        %752 = vmatprep.subr.bf16.mxu0 0
        %753 = vmatpush2.bf16.msra.mxu0 %v700
        %754 = vmatprep.subr.bf16.mxu0 0
        %755 = vmatpush2.bf16.msra.mxu0 %v699
        %756 = vmatprep.subr.bf16.mxu0 0
        %757 = vmatpush2.bf16.msra.mxu0 %v698
        %758 = vmatprep.subr.bf16.mxu0 0
        %759 = vmatpush2.bf16.msra.mxu0 %v697
        %760 = vmatprep.subr.bf16.mxu0 0
        %761 = vmatpush2.bf16.msra.mxu0 %v696
        %762 = vmatprep.subr.bf16.mxu0 0
        %763 = vmatpush2.bf16.msra.mxu0 %v695
        %764 = vmatprep.subr.bf16.mxu0 0
        %765 = vmatpush2.bf16.msra.mxu0 %v694
        %766 = vmatprep.mubr.bf16.mxu0 %v543
        %767 = vmatmul.mubr.bf16.gmra.mxu0 %v542
        %v768 = vpop.f32.mrf.mxu0
        %v769 = vadd.f32 0.0, %v768
        %v770 = vpop.f32.mrf.mxu0
        %v771 = vpop.f32.mrf.mxu0
        %v772 = vadd.f32 0.0, %v771
        %v773 = vpop.f32.mrf.mxu0
        %774 = vmatprep.mubr.bf16.mxu0 %v546
        %775 = vmatmul.mubr.bf16.gmra.mxu0 %v545
        %v776 = vpop.f32.mrf.mxu0
        %v777 = vadd.f32 0.0, %v776
        %v778 = vpop.f32.mrf.mxu0
        %v779 = vpop.f32.mrf.mxu0
        %v780 = vadd.f32 0.0, %v779
        %v781 = vpop.f32.mrf.mxu0
        %782 = vmatprep.mubr.bf16.mxu0 %v549
        %783 = vmatmul.mubr.bf16.gmra.mxu0 %v548
        %v784 = vpop.f32.mrf.mxu0
        %v785 = vadd.f32 0.0, %v784
        %v786 = vpop.f32.mrf.mxu0
        %v787 = vpop.f32.mrf.mxu0
        %v788 = vadd.f32 0.0, %v787
        %v789 = vpop.f32.mrf.mxu0
        %790 = vmatprep.mubr.bf16.mxu0 %v552
        %791 = vmatmul.mubr.bf16.gmra.mxu0 %v551
        %v792 = vpop.f32.mrf.mxu0
        %v793 = vadd.f32 0.0, %v792
        %v794 = vpop.f32.mrf.mxu0
        %v795 = vpop.f32.mrf.mxu0
        %v796 = vadd.f32 0.0, %v795
        %v797 = vpop.f32.mrf.mxu0
        %798 = vmatprep.mubr.bf16.mxu0 %v555
        %799 = vmatmul.mubr.bf16.gmra.mxu0 %v554
        %v800 = vpop.f32.mrf.mxu0
        %v801 = vadd.f32 0.0, %v800
        %v802 = vpop.f32.mrf.mxu0
        %v803 = vpop.f32.mrf.mxu0
        %v804 = vadd.f32 0.0, %v803
        %v805 = vpop.f32.mrf.mxu0
        %806 = vmatprep.mubr.bf16.mxu0 %v558
        %807 = vmatmul.mubr.bf16.gmra.mxu0 %v557
        %v808 = vpop.f32.mrf.mxu0
        %v809 = vadd.f32 0.0, %v808
        %v810 = vpop.f32.mrf.mxu0
        %v811 = vpop.f32.mrf.mxu0
        %v812 = vadd.f32 0.0, %v811
        %v813 = vpop.f32.mrf.mxu0
        %814 = vmatprep.mubr.bf16.mxu0 %v561
        %815 = vmatmul.mubr.bf16.gmra.mxu0 %v560
        %v816 = vpop.f32.mrf.mxu0
        %v817 = vadd.f32 0.0, %v816
        %v818 = vpop.f32.mrf.mxu0
        %v819 = vpop.f32.mrf.mxu0
        %v820 = vadd.f32 0.0, %v819
        %v821 = vpop.f32.mrf.mxu0
        %822 = vmatprep.mubr.bf16.mxu0 %v564
        %823 = vmatmul.mubr.bf16.gmra.mxu0 %v563
        %v824 = vpop.f32.mrf.mxu0
        %v825 = vadd.f32 0.0, %v824
        %v826 = vpop.f32.mrf.mxu0
        %v827 = vpop.f32.mrf.mxu0
        %v828 = vadd.f32 0.0, %v827
        %v829 = vpop.f32.mrf.mxu0
        %830 = vdwg.mxu0
        %831 = vmatprep.subr.bf16.mxu0 0
        %832 = vmatpush1.bf16.msra.mxu0 %v709
        %833 = vmatprep.subr.bf16.mxu0 0
        %834 = vmatpush1.bf16.msra.mxu0 %v708
        %835 = vmatprep.subr.bf16.mxu0 0
        %836 = vmatpush1.bf16.msra.mxu0 %v707
        %837 = vmatprep.subr.bf16.mxu0 0
        %838 = vmatpush1.bf16.msra.mxu0 %v706
        %839 = vmatprep.subr.bf16.mxu0 0
        %840 = vmatpush1.bf16.msra.mxu0 %v705
        %841 = vmatprep.subr.bf16.mxu0 0
        %842 = vmatpush1.bf16.msra.mxu0 %v704
        %843 = vmatprep.subr.bf16.mxu0 0
        %844 = vmatpush1.bf16.msra.mxu0 %v703
        %845 = vmatprep.subr.bf16.mxu0 0
        %846 = vmatpush1.bf16.msra.mxu0 %v702
        %847 = vmatprep.subr.bf16.mxu0 0
        %848 = vmatpush2.bf16.msra.mxu0 0
        %849 = vmatprep.subr.bf16.mxu0 0
        %850 = vmatpush2.bf16.msra.mxu0 0
        %851 = vmatprep.subr.bf16.mxu0 0
        %852 = vmatpush2.bf16.msra.mxu0 0
        %853 = vmatprep.subr.bf16.mxu0 0
        %854 = vmatpush2.bf16.msra.mxu0 0
        %855 = vmatprep.subr.bf16.mxu0 0
        %856 = vmatpush2.bf16.msra.mxu0 0
        %857 = vmatprep.subr.bf16.mxu0 0
        %858 = vmatpush2.bf16.msra.mxu0 0
        %859 = vmatprep.subr.bf16.mxu0 0
        %860 = vmatpush2.bf16.msra.mxu0 0
        %861 = vmatprep.subr.bf16.mxu0 0
        %862 = vmatpush2.bf16.msra.mxu0 0
        %863 = vmatprep.mubr.bf16.mxu0 0
        %864 = vmatmul.mubr.bf16.gmra.mxu0 %v544
        %v865 = vpop.f32.mrf.mxu0
        %v866 = vadd.f32 %v769, %v865
        %v867 = vpop.f32.mrf.mxu0
        %v868 = vpop.f32.mrf.mxu0
        %v869 = vadd.f32 %v772, %v868
        %v870 = vpop.f32.mrf.mxu0
        %871 = vmatprep.mubr.bf16.mxu0 0
        %872 = vmatmul.mubr.bf16.gmra.mxu0 %v547
        %v873 = vpop.f32.mrf.mxu0
        %v874 = vadd.f32 %v777, %v873
        %v875 = vpop.f32.mrf.mxu0
        %v876 = vpop.f32.mrf.mxu0
        %v877 = vadd.f32 %v780, %v876
        %v878 = vpop.f32.mrf.mxu0
        %879 = vmatprep.mubr.bf16.mxu0 0
        %880 = vmatmul.mubr.bf16.gmra.mxu0 %v550
        %v881 = vpop.f32.mrf.mxu0
        %v882 = vadd.f32 %v785, %v881
        %v883 = vpop.f32.mrf.mxu0
        %v884 = vpop.f32.mrf.mxu0
        %v885 = vadd.f32 %v788, %v884
        %v886 = vpop.f32.mrf.mxu0
        %887 = vmatprep.mubr.bf16.mxu0 0
        %888 = vmatmul.mubr.bf16.gmra.mxu0 %v553
        %v889 = vpop.f32.mrf.mxu0
        %v890 = vadd.f32 %v793, %v889
        %v891 = vpop.f32.mrf.mxu0
        %v892 = vpop.f32.mrf.mxu0
        %v893 = vadd.f32 %v796, %v892
        %v894 = vpop.f32.mrf.mxu0
        %895 = vmatprep.mubr.bf16.mxu0 0
        %896 = vmatmul.mubr.bf16.gmra.mxu0 %v556
        %v897 = vpop.f32.mrf.mxu0
        %v898 = vadd.f32 %v801, %v897
        %v899 = vpop.f32.mrf.mxu0
        %v900 = vpop.f32.mrf.mxu0
        %v901 = vadd.f32 %v804, %v900
        %v902 = vpop.f32.mrf.mxu0
        %903 = vmatprep.mubr.bf16.mxu0 0
        %904 = vmatmul.mubr.bf16.gmra.mxu0 %v559
        %v905 = vpop.f32.mrf.mxu0
        %v906 = vadd.f32 %v809, %v905
        %v907 = vpop.f32.mrf.mxu0
        %v908 = vpop.f32.mrf.mxu0
        %v909 = vadd.f32 %v812, %v908
        %v910 = vpop.f32.mrf.mxu0
        %911 = vmatprep.mubr.bf16.mxu0 0
        %912 = vmatmul.mubr.bf16.gmra.mxu0 %v562
        %v913 = vpop.f32.mrf.mxu0
        %v914 = vadd.f32 %v817, %v913
        %v915 = vpop.f32.mrf.mxu0
        %v916 = vpop.f32.mrf.mxu0
        %v917 = vadd.f32 %v820, %v916
        %v918 = vpop.f32.mrf.mxu0
        %919 = vmatprep.mubr.bf16.mxu0 0
        %920 = vmatmul.mubr.bf16.gmra.mxu0 %v565
        %v921 = vpop.f32.mrf.mxu0
        %v922 = vadd.f32 %v825, %v921
        %v923 = vpop.f32.mrf.mxu0
        %v924 = vpop.f32.mrf.mxu0
        %v925 = vadd.f32 %v828, %v924
        %v926 = vpop.f32.mrf.mxu0
        %927 = vdwg.mxu0
        %v928 = vadd.f32 %v366, %v866
        %v929 = vadd.f32 %v367, %v869
        %v930 = vadd.f32 %v368, %v874
        %v931 = vadd.f32 %v369, %v877
        %v932 = vadd.f32 %v370, %v882
        %v933 = vadd.f32 %v371, %v885
        %v934 = vadd.f32 %v372, %v890
        %v935 = vadd.f32 %v373, %v893
        %v936 = vadd.f32 %v374, %v898
        %v937 = vadd.f32 %v375, %v901
        %v938 = vadd.f32 %v376, %v906
        %v939 = vadd.f32 %v377, %v909
        %v940 = vadd.f32 %v378, %v914
        %v941 = vadd.f32 %v379, %v917
        %v942 = vadd.f32 %v380, %v922
        %v943 = vadd.f32 %v381, %v925
        %944 = vst [vmem:[#allocation2] sm:$0xff] %v928
        %945 = vst [vmem:[#allocation2 + $0x8] sm:$0xff] %v929
        %946 = vst [vmem:[#allocation2 + $0x10] sm:$0xff] %v930
        %947 = vst [vmem:[#allocation2 + $0x18] sm:$0xff] %v931
        %948 = vst [vmem:[#allocation2 + $0x20] sm:$0xff] %v932
        %949 = vst [vmem:[#allocation2 + $0x28] sm:$0xff] %v933
        %950 = vst [vmem:[#allocation2 + $0x30] sm:$0xff] %v934
        %951 = vst [vmem:[#allocation2 + $0x38] sm:$0xff] %v935
        %952 = vst [vmem:[#allocation2 + $0x40] sm:$0xff] %v936
        %953 = vst [vmem:[#allocation2 + $0x48] sm:$0xff] %v937
        %954 = vst [vmem:[#allocation2 + $0x50] sm:$0xff] %v938
        %955 = vst [vmem:[#allocation2 + $0x58] sm:$0xff] %v939
        %956 = vst [vmem:[#allocation2 + $0x60] sm:$0xff] %v940
        %957 = vst [vmem:[#allocation2 + $0x68] sm:$0xff] %v941
        %958 = vst [vmem:[#allocation2 + $0x70] sm:$0xff] %v942
        %959 = vst [vmem:[#allocation2 + $0x78] sm:$0xff] %v943
        %p960 = scmp.eq.s32.totalorder %s21, 2
        // Predicated region
        $region63: #{unet_forward.12} parent=53 // pred_check
          %p961 = pneg %p960
        $region64: #{unet_forward.12} parent=53 // pred_check_branch
          %963 = sbr.rel (%p961) target = $region66
        $region65: #{unet_forward.12} parent=53 // pred_region
          %v964 = vld [vmem:[#allocation2] sm:$0xff]
          %v965 = vld [vmem:[#allocation2 + $0x8] sm:$0xff]
          %v966 = vld [vmem:[#allocation2 + $0x10] sm:$0xff]
          %v967 = vld [vmem:[#allocation2 + $0x18] sm:$0xff]
          %v968 = vld [vmem:[#allocation2 + $0x20] sm:$0xff]
          %v969 = vld [vmem:[#allocation2 + $0x28] sm:$0xff]
          %v970 = vld [vmem:[#allocation2 + $0x30] sm:$0xff]
          %v971 = vld [vmem:[#allocation2 + $0x38] sm:$0xff]
          %v972 = vld [vmem:[#allocation2 + $0x40] sm:$0xff]
          %v973 = vld [vmem:[#allocation2 + $0x48] sm:$0xff]
          %v974 = vld [vmem:[#allocation2 + $0x50] sm:$0xff]
          %v975 = vld [vmem:[#allocation2 + $0x58] sm:$0xff]
          %v976 = vld [vmem:[#allocation2 + $0x60] sm:$0xff]
          %v977 = vld [vmem:[#allocation2 + $0x68] sm:$0xff]
          %v978 = vld [vmem:[#allocation2 + $0x70] sm:$0xff]
          %v979 = vld [vmem:[#allocation2 + $0x78] sm:$0xff]
          %v980 = vld [vmem:[%s335] sm:$0x1]
          %v982 = vlaneseq
          %v983 = vshrl.u32 %v982, 7
          %v984 = vsub.s32 0, %v983
          %v985 = vrot.slane %v980, %v984
          %v987 = vadd.f32 %v964, %v985
          %v988 = vadd.f32 %v965, %v985
          %v989 = vadd.f32 %v966, %v985
          %v990 = vadd.f32 %v967, %v985
          %v991 = vadd.f32 %v968, %v985
          %v992 = vadd.f32 %v969, %v985
          %v993 = vadd.f32 %v970, %v985
          %v994 = vadd.f32 %v971, %v985
          %v995 = vadd.f32 %v972, %v985
          %v996 = vadd.f32 %v973, %v985
          %v997 = vadd.f32 %v974, %v985
          %v998 = vadd.f32 %v975, %v985
          %v999 = vadd.f32 %v976, %v985
          %v1000 = vadd.f32 %v977, %v985
          %v1001 = vadd.f32 %v978, %v985
          %v1002 = vadd.f32 %v979, %v985
          %v1003 = vmax.f32 %v987, 0.0
          %v1004 = vmax.f32 %v988, 0.0
          %v1005 = vmax.f32 %v989, 0.0
          %v1006 = vmax.f32 %v990, 0.0
          %v1007 = vmax.f32 %v991, 0.0
          %v1008 = vmax.f32 %v992, 0.0
          %v1009 = vmax.f32 %v993, 0.0
          %v1010 = vmax.f32 %v994, 0.0
          %v1011 = vmax.f32 %v995, 0.0
          %v1012 = vmax.f32 %v996, 0.0
          %v1013 = vmax.f32 %v997, 0.0
          %v1014 = vmax.f32 %v998, 0.0
          %v1015 = vmax.f32 %v999, 0.0
          %v1016 = vmax.f32 %v1000, 0.0
          %v1017 = vmax.f32 %v1001, 0.0
          %v1018 = vmax.f32 %v1002, 0.0
          %v1019 = vpack.c.bf16 %v1004, %v1003
          %v1020 = vpack.c.bf16 %v1006, %v1005
          %v1021 = vpack.c.bf16 %v1008, %v1007
          %v1022 = vpack.c.bf16 %v1010, %v1009
          %v1023 = vpack.c.bf16 %v1012, %v1011
          %v1024 = vpack.c.bf16 %v1014, %v1013
          %v1025 = vpack.c.bf16 %v1016, %v1015
          %v1026 = vpack.c.bf16 %v1018, %v1017
          %v1035 = vunpack.c.l.b16 %v1019
          %v1036 = vunpack.c.h.b16 %v1019
          %v1037 = vunpack.c.l.b16 %v1020
          %v1038 = vunpack.c.h.b16 %v1020
          %v1039 = vunpack.c.l.b16 %v1021
          %v1040 = vunpack.c.h.b16 %v1021
          %v1041 = vunpack.c.l.b16 %v1022
          %v1042 = vunpack.c.h.b16 %v1022
          %v1043 = vunpack.c.l.b16 %v1023
          %v1044 = vunpack.c.h.b16 %v1023
          %v1045 = vunpack.c.l.b16 %v1024
          %v1046 = vunpack.c.h.b16 %v1024
          %v1047 = vunpack.c.l.b16 %v1025
          %v1048 = vunpack.c.h.b16 %v1025
          %v1049 = vunpack.c.l.b16 %v1026
          %v1050 = vunpack.c.h.b16 %v1026
          %v1051 = vpack.c.b16 %v1035, %v1035
          %v1052 = vpack.c.b16 %v1036, %v1036
          %v1053 = vpack.c.b16 %v1037, %v1037
          %v1054 = vpack.c.b16 %v1038, %v1038
          %v1055 = vpack.c.b16 %v1039, %v1039
          %v1056 = vpack.c.b16 %v1040, %v1040
          %v1057 = vpack.c.b16 %v1041, %v1041
          %v1058 = vpack.c.b16 %v1042, %v1042
          %v1059 = vpack.c.b16 %v1043, %v1043
          %v1060 = vpack.c.b16 %v1044, %v1044
          %v1061 = vpack.c.b16 %v1045, %v1045
          %v1062 = vpack.c.b16 %v1046, %v1046
          %v1063 = vpack.c.b16 %v1047, %v1047
          %v1064 = vpack.c.b16 %v1048, %v1048
          %v1065 = vpack.c.b16 %v1049, %v1049
          %v1066 = vpack.c.b16 %v1050, %v1050
          %1083 = vst [vmem:[%s343] sm:$0xf] %v1051
          %1084 = vst [vmem:[%s343 + $0x4] sm:$0xf] %v1052
          %1085 = vst [vmem:[%s343 + $0x8] sm:$0xf] %v1053
          %1086 = vst [vmem:[%s343 + $0xc] sm:$0xf] %v1054
          %1087 = vst [vmem:[%s343 + $0x10] sm:$0xf] %v1055
          %1088 = vst [vmem:[%s343 + $0x14] sm:$0xf] %v1056
          %1089 = vst [vmem:[%s343 + $0x18] sm:$0xf] %v1057
          %1090 = vst [vmem:[%s343 + $0x1c] sm:$0xf] %v1058
          %1091 = vst [vmem:[%s343 + $0x20] sm:$0xf] %v1059
          %1092 = vst [vmem:[%s343 + $0x24] sm:$0xf] %v1060
          %1093 = vst [vmem:[%s343 + $0x28] sm:$0xf] %v1061
          %1094 = vst [vmem:[%s343 + $0x2c] sm:$0xf] %v1062
          %1095 = vst [vmem:[%s343 + $0x30] sm:$0xf] %v1063
          %1096 = vst [vmem:[%s343 + $0x34] sm:$0xf] %v1064
          %1097 = vst [vmem:[%s343 + $0x38] sm:$0xf] %v1065
          %1098 = vst [vmem:[%s343 + $0x3c] sm:$0xf] %v1066
        $region66: #{unet_forward.12} parent=53 // pred_fallthru
          _
        %s1099 = smul.u32 16, %s19
        %p1100 = scmp.lt.s32.totalorder %s1099, 15
        %s1101 = scalar_select %p1100, %s1099, 15
        %p1102 = scmp.lt.s32.totalorder %s20, 0
        %s1103 = scalar_select %p1102, %s20, 0
        %s1104 = sadd.s32 %s1103, %s1101
        %s1105 = smul.addr %s1104, 4
        %s1106 = scalar_lea.vmem %s3, %s1105
        // Predicated region
        $region67: #{unet_forward.12} parent=53 // pred_check
          %p1107 = pneg %p135
        $region68: #{unet_forward.12} parent=53 // pred_check_branch
          %1109 = sbr.rel (%p1107) target = $region70
        $region69: #{unet_forward.12} parent=53 // pred_region
          %s1110 = smul.u32 16, %s19
        $region70: #{unet_forward.12} parent=53 // pred_fallthru
          _
        // Predicated region
        $region71: #{unet_forward.12} parent=53 // pred_check
          %p1111 = pneg %p135
        $region72: #{unet_forward.12} parent=53 // pred_check_branch
          %1113 = sbr.rel (%p1111) target = $region74
        $region73: #{unet_forward.12} parent=53 // pred_region
          %s1114 = smul.u32 16, %s19
          %p1115 = scmp.lt.s32.totalorder %s1114, 15
          %s1116 = scalar_select %p1115, %s1114, 15
          %p1117 = scmp.lt.s32.totalorder %s20, 0
          %s1118 = scalar_select %p1117, %s20, 0
          %s1119 = sadd.s32 %s1118, %s1116
          %s1120 = smul.addr %s1119, 4
          %s1121 = scalar_lea.vmem %s3, %s1120
        $region74: #{unet_forward.12} parent=53 // pred_fallthru
          _
      $region54: #{unet_forward.12} parent=5 // pred_fallthru
        _
      %p1122 = scmp.le.s32.totalorder 2, %s9
      // Predicated region
      $region75: #{unet_forward.12} parent=5 // pred_check
        %p1123 = pneg %p1122
      $region76: #{unet_forward.12} parent=5 // pred_check_branch
        %1125 = sbr.rel (%p1123) target = $region78
      $region77: #{unet_forward.12} parent=5 // pred_region
        %s1126 = ssub.s32 %s9, 2
      $region78: #{unet_forward.12} parent=5 // pred_fallthru
        _
    $region6: #{unet_forward.12} parent=1 // loop_footer
      %s13 = sadd.s32 1, %s9
    $region7: #{unet_forward.12} parent=1 // loop_footer_branch
      %8 = sbr.rel target = $region3
    $region8: #{unet_forward.12} parent=1 // loop_exit
      _

// kernel: mul.51
$region0: #{mul.51}
  #allocation0 [shape = 's32[1]{0}', space=sflag, size = 0x4, scoped, tag = 'scoped memory for mul.51']
  %s0 = inlined_call_operand.vmem [shape: f32[2,512], index: 0, kind: input, shape index: {}]
  %s1 = inlined_call_operand.vmem [shape: f32[2,2,2,512], index: 1, kind: output, shape index: {}]
  // Predicated region
  $region2: #{mul.51} parent=0 // pred_check
    _
  $region3: #{mul.51} parent=0 // pred_check_branch
    %3 = sbr.rel (0) target = $region5
  $region4: #{mul.51} parent=0 // pred_region
    _
  $region5: #{mul.51} parent=0 // pred_fallthru
    _
  %v4 = vld [vmem:[%s0] ss:$0 sm:$0xff]
  %5 = vst [vmem:[%s1] sm:$0x3] %v4
  %s6 = scalar_lea.vmem %s0, 1
  %v7 = vld [vmem:[%s6] ss:$0 sm:$0xff]
  %s8 = scalar_lea.vmem %s1, 16
  %9 = vst [vmem:[%s8] sm:$0x3] %v7
  %s10 = scalar_lea.vmem %s1, 8
  %11 = vst [vmem:[%s10] sm:$0x3] %v4
  %s12 = scalar_lea.vmem %s1, 24
  %13 = vst [vmem:[%s12] sm:$0x3] %v7
  %s14 = scalar_lea.vmem %s0, 2
  %v15 = vld [vmem:[%s14] ss:$0 sm:$0xff]
  %s16 = scalar_lea.vmem %s1, 2
  %17 = vst [vmem:[%s16] sm:$0x3] %v15
  %s18 = scalar_lea.vmem %s0, 2
  %s19 = scalar_lea.vmem %s18, 1
  %v20 = vld [vmem:[%s19] ss:$0 sm:$0xff]
  %s21 = scalar_lea.vmem %s1, 18
  %22 = vst [vmem:[%s21] sm:$0x3] %v20
  %s23 = scalar_lea.vmem %s1, 10
  %24 = vst [vmem:[%s23] sm:$0x3] %v15
  %s25 = scalar_lea.vmem %s1, 26
  %26 = vst [vmem:[%s25] sm:$0x3] %v20
  %s27 = scalar_lea.vmem %s0, 4
  %v28 = vld [vmem:[%s27] ss:$0 sm:$0xff]
  %s29 = scalar_lea.vmem %s1, 4
  %30 = vst [vmem:[%s29] sm:$0x3] %v28
  %s31 = scalar_lea.vmem %s0, 4
  %s32 = scalar_lea.vmem %s31, 1
  %v33 = vld [vmem:[%s32] ss:$0 sm:$0xff]
  %s34 = scalar_lea.vmem %s1, 20
  %35 = vst [vmem:[%s34] sm:$0x3] %v33
  %s36 = scalar_lea.vmem %s1, 12
  %37 = vst [vmem:[%s36] sm:$0x3] %v28
  %s38 = scalar_lea.vmem %s1, 28
  %39 = vst [vmem:[%s38] sm:$0x3] %v33
  %s40 = scalar_lea.vmem %s0, 6
  %v41 = vld [vmem:[%s40] ss:$0 sm:$0xff]
  %s42 = scalar_lea.vmem %s1, 6
  %43 = vst [vmem:[%s42] sm:$0x3] %v41
  %s44 = scalar_lea.vmem %s0, 6
  %s45 = scalar_lea.vmem %s44, 1
  %v46 = vld [vmem:[%s45] ss:$0 sm:$0xff]
  %s47 = scalar_lea.vmem %s1, 22
  %48 = vst [vmem:[%s47] sm:$0x3] %v46
  %s49 = scalar_lea.vmem %s1, 14
  %50 = vst [vmem:[%s49] sm:$0x3] %v41
  %s51 = scalar_lea.vmem %s1, 30
  %52 = vst [vmem:[%s51] sm:$0x3] %v46

// kernel: mul.47
$region0: #{mul.47}
  #allocation0 [shape = 's32[1]{0}', space=sflag, size = 0x4, scoped, tag = 'scoped memory for mul.47']
  %s0 = inlined_call_operand.vmem [shape: f32[2,256], index: 0, kind: input, shape index: {}]
  %s1 = inlined_call_operand.vmem [shape: f32[2,4,4,256], index: 1, kind: output, shape index: {}]
  // Predicated region
  $region2: #{mul.47} parent=0 // pred_check
    _
  $region3: #{mul.47} parent=0 // pred_check_branch
    %3 = sbr.rel (0) target = $region5
  $region4: #{mul.47} parent=0 // pred_region
    _
  $region5: #{mul.47} parent=0 // pred_fallthru
    _
  %v4 = vld [vmem:[%s0] ss:$0 sm:$0xff]
  %5 = vst [vmem:[%s1] sm:$0xf] %v4
  %s6 = scalar_lea.vmem %s0, 1
  %v7 = vld [vmem:[%s6] ss:$0 sm:$0xff]
  %s8 = scalar_lea.vmem %s1, 32
  %9 = vst [vmem:[%s8] sm:$0xf] %v7
  %s10 = scalar_lea.vmem %s1, 8
  %11 = vst [vmem:[%s10] sm:$0xf] %v4
  %s12 = scalar_lea.vmem %s1, 40
  %13 = vst [vmem:[%s12] sm:$0xf] %v7
  %s14 = scalar_lea.vmem %s1, 16
  %15 = vst [vmem:[%s14] sm:$0xf] %v4
  %s16 = scalar_lea.vmem %s1, 48
  %17 = vst [vmem:[%s16] sm:$0xf] %v7
  %s18 = scalar_lea.vmem %s1, 24
  %19 = vst [vmem:[%s18] sm:$0xf] %v4
  %s20 = scalar_lea.vmem %s1, 56
  %21 = vst [vmem:[%s20] sm:$0xf] %v7
  %s22 = scalar_lea.vmem %s0, 2
  %v23 = vld [vmem:[%s22] ss:$0 sm:$0xff]
  %s24 = scalar_lea.vmem %s1, 4
  %25 = vst [vmem:[%s24] sm:$0xf] %v23
  %s26 = scalar_lea.vmem %s0, 2
  %s27 = scalar_lea.vmem %s26, 1
  %v28 = vld [vmem:[%s27] ss:$0 sm:$0xff]
  %s29 = scalar_lea.vmem %s1, 36
  %30 = vst [vmem:[%s29] sm:$0xf] %v28
  %s31 = scalar_lea.vmem %s1, 12
  %32 = vst [vmem:[%s31] sm:$0xf] %v23
  %s33 = scalar_lea.vmem %s1, 44
  %34 = vst [vmem:[%s33] sm:$0xf] %v28
  %s35 = scalar_lea.vmem %s1, 20
  %36 = vst [vmem:[%s35] sm:$0xf] %v23
  %s37 = scalar_lea.vmem %s1, 52
  %38 = vst [vmem:[%s37] sm:$0xf] %v28
  %s39 = scalar_lea.vmem %s1, 28
  %40 = vst [vmem:[%s39] sm:$0xf] %v23
  %s41 = scalar_lea.vmem %s1, 60
  %42 = vst [vmem:[%s41] sm:$0xf] %v28

// kernel: mul.43
$region0: #{mul.43}
  #allocation0 [shape = 's32[1]{0}', space=sflag, size = 0x4, scoped, tag = 'scoped memory for mul.43']
  %s0 = inlined_call_operand.vmem [shape: f32[2,128], index: 0, kind: input, shape index: {}]
  %s1 = inlined_call_operand.vmem [shape: f32[2,8,8,128], index: 1, kind: output, shape index: {}]
  // Predicated region
  $region2: #{mul.43} parent=0 // pred_check
    _
  $region3: #{mul.43} parent=0 // pred_check_branch
    %3 = sbr.rel (0) target = $region5
  $region4: #{mul.43} parent=0 // pred_region
    _
  $region5: #{mul.43} parent=0 // pred_fallthru
    _
  %v4 = vld [vmem:[%s0] ss:$0 sm:$0xff]
  %5 = vst [vmem:[%s1] sm:$0xff] %v4
  %s6 = scalar_lea.vmem %s0, 1
  %v7 = vld [vmem:[%s6] ss:$0 sm:$0xff]
  %s8 = scalar_lea.vmem %s1, 64
  %9 = vst [vmem:[%s8] sm:$0xff] %v7
  %s10 = scalar_lea.vmem %s1, 8
  %11 = vst [vmem:[%s10] sm:$0xff] %v4
  %s12 = scalar_lea.vmem %s1, 72
  %13 = vst [vmem:[%s12] sm:$0xff] %v7
  %s14 = scalar_lea.vmem %s1, 16
  %15 = vst [vmem:[%s14] sm:$0xff] %v4
  %s16 = scalar_lea.vmem %s1, 80
  %17 = vst [vmem:[%s16] sm:$0xff] %v7
  %s18 = scalar_lea.vmem %s1, 24
  %19 = vst [vmem:[%s18] sm:$0xff] %v4
  %s20 = scalar_lea.vmem %s1, 88
  %21 = vst [vmem:[%s20] sm:$0xff] %v7
  %s22 = scalar_lea.vmem %s1, 32
  %23 = vst [vmem:[%s22] sm:$0xff] %v4
  %s24 = scalar_lea.vmem %s1, 96
  %25 = vst [vmem:[%s24] sm:$0xff] %v7
  %s26 = scalar_lea.vmem %s1, 40
  %27 = vst [vmem:[%s26] sm:$0xff] %v4
  %s28 = scalar_lea.vmem %s1, 104
  %29 = vst [vmem:[%s28] sm:$0xff] %v7
  %s30 = scalar_lea.vmem %s1, 48
  %31 = vst [vmem:[%s30] sm:$0xff] %v4
  %s32 = scalar_lea.vmem %s1, 112
  %33 = vst [vmem:[%s32] sm:$0xff] %v7
  %s34 = scalar_lea.vmem %s1, 56
  %35 = vst [vmem:[%s34] sm:$0xff] %v4
  %s36 = scalar_lea.vmem %s1, 120
  %37 = vst [vmem:[%s36] sm:$0xff] %v7

// kernel: unet_forward.13
$region0: #{unet_forward.13}
  #allocation0 [shape = 'u32[]', space=smem, size = 0x4, offset = 0x4, fixed_abs, tag = 'smem constant byte address 0x4 - core index']
  #allocation1 [shape = 'u32[144,128]{1,0:T(1,128)}', space=vmem, size = 0x12000, scoped, tag = 'internal scratch']
  #allocation2 [shape = 'f32[128,128]{1,0:T(8,128)}', space=vmem, size = 0x10000, scoped, tag = 'scratch operand']
  %s0 = inlined_call_operand.vmem [shape: bf16[128,2304], index: 0, kind: input, shape index: {}]
  %s1 = inlined_call_operand.vmem [shape: bf16[2304,128], index: 1, kind: input, shape index: {}]
  %s2 = inlined_call_operand.vmem [shape: f32[1,128], index: 2, kind: input, shape index: {}]
  %s3 = inlined_call_operand.vmem [shape: bf16[128,128], index: 3, kind: output, shape index: {}]
  %s4 = sld [smem:[#allocation0]]
  $region79: #{unet_forward.13} parent=0
    _
  %s6 = ssub.s32 1, %s4
  %s7 = scalar_select 0, %s6, %s4
  $region1: #{unet_forward.13} parent=0
    #allocation3 [shape = 'u8[196608]{0}', space=vmem, size = 0x30000, scoped, tag = 'input window, operand 0']
    loop: start=0, step=1, limit=8
    $region2: #{unet_forward.13} parent=1 // loop_pre_header
      _
    $region3: #{unet_forward.13} parent=1 // loop_header
      %s9 = sphi 0, %s13
      %p10 = scmp.ge.s32.totalorder %s9, 8
      %s16 = sphi 0, %s35
      %s17 = sphi 0, %s31
      %s18 = sphi 0, %s27
      %s19 = sphi 0, %s16
      %s20 = sphi 0, %s17
      %s21 = sphi 0, %s18
      %s22 = sphi 0, %s19
      %s23 = sphi 0, %s20
      %s24 = sphi 0, %s21
      %s40 = sphi 0, %s42
      %s43 = sphi 0, %s40
      %s44 = sphi 0, %s43
      %s60 = sphi 0, %s44
      %s68 = sphi 0, %s70
      %s71 = sphi 0, %s68
      %s72 = sphi 0, %s71
      %s88 = sphi 0, %s72
      %s94 = sphi 0, %s96
      %s97 = sphi 0, %s94
      %s98 = sphi 0, %s97
      %s114 = sphi 0, %s98
      %s122 = sphi 0, %s124
      %s125 = sphi 0, %s122
      %s126 = sphi 0, %s125
      %s142 = sphi 0, %s126
    $region4: #{unet_forward.13} parent=1 // loop_header_branch
      %12 = sbr.rel (%p10) target = $region8
    $region5: #{unet_forward.13} parent=1 // loop_body
      %s14 = ssub.s32 %s9, 1
      %s15 = ssub.s32 %s9, 2
      %s25 = sadd.s32 1, %s18
      %p26 = scmp.ge.s32.totalorder %s25, 6
      %s27 = scalar_select %p26, 0, %s25
      %s28 = sadd.s32 1, %s17
      %s29 = scalar_select %p26, %s28, %s17
      %p30 = scmp.ge.s32.totalorder %s29, 1
      %s31 = scalar_select %p30, 0, %s29
      %s32 = sadd.s32 1, %s16
      %s33 = scalar_select %p30, %s32, %s16
      %p34 = scmp.ge.s32.totalorder %s33, 1
      %s35 = scalar_select %p34, 0, %s33
      %s36 = ssub.s32 %s16, %s35
      %s37 = ssub.s32 %s18, %s27
      %s38 = sor.u32 %s36, %s37
      %p39 = scmp.eq.s32.totalorder %s38, 0
      %s41 = sadd.s32 %s40, 1
      %s42 = scalar_select %p39, %s40, %s41
      %p45 = pneg %p39
      %p46 = scmp.eq.s32.totalorder %s9, 5
      %p47 = por %p45, %p46
      %p48 = scmp.ne.s32.totalorder %s40, %s43
      %p49 = scmp.eq.s32.totalorder %s9, 0
      %p50 = por %p48, %p49
      %p51 = scmp.ne.s32.totalorder %s40, %s43
      %p52 = scmp.eq.s32.totalorder %s14, 5
      %p53 = por %p51, %p52
      %p54 = scmp.ne.s32.totalorder %s43, %s44
      %p55 = scmp.eq.s32.totalorder %s14, 0
      %p56 = por %p54, %p55
      %p57 = scmp.ne.s32.totalorder %s43, %s44
      %p58 = scmp.eq.s32.totalorder %s15, 5
      %p59 = por %p57, %p58
      %p61 = scmp.ne.s32.totalorder %s44, %s60
      %p62 = scmp.eq.s32.totalorder %s15, 0
      %p63 = por %p61, %p62
      %s64 = ssub.s32 %s18, %s27
      %s65 = ssub.s32 %s17, %s31
      %s66 = sor.u32 %s64, %s65
      %p67 = scmp.eq.s32.totalorder %s66, 0
      %s69 = sadd.s32 %s68, 1
      %s70 = scalar_select %p67, %s68, %s69
      %p73 = pneg %p67
      %p74 = scmp.eq.s32.totalorder %s9, 5
      %p75 = por %p73, %p74
      %p76 = scmp.ne.s32.totalorder %s68, %s71
      %p77 = scmp.eq.s32.totalorder %s9, 0
      %p78 = por %p76, %p77
      %p79 = scmp.ne.s32.totalorder %s68, %s71
      %p80 = scmp.eq.s32.totalorder %s14, 5
      %p81 = por %p79, %p80
      %p82 = scmp.ne.s32.totalorder %s71, %s72
      %p83 = scmp.eq.s32.totalorder %s14, 0
      %p84 = por %p82, %p83
      %p85 = scmp.ne.s32.totalorder %s71, %s72
      %p86 = scmp.eq.s32.totalorder %s15, 5
      %p87 = por %p85, %p86
      %p89 = scmp.ne.s32.totalorder %s72, %s88
      %p90 = scmp.eq.s32.totalorder %s15, 0
      %p91 = por %p89, %p90
      %s92 = ssub.s32 %s17, %s31
      %p93 = scmp.eq.s32.totalorder %s92, 0
      %s95 = sadd.s32 %s94, 1
      %s96 = scalar_select %p93, %s94, %s95
      %p99 = pneg %p93
      %p100 = scmp.eq.s32.totalorder %s9, 5
      %p101 = por %p99, %p100
      %p102 = scmp.ne.s32.totalorder %s94, %s97
      %p103 = scmp.eq.s32.totalorder %s9, 0
      %p104 = por %p102, %p103
      %p105 = scmp.ne.s32.totalorder %s94, %s97
      %p106 = scmp.eq.s32.totalorder %s14, 5
      %p107 = por %p105, %p106
      %p108 = scmp.ne.s32.totalorder %s97, %s98
      %p109 = scmp.eq.s32.totalorder %s14, 0
      %p110 = por %p108, %p109
      %p111 = scmp.ne.s32.totalorder %s97, %s98
      %p112 = scmp.eq.s32.totalorder %s15, 5
      %p113 = por %p111, %p112
      %p115 = scmp.ne.s32.totalorder %s98, %s114
      %p116 = scmp.eq.s32.totalorder %s15, 0
      %p117 = por %p115, %p116
      %s118 = ssub.s32 %s16, %s35
      %s119 = ssub.s32 %s17, %s31
      %s120 = sor.u32 %s118, %s119
      %p121 = scmp.eq.s32.totalorder %s120, 0
      %s123 = sadd.s32 %s122, 1
      %s124 = scalar_select %p121, %s122, %s123
      %p127 = pneg %p121
      %p128 = scmp.eq.s32.totalorder %s9, 5
      %p129 = por %p127, %p128
      %p130 = scmp.ne.s32.totalorder %s122, %s125
      %p131 = scmp.eq.s32.totalorder %s9, 0
      %p132 = por %p130, %p131
      %p133 = scmp.ne.s32.totalorder %s122, %s125
      %p134 = scmp.eq.s32.totalorder %s14, 5
      %p135 = por %p133, %p134
      %p136 = scmp.ne.s32.totalorder %s125, %s126
      %p137 = scmp.eq.s32.totalorder %s14, 0
      %p138 = por %p136, %p137
      %p139 = scmp.ne.s32.totalorder %s125, %s126
      %p140 = scmp.eq.s32.totalorder %s15, 5
      %p141 = por %p139, %p140
      %p143 = scmp.ne.s32.totalorder %s126, %s142
      %p144 = scmp.eq.s32.totalorder %s15, 0
      %p145 = por %p143, %p144
      %p146 = scmp.le.s32.totalorder 1, %s9
      %p147 = scmp.lt.s32.totalorder %s9, 7
      %p148 = pnand %p146, %p147
      %p149 = pneg %p148
      // Predicated region
      $region9: #{unet_forward.13} parent=5 // pred_check
        _
      $region10: #{unet_forward.13} parent=5 // pred_check_branch
        %151 = sbr.rel (%p148) target = $region12
      $region11: #{unet_forward.13} parent=5 // pred_region
        %s152 = ssub.s32 %s9, 1
        // Predicated region
        $region13: #{unet_forward.13} parent=11 // pred_check
          %p153 = pneg %p110
        $region14: #{unet_forward.13} parent=11 // pred_check_branch
          %155 = sbr.rel (%p153) target = $region16
        $region15: #{unet_forward.13} parent=11 // pred_region
          %p156 = scmp.lt.s32.totalorder %s20, 0
          %s157 = scalar_select %p156, %s20, 0
          %s158 = scalar_lea.vmem %s2, %s157
        $region16: #{unet_forward.13} parent=11 // pred_fallthru
          _
      $region12: #{unet_forward.13} parent=5 // pred_fallthru
        _
      %p159 = scmp.lt.s32.totalorder %s9, 6
      // Predicated region
      $region17: #{unet_forward.13} parent=5 // pred_check
        %p160 = pneg %p159
      $region18: #{unet_forward.13} parent=5 // pred_check_branch
        %162 = sbr.rel (%p160) target = $region20
      $region19: #{unet_forward.13} parent=5 // pred_region
        // Predicated region
        $region21: #{unet_forward.13} parent=19 // pred_check
          %p163 = pneg %p50
        $region22: #{unet_forward.13} parent=19 // pred_check_branch
          %165 = sbr.rel (%p163) target = $region24
        $region23: #{unet_forward.13} parent=19 // pred_region
          %s166 = sand.u32 %s40, 1
          %s167 = sand.u32 %s40, 1
          %s168 = smul.addr %s167, 192
          %s169 = scalar_lea.vmem [#allocation3], %s168
          %s170 = smul.u32 16, %s16
          %s171 = smul.u32 3, %s18
          %s172 = smul.addr %s170, 18
          %s173 = sadd.s32 %s171, %s172
          %s174 = smul.addr %s173, 4
          %s175 = scalar_lea.vmem %s0, %s174
          // Predicated region
          $region25: #{unet_forward.13} parent=23 // pred_check
            _
          $region26: #{unet_forward.13} parent=23 // pred_check_branch
            %177 = sbr.rel (0) target = $region28
          $region27: #{unet_forward.13} parent=23 // pred_region
            // Predicated region
            $region29: #{unet_forward.13} parent=27 // pred_check
              _
            $region30: #{unet_forward.13} parent=27 // pred_check_branch
              %179 = sbr.rel (0) target = $region32
            $region31: #{unet_forward.13} parent=27 // pred_region
              %s180 = scalar_lea.vmem %s175, 8
              %s181 = scalar_lea.vmem %s169, 8 [#allocation3]
              loop: start=0, step=1, limit=1
              $region33: #{unet_forward.13} parent=31 // loop_pre_header
                _
              $region34: #{unet_forward.13} parent=31 // loop_header
                %s183 = sphi 0, %s187
                %p184 = scmp.ge.s32.totalorder %s183, 1
                %s188 = sphi %s175, %s175
                %s189 = sphi %s169, %s169
              $region35: #{unet_forward.13} parent=31 // loop_header_branch
                %186 = sbr.rel (%p184) target = $region39
              $region36: #{unet_forward.13} parent=31 // loop_body
                %v190 = vld [vmem:[%s188] sm:$0xff]
                %191 = vst [vmem:[%s189] sm:$0xff] %v190
                %v192 = vld [vmem:[%s188 + $0x48] sm:$0xff]
                %193 = vst [vmem:[%s189 + $0xc] sm:$0xff] %v192
                %v194 = vld [vmem:[%s188 + $0x90] sm:$0xff]
                %195 = vst [vmem:[%s189 + $0x18] sm:$0xff] %v194
                %v196 = vld [vmem:[%s188 + $0xd8] sm:$0xff]
                %197 = vst [vmem:[%s189 + $0x24] sm:$0xff] %v196
                %v198 = vld [vmem:[%s188 + $0x120] sm:$0xff]
                %199 = vst [vmem:[%s189 + $0x30] sm:$0xff] %v198
                %v200 = vld [vmem:[%s188 + $0x168] sm:$0xff]
                %201 = vst [vmem:[%s189 + $0x3c] sm:$0xff] %v200
                %v202 = vld [vmem:[%s188 + $0x1b0] sm:$0xff]
                %203 = vst [vmem:[%s189 + $0x48] sm:$0xff] %v202
                %v204 = vld [vmem:[%s188 + $0x1f8] sm:$0xff]
                %205 = vst [vmem:[%s189 + $0x54] sm:$0xff] %v204
                %v206 = vld [vmem:[%s188 + $0x240] sm:$0xff]
                %207 = vst [vmem:[%s189 + $0x60] sm:$0xff] %v206
                %v208 = vld [vmem:[%s188 + $0x288] sm:$0xff]
                %209 = vst [vmem:[%s189 + $0x6c] sm:$0xff] %v208
                %v210 = vld [vmem:[%s188 + $0x2d0] sm:$0xff]
                %211 = vst [vmem:[%s189 + $0x78] sm:$0xff] %v210
                %v212 = vld [vmem:[%s188 + $0x318] sm:$0xff]
                %213 = vst [vmem:[%s189 + $0x84] sm:$0xff] %v212
                %v214 = vld [vmem:[%s188 + $0x360] sm:$0xff]
                %215 = vst [vmem:[%s189 + $0x90] sm:$0xff] %v214
                %v216 = vld [vmem:[%s188 + $0x3a8] sm:$0xff]
                %217 = vst [vmem:[%s189 + $0x9c] sm:$0xff] %v216
                %v218 = vld [vmem:[%s188 + $0x3f0] sm:$0xff]
                %219 = vst [vmem:[%s189 + $0xa8] sm:$0xff] %v218
                %v220 = vld [vmem:[%s188 + $0x438] sm:$0xff]
                %221 = vst [vmem:[%s189 + $0xb4] sm:$0xff] %v220
              $region37: #{unet_forward.13} parent=31 // loop_footer
                %s187 = sadd.s32 1, %s183
              $region38: #{unet_forward.13} parent=31 // loop_footer_branch
                %182 = sbr.rel target = $region34
              $region39: #{unet_forward.13} parent=31 // loop_exit
                _
              %s223 = ssub.s32 16, 1
              loop: start=0, step=1, limit=1
              $region40: #{unet_forward.13} parent=31 // loop_pre_header
                _
              $region41: #{unet_forward.13} parent=31 // loop_header
                %s225 = sphi 0, %s229
                %p226 = scmp.ge.s32.totalorder %s225, 1
                %s230 = sphi %s180, %s180
                %s231 = sphi %s181, %s181
              $region42: #{unet_forward.13} parent=31 // loop_header_branch
                %228 = sbr.rel (%p226) target = $region46
              $region43: #{unet_forward.13} parent=31 // loop_body
                %v232 = vld [vmem:[%s230] sm:%s223]
                %233 = vst [vmem:[%s231] sm:%s223] %v232
                %v234 = vld [vmem:[%s230 + $0x48] sm:%s223]
                %235 = vst [vmem:[%s231 + $0xc] sm:%s223] %v234
                %v236 = vld [vmem:[%s230 + $0x90] sm:%s223]
                %237 = vst [vmem:[%s231 + $0x18] sm:%s223] %v236
                %v238 = vld [vmem:[%s230 + $0xd8] sm:%s223]
                %239 = vst [vmem:[%s231 + $0x24] sm:%s223] %v238
                %v240 = vld [vmem:[%s230 + $0x120] sm:%s223]
                %241 = vst [vmem:[%s231 + $0x30] sm:%s223] %v240
                %v242 = vld [vmem:[%s230 + $0x168] sm:%s223]
                %243 = vst [vmem:[%s231 + $0x3c] sm:%s223] %v242
                %v244 = vld [vmem:[%s230 + $0x1b0] sm:%s223]
                %245 = vst [vmem:[%s231 + $0x48] sm:%s223] %v244
                %v246 = vld [vmem:[%s230 + $0x1f8] sm:%s223]
                %247 = vst [vmem:[%s231 + $0x54] sm:%s223] %v246
                %v248 = vld [vmem:[%s230 + $0x240] sm:%s223]
                %249 = vst [vmem:[%s231 + $0x60] sm:%s223] %v248
                %v250 = vld [vmem:[%s230 + $0x288] sm:%s223]
                %251 = vst [vmem:[%s231 + $0x6c] sm:%s223] %v250
                %v252 = vld [vmem:[%s230 + $0x2d0] sm:%s223]
                %253 = vst [vmem:[%s231 + $0x78] sm:%s223] %v252
                %v254 = vld [vmem:[%s230 + $0x318] sm:%s223]
                %255 = vst [vmem:[%s231 + $0x84] sm:%s223] %v254
                %v256 = vld [vmem:[%s230 + $0x360] sm:%s223]
                %257 = vst [vmem:[%s231 + $0x90] sm:%s223] %v256
                %v258 = vld [vmem:[%s230 + $0x3a8] sm:%s223]
                %259 = vst [vmem:[%s231 + $0x9c] sm:%s223] %v258
                %v260 = vld [vmem:[%s230 + $0x3f0] sm:%s223]
                %261 = vst [vmem:[%s231 + $0xa8] sm:%s223] %v260
                %v262 = vld [vmem:[%s230 + $0x438] sm:%s223]
                %263 = vst [vmem:[%s231 + $0xb4] sm:%s223] %v262
              $region44: #{unet_forward.13} parent=31 // loop_footer
                %s229 = sadd.s32 1, %s225
              $region45: #{unet_forward.13} parent=31 // loop_footer_branch
                %224 = sbr.rel target = $region41
              $region46: #{unet_forward.13} parent=31 // loop_exit
                _
            $region32: #{unet_forward.13} parent=27 // pred_fallthru
              _
          $region28: #{unet_forward.13} parent=23 // pred_fallthru
            _
          %264 = vnop
        $region24: #{unet_forward.13} parent=19 // pred_fallthru
          _
        // Predicated region
        $region47: #{unet_forward.13} parent=19 // pred_check
          %p265 = pneg %p78
        $region48: #{unet_forward.13} parent=19 // pred_check_branch
          %267 = sbr.rel (%p265) target = $region50
        $region49: #{unet_forward.13} parent=19 // pred_region
          %s268 = smul.u32 48, %s18
          %p269 = scmp.lt.s32.totalorder %s268, 287
          %s270 = scalar_select %p269, %s268, 287
          %p271 = scmp.lt.s32.totalorder %s17, 0
          %s272 = scalar_select %p271, %s17, 0
          %s273 = sadd.s32 %s272, %s270
          %s274 = smul.addr %s273, 4
          %s275 = scalar_lea.vmem %s1, %s274
          %s276 = smul.u32 48, %s18
        $region50: #{unet_forward.13} parent=19 // pred_fallthru
          _
      $region20: #{unet_forward.13} parent=5 // pred_fallthru
        _
      %p277 = scmp.le.s32.totalorder 1, %s9
      %p278 = scmp.lt.s32.totalorder %s9, 7
      %p279 = pnand %p277, %p278
      %p280 = pneg %p279
      // Predicated region
      $region51: #{unet_forward.13} parent=5 // pred_check
        _
      $region52: #{unet_forward.13} parent=5 // pred_check_branch
        %282 = sbr.rel (%p279) target = $region54
      $region53: #{unet_forward.13} parent=5 // pred_region
        %s283 = ssub.s32 %s9, 1
        %s284 = sand.u32 %s43, 1
        %s285 = sand.u32 %s43, 1
        %s286 = smul.addr %s285, 192
        %s287 = scalar_lea.vmem [#allocation3], %s286
        // Predicated region
        $region55: #{unet_forward.13} parent=53 // pred_check
          %p288 = pneg %p56
        $region56: #{unet_forward.13} parent=53 // pred_check_branch
          %290 = sbr.rel (%p288) target = $region58
        $region57: #{unet_forward.13} parent=53 // pred_region
          _
        $region58: #{unet_forward.13} parent=53 // pred_fallthru
          _
        %s291 = sand.u32 %s43, 1
        %s292 = sand.u32 %s43, 1
        %s293 = smul.addr %s292, 192
        %s294 = scalar_lea.vmem [#allocation3], %s293
        %p295 = pneg %p56
        %p296 = pneg %p53
        %s297 = smul.u32 48, %s21
        %p298 = scmp.lt.s32.totalorder %s297, 287
        %s299 = scalar_select %p298, %s297, 287
        %p300 = scmp.lt.s32.totalorder %s20, 0
        %s301 = scalar_select %p300, %s20, 0
        %s302 = sadd.s32 %s301, %s299
        %s303 = smul.addr %s302, 4
        %s304 = scalar_lea.vmem %s1, %s303
        %p305 = pneg %p84
        %p306 = pneg %p81
        %p307 = scmp.lt.s32.totalorder %s20, 0
        %s308 = scalar_select %p307, %s20, 0
        %s309 = scalar_lea.vmem %s2, %s308
        %p310 = pneg %p110
        %p311 = pneg %p107
        %p312 = pneg %p138
        %p313 = pneg %p135
        %s314 = smul.u32 16, %s19
        %p315 = scmp.lt.s32.totalorder %s314, 15
        %s316 = scalar_select %p315, %s314, 15
        %p317 = scmp.lt.s32.totalorder %s20, 0
        %s318 = scalar_select %p317, %s20, 0
        %s319 = sadd.s32 %s318, %s316
        %s320 = smul.addr %s319, 4
        %s321 = scalar_lea.vmem %s3, %s320
        %s322 = smul.u32 16, %s19
        %s323 = smul.u32 3, %s21
        %s324 = smul.u32 48, %s21
        %p325 = scmp.lt.s32.totalorder %s324, 287
        %s326 = scalar_select %p325, %s324, 287
        %p327 = scmp.lt.s32.totalorder %s20, 0
        %s328 = scalar_select %p327, %s20, 0
        %s329 = sadd.s32 %s328, %s326
        %s330 = smul.addr %s329, 4
        %s331 = scalar_lea.vmem %s1, %s330
        %s332 = smul.u32 48, %s21
        %p333 = scmp.lt.s32.totalorder %s20, 0
        %s334 = scalar_select %p333, %s20, 0
        %s335 = scalar_lea.vmem %s2, %s334
        %s336 = smul.u32 16, %s19
        %p337 = scmp.lt.s32.totalorder %s336, 15
        %s338 = scalar_select %p337, %s336, 15
        %p339 = scmp.lt.s32.totalorder %s20, 0
        %s340 = scalar_select %p339, %s20, 0
        %s341 = sadd.s32 %s340, %s338
        %s342 = smul.addr %s341, 4
        %s343 = scalar_lea.vmem %s3, %s342
        %s344 = smul.u32 16, %s19
        %p346 = scmp.eq.s32.totalorder %s21, 0
        // Predicated region
        $region59: #{unet_forward.13} parent=53 // pred_check
          %p347 = pneg %p346
        $region60: #{unet_forward.13} parent=53 // pred_check_branch
          %349 = sbr.rel (%p347) target = $region62
        $region61: #{unet_forward.13} parent=53 // pred_region
          %350 = vst [vmem:[#allocation2] sm:$0xff] 0.0
          %351 = vst [vmem:[#allocation2 + $0x8] sm:$0xff] 0.0
          %352 = vst [vmem:[#allocation2 + $0x10] sm:$0xff] 0.0
          %353 = vst [vmem:[#allocation2 + $0x18] sm:$0xff] 0.0
          %354 = vst [vmem:[#allocation2 + $0x20] sm:$0xff] 0.0
          %355 = vst [vmem:[#allocation2 + $0x28] sm:$0xff] 0.0
          %356 = vst [vmem:[#allocation2 + $0x30] sm:$0xff] 0.0
          %357 = vst [vmem:[#allocation2 + $0x38] sm:$0xff] 0.0
          %358 = vst [vmem:[#allocation2 + $0x40] sm:$0xff] 0.0
          %359 = vst [vmem:[#allocation2 + $0x48] sm:$0xff] 0.0
          %360 = vst [vmem:[#allocation2 + $0x50] sm:$0xff] 0.0
          %361 = vst [vmem:[#allocation2 + $0x58] sm:$0xff] 0.0
          %362 = vst [vmem:[#allocation2 + $0x60] sm:$0xff] 0.0
          %363 = vst [vmem:[#allocation2 + $0x68] sm:$0xff] 0.0
          %364 = vst [vmem:[#allocation2 + $0x70] sm:$0xff] 0.0
          %365 = vst [vmem:[#allocation2 + $0x78] sm:$0xff] 0.0
        $region62: #{unet_forward.13} parent=53 // pred_fallthru
          _
        %v366 = vld [vmem:[#allocation2] sm:$0xff]
        %v367 = vld [vmem:[#allocation2 + $0x8] sm:$0xff]
        %v368 = vld [vmem:[#allocation2 + $0x10] sm:$0xff]
        %v369 = vld [vmem:[#allocation2 + $0x18] sm:$0xff]
        %v370 = vld [vmem:[#allocation2 + $0x20] sm:$0xff]
        %v371 = vld [vmem:[#allocation2 + $0x28] sm:$0xff]
        %v372 = vld [vmem:[#allocation2 + $0x30] sm:$0xff]
        %v373 = vld [vmem:[#allocation2 + $0x38] sm:$0xff]
        %v374 = vld [vmem:[#allocation2 + $0x40] sm:$0xff]
        %v375 = vld [vmem:[#allocation2 + $0x48] sm:$0xff]
        %v376 = vld [vmem:[#allocation2 + $0x50] sm:$0xff]
        %v377 = vld [vmem:[#allocation2 + $0x58] sm:$0xff]
        %v378 = vld [vmem:[#allocation2 + $0x60] sm:$0xff]
        %v379 = vld [vmem:[#allocation2 + $0x68] sm:$0xff]
        %v380 = vld [vmem:[#allocation2 + $0x70] sm:$0xff]
        %v381 = vld [vmem:[#allocation2 + $0x78] sm:$0xff]
        %v382 = vld [vmem:[%s287] sm:$0xff]
        %v383 = vld [vmem:[%s287 + $0x8] sm:$0xf]
        %v384 = vld [vmem:[%s287 + $0xc] sm:$0xff]
        %v385 = vld [vmem:[%s287 + $0x14] sm:$0xf]
        %v386 = vld [vmem:[%s287 + $0x18] sm:$0xff]
        %v387 = vld [vmem:[%s287 + $0x20] sm:$0xf]
        %v388 = vld [vmem:[%s287 + $0x24] sm:$0xff]
        %v389 = vld [vmem:[%s287 + $0x2c] sm:$0xf]
        %v390 = vld [vmem:[%s287 + $0x30] sm:$0xff]
        %v391 = vld [vmem:[%s287 + $0x38] sm:$0xf]
        %v392 = vld [vmem:[%s287 + $0x3c] sm:$0xff]
        %v393 = vld [vmem:[%s287 + $0x44] sm:$0xf]
        %v394 = vld [vmem:[%s287 + $0x48] sm:$0xff]
        %v395 = vld [vmem:[%s287 + $0x50] sm:$0xf]
        %v396 = vld [vmem:[%s287 + $0x54] sm:$0xff]
        %v397 = vld [vmem:[%s287 + $0x5c] sm:$0xf]
        %v398 = vld [vmem:[%s287 + $0x60] sm:$0xff]
        %v399 = vld [vmem:[%s287 + $0x68] sm:$0xf]
        %v400 = vld [vmem:[%s287 + $0x6c] sm:$0xff]
        %v401 = vld [vmem:[%s287 + $0x74] sm:$0xf]
        %v402 = vld [vmem:[%s287 + $0x78] sm:$0xff]
        %v403 = vld [vmem:[%s287 + $0x80] sm:$0xf]
        %v404 = vld [vmem:[%s287 + $0x84] sm:$0xff]
        %v405 = vld [vmem:[%s287 + $0x8c] sm:$0xf]
        %v406 = vld [vmem:[%s287 + $0x90] sm:$0xff]
        %v407 = vld [vmem:[%s287 + $0x98] sm:$0xf]
        %v408 = vld [vmem:[%s287 + $0x9c] sm:$0xff]
        %v409 = vld [vmem:[%s287 + $0xa4] sm:$0xf]
        %v410 = vld [vmem:[%s287 + $0xa8] sm:$0xff]
        %v411 = vld [vmem:[%s287 + $0xb0] sm:$0xf]
        %v412 = vld [vmem:[%s287 + $0xb4] sm:$0xff]
        %v413 = vld [vmem:[%s287 + $0xbc] sm:$0xf]
        %v414 = vld [vmem:[%s331] sm:$0xf]
        %v415 = vld [vmem:[%s331 + $0x4] sm:$0xf]
        %v416 = vld [vmem:[%s331 + $0x8] sm:$0xf]
        %v417 = vld [vmem:[%s331 + $0xc] sm:$0xf]
        %v418 = vld [vmem:[%s331 + $0x10] sm:$0xf]
        %v419 = vld [vmem:[%s331 + $0x14] sm:$0xf]
        %v420 = vld [vmem:[%s331 + $0x18] sm:$0xf]
        %v421 = vld [vmem:[%s331 + $0x1c] sm:$0xf]
        %v422 = vld [vmem:[%s331 + $0x20] sm:$0xf]
        %v423 = vld [vmem:[%s331 + $0x24] sm:$0xf]
        %v424 = vld [vmem:[%s331 + $0x28] sm:$0xf]
        %v425 = vld [vmem:[%s331 + $0x2c] sm:$0xf]
        %v426 = vld [vmem:[%s331 + $0x30] sm:$0xf]
        %v427 = vld [vmem:[%s331 + $0x34] sm:$0xf]
        %v428 = vld [vmem:[%s331 + $0x38] sm:$0xf]
        %v429 = vld [vmem:[%s331 + $0x3c] sm:$0xf]
        %v430 = vld [vmem:[%s331 + $0x40] sm:$0xf]
        %v431 = vld [vmem:[%s331 + $0x44] sm:$0xf]
        %v432 = vld [vmem:[%s331 + $0x48] sm:$0xf]
        %v433 = vld [vmem:[%s331 + $0x4c] sm:$0xf]
        %v434 = vld [vmem:[%s331 + $0x50] sm:$0xf]
        %v435 = vld [vmem:[%s331 + $0x54] sm:$0xf]
        %v436 = vld [vmem:[%s331 + $0x58] sm:$0xf]
        %v437 = vld [vmem:[%s331 + $0x5c] sm:$0xf]
        %v438 = vld [vmem:[%s331 + $0x60] sm:$0xf]
        %v439 = vld [vmem:[%s331 + $0x64] sm:$0xf]
        %v440 = vld [vmem:[%s331 + $0x68] sm:$0xf]
        %v441 = vld [vmem:[%s331 + $0x6c] sm:$0xf]
        %v442 = vld [vmem:[%s331 + $0x70] sm:$0xf]
        %v443 = vld [vmem:[%s331 + $0x74] sm:$0xf]
        %v444 = vld [vmem:[%s331 + $0x78] sm:$0xf]
        %v445 = vld [vmem:[%s331 + $0x7c] sm:$0xf]
        %v446 = vld [vmem:[%s331 + $0x80] sm:$0xf]
        %v447 = vld [vmem:[%s331 + $0x84] sm:$0xf]
        %v448 = vld [vmem:[%s331 + $0x88] sm:$0xf]
        %v449 = vld [vmem:[%s331 + $0x8c] sm:$0xf]
        %v450 = vld [vmem:[%s331 + $0x90] sm:$0xf]
        %v451 = vld [vmem:[%s331 + $0x94] sm:$0xf]
        %v452 = vld [vmem:[%s331 + $0x98] sm:$0xf]
        %v453 = vld [vmem:[%s331 + $0x9c] sm:$0xf]
        %v454 = vld [vmem:[%s331 + $0xa0] sm:$0xf]
        %v455 = vld [vmem:[%s331 + $0xa4] sm:$0xf]
        %v456 = vld [vmem:[%s331 + $0xa8] sm:$0xf]
        %v457 = vld [vmem:[%s331 + $0xac] sm:$0xf]
        %v458 = vld [vmem:[%s331 + $0xb0] sm:$0xf]
        %v459 = vld [vmem:[%s331 + $0xb4] sm:$0xf]
        %v460 = vld [vmem:[%s331 + $0xb8] sm:$0xf]
        %v461 = vld [vmem:[%s331 + $0xbc] sm:$0xf]
        %v494 = vunpack.c.l.b16 %v382
        %v495 = vunpack.c.h.b16 %v382
        %v496 = vunpack.c.l.b16 %v383
        %v497 = vunpack.c.l.b16 %v384
        %v498 = vunpack.c.h.b16 %v384
        %v499 = vunpack.c.l.b16 %v385
        %v500 = vunpack.c.l.b16 %v386
        %v501 = vunpack.c.h.b16 %v386
        %v502 = vunpack.c.l.b16 %v387
        %v503 = vunpack.c.l.b16 %v388
        %v504 = vunpack.c.h.b16 %v388
        %v505 = vunpack.c.l.b16 %v389
        %v506 = vunpack.c.l.b16 %v390
        %v507 = vunpack.c.h.b16 %v390
        %v508 = vunpack.c.l.b16 %v391
        %v509 = vunpack.c.l.b16 %v392
        %v510 = vunpack.c.h.b16 %v392
        %v511 = vunpack.c.l.b16 %v393
        %v512 = vunpack.c.l.b16 %v394
        %v513 = vunpack.c.h.b16 %v394
        %v514 = vunpack.c.l.b16 %v395
        %v515 = vunpack.c.l.b16 %v396
        %v516 = vunpack.c.h.b16 %v396
        %v517 = vunpack.c.l.b16 %v397
        %v518 = vunpack.c.l.b16 %v398
        %v519 = vunpack.c.h.b16 %v398
        %v520 = vunpack.c.l.b16 %v399
        %v521 = vunpack.c.l.b16 %v400
        %v522 = vunpack.c.h.b16 %v400
        %v523 = vunpack.c.l.b16 %v401
        %v524 = vunpack.c.l.b16 %v402
        %v525 = vunpack.c.h.b16 %v402
        %v526 = vunpack.c.l.b16 %v403
        %v527 = vunpack.c.l.b16 %v404
        %v528 = vunpack.c.h.b16 %v404
        %v529 = vunpack.c.l.b16 %v405
        %v530 = vunpack.c.l.b16 %v406
        %v531 = vunpack.c.h.b16 %v406
        %v532 = vunpack.c.l.b16 %v407
        %v533 = vunpack.c.l.b16 %v408
        %v534 = vunpack.c.h.b16 %v408
        %v535 = vunpack.c.l.b16 %v409
        %v536 = vunpack.c.l.b16 %v410
        %v537 = vunpack.c.h.b16 %v410
        %v538 = vunpack.c.l.b16 %v411
        %v539 = vunpack.c.l.b16 %v412
        %v540 = vunpack.c.h.b16 %v412
        %v541 = vunpack.c.l.b16 %v413
        %v542 = vpack.c.b16 %v497, %v494
        %v543 = vpack.c.b16 %v498, %v495
        %v544 = vpack.c.b16 %v499, %v496
        %v545 = vpack.c.b16 %v503, %v500
        %v546 = vpack.c.b16 %v504, %v501
        %v547 = vpack.c.b16 %v505, %v502
        %v548 = vpack.c.b16 %v509, %v506
        %v549 = vpack.c.b16 %v510, %v507
        %v550 = vpack.c.b16 %v511, %v508
        %v551 = vpack.c.b16 %v515, %v512
        %v552 = vpack.c.b16 %v516, %v513
        %v553 = vpack.c.b16 %v517, %v514
        %v554 = vpack.c.b16 %v521, %v518
        %v555 = vpack.c.b16 %v522, %v519
        %v556 = vpack.c.b16 %v523, %v520
        %v557 = vpack.c.b16 %v527, %v524
        %v558 = vpack.c.b16 %v528, %v525
        %v559 = vpack.c.b16 %v529, %v526
        %v560 = vpack.c.b16 %v533, %v530
        %v561 = vpack.c.b16 %v534, %v531
        %v562 = vpack.c.b16 %v535, %v532
        %v563 = vpack.c.b16 %v539, %v536
        %v564 = vpack.c.b16 %v540, %v537
        %v565 = vpack.c.b16 %v541, %v538
        %v638 = vunpack.c.l.b16 %v414
        %v639 = vunpack.c.l.b16 %v415
        %v640 = vunpack.c.l.b16 %v416
        %v641 = vunpack.c.l.b16 %v417
        %v642 = vunpack.c.l.b16 %v418
        %v643 = vunpack.c.l.b16 %v419
        %v644 = vunpack.c.l.b16 %v420
        %v645 = vunpack.c.l.b16 %v421
        %v646 = vunpack.c.l.b16 %v422
        %v647 = vunpack.c.l.b16 %v423
        %v648 = vunpack.c.l.b16 %v424
        %v649 = vunpack.c.l.b16 %v425
        %v650 = vunpack.c.l.b16 %v426
        %v651 = vunpack.c.l.b16 %v427
        %v652 = vunpack.c.l.b16 %v428
        %v653 = vunpack.c.l.b16 %v429
        %v654 = vunpack.c.l.b16 %v430
        %v655 = vunpack.c.l.b16 %v431
        %v656 = vunpack.c.l.b16 %v432
        %v657 = vunpack.c.l.b16 %v433
        %v658 = vunpack.c.l.b16 %v434
        %v659 = vunpack.c.l.b16 %v435
        %v660 = vunpack.c.l.b16 %v436
        %v661 = vunpack.c.l.b16 %v437
        %v662 = vunpack.c.l.b16 %v438
        %v663 = vunpack.c.l.b16 %v439
        %v664 = vunpack.c.l.b16 %v440
        %v665 = vunpack.c.l.b16 %v441
        %v666 = vunpack.c.l.b16 %v442
        %v667 = vunpack.c.l.b16 %v443
        %v668 = vunpack.c.l.b16 %v444
        %v669 = vunpack.c.l.b16 %v445
        %v670 = vunpack.c.l.b16 %v446
        %v671 = vunpack.c.l.b16 %v447
        %v672 = vunpack.c.l.b16 %v448
        %v673 = vunpack.c.l.b16 %v449
        %v674 = vunpack.c.l.b16 %v450
        %v675 = vunpack.c.l.b16 %v451
        %v676 = vunpack.c.l.b16 %v452
        %v677 = vunpack.c.l.b16 %v453
        %v678 = vunpack.c.l.b16 %v454
        %v679 = vunpack.c.l.b16 %v455
        %v680 = vunpack.c.l.b16 %v456
        %v681 = vunpack.c.l.b16 %v457
        %v682 = vunpack.c.l.b16 %v458
        %v683 = vunpack.c.l.b16 %v459
        %v684 = vunpack.c.l.b16 %v460
        %v685 = vunpack.c.l.b16 %v461
        %v686 = vpack.c.b16 %v639, %v638
        %v687 = vpack.c.b16 %v641, %v640
        %v688 = vpack.c.b16 %v643, %v642
        %v689 = vpack.c.b16 %v645, %v644
        %v690 = vpack.c.b16 %v647, %v646
        %v691 = vpack.c.b16 %v649, %v648
        %v692 = vpack.c.b16 %v651, %v650
        %v693 = vpack.c.b16 %v653, %v652
        %v694 = vpack.c.b16 %v655, %v654
        %v695 = vpack.c.b16 %v657, %v656
        %v696 = vpack.c.b16 %v659, %v658
        %v697 = vpack.c.b16 %v661, %v660
        %v698 = vpack.c.b16 %v663, %v662
        %v699 = vpack.c.b16 %v665, %v664
        %v700 = vpack.c.b16 %v667, %v666
        %v701 = vpack.c.b16 %v669, %v668
        %v702 = vpack.c.b16 %v671, %v670
        %v703 = vpack.c.b16 %v673, %v672
        %v704 = vpack.c.b16 %v675, %v674
        %v705 = vpack.c.b16 %v677, %v676
        %v706 = vpack.c.b16 %v679, %v678
        %v707 = vpack.c.b16 %v681, %v680
        %v708 = vpack.c.b16 %v683, %v682
        %v709 = vpack.c.b16 %v685, %v684
        %734 = vmatprep.subr.bf16.mxu0 0
        %735 = vmatpush1.bf16.msra.mxu0 %v693
        %736 = vmatprep.subr.bf16.mxu0 0
        %737 = vmatpush1.bf16.msra.mxu0 %v692
        %738 = vmatprep.subr.bf16.mxu0 0
        %739 = vmatpush1.bf16.msra.mxu0 %v691
        %740 = vmatprep.subr.bf16.mxu0 0
        %741 = vmatpush1.bf16.msra.mxu0 %v690
        %742 = vmatprep.subr.bf16.mxu0 0
        %743 = vmatpush1.bf16.msra.mxu0 %v689
        %744 = vmatprep.subr.bf16.mxu0 0
        %745 = vmatpush1.bf16.msra.mxu0 %v688
        %746 = vmatprep.subr.bf16.mxu0 0
        %747 = vmatpush1.bf16.msra.mxu0 %v687
        %748 = vmatprep.subr.bf16.mxu0 0
        %749 = vmatpush1.bf16.msra.mxu0 %v686
        %750 = vmatprep.subr.bf16.mxu0 0
        %751 = vmatpush2.bf16.msra.mxu0 %v701
        %752 = vmatprep.subr.bf16.mxu0 0
        %753 = vmatpush2.bf16.msra.mxu0 %v700
        %754 = vmatprep.subr.bf16.mxu0 0
        %755 = vmatpush2.bf16.msra.mxu0 %v699
        %756 = vmatprep.subr.bf16.mxu0 0
        %757 = vmatpush2.bf16.msra.mxu0 %v698
        %758 = vmatprep.subr.bf16.mxu0 0
        %759 = vmatpush2.bf16.msra.mxu0 %v697
        %760 = vmatprep.subr.bf16.mxu0 0
        %761 = vmatpush2.bf16.msra.mxu0 %v696
        %762 = vmatprep.subr.bf16.mxu0 0
        %763 = vmatpush2.bf16.msra.mxu0 %v695
        %764 = vmatprep.subr.bf16.mxu0 0
        %765 = vmatpush2.bf16.msra.mxu0 %v694
        %766 = vmatprep.mubr.bf16.mxu0 %v543
        %767 = vmatmul.mubr.bf16.gmra.mxu0 %v542
        %v768 = vpop.f32.mrf.mxu0
        %v769 = vadd.f32 0.0, %v768
        %v770 = vpop.f32.mrf.mxu0
        %v771 = vpop.f32.mrf.mxu0
        %v772 = vadd.f32 0.0, %v771
        %v773 = vpop.f32.mrf.mxu0
        %774 = vmatprep.mubr.bf16.mxu0 %v546
        %775 = vmatmul.mubr.bf16.gmra.mxu0 %v545
        %v776 = vpop.f32.mrf.mxu0
        %v777 = vadd.f32 0.0, %v776
        %v778 = vpop.f32.mrf.mxu0
        %v779 = vpop.f32.mrf.mxu0
        %v780 = vadd.f32 0.0, %v779
        %v781 = vpop.f32.mrf.mxu0
        %782 = vmatprep.mubr.bf16.mxu0 %v549
        %783 = vmatmul.mubr.bf16.gmra.mxu0 %v548
        %v784 = vpop.f32.mrf.mxu0
        %v785 = vadd.f32 0.0, %v784
        %v786 = vpop.f32.mrf.mxu0
        %v787 = vpop.f32.mrf.mxu0
        %v788 = vadd.f32 0.0, %v787
        %v789 = vpop.f32.mrf.mxu0
        %790 = vmatprep.mubr.bf16.mxu0 %v552
        %791 = vmatmul.mubr.bf16.gmra.mxu0 %v551
        %v792 = vpop.f32.mrf.mxu0
        %v793 = vadd.f32 0.0, %v792
        %v794 = vpop.f32.mrf.mxu0
        %v795 = vpop.f32.mrf.mxu0
        %v796 = vadd.f32 0.0, %v795
        %v797 = vpop.f32.mrf.mxu0
        %798 = vmatprep.mubr.bf16.mxu0 %v555
        %799 = vmatmul.mubr.bf16.gmra.mxu0 %v554
        %v800 = vpop.f32.mrf.mxu0
        %v801 = vadd.f32 0.0, %v800
        %v802 = vpop.f32.mrf.mxu0
        %v803 = vpop.f32.mrf.mxu0
        %v804 = vadd.f32 0.0, %v803
        %v805 = vpop.f32.mrf.mxu0
        %806 = vmatprep.mubr.bf16.mxu0 %v558
        %807 = vmatmul.mubr.bf16.gmra.mxu0 %v557
        %v808 = vpop.f32.mrf.mxu0
        %v809 = vadd.f32 0.0, %v808
        %v810 = vpop.f32.mrf.mxu0
        %v811 = vpop.f32.mrf.mxu0
        %v812 = vadd.f32 0.0, %v811
        %v813 = vpop.f32.mrf.mxu0
        %814 = vmatprep.mubr.bf16.mxu0 %v561
        %815 = vmatmul.mubr.bf16.gmra.mxu0 %v560
        %v816 = vpop.f32.mrf.mxu0
        %v817 = vadd.f32 0.0, %v816
        %v818 = vpop.f32.mrf.mxu0
        %v819 = vpop.f32.mrf.mxu0
        %v820 = vadd.f32 0.0, %v819
        %v821 = vpop.f32.mrf.mxu0
        %822 = vmatprep.mubr.bf16.mxu0 %v564
        %823 = vmatmul.mubr.bf16.gmra.mxu0 %v563
        %v824 = vpop.f32.mrf.mxu0
        %v825 = vadd.f32 0.0, %v824
        %v826 = vpop.f32.mrf.mxu0
        %v827 = vpop.f32.mrf.mxu0
        %v828 = vadd.f32 0.0, %v827
        %v829 = vpop.f32.mrf.mxu0
        %830 = vdwg.mxu0
        %831 = vmatprep.subr.bf16.mxu0 0
        %832 = vmatpush1.bf16.msra.mxu0 %v709
        %833 = vmatprep.subr.bf16.mxu0 0
        %834 = vmatpush1.bf16.msra.mxu0 %v708
        %835 = vmatprep.subr.bf16.mxu0 0
        %836 = vmatpush1.bf16.msra.mxu0 %v707
        %837 = vmatprep.subr.bf16.mxu0 0
        %838 = vmatpush1.bf16.msra.mxu0 %v706
        %839 = vmatprep.subr.bf16.mxu0 0
        %840 = vmatpush1.bf16.msra.mxu0 %v705
        %841 = vmatprep.subr.bf16.mxu0 0
        %842 = vmatpush1.bf16.msra.mxu0 %v704
        %843 = vmatprep.subr.bf16.mxu0 0
        %844 = vmatpush1.bf16.msra.mxu0 %v703
        %845 = vmatprep.subr.bf16.mxu0 0
        %846 = vmatpush1.bf16.msra.mxu0 %v702
        %847 = vmatprep.subr.bf16.mxu0 0
        %848 = vmatpush2.bf16.msra.mxu0 0
        %849 = vmatprep.subr.bf16.mxu0 0
        %850 = vmatpush2.bf16.msra.mxu0 0
        %851 = vmatprep.subr.bf16.mxu0 0
        %852 = vmatpush2.bf16.msra.mxu0 0
        %853 = vmatprep.subr.bf16.mxu0 0
        %854 = vmatpush2.bf16.msra.mxu0 0
        %855 = vmatprep.subr.bf16.mxu0 0
        %856 = vmatpush2.bf16.msra.mxu0 0
        %857 = vmatprep.subr.bf16.mxu0 0
        %858 = vmatpush2.bf16.msra.mxu0 0
        %859 = vmatprep.subr.bf16.mxu0 0
        %860 = vmatpush2.bf16.msra.mxu0 0
        %861 = vmatprep.subr.bf16.mxu0 0
        %862 = vmatpush2.bf16.msra.mxu0 0
        %863 = vmatprep.mubr.bf16.mxu0 0
        %864 = vmatmul.mubr.bf16.gmra.mxu0 %v544
        %v865 = vpop.f32.mrf.mxu0
        %v866 = vadd.f32 %v769, %v865
        %v867 = vpop.f32.mrf.mxu0
        %v868 = vpop.f32.mrf.mxu0
        %v869 = vadd.f32 %v772, %v868
        %v870 = vpop.f32.mrf.mxu0
        %871 = vmatprep.mubr.bf16.mxu0 0
        %872 = vmatmul.mubr.bf16.gmra.mxu0 %v547
        %v873 = vpop.f32.mrf.mxu0
        %v874 = vadd.f32 %v777, %v873
        %v875 = vpop.f32.mrf.mxu0
        %v876 = vpop.f32.mrf.mxu0
        %v877 = vadd.f32 %v780, %v876
        %v878 = vpop.f32.mrf.mxu0
        %879 = vmatprep.mubr.bf16.mxu0 0
        %880 = vmatmul.mubr.bf16.gmra.mxu0 %v550
        %v881 = vpop.f32.mrf.mxu0
        %v882 = vadd.f32 %v785, %v881
        %v883 = vpop.f32.mrf.mxu0
        %v884 = vpop.f32.mrf.mxu0
        %v885 = vadd.f32 %v788, %v884
        %v886 = vpop.f32.mrf.mxu0
        %887 = vmatprep.mubr.bf16.mxu0 0
        %888 = vmatmul.mubr.bf16.gmra.mxu0 %v553
        %v889 = vpop.f32.mrf.mxu0
        %v890 = vadd.f32 %v793, %v889
        %v891 = vpop.f32.mrf.mxu0
        %v892 = vpop.f32.mrf.mxu0
        %v893 = vadd.f32 %v796, %v892
        %v894 = vpop.f32.mrf.mxu0
        %895 = vmatprep.mubr.bf16.mxu0 0
        %896 = vmatmul.mubr.bf16.gmra.mxu0 %v556
        %v897 = vpop.f32.mrf.mxu0
        %v898 = vadd.f32 %v801, %v897
        %v899 = vpop.f32.mrf.mxu0
        %v900 = vpop.f32.mrf.mxu0
        %v901 = vadd.f32 %v804, %v900
        %v902 = vpop.f32.mrf.mxu0
        %903 = vmatprep.mubr.bf16.mxu0 0
        %904 = vmatmul.mubr.bf16.gmra.mxu0 %v559
        %v905 = vpop.f32.mrf.mxu0
        %v906 = vadd.f32 %v809, %v905
        %v907 = vpop.f32.mrf.mxu0
        %v908 = vpop.f32.mrf.mxu0
        %v909 = vadd.f32 %v812, %v908
        %v910 = vpop.f32.mrf.mxu0
        %911 = vmatprep.mubr.bf16.mxu0 0
        %912 = vmatmul.mubr.bf16.gmra.mxu0 %v562
        %v913 = vpop.f32.mrf.mxu0
        %v914 = vadd.f32 %v817, %v913
        %v915 = vpop.f32.mrf.mxu0
        %v916 = vpop.f32.mrf.mxu0
        %v917 = vadd.f32 %v820, %v916
        %v918 = vpop.f32.mrf.mxu0
        %919 = vmatprep.mubr.bf16.mxu0 0
        %920 = vmatmul.mubr.bf16.gmra.mxu0 %v565
        %v921 = vpop.f32.mrf.mxu0
        %v922 = vadd.f32 %v825, %v921
        %v923 = vpop.f32.mrf.mxu0
        %v924 = vpop.f32.mrf.mxu0
        %v925 = vadd.f32 %v828, %v924
        %v926 = vpop.f32.mrf.mxu0
        %927 = vdwg.mxu0
        %v928 = vadd.f32 %v366, %v866
        %v929 = vadd.f32 %v367, %v869
        %v930 = vadd.f32 %v368, %v874
        %v931 = vadd.f32 %v369, %v877
        %v932 = vadd.f32 %v370, %v882
        %v933 = vadd.f32 %v371, %v885
        %v934 = vadd.f32 %v372, %v890
        %v935 = vadd.f32 %v373, %v893
        %v936 = vadd.f32 %v374, %v898
        %v937 = vadd.f32 %v375, %v901
        %v938 = vadd.f32 %v376, %v906
        %v939 = vadd.f32 %v377, %v909
        %v940 = vadd.f32 %v378, %v914
        %v941 = vadd.f32 %v379, %v917
        %v942 = vadd.f32 %v380, %v922
        %v943 = vadd.f32 %v381, %v925
        %944 = vst [vmem:[#allocation2] sm:$0xff] %v928
        %945 = vst [vmem:[#allocation2 + $0x8] sm:$0xff] %v929
        %946 = vst [vmem:[#allocation2 + $0x10] sm:$0xff] %v930
        %947 = vst [vmem:[#allocation2 + $0x18] sm:$0xff] %v931
        %948 = vst [vmem:[#allocation2 + $0x20] sm:$0xff] %v932
        %949 = vst [vmem:[#allocation2 + $0x28] sm:$0xff] %v933
        %950 = vst [vmem:[#allocation2 + $0x30] sm:$0xff] %v934
        %951 = vst [vmem:[#allocation2 + $0x38] sm:$0xff] %v935
        %952 = vst [vmem:[#allocation2 + $0x40] sm:$0xff] %v936
        %953 = vst [vmem:[#allocation2 + $0x48] sm:$0xff] %v937
        %954 = vst [vmem:[#allocation2 + $0x50] sm:$0xff] %v938
        %955 = vst [vmem:[#allocation2 + $0x58] sm:$0xff] %v939
        %956 = vst [vmem:[#allocation2 + $0x60] sm:$0xff] %v940
        %957 = vst [vmem:[#allocation2 + $0x68] sm:$0xff] %v941
        %958 = vst [vmem:[#allocation2 + $0x70] sm:$0xff] %v942
        %959 = vst [vmem:[#allocation2 + $0x78] sm:$0xff] %v943
        %p960 = scmp.eq.s32.totalorder %s21, 5
        // Predicated region
        $region63: #{unet_forward.13} parent=53 // pred_check
          %p961 = pneg %p960
        $region64: #{unet_forward.13} parent=53 // pred_check_branch
          %963 = sbr.rel (%p961) target = $region66
        $region65: #{unet_forward.13} parent=53 // pred_region
          %v964 = vld [vmem:[#allocation2] sm:$0xff]
          %v965 = vld [vmem:[#allocation2 + $0x8] sm:$0xff]
          %v966 = vld [vmem:[#allocation2 + $0x10] sm:$0xff]
          %v967 = vld [vmem:[#allocation2 + $0x18] sm:$0xff]
          %v968 = vld [vmem:[#allocation2 + $0x20] sm:$0xff]
          %v969 = vld [vmem:[#allocation2 + $0x28] sm:$0xff]
          %v970 = vld [vmem:[#allocation2 + $0x30] sm:$0xff]
          %v971 = vld [vmem:[#allocation2 + $0x38] sm:$0xff]
          %v972 = vld [vmem:[#allocation2 + $0x40] sm:$0xff]
          %v973 = vld [vmem:[#allocation2 + $0x48] sm:$0xff]
          %v974 = vld [vmem:[#allocation2 + $0x50] sm:$0xff]
          %v975 = vld [vmem:[#allocation2 + $0x58] sm:$0xff]
          %v976 = vld [vmem:[#allocation2 + $0x60] sm:$0xff]
          %v977 = vld [vmem:[#allocation2 + $0x68] sm:$0xff]
          %v978 = vld [vmem:[#allocation2 + $0x70] sm:$0xff]
          %v979 = vld [vmem:[#allocation2 + $0x78] sm:$0xff]
          %v980 = vld [vmem:[%s335] sm:$0x1]
          %v982 = vlaneseq
          %v983 = vshrl.u32 %v982, 7
          %v984 = vsub.s32 0, %v983
          %v985 = vrot.slane %v980, %v984
          %v987 = vadd.f32 %v964, %v985
          %v988 = vadd.f32 %v965, %v985
          %v989 = vadd.f32 %v966, %v985
          %v990 = vadd.f32 %v967, %v985
          %v991 = vadd.f32 %v968, %v985
          %v992 = vadd.f32 %v969, %v985
          %v993 = vadd.f32 %v970, %v985
          %v994 = vadd.f32 %v971, %v985
          %v995 = vadd.f32 %v972, %v985
          %v996 = vadd.f32 %v973, %v985
          %v997 = vadd.f32 %v974, %v985
          %v998 = vadd.f32 %v975, %v985
          %v999 = vadd.f32 %v976, %v985
          %v1000 = vadd.f32 %v977, %v985
          %v1001 = vadd.f32 %v978, %v985
          %v1002 = vadd.f32 %v979, %v985
          %v1003 = vmax.f32 %v987, 0.0
          %v1004 = vmax.f32 %v988, 0.0
          %v1005 = vmax.f32 %v989, 0.0
          %v1006 = vmax.f32 %v990, 0.0
          %v1007 = vmax.f32 %v991, 0.0
          %v1008 = vmax.f32 %v992, 0.0
          %v1009 = vmax.f32 %v993, 0.0
          %v1010 = vmax.f32 %v994, 0.0
          %v1011 = vmax.f32 %v995, 0.0
          %v1012 = vmax.f32 %v996, 0.0
          %v1013 = vmax.f32 %v997, 0.0
          %v1014 = vmax.f32 %v998, 0.0
          %v1015 = vmax.f32 %v999, 0.0
          %v1016 = vmax.f32 %v1000, 0.0
          %v1017 = vmax.f32 %v1001, 0.0
          %v1018 = vmax.f32 %v1002, 0.0
          %v1019 = vpack.c.bf16 %v1004, %v1003
          %v1020 = vpack.c.bf16 %v1006, %v1005
          %v1021 = vpack.c.bf16 %v1008, %v1007
          %v1022 = vpack.c.bf16 %v1010, %v1009
          %v1023 = vpack.c.bf16 %v1012, %v1011
          %v1024 = vpack.c.bf16 %v1014, %v1013
          %v1025 = vpack.c.bf16 %v1016, %v1015
          %v1026 = vpack.c.bf16 %v1018, %v1017
          %v1035 = vunpack.c.l.b16 %v1019
          %v1036 = vunpack.c.h.b16 %v1019
          %v1037 = vunpack.c.l.b16 %v1020
          %v1038 = vunpack.c.h.b16 %v1020
          %v1039 = vunpack.c.l.b16 %v1021
          %v1040 = vunpack.c.h.b16 %v1021
          %v1041 = vunpack.c.l.b16 %v1022
          %v1042 = vunpack.c.h.b16 %v1022
          %v1043 = vunpack.c.l.b16 %v1023
          %v1044 = vunpack.c.h.b16 %v1023
          %v1045 = vunpack.c.l.b16 %v1024
          %v1046 = vunpack.c.h.b16 %v1024
          %v1047 = vunpack.c.l.b16 %v1025
          %v1048 = vunpack.c.h.b16 %v1025
          %v1049 = vunpack.c.l.b16 %v1026
          %v1050 = vunpack.c.h.b16 %v1026
          %v1051 = vpack.c.b16 %v1035, %v1035
          %v1052 = vpack.c.b16 %v1036, %v1036
          %v1053 = vpack.c.b16 %v1037, %v1037
          %v1054 = vpack.c.b16 %v1038, %v1038
          %v1055 = vpack.c.b16 %v1039, %v1039
          %v1056 = vpack.c.b16 %v1040, %v1040
          %v1057 = vpack.c.b16 %v1041, %v1041
          %v1058 = vpack.c.b16 %v1042, %v1042
          %v1059 = vpack.c.b16 %v1043, %v1043
          %v1060 = vpack.c.b16 %v1044, %v1044
          %v1061 = vpack.c.b16 %v1045, %v1045
          %v1062 = vpack.c.b16 %v1046, %v1046
          %v1063 = vpack.c.b16 %v1047, %v1047
          %v1064 = vpack.c.b16 %v1048, %v1048
          %v1065 = vpack.c.b16 %v1049, %v1049
          %v1066 = vpack.c.b16 %v1050, %v1050
          %1083 = vst [vmem:[%s343] sm:$0xf] %v1051
          %1084 = vst [vmem:[%s343 + $0x4] sm:$0xf] %v1052
          %1085 = vst [vmem:[%s343 + $0x8] sm:$0xf] %v1053
          %1086 = vst [vmem:[%s343 + $0xc] sm:$0xf] %v1054
          %1087 = vst [vmem:[%s343 + $0x10] sm:$0xf] %v1055
          %1088 = vst [vmem:[%s343 + $0x14] sm:$0xf] %v1056
          %1089 = vst [vmem:[%s343 + $0x18] sm:$0xf] %v1057
          %1090 = vst [vmem:[%s343 + $0x1c] sm:$0xf] %v1058
          %1091 = vst [vmem:[%s343 + $0x20] sm:$0xf] %v1059
          %1092 = vst [vmem:[%s343 + $0x24] sm:$0xf] %v1060
          %1093 = vst [vmem:[%s343 + $0x28] sm:$0xf] %v1061
          %1094 = vst [vmem:[%s343 + $0x2c] sm:$0xf] %v1062
          %1095 = vst [vmem:[%s343 + $0x30] sm:$0xf] %v1063
          %1096 = vst [vmem:[%s343 + $0x34] sm:$0xf] %v1064
          %1097 = vst [vmem:[%s343 + $0x38] sm:$0xf] %v1065
          %1098 = vst [vmem:[%s343 + $0x3c] sm:$0xf] %v1066
        $region66: #{unet_forward.13} parent=53 // pred_fallthru
          _
        %s1099 = smul.u32 16, %s19
        %p1100 = scmp.lt.s32.totalorder %s1099, 15
        %s1101 = scalar_select %p1100, %s1099, 15
        %p1102 = scmp.lt.s32.totalorder %s20, 0
        %s1103 = scalar_select %p1102, %s20, 0
        %s1104 = sadd.s32 %s1103, %s1101
        %s1105 = smul.addr %s1104, 4
        %s1106 = scalar_lea.vmem %s3, %s1105
        // Predicated region
        $region67: #{unet_forward.13} parent=53 // pred_check
          %p1107 = pneg %p135
        $region68: #{unet_forward.13} parent=53 // pred_check_branch
          %1109 = sbr.rel (%p1107) target = $region70
        $region69: #{unet_forward.13} parent=53 // pred_region
          %s1110 = smul.u32 16, %s19
        $region70: #{unet_forward.13} parent=53 // pred_fallthru
          _
        // Predicated region
        $region71: #{unet_forward.13} parent=53 // pred_check
          %p1111 = pneg %p135
        $region72: #{unet_forward.13} parent=53 // pred_check_branch
          %1113 = sbr.rel (%p1111) target = $region74
        $region73: #{unet_forward.13} parent=53 // pred_region
          %s1114 = smul.u32 16, %s19
          %p1115 = scmp.lt.s32.totalorder %s1114, 15
          %s1116 = scalar_select %p1115, %s1114, 15
          %p1117 = scmp.lt.s32.totalorder %s20, 0
          %s1118 = scalar_select %p1117, %s20, 0
          %s1119 = sadd.s32 %s1118, %s1116
          %s1120 = smul.addr %s1119, 4
          %s1121 = scalar_lea.vmem %s3, %s1120
        $region74: #{unet_forward.13} parent=53 // pred_fallthru
          _
      $region54: #{unet_forward.13} parent=5 // pred_fallthru
        _
      %p1122 = scmp.le.s32.totalorder 2, %s9
      // Predicated region
      $region75: #{unet_forward.13} parent=5 // pred_check
        %p1123 = pneg %p1122
      $region76: #{unet_forward.13} parent=5 // pred_check_branch
        %1125 = sbr.rel (%p1123) target = $region78
      $region77: #{unet_forward.13} parent=5 // pred_region
        %s1126 = ssub.s32 %s9, 2
      $region78: #{unet_forward.13} parent=5 // pred_fallthru
        _
    $region6: #{unet_forward.13} parent=1 // loop_footer
      %s13 = sadd.s32 1, %s9
    $region7: #{unet_forward.13} parent=1 // loop_footer_branch
      %8 = sbr.rel target = $region3
    $region8: #{unet_forward.13} parent=1 // loop_exit
      _

// kernel: unet_forward.15
$region0: #{unet_forward.15}
  #allocation0 [shape = 'u32[]', space=smem, size = 0x4, offset = 0x4, fixed_abs, tag = 'smem constant byte address 0x4 - core index']
  #allocation1 [shape = 'u32[144,128]{1,0:T(1,128)}', space=vmem, size = 0x12000, scoped, tag = 'internal scratch']
  #allocation2 [shape = 'f32[128,256]{1,0:T(8,128)}', space=vmem, size = 0x20000, scoped, tag = 'scratch operand']
  %s0 = inlined_call_operand.vmem [shape: bf16[128,128], index: 0, kind: input, shape index: {}]
  %s1 = inlined_call_operand.vmem [shape: bf16[128,256], index: 1, kind: input, shape index: {}]
  %s2 = inlined_call_operand.vmem [shape: f32[1,256], index: 2, kind: input, shape index: {}]
  %s3 = inlined_call_operand.vmem [shape: bf16[128,256], index: 3, kind: output, shape index: {}]
  %s4 = sld [smem:[#allocation0]]
  $region30: #{unet_forward.15} parent=0
    _
  %s6 = ssub.s32 1, %s4
  %s7 = scalar_select 0, %s6, %s4
  // Predicated region
  $region2: #{unet_forward.15} parent=0 // pred_check
    _
  $region3: #{unet_forward.15} parent=0 // pred_check_branch
    %9 = sbr.rel (0) target = $region5
  $region4: #{unet_forward.15} parent=0 // pred_region
    _
  $region5: #{unet_forward.15} parent=0 // pred_fallthru
    _
  // Predicated region
  $region6: #{unet_forward.15} parent=0 // pred_check
    _
  $region7: #{unet_forward.15} parent=0 // pred_check_branch
    %11 = sbr.rel (0) target = $region9
  $region8: #{unet_forward.15} parent=0 // pred_region
    _
  $region9: #{unet_forward.15} parent=0 // pred_fallthru
    _
  // Predicated region
  $region10: #{unet_forward.15} parent=0 // pred_check
    _
  $region11: #{unet_forward.15} parent=0 // pred_check_branch
    %13 = sbr.rel (0) target = $region13
  $region12: #{unet_forward.15} parent=0 // pred_region
    _
  $region13: #{unet_forward.15} parent=0 // pred_fallthru
    _
  %p15 = scmp.eq.s32.totalorder 0, 0
  // Predicated region
  $region14: #{unet_forward.15} parent=0 // pred_check
    %p16 = pneg %p15
  $region15: #{unet_forward.15} parent=0 // pred_check_branch
    %18 = sbr.rel (%p16) target = $region17
  $region16: #{unet_forward.15} parent=0 // pred_region
    %19 = vst [vmem:[#allocation2] sm:$0xff] 0.0
    %20 = vst [vmem:[#allocation2 + $0x8] sm:$0xff] 0.0
    %21 = vst [vmem:[#allocation2 + $0x10] sm:$0xff] 0.0
    %22 = vst [vmem:[#allocation2 + $0x18] sm:$0xff] 0.0
    %23 = vst [vmem:[#allocation2 + $0x20] sm:$0xff] 0.0
    %24 = vst [vmem:[#allocation2 + $0x28] sm:$0xff] 0.0
    %25 = vst [vmem:[#allocation2 + $0x30] sm:$0xff] 0.0
    %26 = vst [vmem:[#allocation2 + $0x38] sm:$0xff] 0.0
    %27 = vst [vmem:[#allocation2 + $0x40] sm:$0xff] 0.0
    %28 = vst [vmem:[#allocation2 + $0x48] sm:$0xff] 0.0
    %29 = vst [vmem:[#allocation2 + $0x50] sm:$0xff] 0.0
    %30 = vst [vmem:[#allocation2 + $0x58] sm:$0xff] 0.0
    %31 = vst [vmem:[#allocation2 + $0x60] sm:$0xff] 0.0
    %32 = vst [vmem:[#allocation2 + $0x68] sm:$0xff] 0.0
    %33 = vst [vmem:[#allocation2 + $0x70] sm:$0xff] 0.0
    %34 = vst [vmem:[#allocation2 + $0x78] sm:$0xff] 0.0
    %35 = vst [vmem:[#allocation2 + $0x80] sm:$0xff] 0.0
    %36 = vst [vmem:[#allocation2 + $0x88] sm:$0xff] 0.0
    %37 = vst [vmem:[#allocation2 + $0x90] sm:$0xff] 0.0
    %38 = vst [vmem:[#allocation2 + $0x98] sm:$0xff] 0.0
    %39 = vst [vmem:[#allocation2 + $0xa0] sm:$0xff] 0.0
    %40 = vst [vmem:[#allocation2 + $0xa8] sm:$0xff] 0.0
    %41 = vst [vmem:[#allocation2 + $0xb0] sm:$0xff] 0.0
    %42 = vst [vmem:[#allocation2 + $0xb8] sm:$0xff] 0.0
    %43 = vst [vmem:[#allocation2 + $0xc0] sm:$0xff] 0.0
    %44 = vst [vmem:[#allocation2 + $0xc8] sm:$0xff] 0.0
    %45 = vst [vmem:[#allocation2 + $0xd0] sm:$0xff] 0.0
    %46 = vst [vmem:[#allocation2 + $0xd8] sm:$0xff] 0.0
    %47 = vst [vmem:[#allocation2 + $0xe0] sm:$0xff] 0.0
    %48 = vst [vmem:[#allocation2 + $0xe8] sm:$0xff] 0.0
    %49 = vst [vmem:[#allocation2 + $0xf0] sm:$0xff] 0.0
    %50 = vst [vmem:[#allocation2 + $0xf8] sm:$0xff] 0.0
  $region17: #{unet_forward.15} parent=0 // pred_fallthru
    _
  %v51 = vld [vmem:[#allocation2] sm:$0xff]
  %v52 = vld [vmem:[#allocation2 + $0x8] sm:$0xff]
  %v53 = vld [vmem:[#allocation2 + $0x10] sm:$0xff]
  %v54 = vld [vmem:[#allocation2 + $0x18] sm:$0xff]
  %v55 = vld [vmem:[#allocation2 + $0x20] sm:$0xff]
  %v56 = vld [vmem:[#allocation2 + $0x28] sm:$0xff]
  %v57 = vld [vmem:[#allocation2 + $0x30] sm:$0xff]
  %v58 = vld [vmem:[#allocation2 + $0x38] sm:$0xff]
  %v59 = vld [vmem:[#allocation2 + $0x40] sm:$0xff]
  %v60 = vld [vmem:[#allocation2 + $0x48] sm:$0xff]
  %v61 = vld [vmem:[#allocation2 + $0x50] sm:$0xff]
  %v62 = vld [vmem:[#allocation2 + $0x58] sm:$0xff]
  %v63 = vld [vmem:[#allocation2 + $0x60] sm:$0xff]
  %v64 = vld [vmem:[#allocation2 + $0x68] sm:$0xff]
  %v65 = vld [vmem:[#allocation2 + $0x70] sm:$0xff]
  %v66 = vld [vmem:[#allocation2 + $0x78] sm:$0xff]
  %v67 = vld [vmem:[#allocation2 + $0x80] sm:$0xff]
  %v68 = vld [vmem:[#allocation2 + $0x88] sm:$0xff]
  %v69 = vld [vmem:[#allocation2 + $0x90] sm:$0xff]
  %v70 = vld [vmem:[#allocation2 + $0x98] sm:$0xff]
  %v71 = vld [vmem:[#allocation2 + $0xa0] sm:$0xff]
  %v72 = vld [vmem:[#allocation2 + $0xa8] sm:$0xff]
  %v73 = vld [vmem:[#allocation2 + $0xb0] sm:$0xff]
  %v74 = vld [vmem:[#allocation2 + $0xb8] sm:$0xff]
  %v75 = vld [vmem:[#allocation2 + $0xc0] sm:$0xff]
  %v76 = vld [vmem:[#allocation2 + $0xc8] sm:$0xff]
  %v77 = vld [vmem:[#allocation2 + $0xd0] sm:$0xff]
  %v78 = vld [vmem:[#allocation2 + $0xd8] sm:$0xff]
  %v79 = vld [vmem:[#allocation2 + $0xe0] sm:$0xff]
  %v80 = vld [vmem:[#allocation2 + $0xe8] sm:$0xff]
  %v81 = vld [vmem:[#allocation2 + $0xf0] sm:$0xff]
  %v82 = vld [vmem:[#allocation2 + $0xf8] sm:$0xff]
  %v83 = vld [vmem:[%s0] sm:$0xf]
  %v84 = vld [vmem:[%s0 + $0x4] sm:$0xf]
  %v85 = vld [vmem:[%s0 + $0x8] sm:$0xf]
  %v86 = vld [vmem:[%s0 + $0xc] sm:$0xf]
  %v87 = vld [vmem:[%s0 + $0x10] sm:$0xf]
  %v88 = vld [vmem:[%s0 + $0x14] sm:$0xf]
  %v89 = vld [vmem:[%s0 + $0x18] sm:$0xf]
  %v90 = vld [vmem:[%s0 + $0x1c] sm:$0xf]
  %v91 = vld [vmem:[%s0 + $0x20] sm:$0xf]
  %v92 = vld [vmem:[%s0 + $0x24] sm:$0xf]
  %v93 = vld [vmem:[%s0 + $0x28] sm:$0xf]
  %v94 = vld [vmem:[%s0 + $0x2c] sm:$0xf]
  %v95 = vld [vmem:[%s0 + $0x30] sm:$0xf]
  %v96 = vld [vmem:[%s0 + $0x34] sm:$0xf]
  %v97 = vld [vmem:[%s0 + $0x38] sm:$0xf]
  %v98 = vld [vmem:[%s0 + $0x3c] sm:$0xf]
  %v99 = vld [vmem:[%s1] sm:$0xff]
  %v100 = vld [vmem:[%s1 + $0x8] sm:$0xff]
  %v101 = vld [vmem:[%s1 + $0x10] sm:$0xff]
  %v102 = vld [vmem:[%s1 + $0x18] sm:$0xff]
  %v103 = vld [vmem:[%s1 + $0x20] sm:$0xff]
  %v104 = vld [vmem:[%s1 + $0x28] sm:$0xff]
  %v105 = vld [vmem:[%s1 + $0x30] sm:$0xff]
  %v106 = vld [vmem:[%s1 + $0x38] sm:$0xff]
  %v107 = vld [vmem:[%s1 + $0x40] sm:$0xff]
  %v108 = vld [vmem:[%s1 + $0x48] sm:$0xff]
  %v109 = vld [vmem:[%s1 + $0x50] sm:$0xff]
  %v110 = vld [vmem:[%s1 + $0x58] sm:$0xff]
  %v111 = vld [vmem:[%s1 + $0x60] sm:$0xff]
  %v112 = vld [vmem:[%s1 + $0x68] sm:$0xff]
  %v113 = vld [vmem:[%s1 + $0x70] sm:$0xff]
  %v114 = vld [vmem:[%s1 + $0x78] sm:$0xff]
  %v131 = vunpack.c.l.b16 %v83
  %v132 = vunpack.c.l.b16 %v84
  %v133 = vunpack.c.l.b16 %v85
  %v134 = vunpack.c.l.b16 %v86
  %v135 = vunpack.c.l.b16 %v87
  %v136 = vunpack.c.l.b16 %v88
  %v137 = vunpack.c.l.b16 %v89
  %v138 = vunpack.c.l.b16 %v90
  %v139 = vunpack.c.l.b16 %v91
  %v140 = vunpack.c.l.b16 %v92
  %v141 = vunpack.c.l.b16 %v93
  %v142 = vunpack.c.l.b16 %v94
  %v143 = vunpack.c.l.b16 %v95
  %v144 = vunpack.c.l.b16 %v96
  %v145 = vunpack.c.l.b16 %v97
  %v146 = vunpack.c.l.b16 %v98
  %v147 = vpack.c.b16 %v132, %v131
  %v148 = vpack.c.b16 %v134, %v133
  %v149 = vpack.c.b16 %v136, %v135
  %v150 = vpack.c.b16 %v138, %v137
  %v151 = vpack.c.b16 %v140, %v139
  %v152 = vpack.c.b16 %v142, %v141
  %v153 = vpack.c.b16 %v144, %v143
  %v154 = vpack.c.b16 %v146, %v145
  %v179 = vunpack.c.l.b16 %v99
  %v180 = vunpack.c.h.b16 %v99
  %v181 = vunpack.c.l.b16 %v100
  %v182 = vunpack.c.h.b16 %v100
  %v183 = vunpack.c.l.b16 %v101
  %v184 = vunpack.c.h.b16 %v101
  %v185 = vunpack.c.l.b16 %v102
  %v186 = vunpack.c.h.b16 %v102
  %v187 = vunpack.c.l.b16 %v103
  %v188 = vunpack.c.h.b16 %v103
  %v189 = vunpack.c.l.b16 %v104
  %v190 = vunpack.c.h.b16 %v104
  %v191 = vunpack.c.l.b16 %v105
  %v192 = vunpack.c.h.b16 %v105
  %v193 = vunpack.c.l.b16 %v106
  %v194 = vunpack.c.h.b16 %v106
  %v195 = vunpack.c.l.b16 %v107
  %v196 = vunpack.c.h.b16 %v107
  %v197 = vunpack.c.l.b16 %v108
  %v198 = vunpack.c.h.b16 %v108
  %v199 = vunpack.c.l.b16 %v109
  %v200 = vunpack.c.h.b16 %v109
  %v201 = vunpack.c.l.b16 %v110
  %v202 = vunpack.c.h.b16 %v110
  %v203 = vunpack.c.l.b16 %v111
  %v204 = vunpack.c.h.b16 %v111
  %v205 = vunpack.c.l.b16 %v112
  %v206 = vunpack.c.h.b16 %v112
  %v207 = vunpack.c.l.b16 %v113
  %v208 = vunpack.c.h.b16 %v113
  %v209 = vunpack.c.l.b16 %v114
  %v210 = vunpack.c.h.b16 %v114
  %v211 = vpack.c.b16 %v181, %v179
  %v212 = vpack.c.b16 %v182, %v180
  %v213 = vpack.c.b16 %v185, %v183
  %v214 = vpack.c.b16 %v186, %v184
  %v215 = vpack.c.b16 %v189, %v187
  %v216 = vpack.c.b16 %v190, %v188
  %v217 = vpack.c.b16 %v193, %v191
  %v218 = vpack.c.b16 %v194, %v192
  %v219 = vpack.c.b16 %v197, %v195
  %v220 = vpack.c.b16 %v198, %v196
  %v221 = vpack.c.b16 %v201, %v199
  %v222 = vpack.c.b16 %v202, %v200
  %v223 = vpack.c.b16 %v205, %v203
  %v224 = vpack.c.b16 %v206, %v204
  %v225 = vpack.c.b16 %v209, %v207
  %v226 = vpack.c.b16 %v210, %v208
  %243 = vmatprep.subr.bf16.mxu0 %v226
  %244 = vmatpush1.bf16.msra.mxu0 %v225
  %245 = vmatprep.subr.bf16.mxu0 %v224
  %246 = vmatpush1.bf16.msra.mxu0 %v223
  %247 = vmatprep.subr.bf16.mxu0 %v222
  %248 = vmatpush1.bf16.msra.mxu0 %v221
  %249 = vmatprep.subr.bf16.mxu0 %v220
  %250 = vmatpush1.bf16.msra.mxu0 %v219
  %251 = vmatprep.subr.bf16.mxu0 %v218
  %252 = vmatpush1.bf16.msra.mxu0 %v217
  %253 = vmatprep.subr.bf16.mxu0 %v216
  %254 = vmatpush1.bf16.msra.mxu0 %v215
  %255 = vmatprep.subr.bf16.mxu0 %v214
  %256 = vmatpush1.bf16.msra.mxu0 %v213
  %257 = vmatprep.subr.bf16.mxu0 %v212
  %258 = vmatpush1.bf16.msra.mxu0 %v211
  %259 = vmatprep.subr.bf16.mxu0 0
  %260 = vmatpush2.bf16.msra.mxu0 0
  %261 = vmatprep.subr.bf16.mxu0 0
  %262 = vmatpush2.bf16.msra.mxu0 0
  %263 = vmatprep.subr.bf16.mxu0 0
  %264 = vmatpush2.bf16.msra.mxu0 0
  %265 = vmatprep.subr.bf16.mxu0 0
  %266 = vmatpush2.bf16.msra.mxu0 0
  %267 = vmatprep.subr.bf16.mxu0 0
  %268 = vmatpush2.bf16.msra.mxu0 0
  %269 = vmatprep.subr.bf16.mxu0 0
  %270 = vmatpush2.bf16.msra.mxu0 0
  %271 = vmatprep.subr.bf16.mxu0 0
  %272 = vmatpush2.bf16.msra.mxu0 0
  %273 = vmatprep.subr.bf16.mxu0 0
  %274 = vmatpush2.bf16.msra.mxu0 0
  %275 = vmatprep.mubr.bf16.mxu0 0
  %276 = vmatmul.mubr.bf16.gmra.mxu0 %v147
  %v277 = vpop.f32.mrf.mxu0
  %v278 = vadd.f32 0.0, %v277
  %v279 = vpop.f32.mrf.mxu0
  %v280 = vadd.f32 0.0, %v279
  %v281 = vpop.f32.mrf.mxu0
  %v282 = vadd.f32 0.0, %v281
  %v283 = vpop.f32.mrf.mxu0
  %v284 = vadd.f32 0.0, %v283
  %285 = vmatprep.mubr.bf16.mxu0 0
  %286 = vmatmul.mubr.bf16.gmra.mxu0 %v148
  %v287 = vpop.f32.mrf.mxu0
  %v288 = vadd.f32 0.0, %v287
  %v289 = vpop.f32.mrf.mxu0
  %v290 = vadd.f32 0.0, %v289
  %v291 = vpop.f32.mrf.mxu0
  %v292 = vadd.f32 0.0, %v291
  %v293 = vpop.f32.mrf.mxu0
  %v294 = vadd.f32 0.0, %v293
  %295 = vmatprep.mubr.bf16.mxu0 0
  %296 = vmatmul.mubr.bf16.gmra.mxu0 %v149
  %v297 = vpop.f32.mrf.mxu0
  %v298 = vadd.f32 0.0, %v297
  %v299 = vpop.f32.mrf.mxu0
  %v300 = vadd.f32 0.0, %v299
  %v301 = vpop.f32.mrf.mxu0
  %v302 = vadd.f32 0.0, %v301
  %v303 = vpop.f32.mrf.mxu0
  %v304 = vadd.f32 0.0, %v303
  %305 = vmatprep.mubr.bf16.mxu0 0
  %306 = vmatmul.mubr.bf16.gmra.mxu0 %v150
  %v307 = vpop.f32.mrf.mxu0
  %v308 = vadd.f32 0.0, %v307
  %v309 = vpop.f32.mrf.mxu0
  %v310 = vadd.f32 0.0, %v309
  %v311 = vpop.f32.mrf.mxu0
  %v312 = vadd.f32 0.0, %v311
  %v313 = vpop.f32.mrf.mxu0
  %v314 = vadd.f32 0.0, %v313
  %315 = vmatprep.mubr.bf16.mxu0 0
  %316 = vmatmul.mubr.bf16.gmra.mxu0 %v151
  %v317 = vpop.f32.mrf.mxu0
  %v318 = vadd.f32 0.0, %v317
  %v319 = vpop.f32.mrf.mxu0
  %v320 = vadd.f32 0.0, %v319
  %v321 = vpop.f32.mrf.mxu0
  %v322 = vadd.f32 0.0, %v321
  %v323 = vpop.f32.mrf.mxu0
  %v324 = vadd.f32 0.0, %v323
  %325 = vmatprep.mubr.bf16.mxu0 0
  %326 = vmatmul.mubr.bf16.gmra.mxu0 %v152
  %v327 = vpop.f32.mrf.mxu0
  %v328 = vadd.f32 0.0, %v327
  %v329 = vpop.f32.mrf.mxu0
  %v330 = vadd.f32 0.0, %v329
  %v331 = vpop.f32.mrf.mxu0
  %v332 = vadd.f32 0.0, %v331
  %v333 = vpop.f32.mrf.mxu0
  %v334 = vadd.f32 0.0, %v333
  %335 = vmatprep.mubr.bf16.mxu0 0
  %336 = vmatmul.mubr.bf16.gmra.mxu0 %v153
  %v337 = vpop.f32.mrf.mxu0
  %v338 = vadd.f32 0.0, %v337
  %v339 = vpop.f32.mrf.mxu0
  %v340 = vadd.f32 0.0, %v339
  %v341 = vpop.f32.mrf.mxu0
  %v342 = vadd.f32 0.0, %v341
  %v343 = vpop.f32.mrf.mxu0
  %v344 = vadd.f32 0.0, %v343
  %345 = vmatprep.mubr.bf16.mxu0 0
  %346 = vmatmul.mubr.bf16.gmra.mxu0 %v154
  %v347 = vpop.f32.mrf.mxu0
  %v348 = vadd.f32 0.0, %v347
  %v349 = vpop.f32.mrf.mxu0
  %v350 = vadd.f32 0.0, %v349
  %v351 = vpop.f32.mrf.mxu0
  %v352 = vadd.f32 0.0, %v351
  %v353 = vpop.f32.mrf.mxu0
  %v354 = vadd.f32 0.0, %v353
  %355 = vdwg.mxu0
  %v356 = vadd.f32 %v51, %v278
  %v357 = vadd.f32 %v52, %v280
  %v358 = vadd.f32 %v53, %v282
  %v359 = vadd.f32 %v54, %v284
  %v360 = vadd.f32 %v55, %v288
  %v361 = vadd.f32 %v56, %v290
  %v362 = vadd.f32 %v57, %v292
  %v363 = vadd.f32 %v58, %v294
  %v364 = vadd.f32 %v59, %v298
  %v365 = vadd.f32 %v60, %v300
  %v366 = vadd.f32 %v61, %v302
  %v367 = vadd.f32 %v62, %v304
  %v368 = vadd.f32 %v63, %v308
  %v369 = vadd.f32 %v64, %v310
  %v370 = vadd.f32 %v65, %v312
  %v371 = vadd.f32 %v66, %v314
  %v372 = vadd.f32 %v67, %v318
  %v373 = vadd.f32 %v68, %v320
  %v374 = vadd.f32 %v69, %v322
  %v375 = vadd.f32 %v70, %v324
  %v376 = vadd.f32 %v71, %v328
  %v377 = vadd.f32 %v72, %v330
  %v378 = vadd.f32 %v73, %v332
  %v379 = vadd.f32 %v74, %v334
  %v380 = vadd.f32 %v75, %v338
  %v381 = vadd.f32 %v76, %v340
  %v382 = vadd.f32 %v77, %v342
  %v383 = vadd.f32 %v78, %v344
  %v384 = vadd.f32 %v79, %v348
  %v385 = vadd.f32 %v80, %v350
  %v386 = vadd.f32 %v81, %v352
  %v387 = vadd.f32 %v82, %v354
  %388 = vst [vmem:[#allocation2] sm:$0xff] %v356
  %389 = vst [vmem:[#allocation2 + $0x8] sm:$0xff] %v357
  %390 = vst [vmem:[#allocation2 + $0x10] sm:$0xff] %v358
  %391 = vst [vmem:[#allocation2 + $0x18] sm:$0xff] %v359
  %392 = vst [vmem:[#allocation2 + $0x20] sm:$0xff] %v360
  %393 = vst [vmem:[#allocation2 + $0x28] sm:$0xff] %v361
  %394 = vst [vmem:[#allocation2 + $0x30] sm:$0xff] %v362
  %395 = vst [vmem:[#allocation2 + $0x38] sm:$0xff] %v363
  %396 = vst [vmem:[#allocation2 + $0x40] sm:$0xff] %v364
  %397 = vst [vmem:[#allocation2 + $0x48] sm:$0xff] %v365
  %398 = vst [vmem:[#allocation2 + $0x50] sm:$0xff] %v366
  %399 = vst [vmem:[#allocation2 + $0x58] sm:$0xff] %v367
  %400 = vst [vmem:[#allocation2 + $0x60] sm:$0xff] %v368
  %401 = vst [vmem:[#allocation2 + $0x68] sm:$0xff] %v369
  %402 = vst [vmem:[#allocation2 + $0x70] sm:$0xff] %v370
  %403 = vst [vmem:[#allocation2 + $0x78] sm:$0xff] %v371
  %404 = vst [vmem:[#allocation2 + $0x80] sm:$0xff] %v372
  %405 = vst [vmem:[#allocation2 + $0x88] sm:$0xff] %v373
  %406 = vst [vmem:[#allocation2 + $0x90] sm:$0xff] %v374
  %407 = vst [vmem:[#allocation2 + $0x98] sm:$0xff] %v375
  %408 = vst [vmem:[#allocation2 + $0xa0] sm:$0xff] %v376
  %409 = vst [vmem:[#allocation2 + $0xa8] sm:$0xff] %v377
  %410 = vst [vmem:[#allocation2 + $0xb0] sm:$0xff] %v378
  %411 = vst [vmem:[#allocation2 + $0xb8] sm:$0xff] %v379
  %412 = vst [vmem:[#allocation2 + $0xc0] sm:$0xff] %v380
  %413 = vst [vmem:[#allocation2 + $0xc8] sm:$0xff] %v381
  %414 = vst [vmem:[#allocation2 + $0xd0] sm:$0xff] %v382
  %415 = vst [vmem:[#allocation2 + $0xd8] sm:$0xff] %v383
  %416 = vst [vmem:[#allocation2 + $0xe0] sm:$0xff] %v384
  %417 = vst [vmem:[#allocation2 + $0xe8] sm:$0xff] %v385
  %418 = vst [vmem:[#allocation2 + $0xf0] sm:$0xff] %v386
  %419 = vst [vmem:[#allocation2 + $0xf8] sm:$0xff] %v387
  // Predicated region
  $region18: #{unet_forward.15} parent=0 // pred_check
    %p420 = pneg %p15
  $region19: #{unet_forward.15} parent=0 // pred_check_branch
    %422 = sbr.rel (%p420) target = $region21
  $region20: #{unet_forward.15} parent=0 // pred_region
    %v423 = vld [vmem:[#allocation2] sm:$0xff]
    %v424 = vld [vmem:[#allocation2 + $0x8] sm:$0xff]
    %v425 = vld [vmem:[#allocation2 + $0x10] sm:$0xff]
    %v426 = vld [vmem:[#allocation2 + $0x18] sm:$0xff]
    %v427 = vld [vmem:[#allocation2 + $0x20] sm:$0xff]
    %v428 = vld [vmem:[#allocation2 + $0x28] sm:$0xff]
    %v429 = vld [vmem:[#allocation2 + $0x30] sm:$0xff]
    %v430 = vld [vmem:[#allocation2 + $0x38] sm:$0xff]
    %v431 = vld [vmem:[#allocation2 + $0x40] sm:$0xff]
    %v432 = vld [vmem:[#allocation2 + $0x48] sm:$0xff]
    %v433 = vld [vmem:[#allocation2 + $0x50] sm:$0xff]
    %v434 = vld [vmem:[#allocation2 + $0x58] sm:$0xff]
    %v435 = vld [vmem:[#allocation2 + $0x60] sm:$0xff]
    %v436 = vld [vmem:[#allocation2 + $0x68] sm:$0xff]
    %v437 = vld [vmem:[#allocation2 + $0x70] sm:$0xff]
    %v438 = vld [vmem:[#allocation2 + $0x78] sm:$0xff]
    %v439 = vld [vmem:[#allocation2 + $0x80] sm:$0xff]
    %v440 = vld [vmem:[#allocation2 + $0x88] sm:$0xff]
    %v441 = vld [vmem:[#allocation2 + $0x90] sm:$0xff]
    %v442 = vld [vmem:[#allocation2 + $0x98] sm:$0xff]
    %v443 = vld [vmem:[#allocation2 + $0xa0] sm:$0xff]
    %v444 = vld [vmem:[#allocation2 + $0xa8] sm:$0xff]
    %v445 = vld [vmem:[#allocation2 + $0xb0] sm:$0xff]
    %v446 = vld [vmem:[#allocation2 + $0xb8] sm:$0xff]
    %v447 = vld [vmem:[#allocation2 + $0xc0] sm:$0xff]
    %v448 = vld [vmem:[#allocation2 + $0xc8] sm:$0xff]
    %v449 = vld [vmem:[#allocation2 + $0xd0] sm:$0xff]
    %v450 = vld [vmem:[#allocation2 + $0xd8] sm:$0xff]
    %v451 = vld [vmem:[#allocation2 + $0xe0] sm:$0xff]
    %v452 = vld [vmem:[#allocation2 + $0xe8] sm:$0xff]
    %v453 = vld [vmem:[#allocation2 + $0xf0] sm:$0xff]
    %v454 = vld [vmem:[#allocation2 + $0xf8] sm:$0xff]
    %v455 = vld [vmem:[%s2] sm:$0x3]
    %v457 = vlaneseq
    %v458 = vshrl.u32 %v457, 7
    %v459 = vsub.s32 0, %v458
    %v460 = vrot.slane %v455, %v459
    %v461 = vlaneseq
    %v462 = vshrl.u32 %v461, 7
    %v463 = vsub.s32 1, %v462
    %v464 = vrot.slane %v455, %v463
    %v467 = vadd.f32 %v423, %v460
    %v468 = vadd.f32 %v424, %v464
    %v469 = vadd.f32 %v425, %v460
    %v470 = vadd.f32 %v426, %v464
    %v471 = vadd.f32 %v427, %v460
    %v472 = vadd.f32 %v428, %v464
    %v473 = vadd.f32 %v429, %v460
    %v474 = vadd.f32 %v430, %v464
    %v475 = vadd.f32 %v431, %v460
    %v476 = vadd.f32 %v432, %v464
    %v477 = vadd.f32 %v433, %v460
    %v478 = vadd.f32 %v434, %v464
    %v479 = vadd.f32 %v435, %v460
    %v480 = vadd.f32 %v436, %v464
    %v481 = vadd.f32 %v437, %v460
    %v482 = vadd.f32 %v438, %v464
    %v483 = vadd.f32 %v439, %v460
    %v484 = vadd.f32 %v440, %v464
    %v485 = vadd.f32 %v441, %v460
    %v486 = vadd.f32 %v442, %v464
    %v487 = vadd.f32 %v443, %v460
    %v488 = vadd.f32 %v444, %v464
    %v489 = vadd.f32 %v445, %v460
    %v490 = vadd.f32 %v446, %v464
    %v491 = vadd.f32 %v447, %v460
    %v492 = vadd.f32 %v448, %v464
    %v493 = vadd.f32 %v449, %v460
    %v494 = vadd.f32 %v450, %v464
    %v495 = vadd.f32 %v451, %v460
    %v496 = vadd.f32 %v452, %v464
    %v497 = vadd.f32 %v453, %v460
    %v498 = vadd.f32 %v454, %v464
    %v499 = vpack.c.bf16 %v469, %v467
    %v500 = vpack.c.bf16 %v470, %v468
    %v501 = vpack.c.bf16 %v473, %v471
    %v502 = vpack.c.bf16 %v474, %v472
    %v503 = vpack.c.bf16 %v477, %v475
    %v504 = vpack.c.bf16 %v478, %v476
    %v505 = vpack.c.bf16 %v481, %v479
    %v506 = vpack.c.bf16 %v482, %v480
    %v507 = vpack.c.bf16 %v485, %v483
    %v508 = vpack.c.bf16 %v486, %v484
    %v509 = vpack.c.bf16 %v489, %v487
    %v510 = vpack.c.bf16 %v490, %v488
    %v511 = vpack.c.bf16 %v493, %v491
    %v512 = vpack.c.bf16 %v494, %v492
    %v513 = vpack.c.bf16 %v497, %v495
    %v514 = vpack.c.bf16 %v498, %v496
    %v531 = vunpack.c.l.b16 %v499
    %v532 = vunpack.c.l.b16 %v500
    %v533 = vunpack.c.h.b16 %v499
    %v534 = vunpack.c.h.b16 %v500
    %v535 = vunpack.c.l.b16 %v501
    %v536 = vunpack.c.l.b16 %v502
    %v537 = vunpack.c.h.b16 %v501
    %v538 = vunpack.c.h.b16 %v502
    %v539 = vunpack.c.l.b16 %v503
    %v540 = vunpack.c.l.b16 %v504
    %v541 = vunpack.c.h.b16 %v503
    %v542 = vunpack.c.h.b16 %v504
    %v543 = vunpack.c.l.b16 %v505
    %v544 = vunpack.c.l.b16 %v506
    %v545 = vunpack.c.h.b16 %v505
    %v546 = vunpack.c.h.b16 %v506
    %v547 = vunpack.c.l.b16 %v507
    %v548 = vunpack.c.l.b16 %v508
    %v549 = vunpack.c.h.b16 %v507
    %v550 = vunpack.c.h.b16 %v508
    %v551 = vunpack.c.l.b16 %v509
    %v552 = vunpack.c.l.b16 %v510
    %v553 = vunpack.c.h.b16 %v509
    %v554 = vunpack.c.h.b16 %v510
    %v555 = vunpack.c.l.b16 %v511
    %v556 = vunpack.c.l.b16 %v512
    %v557 = vunpack.c.h.b16 %v511
    %v558 = vunpack.c.h.b16 %v512
    %v559 = vunpack.c.l.b16 %v513
    %v560 = vunpack.c.l.b16 %v514
    %v561 = vunpack.c.h.b16 %v513
    %v562 = vunpack.c.h.b16 %v514
    %v563 = vpack.c.b16 %v532, %v531
    %v564 = vpack.c.b16 %v534, %v533
    %v565 = vpack.c.b16 %v536, %v535
    %v566 = vpack.c.b16 %v538, %v537
    %v567 = vpack.c.b16 %v540, %v539
    %v568 = vpack.c.b16 %v542, %v541
    %v569 = vpack.c.b16 %v544, %v543
    %v570 = vpack.c.b16 %v546, %v545
    %v571 = vpack.c.b16 %v548, %v547
    %v572 = vpack.c.b16 %v550, %v549
    %v573 = vpack.c.b16 %v552, %v551
    %v574 = vpack.c.b16 %v554, %v553
    %v575 = vpack.c.b16 %v556, %v555
    %v576 = vpack.c.b16 %v558, %v557
    %v577 = vpack.c.b16 %v560, %v559
    %v578 = vpack.c.b16 %v562, %v561
    %595 = vst [vmem:[%s3] sm:$0xff] %v563
    %596 = vst [vmem:[%s3 + $0x8] sm:$0xff] %v564
    %597 = vst [vmem:[%s3 + $0x10] sm:$0xff] %v565
    %598 = vst [vmem:[%s3 + $0x18] sm:$0xff] %v566
    %599 = vst [vmem:[%s3 + $0x20] sm:$0xff] %v567
    %600 = vst [vmem:[%s3 + $0x28] sm:$0xff] %v568
    %601 = vst [vmem:[%s3 + $0x30] sm:$0xff] %v569
    %602 = vst [vmem:[%s3 + $0x38] sm:$0xff] %v570
    %603 = vst [vmem:[%s3 + $0x40] sm:$0xff] %v571
    %604 = vst [vmem:[%s3 + $0x48] sm:$0xff] %v572
    %605 = vst [vmem:[%s3 + $0x50] sm:$0xff] %v573
    %606 = vst [vmem:[%s3 + $0x58] sm:$0xff] %v574
    %607 = vst [vmem:[%s3 + $0x60] sm:$0xff] %v575
    %608 = vst [vmem:[%s3 + $0x68] sm:$0xff] %v576
    %609 = vst [vmem:[%s3 + $0x70] sm:$0xff] %v577
    %610 = vst [vmem:[%s3 + $0x78] sm:$0xff] %v578
  $region21: #{unet_forward.15} parent=0 // pred_fallthru
    _
  // Predicated region
  $region22: #{unet_forward.15} parent=0 // pred_check
    _
  $region23: #{unet_forward.15} parent=0 // pred_check_branch
    %612 = sbr.rel (0) target = $region25
  $region24: #{unet_forward.15} parent=0 // pred_region
    _
  $region25: #{unet_forward.15} parent=0 // pred_fallthru
    _
  // Predicated region
  $region26: #{unet_forward.15} parent=0 // pred_check
    _
  $region27: #{unet_forward.15} parent=0 // pred_check_branch
    %614 = sbr.rel (0) target = $region29
  $region28: #{unet_forward.15} parent=0 // pred_region
    _
  $region29: #{unet_forward.15} parent=0 // pred_fallthru
    _

// kernel: unet_forward.16
$region0: #{unet_forward.16}
  #allocation0 [shape = 'u32[]', space=smem, size = 0x4, offset = 0x4, fixed_abs, tag = 'smem constant byte address 0x4 - core index']
  #allocation1 [shape = 'u32[144,128]{1,0:T(1,128)}', space=vmem, size = 0x12000, scoped, tag = 'internal scratch']
  #allocation2 [shape = 'f32[256,128]{1,0:T(8,128)}', space=vmem, size = 0x20000, scoped, tag = 'scratch operand']
  %s0 = inlined_call_operand.vmem [shape: bf16[512,1152], index: 0, kind: input, shape index: {}]
  %s1 = inlined_call_operand.vmem [shape: bf16[1152,128], index: 1, kind: input, shape index: {}]
  %s2 = inlined_call_operand.vmem [shape: f32[1,128], index: 2, kind: input, shape index: {}]
  %s3 = inlined_call_operand.vmem [shape: bf16[512,128], index: 3, kind: output, shape index: {}]
  %s4 = sld [smem:[#allocation0]]
  $region79: #{unet_forward.16} parent=0
    _
  %s6 = ssub.s32 1, %s4
  %s7 = scalar_select 0, %s6, %s4
  $region1: #{unet_forward.16} parent=0
    #allocation3 [shape = 'u8[393216]{0}', space=vmem, size = 0x60000, scoped, tag = 'input window, operand 0']
    loop: start=0, step=1, limit=8
    $region2: #{unet_forward.16} parent=1 // loop_pre_header
      _
    $region3: #{unet_forward.16} parent=1 // loop_header
      %s9 = sphi 0, %s13
      %p10 = scmp.ge.s32.totalorder %s9, 8
      %s16 = sphi 0, %s35
      %s17 = sphi 0, %s31
      %s18 = sphi 0, %s27
      %s19 = sphi 0, %s16
      %s20 = sphi 0, %s17
      %s21 = sphi 0, %s18
      %s22 = sphi 0, %s19
      %s23 = sphi 0, %s20
      %s24 = sphi 0, %s21
      %s40 = sphi 0, %s42
      %s43 = sphi 0, %s40
      %s44 = sphi 0, %s43
      %s60 = sphi 0, %s44
      %s68 = sphi 0, %s70
      %s71 = sphi 0, %s68
      %s72 = sphi 0, %s71
      %s88 = sphi 0, %s72
      %s94 = sphi 0, %s96
      %s97 = sphi 0, %s94
      %s98 = sphi 0, %s97
      %s114 = sphi 0, %s98
      %s122 = sphi 0, %s124
      %s125 = sphi 0, %s122
      %s126 = sphi 0, %s125
      %s142 = sphi 0, %s126
    $region4: #{unet_forward.16} parent=1 // loop_header_branch
      %12 = sbr.rel (%p10) target = $region8
    $region5: #{unet_forward.16} parent=1 // loop_body
      %s14 = ssub.s32 %s9, 1
      %s15 = ssub.s32 %s9, 2
      %s25 = sadd.s32 1, %s18
      %p26 = scmp.ge.s32.totalorder %s25, 3
      %s27 = scalar_select %p26, 0, %s25
      %s28 = sadd.s32 1, %s17
      %s29 = scalar_select %p26, %s28, %s17
      %p30 = scmp.ge.s32.totalorder %s29, 1
      %s31 = scalar_select %p30, 0, %s29
      %s32 = sadd.s32 1, %s16
      %s33 = scalar_select %p30, %s32, %s16
      %p34 = scmp.ge.s32.totalorder %s33, 2
      %s35 = scalar_select %p34, 0, %s33
      %s36 = ssub.s32 %s16, %s35
      %s37 = ssub.s32 %s18, %s27
      %s38 = sor.u32 %s36, %s37
      %p39 = scmp.eq.s32.totalorder %s38, 0
      %s41 = sadd.s32 %s40, 1
      %s42 = scalar_select %p39, %s40, %s41
      %p45 = pneg %p39
      %p46 = scmp.eq.s32.totalorder %s9, 5
      %p47 = por %p45, %p46
      %p48 = scmp.ne.s32.totalorder %s40, %s43
      %p49 = scmp.eq.s32.totalorder %s9, 0
      %p50 = por %p48, %p49
      %p51 = scmp.ne.s32.totalorder %s40, %s43
      %p52 = scmp.eq.s32.totalorder %s14, 5
      %p53 = por %p51, %p52
      %p54 = scmp.ne.s32.totalorder %s43, %s44
      %p55 = scmp.eq.s32.totalorder %s14, 0
      %p56 = por %p54, %p55
      %p57 = scmp.ne.s32.totalorder %s43, %s44
      %p58 = scmp.eq.s32.totalorder %s15, 5
      %p59 = por %p57, %p58
      %p61 = scmp.ne.s32.totalorder %s44, %s60
      %p62 = scmp.eq.s32.totalorder %s15, 0
      %p63 = por %p61, %p62
      %s64 = ssub.s32 %s18, %s27
      %s65 = ssub.s32 %s17, %s31
      %s66 = sor.u32 %s64, %s65
      %p67 = scmp.eq.s32.totalorder %s66, 0
      %s69 = sadd.s32 %s68, 1
      %s70 = scalar_select %p67, %s68, %s69
      %p73 = pneg %p67
      %p74 = scmp.eq.s32.totalorder %s9, 5
      %p75 = por %p73, %p74
      %p76 = scmp.ne.s32.totalorder %s68, %s71
      %p77 = scmp.eq.s32.totalorder %s9, 0
      %p78 = por %p76, %p77
      %p79 = scmp.ne.s32.totalorder %s68, %s71
      %p80 = scmp.eq.s32.totalorder %s14, 5
      %p81 = por %p79, %p80
      %p82 = scmp.ne.s32.totalorder %s71, %s72
      %p83 = scmp.eq.s32.totalorder %s14, 0
      %p84 = por %p82, %p83
      %p85 = scmp.ne.s32.totalorder %s71, %s72
      %p86 = scmp.eq.s32.totalorder %s15, 5
      %p87 = por %p85, %p86
      %p89 = scmp.ne.s32.totalorder %s72, %s88
      %p90 = scmp.eq.s32.totalorder %s15, 0
      %p91 = por %p89, %p90
      %s92 = ssub.s32 %s17, %s31
      %p93 = scmp.eq.s32.totalorder %s92, 0
      %s95 = sadd.s32 %s94, 1
      %s96 = scalar_select %p93, %s94, %s95
      %p99 = pneg %p93
      %p100 = scmp.eq.s32.totalorder %s9, 5
      %p101 = por %p99, %p100
      %p102 = scmp.ne.s32.totalorder %s94, %s97
      %p103 = scmp.eq.s32.totalorder %s9, 0
      %p104 = por %p102, %p103
      %p105 = scmp.ne.s32.totalorder %s94, %s97
      %p106 = scmp.eq.s32.totalorder %s14, 5
      %p107 = por %p105, %p106
      %p108 = scmp.ne.s32.totalorder %s97, %s98
      %p109 = scmp.eq.s32.totalorder %s14, 0
      %p110 = por %p108, %p109
      %p111 = scmp.ne.s32.totalorder %s97, %s98
      %p112 = scmp.eq.s32.totalorder %s15, 5
      %p113 = por %p111, %p112
      %p115 = scmp.ne.s32.totalorder %s98, %s114
      %p116 = scmp.eq.s32.totalorder %s15, 0
      %p117 = por %p115, %p116
      %s118 = ssub.s32 %s16, %s35
      %s119 = ssub.s32 %s17, %s31
      %s120 = sor.u32 %s118, %s119
      %p121 = scmp.eq.s32.totalorder %s120, 0
      %s123 = sadd.s32 %s122, 1
      %s124 = scalar_select %p121, %s122, %s123
      %p127 = pneg %p121
      %p128 = scmp.eq.s32.totalorder %s9, 5
      %p129 = por %p127, %p128
      %p130 = scmp.ne.s32.totalorder %s122, %s125
      %p131 = scmp.eq.s32.totalorder %s9, 0
      %p132 = por %p130, %p131
      %p133 = scmp.ne.s32.totalorder %s122, %s125
      %p134 = scmp.eq.s32.totalorder %s14, 5
      %p135 = por %p133, %p134
      %p136 = scmp.ne.s32.totalorder %s125, %s126
      %p137 = scmp.eq.s32.totalorder %s14, 0
      %p138 = por %p136, %p137
      %p139 = scmp.ne.s32.totalorder %s125, %s126
      %p140 = scmp.eq.s32.totalorder %s15, 5
      %p141 = por %p139, %p140
      %p143 = scmp.ne.s32.totalorder %s126, %s142
      %p144 = scmp.eq.s32.totalorder %s15, 0
      %p145 = por %p143, %p144
      %p146 = scmp.le.s32.totalorder 1, %s9
      %p147 = scmp.lt.s32.totalorder %s9, 7
      %p148 = pnand %p146, %p147
      %p149 = pneg %p148
      // Predicated region
      $region9: #{unet_forward.16} parent=5 // pred_check
        _
      $region10: #{unet_forward.16} parent=5 // pred_check_branch
        %151 = sbr.rel (%p148) target = $region12
      $region11: #{unet_forward.16} parent=5 // pred_region
        %s152 = ssub.s32 %s9, 1
        // Predicated region
        $region13: #{unet_forward.16} parent=11 // pred_check
          %p153 = pneg %p110
        $region14: #{unet_forward.16} parent=11 // pred_check_branch
          %155 = sbr.rel (%p153) target = $region16
        $region15: #{unet_forward.16} parent=11 // pred_region
          %p156 = scmp.lt.s32.totalorder %s20, 0
          %s157 = scalar_select %p156, %s20, 0
          %s158 = scalar_lea.vmem %s2, %s157
        $region16: #{unet_forward.16} parent=11 // pred_fallthru
          _
      $region12: #{unet_forward.16} parent=5 // pred_fallthru
        _
      %p159 = scmp.lt.s32.totalorder %s9, 6
      // Predicated region
      $region17: #{unet_forward.16} parent=5 // pred_check
        %p160 = pneg %p159
      $region18: #{unet_forward.16} parent=5 // pred_check_branch
        %162 = sbr.rel (%p160) target = $region20
      $region19: #{unet_forward.16} parent=5 // pred_region
        // Predicated region
        $region21: #{unet_forward.16} parent=19 // pred_check
          %p163 = pneg %p50
        $region22: #{unet_forward.16} parent=19 // pred_check_branch
          %165 = sbr.rel (%p163) target = $region24
        $region23: #{unet_forward.16} parent=19 // pred_region
          %s166 = sand.u32 %s40, 1
          %s167 = sand.u32 %s40, 1
          %s168 = smul.addr %s167, 384
          %s169 = scalar_lea.vmem [#allocation3], %s168
          %s170 = smul.u32 32, %s16
          %s171 = smul.u32 3, %s18
          %s172 = smul.addr %s170, 9
          %s173 = sadd.s32 %s171, %s172
          %s174 = smul.addr %s173, 4
          %s175 = scalar_lea.vmem %s0, %s174
          // Predicated region
          $region25: #{unet_forward.16} parent=23 // pred_check
            _
          $region26: #{unet_forward.16} parent=23 // pred_check_branch
            %177 = sbr.rel (0) target = $region28
          $region27: #{unet_forward.16} parent=23 // pred_region
            // Predicated region
            $region29: #{unet_forward.16} parent=27 // pred_check
              _
            $region30: #{unet_forward.16} parent=27 // pred_check_branch
              %179 = sbr.rel (0) target = $region32
            $region31: #{unet_forward.16} parent=27 // pred_region
              %s180 = scalar_lea.vmem %s175, 8
              %s181 = scalar_lea.vmem %s169, 8 [#allocation3]
              loop: start=0, step=1, limit=1
              $region33: #{unet_forward.16} parent=31 // loop_pre_header
                _
              $region34: #{unet_forward.16} parent=31 // loop_header
                %s183 = sphi 0, %s187
                %p184 = scmp.ge.s32.totalorder %s183, 1
                %s188 = sphi %s175, %s175
                %s189 = sphi %s169, %s169
              $region35: #{unet_forward.16} parent=31 // loop_header_branch
                %186 = sbr.rel (%p184) target = $region39
              $region36: #{unet_forward.16} parent=31 // loop_body
                %v190 = vld [vmem:[%s188] sm:$0xff]
                %191 = vst [vmem:[%s189] sm:$0xff] %v190
                %v192 = vld [vmem:[%s188 + $0x24] sm:$0xff]
                %193 = vst [vmem:[%s189 + $0xc] sm:$0xff] %v192
                %v194 = vld [vmem:[%s188 + $0x48] sm:$0xff]
                %195 = vst [vmem:[%s189 + $0x18] sm:$0xff] %v194
                %v196 = vld [vmem:[%s188 + $0x6c] sm:$0xff]
                %197 = vst [vmem:[%s189 + $0x24] sm:$0xff] %v196
                %v198 = vld [vmem:[%s188 + $0x90] sm:$0xff]
                %199 = vst [vmem:[%s189 + $0x30] sm:$0xff] %v198
                %v200 = vld [vmem:[%s188 + $0xb4] sm:$0xff]
                %201 = vst [vmem:[%s189 + $0x3c] sm:$0xff] %v200
                %v202 = vld [vmem:[%s188 + $0xd8] sm:$0xff]
                %203 = vst [vmem:[%s189 + $0x48] sm:$0xff] %v202
                %v204 = vld [vmem:[%s188 + $0xfc] sm:$0xff]
                %205 = vst [vmem:[%s189 + $0x54] sm:$0xff] %v204
                %v206 = vld [vmem:[%s188 + $0x120] sm:$0xff]
                %207 = vst [vmem:[%s189 + $0x60] sm:$0xff] %v206
                %v208 = vld [vmem:[%s188 + $0x144] sm:$0xff]
                %209 = vst [vmem:[%s189 + $0x6c] sm:$0xff] %v208
                %v210 = vld [vmem:[%s188 + $0x168] sm:$0xff]
                %211 = vst [vmem:[%s189 + $0x78] sm:$0xff] %v210
                %v212 = vld [vmem:[%s188 + $0x18c] sm:$0xff]
                %213 = vst [vmem:[%s189 + $0x84] sm:$0xff] %v212
                %v214 = vld [vmem:[%s188 + $0x1b0] sm:$0xff]
                %215 = vst [vmem:[%s189 + $0x90] sm:$0xff] %v214
                %v216 = vld [vmem:[%s188 + $0x1d4] sm:$0xff]
                %217 = vst [vmem:[%s189 + $0x9c] sm:$0xff] %v216
                %v218 = vld [vmem:[%s188 + $0x1f8] sm:$0xff]
                %219 = vst [vmem:[%s189 + $0xa8] sm:$0xff] %v218
                %v220 = vld [vmem:[%s188 + $0x21c] sm:$0xff]
                %221 = vst [vmem:[%s189 + $0xb4] sm:$0xff] %v220
                %v222 = vld [vmem:[%s188 + $0x240] sm:$0xff]
                %223 = vst [vmem:[%s189 + $0xc0] sm:$0xff] %v222
                %v224 = vld [vmem:[%s188 + $0x264] sm:$0xff]
                %225 = vst [vmem:[%s189 + $0xcc] sm:$0xff] %v224
                %v226 = vld [vmem:[%s188 + $0x288] sm:$0xff]
                %227 = vst [vmem:[%s189 + $0xd8] sm:$0xff] %v226
                %v228 = vld [vmem:[%s188 + $0x2ac] sm:$0xff]
                %229 = vst [vmem:[%s189 + $0xe4] sm:$0xff] %v228
                %v230 = vld [vmem:[%s188 + $0x2d0] sm:$0xff]
                %231 = vst [vmem:[%s189 + $0xf0] sm:$0xff] %v230
                %v232 = vld [vmem:[%s188 + $0x2f4] sm:$0xff]
                %233 = vst [vmem:[%s189 + $0xfc] sm:$0xff] %v232
                %v234 = vld [vmem:[%s188 + $0x318] sm:$0xff]
                %235 = vst [vmem:[%s189 + $0x108] sm:$0xff] %v234
                %v236 = vld [vmem:[%s188 + $0x33c] sm:$0xff]
                %237 = vst [vmem:[%s189 + $0x114] sm:$0xff] %v236
                %v238 = vld [vmem:[%s188 + $0x360] sm:$0xff]
                %239 = vst [vmem:[%s189 + $0x120] sm:$0xff] %v238
                %v240 = vld [vmem:[%s188 + $0x384] sm:$0xff]
                %241 = vst [vmem:[%s189 + $0x12c] sm:$0xff] %v240
                %v242 = vld [vmem:[%s188 + $0x3a8] sm:$0xff]
                %243 = vst [vmem:[%s189 + $0x138] sm:$0xff] %v242
                %v244 = vld [vmem:[%s188 + $0x3cc] sm:$0xff]
                %245 = vst [vmem:[%s189 + $0x144] sm:$0xff] %v244
                %v246 = vld [vmem:[%s188 + $0x3f0] sm:$0xff]
                %247 = vst [vmem:[%s189 + $0x150] sm:$0xff] %v246
                %v248 = vld [vmem:[%s188 + $0x414] sm:$0xff]
                %249 = vst [vmem:[%s189 + $0x15c] sm:$0xff] %v248
                %v250 = vld [vmem:[%s188 + $0x438] sm:$0xff]
                %251 = vst [vmem:[%s189 + $0x168] sm:$0xff] %v250
                %v252 = vld [vmem:[%s188 + $0x45c] sm:$0xff]
                %253 = vst [vmem:[%s189 + $0x174] sm:$0xff] %v252
              $region37: #{unet_forward.16} parent=31 // loop_footer
                %s187 = sadd.s32 1, %s183
              $region38: #{unet_forward.16} parent=31 // loop_footer_branch
                %182 = sbr.rel target = $region34
              $region39: #{unet_forward.16} parent=31 // loop_exit
                _
              %s255 = ssub.s32 16, 1
              loop: start=0, step=1, limit=1
              $region40: #{unet_forward.16} parent=31 // loop_pre_header
                _
              $region41: #{unet_forward.16} parent=31 // loop_header
                %s257 = sphi 0, %s261
                %p258 = scmp.ge.s32.totalorder %s257, 1
                %s262 = sphi %s180, %s180
                %s263 = sphi %s181, %s181
              $region42: #{unet_forward.16} parent=31 // loop_header_branch
                %260 = sbr.rel (%p258) target = $region46
              $region43: #{unet_forward.16} parent=31 // loop_body
                %v264 = vld [vmem:[%s262] sm:%s255]
                %265 = vst [vmem:[%s263] sm:%s255] %v264
                %v266 = vld [vmem:[%s262 + $0x24] sm:%s255]
                %267 = vst [vmem:[%s263 + $0xc] sm:%s255] %v266
                %v268 = vld [vmem:[%s262 + $0x48] sm:%s255]
                %269 = vst [vmem:[%s263 + $0x18] sm:%s255] %v268
                %v270 = vld [vmem:[%s262 + $0x6c] sm:%s255]
                %271 = vst [vmem:[%s263 + $0x24] sm:%s255] %v270
                %v272 = vld [vmem:[%s262 + $0x90] sm:%s255]
                %273 = vst [vmem:[%s263 + $0x30] sm:%s255] %v272
                %v274 = vld [vmem:[%s262 + $0xb4] sm:%s255]
                %275 = vst [vmem:[%s263 + $0x3c] sm:%s255] %v274
                %v276 = vld [vmem:[%s262 + $0xd8] sm:%s255]
                %277 = vst [vmem:[%s263 + $0x48] sm:%s255] %v276
                %v278 = vld [vmem:[%s262 + $0xfc] sm:%s255]
                %279 = vst [vmem:[%s263 + $0x54] sm:%s255] %v278
                %v280 = vld [vmem:[%s262 + $0x120] sm:%s255]
                %281 = vst [vmem:[%s263 + $0x60] sm:%s255] %v280
                %v282 = vld [vmem:[%s262 + $0x144] sm:%s255]
                %283 = vst [vmem:[%s263 + $0x6c] sm:%s255] %v282
                %v284 = vld [vmem:[%s262 + $0x168] sm:%s255]
                %285 = vst [vmem:[%s263 + $0x78] sm:%s255] %v284
                %v286 = vld [vmem:[%s262 + $0x18c] sm:%s255]
                %287 = vst [vmem:[%s263 + $0x84] sm:%s255] %v286
                %v288 = vld [vmem:[%s262 + $0x1b0] sm:%s255]
                %289 = vst [vmem:[%s263 + $0x90] sm:%s255] %v288
                %v290 = vld [vmem:[%s262 + $0x1d4] sm:%s255]
                %291 = vst [vmem:[%s263 + $0x9c] sm:%s255] %v290
                %v292 = vld [vmem:[%s262 + $0x1f8] sm:%s255]
                %293 = vst [vmem:[%s263 + $0xa8] sm:%s255] %v292
                %v294 = vld [vmem:[%s262 + $0x21c] sm:%s255]
                %295 = vst [vmem:[%s263 + $0xb4] sm:%s255] %v294
                %v296 = vld [vmem:[%s262 + $0x240] sm:%s255]
                %297 = vst [vmem:[%s263 + $0xc0] sm:%s255] %v296
                %v298 = vld [vmem:[%s262 + $0x264] sm:%s255]
                %299 = vst [vmem:[%s263 + $0xcc] sm:%s255] %v298
                %v300 = vld [vmem:[%s262 + $0x288] sm:%s255]
                %301 = vst [vmem:[%s263 + $0xd8] sm:%s255] %v300
                %v302 = vld [vmem:[%s262 + $0x2ac] sm:%s255]
                %303 = vst [vmem:[%s263 + $0xe4] sm:%s255] %v302
                %v304 = vld [vmem:[%s262 + $0x2d0] sm:%s255]
                %305 = vst [vmem:[%s263 + $0xf0] sm:%s255] %v304
                %v306 = vld [vmem:[%s262 + $0x2f4] sm:%s255]
                %307 = vst [vmem:[%s263 + $0xfc] sm:%s255] %v306
                %v308 = vld [vmem:[%s262 + $0x318] sm:%s255]
                %309 = vst [vmem:[%s263 + $0x108] sm:%s255] %v308
                %v310 = vld [vmem:[%s262 + $0x33c] sm:%s255]
                %311 = vst [vmem:[%s263 + $0x114] sm:%s255] %v310
                %v312 = vld [vmem:[%s262 + $0x360] sm:%s255]
                %313 = vst [vmem:[%s263 + $0x120] sm:%s255] %v312
                %v314 = vld [vmem:[%s262 + $0x384] sm:%s255]
                %315 = vst [vmem:[%s263 + $0x12c] sm:%s255] %v314
                %v316 = vld [vmem:[%s262 + $0x3a8] sm:%s255]
                %317 = vst [vmem:[%s263 + $0x138] sm:%s255] %v316
                %v318 = vld [vmem:[%s262 + $0x3cc] sm:%s255]
                %319 = vst [vmem:[%s263 + $0x144] sm:%s255] %v318
                %v320 = vld [vmem:[%s262 + $0x3f0] sm:%s255]
                %321 = vst [vmem:[%s263 + $0x150] sm:%s255] %v320
                %v322 = vld [vmem:[%s262 + $0x414] sm:%s255]
                %323 = vst [vmem:[%s263 + $0x15c] sm:%s255] %v322
                %v324 = vld [vmem:[%s262 + $0x438] sm:%s255]
                %325 = vst [vmem:[%s263 + $0x168] sm:%s255] %v324
                %v326 = vld [vmem:[%s262 + $0x45c] sm:%s255]
                %327 = vst [vmem:[%s263 + $0x174] sm:%s255] %v326
              $region44: #{unet_forward.16} parent=31 // loop_footer
                %s261 = sadd.s32 1, %s257
              $region45: #{unet_forward.16} parent=31 // loop_footer_branch
                %256 = sbr.rel target = $region41
              $region46: #{unet_forward.16} parent=31 // loop_exit
                _
            $region32: #{unet_forward.16} parent=27 // pred_fallthru
              _
          $region28: #{unet_forward.16} parent=23 // pred_fallthru
            _
          %328 = vnop
        $region24: #{unet_forward.16} parent=19 // pred_fallthru
          _
        // Predicated region
        $region47: #{unet_forward.16} parent=19 // pred_check
          %p329 = pneg %p78
        $region48: #{unet_forward.16} parent=19 // pred_check_branch
          %331 = sbr.rel (%p329) target = $region50
        $region49: #{unet_forward.16} parent=19 // pred_region
          %s332 = smul.u32 48, %s18
          %p333 = scmp.lt.s32.totalorder %s332, 143
          %s334 = scalar_select %p333, %s332, 143
          %p335 = scmp.lt.s32.totalorder %s17, 0
          %s336 = scalar_select %p335, %s17, 0
          %s337 = sadd.s32 %s336, %s334
          %s338 = smul.addr %s337, 4
          %s339 = scalar_lea.vmem %s1, %s338
          %s340 = smul.u32 48, %s18
        $region50: #{unet_forward.16} parent=19 // pred_fallthru
          _
      $region20: #{unet_forward.16} parent=5 // pred_fallthru
        _
      %p341 = scmp.le.s32.totalorder 1, %s9
      %p342 = scmp.lt.s32.totalorder %s9, 7
      %p343 = pnand %p341, %p342
      %p344 = pneg %p343
      // Predicated region
      $region51: #{unet_forward.16} parent=5 // pred_check
        _
      $region52: #{unet_forward.16} parent=5 // pred_check_branch
        %346 = sbr.rel (%p343) target = $region54
      $region53: #{unet_forward.16} parent=5 // pred_region
        %s347 = ssub.s32 %s9, 1
        %s348 = sand.u32 %s43, 1
        %s349 = sand.u32 %s43, 1
        %s350 = smul.addr %s349, 384
        %s351 = scalar_lea.vmem [#allocation3], %s350
        // Predicated region
        $region55: #{unet_forward.16} parent=53 // pred_check
          %p352 = pneg %p56
        $region56: #{unet_forward.16} parent=53 // pred_check_branch
          %354 = sbr.rel (%p352) target = $region58
        $region57: #{unet_forward.16} parent=53 // pred_region
          _
        $region58: #{unet_forward.16} parent=53 // pred_fallthru
          _
        %s355 = sand.u32 %s43, 1
        %s356 = sand.u32 %s43, 1
        %s357 = smul.addr %s356, 384
        %s358 = scalar_lea.vmem [#allocation3], %s357
        %p359 = pneg %p56
        %p360 = pneg %p53
        %s361 = smul.u32 48, %s21
        %p362 = scmp.lt.s32.totalorder %s361, 143
        %s363 = scalar_select %p362, %s361, 143
        %p364 = scmp.lt.s32.totalorder %s20, 0
        %s365 = scalar_select %p364, %s20, 0
        %s366 = sadd.s32 %s365, %s363
        %s367 = smul.addr %s366, 4
        %s368 = scalar_lea.vmem %s1, %s367
        %p369 = pneg %p84
        %p370 = pneg %p81
        %p371 = scmp.lt.s32.totalorder %s20, 0
        %s372 = scalar_select %p371, %s20, 0
        %s373 = scalar_lea.vmem %s2, %s372
        %p374 = pneg %p110
        %p375 = pneg %p107
        %p376 = pneg %p138
        %p377 = pneg %p135
        %s378 = smul.u32 32, %s19
        %p379 = scmp.lt.s32.totalorder %s378, 63
        %s380 = scalar_select %p379, %s378, 63
        %p381 = scmp.lt.s32.totalorder %s20, 0
        %s382 = scalar_select %p381, %s20, 0
        %s383 = sadd.s32 %s382, %s380
        %s384 = smul.addr %s383, 4
        %s385 = scalar_lea.vmem %s3, %s384
        %s386 = smul.u32 32, %s19
        %s387 = smul.u32 3, %s21
        %s388 = smul.u32 48, %s21
        %p389 = scmp.lt.s32.totalorder %s388, 143
        %s390 = scalar_select %p389, %s388, 143
        %p391 = scmp.lt.s32.totalorder %s20, 0
        %s392 = scalar_select %p391, %s20, 0
        %s393 = sadd.s32 %s392, %s390
        %s394 = smul.addr %s393, 4
        %s395 = scalar_lea.vmem %s1, %s394
        %s396 = smul.u32 48, %s21
        %p397 = scmp.lt.s32.totalorder %s20, 0
        %s398 = scalar_select %p397, %s20, 0
        %s399 = scalar_lea.vmem %s2, %s398
        %s400 = smul.u32 32, %s19
        %p401 = scmp.lt.s32.totalorder %s400, 63
        %s402 = scalar_select %p401, %s400, 63
        %p403 = scmp.lt.s32.totalorder %s20, 0
        %s404 = scalar_select %p403, %s20, 0
        %s405 = sadd.s32 %s404, %s402
        %s406 = smul.addr %s405, 4
        %s407 = scalar_lea.vmem %s3, %s406
        %s408 = smul.u32 32, %s19
        %p410 = scmp.eq.s32.totalorder %s21, 0
        // Predicated region
        $region59: #{unet_forward.16} parent=53 // pred_check
          %p411 = pneg %p410
        $region60: #{unet_forward.16} parent=53 // pred_check_branch
          %413 = sbr.rel (%p411) target = $region62
        $region61: #{unet_forward.16} parent=53 // pred_region
          %414 = vst [vmem:[#allocation2] sm:$0xff] 0.0
          %415 = vst [vmem:[#allocation2 + $0x8] sm:$0xff] 0.0
          %416 = vst [vmem:[#allocation2 + $0x10] sm:$0xff] 0.0
          %417 = vst [vmem:[#allocation2 + $0x18] sm:$0xff] 0.0
          %418 = vst [vmem:[#allocation2 + $0x20] sm:$0xff] 0.0
          %419 = vst [vmem:[#allocation2 + $0x28] sm:$0xff] 0.0
          %420 = vst [vmem:[#allocation2 + $0x30] sm:$0xff] 0.0
          %421 = vst [vmem:[#allocation2 + $0x38] sm:$0xff] 0.0
          %422 = vst [vmem:[#allocation2 + $0x40] sm:$0xff] 0.0
          %423 = vst [vmem:[#allocation2 + $0x48] sm:$0xff] 0.0
          %424 = vst [vmem:[#allocation2 + $0x50] sm:$0xff] 0.0
          %425 = vst [vmem:[#allocation2 + $0x58] sm:$0xff] 0.0
          %426 = vst [vmem:[#allocation2 + $0x60] sm:$0xff] 0.0
          %427 = vst [vmem:[#allocation2 + $0x68] sm:$0xff] 0.0
          %428 = vst [vmem:[#allocation2 + $0x70] sm:$0xff] 0.0
          %429 = vst [vmem:[#allocation2 + $0x78] sm:$0xff] 0.0
          %430 = vst [vmem:[#allocation2 + $0x80] sm:$0xff] 0.0
          %431 = vst [vmem:[#allocation2 + $0x88] sm:$0xff] 0.0
          %432 = vst [vmem:[#allocation2 + $0x90] sm:$0xff] 0.0
          %433 = vst [vmem:[#allocation2 + $0x98] sm:$0xff] 0.0
          %434 = vst [vmem:[#allocation2 + $0xa0] sm:$0xff] 0.0
          %435 = vst [vmem:[#allocation2 + $0xa8] sm:$0xff] 0.0
          %436 = vst [vmem:[#allocation2 + $0xb0] sm:$0xff] 0.0
          %437 = vst [vmem:[#allocation2 + $0xb8] sm:$0xff] 0.0
          %438 = vst [vmem:[#allocation2 + $0xc0] sm:$0xff] 0.0
          %439 = vst [vmem:[#allocation2 + $0xc8] sm:$0xff] 0.0
          %440 = vst [vmem:[#allocation2 + $0xd0] sm:$0xff] 0.0
          %441 = vst [vmem:[#allocation2 + $0xd8] sm:$0xff] 0.0
          %442 = vst [vmem:[#allocation2 + $0xe0] sm:$0xff] 0.0
          %443 = vst [vmem:[#allocation2 + $0xe8] sm:$0xff] 0.0
          %444 = vst [vmem:[#allocation2 + $0xf0] sm:$0xff] 0.0
          %445 = vst [vmem:[#allocation2 + $0xf8] sm:$0xff] 0.0
        $region62: #{unet_forward.16} parent=53 // pred_fallthru
          _
        %v446 = vld [vmem:[#allocation2] sm:$0xff]
        %v447 = vld [vmem:[#allocation2 + $0x8] sm:$0xff]
        %v448 = vld [vmem:[#allocation2 + $0x10] sm:$0xff]
        %v449 = vld [vmem:[#allocation2 + $0x18] sm:$0xff]
        %v450 = vld [vmem:[#allocation2 + $0x20] sm:$0xff]
        %v451 = vld [vmem:[#allocation2 + $0x28] sm:$0xff]
        %v452 = vld [vmem:[#allocation2 + $0x30] sm:$0xff]
        %v453 = vld [vmem:[#allocation2 + $0x38] sm:$0xff]
        %v454 = vld [vmem:[#allocation2 + $0x40] sm:$0xff]
        %v455 = vld [vmem:[#allocation2 + $0x48] sm:$0xff]
        %v456 = vld [vmem:[#allocation2 + $0x50] sm:$0xff]
        %v457 = vld [vmem:[#allocation2 + $0x58] sm:$0xff]
        %v458 = vld [vmem:[#allocation2 + $0x60] sm:$0xff]
        %v459 = vld [vmem:[#allocation2 + $0x68] sm:$0xff]
        %v460 = vld [vmem:[#allocation2 + $0x70] sm:$0xff]
        %v461 = vld [vmem:[#allocation2 + $0x78] sm:$0xff]
        %v462 = vld [vmem:[#allocation2 + $0x80] sm:$0xff]
        %v463 = vld [vmem:[#allocation2 + $0x88] sm:$0xff]
        %v464 = vld [vmem:[#allocation2 + $0x90] sm:$0xff]
        %v465 = vld [vmem:[#allocation2 + $0x98] sm:$0xff]
        %v466 = vld [vmem:[#allocation2 + $0xa0] sm:$0xff]
        %v467 = vld [vmem:[#allocation2 + $0xa8] sm:$0xff]
        %v468 = vld [vmem:[#allocation2 + $0xb0] sm:$0xff]
        %v469 = vld [vmem:[#allocation2 + $0xb8] sm:$0xff]
        %v470 = vld [vmem:[#allocation2 + $0xc0] sm:$0xff]
        %v471 = vld [vmem:[#allocation2 + $0xc8] sm:$0xff]
        %v472 = vld [vmem:[#allocation2 + $0xd0] sm:$0xff]
        %v473 = vld [vmem:[#allocation2 + $0xd8] sm:$0xff]
        %v474 = vld [vmem:[#allocation2 + $0xe0] sm:$0xff]
        %v475 = vld [vmem:[#allocation2 + $0xe8] sm:$0xff]
        %v476 = vld [vmem:[#allocation2 + $0xf0] sm:$0xff]
        %v477 = vld [vmem:[#allocation2 + $0xf8] sm:$0xff]
        %v478 = vld [vmem:[%s351] sm:$0xff]
        %v479 = vld [vmem:[%s351 + $0x8] sm:$0xf]
        %v480 = vld [vmem:[%s351 + $0xc] sm:$0xff]
        %v481 = vld [vmem:[%s351 + $0x14] sm:$0xf]
        %v482 = vld [vmem:[%s351 + $0x18] sm:$0xff]
        %v483 = vld [vmem:[%s351 + $0x20] sm:$0xf]
        %v484 = vld [vmem:[%s351 + $0x24] sm:$0xff]
        %v485 = vld [vmem:[%s351 + $0x2c] sm:$0xf]
        %v486 = vld [vmem:[%s351 + $0x30] sm:$0xff]
        %v487 = vld [vmem:[%s351 + $0x38] sm:$0xf]
        %v488 = vld [vmem:[%s351 + $0x3c] sm:$0xff]
        %v489 = vld [vmem:[%s351 + $0x44] sm:$0xf]
        %v490 = vld [vmem:[%s351 + $0x48] sm:$0xff]
        %v491 = vld [vmem:[%s351 + $0x50] sm:$0xf]
        %v492 = vld [vmem:[%s351 + $0x54] sm:$0xff]
        %v493 = vld [vmem:[%s351 + $0x5c] sm:$0xf]
        %v494 = vld [vmem:[%s351 + $0x60] sm:$0xff]
        %v495 = vld [vmem:[%s351 + $0x68] sm:$0xf]
        %v496 = vld [vmem:[%s351 + $0x6c] sm:$0xff]
        %v497 = vld [vmem:[%s351 + $0x74] sm:$0xf]
        %v498 = vld [vmem:[%s351 + $0x78] sm:$0xff]
        %v499 = vld [vmem:[%s351 + $0x80] sm:$0xf]
        %v500 = vld [vmem:[%s351 + $0x84] sm:$0xff]
        %v501 = vld [vmem:[%s351 + $0x8c] sm:$0xf]
        %v502 = vld [vmem:[%s351 + $0x90] sm:$0xff]
        %v503 = vld [vmem:[%s351 + $0x98] sm:$0xf]
        %v504 = vld [vmem:[%s351 + $0x9c] sm:$0xff]
        %v505 = vld [vmem:[%s351 + $0xa4] sm:$0xf]
        %v506 = vld [vmem:[%s351 + $0xa8] sm:$0xff]
        %v507 = vld [vmem:[%s351 + $0xb0] sm:$0xf]
        %v508 = vld [vmem:[%s351 + $0xb4] sm:$0xff]
        %v509 = vld [vmem:[%s351 + $0xbc] sm:$0xf]
        %v510 = vld [vmem:[%s351 + $0xc0] sm:$0xff]
        %v511 = vld [vmem:[%s351 + $0xc8] sm:$0xf]
        %v512 = vld [vmem:[%s351 + $0xcc] sm:$0xff]
        %v513 = vld [vmem:[%s351 + $0xd4] sm:$0xf]
        %v514 = vld [vmem:[%s351 + $0xd8] sm:$0xff]
        %v515 = vld [vmem:[%s351 + $0xe0] sm:$0xf]
        %v516 = vld [vmem:[%s351 + $0xe4] sm:$0xff]
        %v517 = vld [vmem:[%s351 + $0xec] sm:$0xf]
        %v518 = vld [vmem:[%s351 + $0xf0] sm:$0xff]
        %v519 = vld [vmem:[%s351 + $0xf8] sm:$0xf]
        %v520 = vld [vmem:[%s351 + $0xfc] sm:$0xff]
        %v521 = vld [vmem:[%s351 + $0x104] sm:$0xf]
        %v522 = vld [vmem:[%s351 + $0x108] sm:$0xff]
        %v523 = vld [vmem:[%s351 + $0x110] sm:$0xf]
        %v524 = vld [vmem:[%s351 + $0x114] sm:$0xff]
        %v525 = vld [vmem:[%s351 + $0x11c] sm:$0xf]
        %v526 = vld [vmem:[%s351 + $0x120] sm:$0xff]
        %v527 = vld [vmem:[%s351 + $0x128] sm:$0xf]
        %v528 = vld [vmem:[%s351 + $0x12c] sm:$0xff]
        %v529 = vld [vmem:[%s351 + $0x134] sm:$0xf]
        %v530 = vld [vmem:[%s351 + $0x138] sm:$0xff]
        %v531 = vld [vmem:[%s351 + $0x140] sm:$0xf]
        %v532 = vld [vmem:[%s351 + $0x144] sm:$0xff]
        %v533 = vld [vmem:[%s351 + $0x14c] sm:$0xf]
        %v534 = vld [vmem:[%s351 + $0x150] sm:$0xff]
        %v535 = vld [vmem:[%s351 + $0x158] sm:$0xf]
        %v536 = vld [vmem:[%s351 + $0x15c] sm:$0xff]
        %v537 = vld [vmem:[%s351 + $0x164] sm:$0xf]
        %v538 = vld [vmem:[%s351 + $0x168] sm:$0xff]
        %v539 = vld [vmem:[%s351 + $0x170] sm:$0xf]
        %v540 = vld [vmem:[%s351 + $0x174] sm:$0xff]
        %v541 = vld [vmem:[%s351 + $0x17c] sm:$0xf]
        %v542 = vld [vmem:[%s395] sm:$0xf]
        %v543 = vld [vmem:[%s395 + $0x4] sm:$0xf]
        %v544 = vld [vmem:[%s395 + $0x8] sm:$0xf]
        %v545 = vld [vmem:[%s395 + $0xc] sm:$0xf]
        %v546 = vld [vmem:[%s395 + $0x10] sm:$0xf]
        %v547 = vld [vmem:[%s395 + $0x14] sm:$0xf]
        %v548 = vld [vmem:[%s395 + $0x18] sm:$0xf]
        %v549 = vld [vmem:[%s395 + $0x1c] sm:$0xf]
        %v550 = vld [vmem:[%s395 + $0x20] sm:$0xf]
        %v551 = vld [vmem:[%s395 + $0x24] sm:$0xf]
        %v552 = vld [vmem:[%s395 + $0x28] sm:$0xf]
        %v553 = vld [vmem:[%s395 + $0x2c] sm:$0xf]
        %v554 = vld [vmem:[%s395 + $0x30] sm:$0xf]
        %v555 = vld [vmem:[%s395 + $0x34] sm:$0xf]
        %v556 = vld [vmem:[%s395 + $0x38] sm:$0xf]
        %v557 = vld [vmem:[%s395 + $0x3c] sm:$0xf]
        %v558 = vld [vmem:[%s395 + $0x40] sm:$0xf]
        %v559 = vld [vmem:[%s395 + $0x44] sm:$0xf]
        %v560 = vld [vmem:[%s395 + $0x48] sm:$0xf]
        %v561 = vld [vmem:[%s395 + $0x4c] sm:$0xf]
        %v562 = vld [vmem:[%s395 + $0x50] sm:$0xf]
        %v563 = vld [vmem:[%s395 + $0x54] sm:$0xf]
        %v564 = vld [vmem:[%s395 + $0x58] sm:$0xf]
        %v565 = vld [vmem:[%s395 + $0x5c] sm:$0xf]
        %v566 = vld [vmem:[%s395 + $0x60] sm:$0xf]
        %v567 = vld [vmem:[%s395 + $0x64] sm:$0xf]
        %v568 = vld [vmem:[%s395 + $0x68] sm:$0xf]
        %v569 = vld [vmem:[%s395 + $0x6c] sm:$0xf]
        %v570 = vld [vmem:[%s395 + $0x70] sm:$0xf]
        %v571 = vld [vmem:[%s395 + $0x74] sm:$0xf]
        %v572 = vld [vmem:[%s395 + $0x78] sm:$0xf]
        %v573 = vld [vmem:[%s395 + $0x7c] sm:$0xf]
        %v574 = vld [vmem:[%s395 + $0x80] sm:$0xf]
        %v575 = vld [vmem:[%s395 + $0x84] sm:$0xf]
        %v576 = vld [vmem:[%s395 + $0x88] sm:$0xf]
        %v577 = vld [vmem:[%s395 + $0x8c] sm:$0xf]
        %v578 = vld [vmem:[%s395 + $0x90] sm:$0xf]
        %v579 = vld [vmem:[%s395 + $0x94] sm:$0xf]
        %v580 = vld [vmem:[%s395 + $0x98] sm:$0xf]
        %v581 = vld [vmem:[%s395 + $0x9c] sm:$0xf]
        %v582 = vld [vmem:[%s395 + $0xa0] sm:$0xf]
        %v583 = vld [vmem:[%s395 + $0xa4] sm:$0xf]
        %v584 = vld [vmem:[%s395 + $0xa8] sm:$0xf]
        %v585 = vld [vmem:[%s395 + $0xac] sm:$0xf]
        %v586 = vld [vmem:[%s395 + $0xb0] sm:$0xf]
        %v587 = vld [vmem:[%s395 + $0xb4] sm:$0xf]
        %v588 = vld [vmem:[%s395 + $0xb8] sm:$0xf]
        %v589 = vld [vmem:[%s395 + $0xbc] sm:$0xf]
        %v654 = vunpack.c.l.b16 %v478
        %v655 = vunpack.c.h.b16 %v478
        %v656 = vunpack.c.l.b16 %v479
        %v657 = vunpack.c.l.b16 %v480
        %v658 = vunpack.c.h.b16 %v480
        %v659 = vunpack.c.l.b16 %v481
        %v660 = vunpack.c.l.b16 %v482
        %v661 = vunpack.c.h.b16 %v482
        %v662 = vunpack.c.l.b16 %v483
        %v663 = vunpack.c.l.b16 %v484
        %v664 = vunpack.c.h.b16 %v484
        %v665 = vunpack.c.l.b16 %v485
        %v666 = vunpack.c.l.b16 %v486
        %v667 = vunpack.c.h.b16 %v486
        %v668 = vunpack.c.l.b16 %v487
        %v669 = vunpack.c.l.b16 %v488
        %v670 = vunpack.c.h.b16 %v488
        %v671 = vunpack.c.l.b16 %v489
        %v672 = vunpack.c.l.b16 %v490
        %v673 = vunpack.c.h.b16 %v490
        %v674 = vunpack.c.l.b16 %v491
        %v675 = vunpack.c.l.b16 %v492
        %v676 = vunpack.c.h.b16 %v492
        %v677 = vunpack.c.l.b16 %v493
        %v678 = vunpack.c.l.b16 %v494
        %v679 = vunpack.c.h.b16 %v494
        %v680 = vunpack.c.l.b16 %v495
        %v681 = vunpack.c.l.b16 %v496
        %v682 = vunpack.c.h.b16 %v496
        %v683 = vunpack.c.l.b16 %v497
        %v684 = vunpack.c.l.b16 %v498
        %v685 = vunpack.c.h.b16 %v498
        %v686 = vunpack.c.l.b16 %v499
        %v687 = vunpack.c.l.b16 %v500
        %v688 = vunpack.c.h.b16 %v500
        %v689 = vunpack.c.l.b16 %v501
        %v690 = vunpack.c.l.b16 %v502
        %v691 = vunpack.c.h.b16 %v502
        %v692 = vunpack.c.l.b16 %v503
        %v693 = vunpack.c.l.b16 %v504
        %v694 = vunpack.c.h.b16 %v504
        %v695 = vunpack.c.l.b16 %v505
        %v696 = vunpack.c.l.b16 %v506
        %v697 = vunpack.c.h.b16 %v506
        %v698 = vunpack.c.l.b16 %v507
        %v699 = vunpack.c.l.b16 %v508
        %v700 = vunpack.c.h.b16 %v508
        %v701 = vunpack.c.l.b16 %v509
        %v702 = vunpack.c.l.b16 %v510
        %v703 = vunpack.c.h.b16 %v510
        %v704 = vunpack.c.l.b16 %v511
        %v705 = vunpack.c.l.b16 %v512
        %v706 = vunpack.c.h.b16 %v512
        %v707 = vunpack.c.l.b16 %v513
        %v708 = vunpack.c.l.b16 %v514
        %v709 = vunpack.c.h.b16 %v514
        %v710 = vunpack.c.l.b16 %v515
        %v711 = vunpack.c.l.b16 %v516
        %v712 = vunpack.c.h.b16 %v516
        %v713 = vunpack.c.l.b16 %v517
        %v714 = vunpack.c.l.b16 %v518
        %v715 = vunpack.c.h.b16 %v518
        %v716 = vunpack.c.l.b16 %v519
        %v717 = vunpack.c.l.b16 %v520
        %v718 = vunpack.c.h.b16 %v520
        %v719 = vunpack.c.l.b16 %v521
        %v720 = vunpack.c.l.b16 %v522
        %v721 = vunpack.c.h.b16 %v522
        %v722 = vunpack.c.l.b16 %v523
        %v723 = vunpack.c.l.b16 %v524
        %v724 = vunpack.c.h.b16 %v524
        %v725 = vunpack.c.l.b16 %v525
        %v726 = vunpack.c.l.b16 %v526
        %v727 = vunpack.c.h.b16 %v526
        %v728 = vunpack.c.l.b16 %v527
        %v729 = vunpack.c.l.b16 %v528
        %v730 = vunpack.c.h.b16 %v528
        %v731 = vunpack.c.l.b16 %v529
        %v732 = vunpack.c.l.b16 %v530
        %v733 = vunpack.c.h.b16 %v530
        %v734 = vunpack.c.l.b16 %v531
        %v735 = vunpack.c.l.b16 %v532
        %v736 = vunpack.c.h.b16 %v532
        %v737 = vunpack.c.l.b16 %v533
        %v738 = vunpack.c.l.b16 %v534
        %v739 = vunpack.c.h.b16 %v534
        %v740 = vunpack.c.l.b16 %v535
        %v741 = vunpack.c.l.b16 %v536
        %v742 = vunpack.c.h.b16 %v536
        %v743 = vunpack.c.l.b16 %v537
        %v744 = vunpack.c.l.b16 %v538
        %v745 = vunpack.c.h.b16 %v538
        %v746 = vunpack.c.l.b16 %v539
        %v747 = vunpack.c.l.b16 %v540
        %v748 = vunpack.c.h.b16 %v540
        %v749 = vunpack.c.l.b16 %v541
        %v750 = vpack.c.b16 %v657, %v654
        %v751 = vpack.c.b16 %v658, %v655
        %v752 = vpack.c.b16 %v659, %v656
        %v753 = vpack.c.b16 %v663, %v660
        %v754 = vpack.c.b16 %v664, %v661
        %v755 = vpack.c.b16 %v665, %v662
        %v756 = vpack.c.b16 %v669, %v666
        %v757 = vpack.c.b16 %v670, %v667
        %v758 = vpack.c.b16 %v671, %v668
        %v759 = vpack.c.b16 %v675, %v672
        %v760 = vpack.c.b16 %v676, %v673
        %v761 = vpack.c.b16 %v677, %v674
        %v762 = vpack.c.b16 %v681, %v678
        %v763 = vpack.c.b16 %v682, %v679
        %v764 = vpack.c.b16 %v683, %v680
        %v765 = vpack.c.b16 %v687, %v684
        %v766 = vpack.c.b16 %v688, %v685
        %v767 = vpack.c.b16 %v689, %v686
        %v768 = vpack.c.b16 %v693, %v690
        %v769 = vpack.c.b16 %v694, %v691
        %v770 = vpack.c.b16 %v695, %v692
        %v771 = vpack.c.b16 %v699, %v696
        %v772 = vpack.c.b16 %v700, %v697
        %v773 = vpack.c.b16 %v701, %v698
        %v774 = vpack.c.b16 %v705, %v702
        %v775 = vpack.c.b16 %v706, %v703
        %v776 = vpack.c.b16 %v707, %v704
        %v777 = vpack.c.b16 %v711, %v708
        %v778 = vpack.c.b16 %v712, %v709
        %v779 = vpack.c.b16 %v713, %v710
        %v780 = vpack.c.b16 %v717, %v714
        %v781 = vpack.c.b16 %v718, %v715
        %v782 = vpack.c.b16 %v719, %v716
        %v783 = vpack.c.b16 %v723, %v720
        %v784 = vpack.c.b16 %v724, %v721
        %v785 = vpack.c.b16 %v725, %v722
        %v786 = vpack.c.b16 %v729, %v726
        %v787 = vpack.c.b16 %v730, %v727
        %v788 = vpack.c.b16 %v731, %v728
        %v789 = vpack.c.b16 %v735, %v732
        %v790 = vpack.c.b16 %v736, %v733
        %v791 = vpack.c.b16 %v737, %v734
        %v792 = vpack.c.b16 %v741, %v738
        %v793 = vpack.c.b16 %v742, %v739
        %v794 = vpack.c.b16 %v743, %v740
        %v795 = vpack.c.b16 %v747, %v744
        %v796 = vpack.c.b16 %v748, %v745
        %v797 = vpack.c.b16 %v749, %v746
        %v894 = vunpack.c.l.b16 %v542
        %v895 = vunpack.c.l.b16 %v543
        %v896 = vunpack.c.l.b16 %v544
        %v897 = vunpack.c.l.b16 %v545
        %v898 = vunpack.c.l.b16 %v546
        %v899 = vunpack.c.l.b16 %v547
        %v900 = vunpack.c.l.b16 %v548
        %v901 = vunpack.c.l.b16 %v549
        %v902 = vunpack.c.l.b16 %v550
        %v903 = vunpack.c.l.b16 %v551
        %v904 = vunpack.c.l.b16 %v552
        %v905 = vunpack.c.l.b16 %v553
        %v906 = vunpack.c.l.b16 %v554
        %v907 = vunpack.c.l.b16 %v555
        %v908 = vunpack.c.l.b16 %v556
        %v909 = vunpack.c.l.b16 %v557
        %v910 = vunpack.c.l.b16 %v558
        %v911 = vunpack.c.l.b16 %v559
        %v912 = vunpack.c.l.b16 %v560
        %v913 = vunpack.c.l.b16 %v561
        %v914 = vunpack.c.l.b16 %v562
        %v915 = vunpack.c.l.b16 %v563
        %v916 = vunpack.c.l.b16 %v564
        %v917 = vunpack.c.l.b16 %v565
        %v918 = vunpack.c.l.b16 %v566
        %v919 = vunpack.c.l.b16 %v567
        %v920 = vunpack.c.l.b16 %v568
        %v921 = vunpack.c.l.b16 %v569
        %v922 = vunpack.c.l.b16 %v570
        %v923 = vunpack.c.l.b16 %v571
        %v924 = vunpack.c.l.b16 %v572
        %v925 = vunpack.c.l.b16 %v573
        %v926 = vunpack.c.l.b16 %v574
        %v927 = vunpack.c.l.b16 %v575
        %v928 = vunpack.c.l.b16 %v576
        %v929 = vunpack.c.l.b16 %v577
        %v930 = vunpack.c.l.b16 %v578
        %v931 = vunpack.c.l.b16 %v579
        %v932 = vunpack.c.l.b16 %v580
        %v933 = vunpack.c.l.b16 %v581
        %v934 = vunpack.c.l.b16 %v582
        %v935 = vunpack.c.l.b16 %v583
        %v936 = vunpack.c.l.b16 %v584
        %v937 = vunpack.c.l.b16 %v585
        %v938 = vunpack.c.l.b16 %v586
        %v939 = vunpack.c.l.b16 %v587
        %v940 = vunpack.c.l.b16 %v588
        %v941 = vunpack.c.l.b16 %v589
        %v942 = vpack.c.b16 %v895, %v894
        %v943 = vpack.c.b16 %v897, %v896
        %v944 = vpack.c.b16 %v899, %v898
        %v945 = vpack.c.b16 %v901, %v900
        %v946 = vpack.c.b16 %v903, %v902
        %v947 = vpack.c.b16 %v905, %v904
        %v948 = vpack.c.b16 %v907, %v906
        %v949 = vpack.c.b16 %v909, %v908
        %v950 = vpack.c.b16 %v911, %v910
        %v951 = vpack.c.b16 %v913, %v912
        %v952 = vpack.c.b16 %v915, %v914
        %v953 = vpack.c.b16 %v917, %v916
        %v954 = vpack.c.b16 %v919, %v918
        %v955 = vpack.c.b16 %v921, %v920
        %v956 = vpack.c.b16 %v923, %v922
        %v957 = vpack.c.b16 %v925, %v924
        %v958 = vpack.c.b16 %v927, %v926
        %v959 = vpack.c.b16 %v929, %v928
        %v960 = vpack.c.b16 %v931, %v930
        %v961 = vpack.c.b16 %v933, %v932
        %v962 = vpack.c.b16 %v935, %v934
        %v963 = vpack.c.b16 %v937, %v936
        %v964 = vpack.c.b16 %v939, %v938
        %v965 = vpack.c.b16 %v941, %v940
        %990 = vmatprep.subr.bf16.mxu0 0
        %991 = vmatpush1.bf16.msra.mxu0 %v949
        %992 = vmatprep.subr.bf16.mxu0 0
        %993 = vmatpush1.bf16.msra.mxu0 %v948
        %994 = vmatprep.subr.bf16.mxu0 0
        %995 = vmatpush1.bf16.msra.mxu0 %v947
        %996 = vmatprep.subr.bf16.mxu0 0
        %997 = vmatpush1.bf16.msra.mxu0 %v946
        %998 = vmatprep.subr.bf16.mxu0 0
        %999 = vmatpush1.bf16.msra.mxu0 %v945
        %1000 = vmatprep.subr.bf16.mxu0 0
        %1001 = vmatpush1.bf16.msra.mxu0 %v944
        %1002 = vmatprep.subr.bf16.mxu0 0
        %1003 = vmatpush1.bf16.msra.mxu0 %v943
        %1004 = vmatprep.subr.bf16.mxu0 0
        %1005 = vmatpush1.bf16.msra.mxu0 %v942
        %1006 = vmatprep.subr.bf16.mxu0 0
        %1007 = vmatpush2.bf16.msra.mxu0 %v957
        %1008 = vmatprep.subr.bf16.mxu0 0
        %1009 = vmatpush2.bf16.msra.mxu0 %v956
        %1010 = vmatprep.subr.bf16.mxu0 0
        %1011 = vmatpush2.bf16.msra.mxu0 %v955
        %1012 = vmatprep.subr.bf16.mxu0 0
        %1013 = vmatpush2.bf16.msra.mxu0 %v954
        %1014 = vmatprep.subr.bf16.mxu0 0
        %1015 = vmatpush2.bf16.msra.mxu0 %v953
        %1016 = vmatprep.subr.bf16.mxu0 0
        %1017 = vmatpush2.bf16.msra.mxu0 %v952
        %1018 = vmatprep.subr.bf16.mxu0 0
        %1019 = vmatpush2.bf16.msra.mxu0 %v951
        %1020 = vmatprep.subr.bf16.mxu0 0
        %1021 = vmatpush2.bf16.msra.mxu0 %v950
        %1022 = vmatprep.mubr.bf16.mxu0 %v751
        %1023 = vmatmul.mubr.bf16.gmra.mxu0 %v750
        %v1024 = vpop.f32.mrf.mxu0
        %v1025 = vadd.f32 0.0, %v1024
        %v1026 = vpop.f32.mrf.mxu0
        %v1027 = vpop.f32.mrf.mxu0
        %v1028 = vadd.f32 0.0, %v1027
        %v1029 = vpop.f32.mrf.mxu0
        %1030 = vmatprep.mubr.bf16.mxu0 %v754
        %1031 = vmatmul.mubr.bf16.gmra.mxu0 %v753
        %v1032 = vpop.f32.mrf.mxu0
        %v1033 = vadd.f32 0.0, %v1032
        %v1034 = vpop.f32.mrf.mxu0
        %v1035 = vpop.f32.mrf.mxu0
        %v1036 = vadd.f32 0.0, %v1035
        %v1037 = vpop.f32.mrf.mxu0
        %1038 = vmatprep.mubr.bf16.mxu0 %v757
        %1039 = vmatmul.mubr.bf16.gmra.mxu0 %v756
        %v1040 = vpop.f32.mrf.mxu0
        %v1041 = vadd.f32 0.0, %v1040
        %v1042 = vpop.f32.mrf.mxu0
        %v1043 = vpop.f32.mrf.mxu0
        %v1044 = vadd.f32 0.0, %v1043
        %v1045 = vpop.f32.mrf.mxu0
        %1046 = vmatprep.mubr.bf16.mxu0 %v760
        %1047 = vmatmul.mubr.bf16.gmra.mxu0 %v759
        %v1048 = vpop.f32.mrf.mxu0
        %v1049 = vadd.f32 0.0, %v1048
        %v1050 = vpop.f32.mrf.mxu0
        %v1051 = vpop.f32.mrf.mxu0
        %v1052 = vadd.f32 0.0, %v1051
        %v1053 = vpop.f32.mrf.mxu0
        %1054 = vmatprep.mubr.bf16.mxu0 %v763
        %1055 = vmatmul.mubr.bf16.gmra.mxu0 %v762
        %v1056 = vpop.f32.mrf.mxu0
        %v1057 = vadd.f32 0.0, %v1056
        %v1058 = vpop.f32.mrf.mxu0
        %v1059 = vpop.f32.mrf.mxu0
        %v1060 = vadd.f32 0.0, %v1059
        %v1061 = vpop.f32.mrf.mxu0
        %1062 = vmatprep.mubr.bf16.mxu0 %v766
        %1063 = vmatmul.mubr.bf16.gmra.mxu0 %v765
        %v1064 = vpop.f32.mrf.mxu0
        %v1065 = vadd.f32 0.0, %v1064
        %v1066 = vpop.f32.mrf.mxu0
        %v1067 = vpop.f32.mrf.mxu0
        %v1068 = vadd.f32 0.0, %v1067
        %v1069 = vpop.f32.mrf.mxu0
        %1070 = vmatprep.mubr.bf16.mxu0 %v769
        %1071 = vmatmul.mubr.bf16.gmra.mxu0 %v768
        %v1072 = vpop.f32.mrf.mxu0
        %v1073 = vadd.f32 0.0, %v1072
        %v1074 = vpop.f32.mrf.mxu0
        %v1075 = vpop.f32.mrf.mxu0
        %v1076 = vadd.f32 0.0, %v1075
        %v1077 = vpop.f32.mrf.mxu0
        %1078 = vmatprep.mubr.bf16.mxu0 %v772
        %1079 = vmatmul.mubr.bf16.gmra.mxu0 %v771
        %v1080 = vpop.f32.mrf.mxu0
        %v1081 = vadd.f32 0.0, %v1080
        %v1082 = vpop.f32.mrf.mxu0
        %v1083 = vpop.f32.mrf.mxu0
        %v1084 = vadd.f32 0.0, %v1083
        %v1085 = vpop.f32.mrf.mxu0
        %1086 = vmatprep.mubr.bf16.mxu0 %v775
        %1087 = vmatmul.mubr.bf16.gmra.mxu0 %v774
        %v1088 = vpop.f32.mrf.mxu0
        %v1089 = vadd.f32 0.0, %v1088
        %v1090 = vpop.f32.mrf.mxu0
        %v1091 = vpop.f32.mrf.mxu0
        %v1092 = vadd.f32 0.0, %v1091
        %v1093 = vpop.f32.mrf.mxu0
        %1094 = vmatprep.mubr.bf16.mxu0 %v778
        %1095 = vmatmul.mubr.bf16.gmra.mxu0 %v777
        %v1096 = vpop.f32.mrf.mxu0
        %v1097 = vadd.f32 0.0, %v1096
        %v1098 = vpop.f32.mrf.mxu0
        %v1099 = vpop.f32.mrf.mxu0
        %v1100 = vadd.f32 0.0, %v1099
        %v1101 = vpop.f32.mrf.mxu0
        %1102 = vmatprep.mubr.bf16.mxu0 %v781
        %1103 = vmatmul.mubr.bf16.gmra.mxu0 %v780
        %v1104 = vpop.f32.mrf.mxu0
        %v1105 = vadd.f32 0.0, %v1104
        %v1106 = vpop.f32.mrf.mxu0
        %v1107 = vpop.f32.mrf.mxu0
        %v1108 = vadd.f32 0.0, %v1107
        %v1109 = vpop.f32.mrf.mxu0
        %1110 = vmatprep.mubr.bf16.mxu0 %v784
        %1111 = vmatmul.mubr.bf16.gmra.mxu0 %v783
        %v1112 = vpop.f32.mrf.mxu0
        %v1113 = vadd.f32 0.0, %v1112
        %v1114 = vpop.f32.mrf.mxu0
        %v1115 = vpop.f32.mrf.mxu0
        %v1116 = vadd.f32 0.0, %v1115
        %v1117 = vpop.f32.mrf.mxu0
        %1118 = vmatprep.mubr.bf16.mxu0 %v787
        %1119 = vmatmul.mubr.bf16.gmra.mxu0 %v786
        %v1120 = vpop.f32.mrf.mxu0
        %v1121 = vadd.f32 0.0, %v1120
        %v1122 = vpop.f32.mrf.mxu0
        %v1123 = vpop.f32.mrf.mxu0
        %v1124 = vadd.f32 0.0, %v1123
        %v1125 = vpop.f32.mrf.mxu0
        %1126 = vmatprep.mubr.bf16.mxu0 %v790
        %1127 = vmatmul.mubr.bf16.gmra.mxu0 %v789
        %v1128 = vpop.f32.mrf.mxu0
        %v1129 = vadd.f32 0.0, %v1128
        %v1130 = vpop.f32.mrf.mxu0
        %v1131 = vpop.f32.mrf.mxu0
        %v1132 = vadd.f32 0.0, %v1131
        %v1133 = vpop.f32.mrf.mxu0
        %1134 = vmatprep.mubr.bf16.mxu0 %v793
        %1135 = vmatmul.mubr.bf16.gmra.mxu0 %v792
        %v1136 = vpop.f32.mrf.mxu0
        %v1137 = vadd.f32 0.0, %v1136
        %v1138 = vpop.f32.mrf.mxu0
        %v1139 = vpop.f32.mrf.mxu0
        %v1140 = vadd.f32 0.0, %v1139
        %v1141 = vpop.f32.mrf.mxu0
        %1142 = vmatprep.mubr.bf16.mxu0 %v796
        %1143 = vmatmul.mubr.bf16.gmra.mxu0 %v795
        %v1144 = vpop.f32.mrf.mxu0
        %v1145 = vadd.f32 0.0, %v1144
        %v1146 = vpop.f32.mrf.mxu0
        %v1147 = vpop.f32.mrf.mxu0
        %v1148 = vadd.f32 0.0, %v1147
        %v1149 = vpop.f32.mrf.mxu0
        %1150 = vdwg.mxu0
        %1151 = vmatprep.subr.bf16.mxu0 0
        %1152 = vmatpush1.bf16.msra.mxu0 %v965
        %1153 = vmatprep.subr.bf16.mxu0 0
        %1154 = vmatpush1.bf16.msra.mxu0 %v964
        %1155 = vmatprep.subr.bf16.mxu0 0
        %1156 = vmatpush1.bf16.msra.mxu0 %v963
        %1157 = vmatprep.subr.bf16.mxu0 0
        %1158 = vmatpush1.bf16.msra.mxu0 %v962
        %1159 = vmatprep.subr.bf16.mxu0 0
        %1160 = vmatpush1.bf16.msra.mxu0 %v961
        %1161 = vmatprep.subr.bf16.mxu0 0
        %1162 = vmatpush1.bf16.msra.mxu0 %v960
        %1163 = vmatprep.subr.bf16.mxu0 0
        %1164 = vmatpush1.bf16.msra.mxu0 %v959
        %1165 = vmatprep.subr.bf16.mxu0 0
        %1166 = vmatpush1.bf16.msra.mxu0 %v958
        %1167 = vmatprep.subr.bf16.mxu0 0
        %1168 = vmatpush2.bf16.msra.mxu0 0
        %1169 = vmatprep.subr.bf16.mxu0 0
        %1170 = vmatpush2.bf16.msra.mxu0 0
        %1171 = vmatprep.subr.bf16.mxu0 0
        %1172 = vmatpush2.bf16.msra.mxu0 0
        %1173 = vmatprep.subr.bf16.mxu0 0
        %1174 = vmatpush2.bf16.msra.mxu0 0
        %1175 = vmatprep.subr.bf16.mxu0 0
        %1176 = vmatpush2.bf16.msra.mxu0 0
        %1177 = vmatprep.subr.bf16.mxu0 0
        %1178 = vmatpush2.bf16.msra.mxu0 0
        %1179 = vmatprep.subr.bf16.mxu0 0
        %1180 = vmatpush2.bf16.msra.mxu0 0
        %1181 = vmatprep.subr.bf16.mxu0 0
        %1182 = vmatpush2.bf16.msra.mxu0 0
        %1183 = vmatprep.mubr.bf16.mxu0 0
        %1184 = vmatmul.mubr.bf16.gmra.mxu0 %v752
        %v1185 = vpop.f32.mrf.mxu0
        %v1186 = vadd.f32 %v1025, %v1185
        %v1187 = vpop.f32.mrf.mxu0
        %v1188 = vpop.f32.mrf.mxu0
        %v1189 = vadd.f32 %v1028, %v1188
        %v1190 = vpop.f32.mrf.mxu0
        %1191 = vmatprep.mubr.bf16.mxu0 0
        %1192 = vmatmul.mubr.bf16.gmra.mxu0 %v755
        %v1193 = vpop.f32.mrf.mxu0
        %v1194 = vadd.f32 %v1033, %v1193
        %v1195 = vpop.f32.mrf.mxu0
        %v1196 = vpop.f32.mrf.mxu0
        %v1197 = vadd.f32 %v1036, %v1196
        %v1198 = vpop.f32.mrf.mxu0
        %1199 = vmatprep.mubr.bf16.mxu0 0
        %1200 = vmatmul.mubr.bf16.gmra.mxu0 %v758
        %v1201 = vpop.f32.mrf.mxu0
        %v1202 = vadd.f32 %v1041, %v1201
        %v1203 = vpop.f32.mrf.mxu0
        %v1204 = vpop.f32.mrf.mxu0
        %v1205 = vadd.f32 %v1044, %v1204
        %v1206 = vpop.f32.mrf.mxu0
        %1207 = vmatprep.mubr.bf16.mxu0 0
        %1208 = vmatmul.mubr.bf16.gmra.mxu0 %v761
        %v1209 = vpop.f32.mrf.mxu0
        %v1210 = vadd.f32 %v1049, %v1209
        %v1211 = vpop.f32.mrf.mxu0
        %v1212 = vpop.f32.mrf.mxu0
        %v1213 = vadd.f32 %v1052, %v1212
        %v1214 = vpop.f32.mrf.mxu0
        %1215 = vmatprep.mubr.bf16.mxu0 0
        %1216 = vmatmul.mubr.bf16.gmra.mxu0 %v764
        %v1217 = vpop.f32.mrf.mxu0
        %v1218 = vadd.f32 %v1057, %v1217
        %v1219 = vpop.f32.mrf.mxu0
        %v1220 = vpop.f32.mrf.mxu0
        %v1221 = vadd.f32 %v1060, %v1220
        %v1222 = vpop.f32.mrf.mxu0
        %1223 = vmatprep.mubr.bf16.mxu0 0
        %1224 = vmatmul.mubr.bf16.gmra.mxu0 %v767
        %v1225 = vpop.f32.mrf.mxu0
        %v1226 = vadd.f32 %v1065, %v1225
        %v1227 = vpop.f32.mrf.mxu0
        %v1228 = vpop.f32.mrf.mxu0
        %v1229 = vadd.f32 %v1068, %v1228
        %v1230 = vpop.f32.mrf.mxu0
        %1231 = vmatprep.mubr.bf16.mxu0 0
        %1232 = vmatmul.mubr.bf16.gmra.mxu0 %v770
        %v1233 = vpop.f32.mrf.mxu0
        %v1234 = vadd.f32 %v1073, %v1233
        %v1235 = vpop.f32.mrf.mxu0
        %v1236 = vpop.f32.mrf.mxu0
        %v1237 = vadd.f32 %v1076, %v1236
        %v1238 = vpop.f32.mrf.mxu0
        %1239 = vmatprep.mubr.bf16.mxu0 0
        %1240 = vmatmul.mubr.bf16.gmra.mxu0 %v773
        %v1241 = vpop.f32.mrf.mxu0
        %v1242 = vadd.f32 %v1081, %v1241
        %v1243 = vpop.f32.mrf.mxu0
        %v1244 = vpop.f32.mrf.mxu0
        %v1245 = vadd.f32 %v1084, %v1244
        %v1246 = vpop.f32.mrf.mxu0
        %1247 = vmatprep.mubr.bf16.mxu0 0
        %1248 = vmatmul.mubr.bf16.gmra.mxu0 %v776
        %v1249 = vpop.f32.mrf.mxu0
        %v1250 = vadd.f32 %v1089, %v1249
        %v1251 = vpop.f32.mrf.mxu0
        %v1252 = vpop.f32.mrf.mxu0
        %v1253 = vadd.f32 %v1092, %v1252
        %v1254 = vpop.f32.mrf.mxu0
        %1255 = vmatprep.mubr.bf16.mxu0 0
        %1256 = vmatmul.mubr.bf16.gmra.mxu0 %v779
        %v1257 = vpop.f32.mrf.mxu0
        %v1258 = vadd.f32 %v1097, %v1257
        %v1259 = vpop.f32.mrf.mxu0
        %v1260 = vpop.f32.mrf.mxu0
        %v1261 = vadd.f32 %v1100, %v1260
        %v1262 = vpop.f32.mrf.mxu0
        %1263 = vmatprep.mubr.bf16.mxu0 0
        %1264 = vmatmul.mubr.bf16.gmra.mxu0 %v782
        %v1265 = vpop.f32.mrf.mxu0
        %v1266 = vadd.f32 %v1105, %v1265
        %v1267 = vpop.f32.mrf.mxu0
        %v1268 = vpop.f32.mrf.mxu0
        %v1269 = vadd.f32 %v1108, %v1268
        %v1270 = vpop.f32.mrf.mxu0
        %1271 = vmatprep.mubr.bf16.mxu0 0
        %1272 = vmatmul.mubr.bf16.gmra.mxu0 %v785
        %v1273 = vpop.f32.mrf.mxu0
        %v1274 = vadd.f32 %v1113, %v1273
        %v1275 = vpop.f32.mrf.mxu0
        %v1276 = vpop.f32.mrf.mxu0
        %v1277 = vadd.f32 %v1116, %v1276
        %v1278 = vpop.f32.mrf.mxu0
        %1279 = vmatprep.mubr.bf16.mxu0 0
        %1280 = vmatmul.mubr.bf16.gmra.mxu0 %v788
        %v1281 = vpop.f32.mrf.mxu0
        %v1282 = vadd.f32 %v1121, %v1281
        %v1283 = vpop.f32.mrf.mxu0
        %v1284 = vpop.f32.mrf.mxu0
        %v1285 = vadd.f32 %v1124, %v1284
        %v1286 = vpop.f32.mrf.mxu0
        %1287 = vmatprep.mubr.bf16.mxu0 0
        %1288 = vmatmul.mubr.bf16.gmra.mxu0 %v791
        %v1289 = vpop.f32.mrf.mxu0
        %v1290 = vadd.f32 %v1129, %v1289
        %v1291 = vpop.f32.mrf.mxu0
        %v1292 = vpop.f32.mrf.mxu0
        %v1293 = vadd.f32 %v1132, %v1292
        %v1294 = vpop.f32.mrf.mxu0
        %1295 = vmatprep.mubr.bf16.mxu0 0
        %1296 = vmatmul.mubr.bf16.gmra.mxu0 %v794
        %v1297 = vpop.f32.mrf.mxu0
        %v1298 = vadd.f32 %v1137, %v1297
        %v1299 = vpop.f32.mrf.mxu0
        %v1300 = vpop.f32.mrf.mxu0
        %v1301 = vadd.f32 %v1140, %v1300
        %v1302 = vpop.f32.mrf.mxu0
        %1303 = vmatprep.mubr.bf16.mxu0 0
        %1304 = vmatmul.mubr.bf16.gmra.mxu0 %v797
        %v1305 = vpop.f32.mrf.mxu0
        %v1306 = vadd.f32 %v1145, %v1305
        %v1307 = vpop.f32.mrf.mxu0
        %v1308 = vpop.f32.mrf.mxu0
        %v1309 = vadd.f32 %v1148, %v1308
        %v1310 = vpop.f32.mrf.mxu0
        %1311 = vdwg.mxu0
        %v1312 = vadd.f32 %v446, %v1186
        %v1313 = vadd.f32 %v447, %v1189
        %v1314 = vadd.f32 %v448, %v1194
        %v1315 = vadd.f32 %v449, %v1197
        %v1316 = vadd.f32 %v450, %v1202
        %v1317 = vadd.f32 %v451, %v1205
        %v1318 = vadd.f32 %v452, %v1210
        %v1319 = vadd.f32 %v453, %v1213
        %v1320 = vadd.f32 %v454, %v1218
        %v1321 = vadd.f32 %v455, %v1221
        %v1322 = vadd.f32 %v456, %v1226
        %v1323 = vadd.f32 %v457, %v1229
        %v1324 = vadd.f32 %v458, %v1234
        %v1325 = vadd.f32 %v459, %v1237
        %v1326 = vadd.f32 %v460, %v1242
        %v1327 = vadd.f32 %v461, %v1245
        %v1328 = vadd.f32 %v462, %v1250
        %v1329 = vadd.f32 %v463, %v1253
        %v1330 = vadd.f32 %v464, %v1258
        %v1331 = vadd.f32 %v465, %v1261
        %v1332 = vadd.f32 %v466, %v1266
        %v1333 = vadd.f32 %v467, %v1269
        %v1334 = vadd.f32 %v468, %v1274
        %v1335 = vadd.f32 %v469, %v1277
        %v1336 = vadd.f32 %v470, %v1282
        %v1337 = vadd.f32 %v471, %v1285
        %v1338 = vadd.f32 %v472, %v1290
        %v1339 = vadd.f32 %v473, %v1293
        %v1340 = vadd.f32 %v474, %v1298
        %v1341 = vadd.f32 %v475, %v1301
        %v1342 = vadd.f32 %v476, %v1306
        %v1343 = vadd.f32 %v477, %v1309
        %1344 = vst [vmem:[#allocation2] sm:$0xff] %v1312
        %1345 = vst [vmem:[#allocation2 + $0x8] sm:$0xff] %v1313
        %1346 = vst [vmem:[#allocation2 + $0x10] sm:$0xff] %v1314
        %1347 = vst [vmem:[#allocation2 + $0x18] sm:$0xff] %v1315
        %1348 = vst [vmem:[#allocation2 + $0x20] sm:$0xff] %v1316
        %1349 = vst [vmem:[#allocation2 + $0x28] sm:$0xff] %v1317
        %1350 = vst [vmem:[#allocation2 + $0x30] sm:$0xff] %v1318
        %1351 = vst [vmem:[#allocation2 + $0x38] sm:$0xff] %v1319
        %1352 = vst [vmem:[#allocation2 + $0x40] sm:$0xff] %v1320
        %1353 = vst [vmem:[#allocation2 + $0x48] sm:$0xff] %v1321
        %1354 = vst [vmem:[#allocation2 + $0x50] sm:$0xff] %v1322
        %1355 = vst [vmem:[#allocation2 + $0x58] sm:$0xff] %v1323
        %1356 = vst [vmem:[#allocation2 + $0x60] sm:$0xff] %v1324
        %1357 = vst [vmem:[#allocation2 + $0x68] sm:$0xff] %v1325
        %1358 = vst [vmem:[#allocation2 + $0x70] sm:$0xff] %v1326
        %1359 = vst [vmem:[#allocation2 + $0x78] sm:$0xff] %v1327
        %1360 = vst [vmem:[#allocation2 + $0x80] sm:$0xff] %v1328
        %1361 = vst [vmem:[#allocation2 + $0x88] sm:$0xff] %v1329
        %1362 = vst [vmem:[#allocation2 + $0x90] sm:$0xff] %v1330
        %1363 = vst [vmem:[#allocation2 + $0x98] sm:$0xff] %v1331
        %1364 = vst [vmem:[#allocation2 + $0xa0] sm:$0xff] %v1332
        %1365 = vst [vmem:[#allocation2 + $0xa8] sm:$0xff] %v1333
        %1366 = vst [vmem:[#allocation2 + $0xb0] sm:$0xff] %v1334
        %1367 = vst [vmem:[#allocation2 + $0xb8] sm:$0xff] %v1335
        %1368 = vst [vmem:[#allocation2 + $0xc0] sm:$0xff] %v1336
        %1369 = vst [vmem:[#allocation2 + $0xc8] sm:$0xff] %v1337
        %1370 = vst [vmem:[#allocation2 + $0xd0] sm:$0xff] %v1338
        %1371 = vst [vmem:[#allocation2 + $0xd8] sm:$0xff] %v1339
        %1372 = vst [vmem:[#allocation2 + $0xe0] sm:$0xff] %v1340
        %1373 = vst [vmem:[#allocation2 + $0xe8] sm:$0xff] %v1341
        %1374 = vst [vmem:[#allocation2 + $0xf0] sm:$0xff] %v1342
        %1375 = vst [vmem:[#allocation2 + $0xf8] sm:$0xff] %v1343
        %p1376 = scmp.eq.s32.totalorder %s21, 2
        // Predicated region
        $region63: #{unet_forward.16} parent=53 // pred_check
          %p1377 = pneg %p1376
        $region64: #{unet_forward.16} parent=53 // pred_check_branch
          %1379 = sbr.rel (%p1377) target = $region66
        $region65: #{unet_forward.16} parent=53 // pred_region
          %v1380 = vld [vmem:[#allocation2] sm:$0xff]
          %v1381 = vld [vmem:[#allocation2 + $0x8] sm:$0xff]
          %v1382 = vld [vmem:[#allocation2 + $0x10] sm:$0xff]
          %v1383 = vld [vmem:[#allocation2 + $0x18] sm:$0xff]
          %v1384 = vld [vmem:[#allocation2 + $0x20] sm:$0xff]
          %v1385 = vld [vmem:[#allocation2 + $0x28] sm:$0xff]
          %v1386 = vld [vmem:[#allocation2 + $0x30] sm:$0xff]
          %v1387 = vld [vmem:[#allocation2 + $0x38] sm:$0xff]
          %v1388 = vld [vmem:[#allocation2 + $0x40] sm:$0xff]
          %v1389 = vld [vmem:[#allocation2 + $0x48] sm:$0xff]
          %v1390 = vld [vmem:[#allocation2 + $0x50] sm:$0xff]
          %v1391 = vld [vmem:[#allocation2 + $0x58] sm:$0xff]
          %v1392 = vld [vmem:[#allocation2 + $0x60] sm:$0xff]
          %v1393 = vld [vmem:[#allocation2 + $0x68] sm:$0xff]
          %v1394 = vld [vmem:[#allocation2 + $0x70] sm:$0xff]
          %v1395 = vld [vmem:[#allocation2 + $0x78] sm:$0xff]
          %v1396 = vld [vmem:[#allocation2 + $0x80] sm:$0xff]
          %v1397 = vld [vmem:[#allocation2 + $0x88] sm:$0xff]
          %v1398 = vld [vmem:[#allocation2 + $0x90] sm:$0xff]
          %v1399 = vld [vmem:[#allocation2 + $0x98] sm:$0xff]
          %v1400 = vld [vmem:[#allocation2 + $0xa0] sm:$0xff]
          %v1401 = vld [vmem:[#allocation2 + $0xa8] sm:$0xff]
          %v1402 = vld [vmem:[#allocation2 + $0xb0] sm:$0xff]
          %v1403 = vld [vmem:[#allocation2 + $0xb8] sm:$0xff]
          %v1404 = vld [vmem:[#allocation2 + $0xc0] sm:$0xff]
          %v1405 = vld [vmem:[#allocation2 + $0xc8] sm:$0xff]
          %v1406 = vld [vmem:[#allocation2 + $0xd0] sm:$0xff]
          %v1407 = vld [vmem:[#allocation2 + $0xd8] sm:$0xff]
          %v1408 = vld [vmem:[#allocation2 + $0xe0] sm:$0xff]
          %v1409 = vld [vmem:[#allocation2 + $0xe8] sm:$0xff]
          %v1410 = vld [vmem:[#allocation2 + $0xf0] sm:$0xff]
          %v1411 = vld [vmem:[#allocation2 + $0xf8] sm:$0xff]
          %v1412 = vld [vmem:[%s399] sm:$0x1]
          %v1414 = vlaneseq
          %v1415 = vshrl.u32 %v1414, 7
          %v1416 = vsub.s32 0, %v1415
          %v1417 = vrot.slane %v1412, %v1416
          %v1419 = vadd.f32 %v1380, %v1417
          %v1420 = vadd.f32 %v1381, %v1417
          %v1421 = vadd.f32 %v1382, %v1417
          %v1422 = vadd.f32 %v1383, %v1417
          %v1423 = vadd.f32 %v1384, %v1417
          %v1424 = vadd.f32 %v1385, %v1417
          %v1425 = vadd.f32 %v1386, %v1417
          %v1426 = vadd.f32 %v1387, %v1417
          %v1427 = vadd.f32 %v1388, %v1417
          %v1428 = vadd.f32 %v1389, %v1417
          %v1429 = vadd.f32 %v1390, %v1417
          %v1430 = vadd.f32 %v1391, %v1417
          %v1431 = vadd.f32 %v1392, %v1417
          %v1432 = vadd.f32 %v1393, %v1417
          %v1433 = vadd.f32 %v1394, %v1417
          %v1434 = vadd.f32 %v1395, %v1417
          %v1435 = vadd.f32 %v1396, %v1417
          %v1436 = vadd.f32 %v1397, %v1417
          %v1437 = vadd.f32 %v1398, %v1417
          %v1438 = vadd.f32 %v1399, %v1417
          %v1439 = vadd.f32 %v1400, %v1417
          %v1440 = vadd.f32 %v1401, %v1417
          %v1441 = vadd.f32 %v1402, %v1417
          %v1442 = vadd.f32 %v1403, %v1417
          %v1443 = vadd.f32 %v1404, %v1417
          %v1444 = vadd.f32 %v1405, %v1417
          %v1445 = vadd.f32 %v1406, %v1417
          %v1446 = vadd.f32 %v1407, %v1417
          %v1447 = vadd.f32 %v1408, %v1417
          %v1448 = vadd.f32 %v1409, %v1417
          %v1449 = vadd.f32 %v1410, %v1417
          %v1450 = vadd.f32 %v1411, %v1417
          %v1451 = vmax.f32 %v1419, 0.0
          %v1452 = vmax.f32 %v1420, 0.0
          %v1453 = vmax.f32 %v1421, 0.0
          %v1454 = vmax.f32 %v1422, 0.0
          %v1455 = vmax.f32 %v1423, 0.0
          %v1456 = vmax.f32 %v1424, 0.0
          %v1457 = vmax.f32 %v1425, 0.0
          %v1458 = vmax.f32 %v1426, 0.0
          %v1459 = vmax.f32 %v1427, 0.0
          %v1460 = vmax.f32 %v1428, 0.0
          %v1461 = vmax.f32 %v1429, 0.0
          %v1462 = vmax.f32 %v1430, 0.0
          %v1463 = vmax.f32 %v1431, 0.0
          %v1464 = vmax.f32 %v1432, 0.0
          %v1465 = vmax.f32 %v1433, 0.0
          %v1466 = vmax.f32 %v1434, 0.0
          %v1467 = vmax.f32 %v1435, 0.0
          %v1468 = vmax.f32 %v1436, 0.0
          %v1469 = vmax.f32 %v1437, 0.0
          %v1470 = vmax.f32 %v1438, 0.0
          %v1471 = vmax.f32 %v1439, 0.0
          %v1472 = vmax.f32 %v1440, 0.0
          %v1473 = vmax.f32 %v1441, 0.0
          %v1474 = vmax.f32 %v1442, 0.0
          %v1475 = vmax.f32 %v1443, 0.0
          %v1476 = vmax.f32 %v1444, 0.0
          %v1477 = vmax.f32 %v1445, 0.0
          %v1478 = vmax.f32 %v1446, 0.0
          %v1479 = vmax.f32 %v1447, 0.0
          %v1480 = vmax.f32 %v1448, 0.0
          %v1481 = vmax.f32 %v1449, 0.0
          %v1482 = vmax.f32 %v1450, 0.0
          %v1483 = vpack.c.bf16 %v1452, %v1451
          %v1484 = vpack.c.bf16 %v1454, %v1453
          %v1485 = vpack.c.bf16 %v1456, %v1455
          %v1486 = vpack.c.bf16 %v1458, %v1457
          %v1487 = vpack.c.bf16 %v1460, %v1459
          %v1488 = vpack.c.bf16 %v1462, %v1461
          %v1489 = vpack.c.bf16 %v1464, %v1463
          %v1490 = vpack.c.bf16 %v1466, %v1465
          %v1491 = vpack.c.bf16 %v1468, %v1467
          %v1492 = vpack.c.bf16 %v1470, %v1469
          %v1493 = vpack.c.bf16 %v1472, %v1471
          %v1494 = vpack.c.bf16 %v1474, %v1473
          %v1495 = vpack.c.bf16 %v1476, %v1475
          %v1496 = vpack.c.bf16 %v1478, %v1477
          %v1497 = vpack.c.bf16 %v1480, %v1479
          %v1498 = vpack.c.bf16 %v1482, %v1481
          %v1515 = vunpack.c.l.b16 %v1483
          %v1516 = vunpack.c.h.b16 %v1483
          %v1517 = vunpack.c.l.b16 %v1484
          %v1518 = vunpack.c.h.b16 %v1484
          %v1519 = vunpack.c.l.b16 %v1485
          %v1520 = vunpack.c.h.b16 %v1485
          %v1521 = vunpack.c.l.b16 %v1486
          %v1522 = vunpack.c.h.b16 %v1486
          %v1523 = vunpack.c.l.b16 %v1487
          %v1524 = vunpack.c.h.b16 %v1487
          %v1525 = vunpack.c.l.b16 %v1488
          %v1526 = vunpack.c.h.b16 %v1488
          %v1527 = vunpack.c.l.b16 %v1489
          %v1528 = vunpack.c.h.b16 %v1489
          %v1529 = vunpack.c.l.b16 %v1490
          %v1530 = vunpack.c.h.b16 %v1490
          %v1531 = vunpack.c.l.b16 %v1491
          %v1532 = vunpack.c.h.b16 %v1491
          %v1533 = vunpack.c.l.b16 %v1492
          %v1534 = vunpack.c.h.b16 %v1492
          %v1535 = vunpack.c.l.b16 %v1493
          %v1536 = vunpack.c.h.b16 %v1493
          %v1537 = vunpack.c.l.b16 %v1494
          %v1538 = vunpack.c.h.b16 %v1494
          %v1539 = vunpack.c.l.b16 %v1495
          %v1540 = vunpack.c.h.b16 %v1495
          %v1541 = vunpack.c.l.b16 %v1496
          %v1542 = vunpack.c.h.b16 %v1496
          %v1543 = vunpack.c.l.b16 %v1497
          %v1544 = vunpack.c.h.b16 %v1497
          %v1545 = vunpack.c.l.b16 %v1498
          %v1546 = vunpack.c.h.b16 %v1498
          %v1547 = vpack.c.b16 %v1515, %v1515
          %v1548 = vpack.c.b16 %v1516, %v1516
          %v1549 = vpack.c.b16 %v1517, %v1517
          %v1550 = vpack.c.b16 %v1518, %v1518
          %v1551 = vpack.c.b16 %v1519, %v1519
          %v1552 = vpack.c.b16 %v1520, %v1520
          %v1553 = vpack.c.b16 %v1521, %v1521
          %v1554 = vpack.c.b16 %v1522, %v1522
          %v1555 = vpack.c.b16 %v1523, %v1523
          %v1556 = vpack.c.b16 %v1524, %v1524
          %v1557 = vpack.c.b16 %v1525, %v1525
          %v1558 = vpack.c.b16 %v1526, %v1526
          %v1559 = vpack.c.b16 %v1527, %v1527
          %v1560 = vpack.c.b16 %v1528, %v1528
          %v1561 = vpack.c.b16 %v1529, %v1529
          %v1562 = vpack.c.b16 %v1530, %v1530
          %v1563 = vpack.c.b16 %v1531, %v1531
          %v1564 = vpack.c.b16 %v1532, %v1532
          %v1565 = vpack.c.b16 %v1533, %v1533
          %v1566 = vpack.c.b16 %v1534, %v1534
          %v1567 = vpack.c.b16 %v1535, %v1535
          %v1568 = vpack.c.b16 %v1536, %v1536
          %v1569 = vpack.c.b16 %v1537, %v1537
          %v1570 = vpack.c.b16 %v1538, %v1538
          %v1571 = vpack.c.b16 %v1539, %v1539
          %v1572 = vpack.c.b16 %v1540, %v1540
          %v1573 = vpack.c.b16 %v1541, %v1541
          %v1574 = vpack.c.b16 %v1542, %v1542
          %v1575 = vpack.c.b16 %v1543, %v1543
          %v1576 = vpack.c.b16 %v1544, %v1544
          %v1577 = vpack.c.b16 %v1545, %v1545
          %v1578 = vpack.c.b16 %v1546, %v1546
          %1611 = vst [vmem:[%s407] sm:$0xf] %v1547
          %1612 = vst [vmem:[%s407 + $0x4] sm:$0xf] %v1548
          %1613 = vst [vmem:[%s407 + $0x8] sm:$0xf] %v1549
          %1614 = vst [vmem:[%s407 + $0xc] sm:$0xf] %v1550
          %1615 = vst [vmem:[%s407 + $0x10] sm:$0xf] %v1551
          %1616 = vst [vmem:[%s407 + $0x14] sm:$0xf] %v1552
          %1617 = vst [vmem:[%s407 + $0x18] sm:$0xf] %v1553
          %1618 = vst [vmem:[%s407 + $0x1c] sm:$0xf] %v1554
          %1619 = vst [vmem:[%s407 + $0x20] sm:$0xf] %v1555
          %1620 = vst [vmem:[%s407 + $0x24] sm:$0xf] %v1556
          %1621 = vst [vmem:[%s407 + $0x28] sm:$0xf] %v1557
          %1622 = vst [vmem:[%s407 + $0x2c] sm:$0xf] %v1558
          %1623 = vst [vmem:[%s407 + $0x30] sm:$0xf] %v1559
          %1624 = vst [vmem:[%s407 + $0x34] sm:$0xf] %v1560
          %1625 = vst [vmem:[%s407 + $0x38] sm:$0xf] %v1561
          %1626 = vst [vmem:[%s407 + $0x3c] sm:$0xf] %v1562
          %1627 = vst [vmem:[%s407 + $0x40] sm:$0xf] %v1563
          %1628 = vst [vmem:[%s407 + $0x44] sm:$0xf] %v1564
          %1629 = vst [vmem:[%s407 + $0x48] sm:$0xf] %v1565
          %1630 = vst [vmem:[%s407 + $0x4c] sm:$0xf] %v1566
          %1631 = vst [vmem:[%s407 + $0x50] sm:$0xf] %v1567
          %1632 = vst [vmem:[%s407 + $0x54] sm:$0xf] %v1568
          %1633 = vst [vmem:[%s407 + $0x58] sm:$0xf] %v1569
          %1634 = vst [vmem:[%s407 + $0x5c] sm:$0xf] %v1570
          %1635 = vst [vmem:[%s407 + $0x60] sm:$0xf] %v1571
          %1636 = vst [vmem:[%s407 + $0x64] sm:$0xf] %v1572
          %1637 = vst [vmem:[%s407 + $0x68] sm:$0xf] %v1573
          %1638 = vst [vmem:[%s407 + $0x6c] sm:$0xf] %v1574
          %1639 = vst [vmem:[%s407 + $0x70] sm:$0xf] %v1575
          %1640 = vst [vmem:[%s407 + $0x74] sm:$0xf] %v1576
          %1641 = vst [vmem:[%s407 + $0x78] sm:$0xf] %v1577
          %1642 = vst [vmem:[%s407 + $0x7c] sm:$0xf] %v1578
        $region66: #{unet_forward.16} parent=53 // pred_fallthru
          _
        %s1643 = smul.u32 32, %s19
        %p1644 = scmp.lt.s32.totalorder %s1643, 63
        %s1645 = scalar_select %p1644, %s1643, 63
        %p1646 = scmp.lt.s32.totalorder %s20, 0
        %s1647 = scalar_select %p1646, %s20, 0
        %s1648 = sadd.s32 %s1647, %s1645
        %s1649 = smul.addr %s1648, 4
        %s1650 = scalar_lea.vmem %s3, %s1649
        // Predicated region
        $region67: #{unet_forward.16} parent=53 // pred_check
          %p1651 = pneg %p135
        $region68: #{unet_forward.16} parent=53 // pred_check_branch
          %1653 = sbr.rel (%p1651) target = $region70
        $region69: #{unet_forward.16} parent=53 // pred_region
          %s1654 = smul.u32 32, %s19
        $region70: #{unet_forward.16} parent=53 // pred_fallthru
          _
      $region54: #{unet_forward.16} parent=5 // pred_fallthru
        _
      %p1655 = scmp.le.s32.totalorder 2, %s9
      // Predicated region
      $region71: #{unet_forward.16} parent=5 // pred_check
        %p1656 = pneg %p1655
      $region72: #{unet_forward.16} parent=5 // pred_check_branch
        %1658 = sbr.rel (%p1656) target = $region74
      $region73: #{unet_forward.16} parent=5 // pred_region
        %s1659 = ssub.s32 %s9, 2
        // Predicated region
        $region75: #{unet_forward.16} parent=73 // pred_check
          %p1660 = pneg %p141
        $region76: #{unet_forward.16} parent=73 // pred_check_branch
          %1662 = sbr.rel (%p1660) target = $region78
        $region77: #{unet_forward.16} parent=73 // pred_region
          %s1663 = smul.u32 32, %s22
          %p1664 = scmp.lt.s32.totalorder %s1663, 63
          %s1665 = scalar_select %p1664, %s1663, 63
          %p1666 = scmp.lt.s32.totalorder %s23, 0
          %s1667 = scalar_select %p1666, %s23, 0
          %s1668 = sadd.s32 %s1667, %s1665
          %s1669 = smul.addr %s1668, 4
          %s1670 = scalar_lea.vmem %s3, %s1669
        $region78: #{unet_forward.16} parent=73 // pred_fallthru
          _
      $region74: #{unet_forward.16} parent=5 // pred_fallthru
        _
    $region6: #{unet_forward.16} parent=1 // loop_footer
      %s13 = sadd.s32 1, %s9
    $region7: #{unet_forward.16} parent=1 // loop_footer_branch
      %8 = sbr.rel target = $region3
    $region8: #{unet_forward.16} parent=1 // loop_exit
      _

</llo_original>
